<compile_context>
chip_gen: v7x
topology: tpu7x:2x2x1
jax: 0.10.0
libtpu: 0.0.40
codegen_flags: <defaults>
</compile_context>

<pallas_src>
import functools
import math

import jax
import jax.numpy as jnp
from jax import lax
from jax.experimental import pallas as pl
from jax.experimental.pallas import tpu as pltpu


K_CHANNELS = 3          # self.K
SKIP_COEFF = 4          # skip_layers_coeff
ENC_DEC_OUT = 8         # enc_dec_out
NUM_SKIP_LAYERS = 2     # num_skip_layers

MAX_FUSED_ROWS = 4096               # single-tile (fully fused) row cap
VMEM_LIMIT = 32 * 1024 * 1024       # explicit scoped-VMEM cap (safe on v5e/v6e/v7x)
BN_EPS = 1e-5


def _round_up(x, m):
    return (x + m - 1) // m * m


# --------------------------------------------------------------------------
# In-kernel helpers
# --------------------------------------------------------------------------

def _bn_relu(y, gamma, beta, eps, relu=True):
    """Training-mode BatchNorm (+ReLU) over the row axis, two-pass, f32."""
    inv_count = 1.0 / y.shape[0]
    mean = jnp.sum(y, axis=0, keepdims=True) * inv_count
    d = y - mean
    var = jnp.sum(d * d, axis=0, keepdims=True) * inv_count
    y = d * (lax.rsqrt(var + eps) * gamma) + beta
    return jnp.maximum(y, 0.0) if relu else y


# --------------------------------------------------------------------------
# Pallas kernel bodies (single tile: block == full array)
# --------------------------------------------------------------------------

def _conv_bn_relu_kernel(a_ref, w_ref, g_ref, b_ref, *rest, eps, post_bn):
    """y = ReLU(BN(a @ w)); optionally also apply the next layer's leading BN."""
    o_ref = rest[-1]
    y = jnp.dot(a_ref[...], w_ref[...], preferred_element_type=jnp.float32)
    y = _bn_relu(y, g_ref[...], b_ref[...], eps)
    if post_bn:
        y = _bn_relu(y, rest[0][...], rest[1][...], eps, relu=False)
    o_ref[...] = y.astype(o_ref.dtype)


def _skip_chain_kernel(x_ref, w1_ref, g1_ref, b1_ref, w2_ref, g2_ref, b2_ref,
                       o_ref, *, eps):
    """Two fused 1x1 conv -> BN -> ReLU layers (skip path); y1 never hits HBM."""
    y1 = jnp.dot(x_ref[...], w1_ref[...], preferred_element_type=jnp.float32)
    y1 = _bn_relu(y1, g1_ref[...], b1_ref[...], eps)
    y2 = jnp.dot(y1.astype(jnp.bfloat16), w2_ref[...],
                 preferred_element_type=jnp.float32)
    y2 = _bn_relu(y2, g2_ref[...], b2_ref[...], eps)
    o_ref[...] = y2.astype(o_ref.dtype)


def _up_layer_kernel(a_ref, w_ref, bias_ref, *rest, eps, cout, post_bn, combine):
    """Sub-pixel ConvTranspose (phase-stacked matmul) + bias + ReLU,
    then optionally the next layer's phase-folded BN, or the final 1x1 combine."""
    o_ref = rest[-1]
    y = jnp.dot(a_ref[...], w_ref[...], preferred_element_type=jnp.float32)
    y = jnp.maximum(y + bias_ref[...], 0.0)            # (M, 4*cout), phase-grouped

    idx = 0
    if post_bn:
        g4_ref, b4_ref = rest[idx], rest[idx + 1]
        idx += 2
        inv_count = 1.0 / (4 * y.shape[0])              # stats over all 4 phases
        csum = jnp.sum(y, axis=0, keepdims=True)
        mean = (csum[:, 0:cout] + csum[:, cout:2 * cout]
                + csum[:, 2 * cout:3 * cout] + csum[:, 3 * cout:4 * cout]) * inv_count
        mean4 = jnp.concatenate([mean, mean, mean, mean], axis=1)
        d = y - mean4
        csq = jnp.sum(d * d, axis=0, keepdims=True)
        var = (csq[:, 0:cout] + csq[:, cout:2 * cout]
               + csq[:, 2 * cout:3 * cout] + csq[:, 3 * cout:4 * cout]) * inv_count
        inv4 = jnp.concatenate([lax.rsqrt(var + eps)] * 4, axis=1)
        y = d * (inv4 * g4_ref[...]) + b4_ref[...]

    if combine:
        s_ref, wu_ref, ws_ref, cb_ref = rest[idx], rest[idx + 1], rest[idx + 2], rest[idx + 3]
        out = jnp.dot(y.astype(jnp.bfloat16), wu_ref[...],
                      preferred_element_type=jnp.float32)
        out = out + jnp.dot(s_ref[...], ws_ref[...],
                            preferred_element_type=jnp.float32)
        o_ref[...] = out + cb_ref[...]
    else:
        o_ref[...] = y.astype(o_ref.dtype)


# --------------------------------------------------------------------------
# pallas_call wrapper (single tile: grid=(1,), block == full array)
# --------------------------------------------------------------------------

def _spec2(shape):
    return pl.BlockSpec(shape, lambda i: (0, 0))


def _single_tile_call(kernel, inputs, out_shape):
    return pl.pallas_call(
        kernel,
        out_shape=out_shape,
        grid=(1,),
        in_specs=[_spec2(x.shape) for x in inputs],
        out_specs=_spec2(out_shape.shape),
        compiler_params=pltpu.CompilerParams(
            dimension_semantics=("arbitrary",), vmem_limit_bytes=VMEM_LIMIT),
    )(*inputs)


# --------------------------------------------------------------------------
# Conv plumbing (glue: patch extraction in plain JAX, bf16 operands)
# --------------------------------------------------------------------------

def _im2col(x_nhwc, kh, kw, stride, pad):
    b, h, w, c = x_nhwc.shape
    x_p = jnp.pad(x_nhwc, ((0, 0), (pad, pad), (pad, pad), (0, 0)))
    ho = (h + 2 * pad - kh) // stride + 1
    wo = (w + 2 * pad - kw) // stride + 1
    cols = []
    for i in range(kh):
        for j in range(kw):
            cols.append(x_p[:, i:i + stride * ho:stride, j:j + stride * wo:stride, :])
    patches = jnp.concatenate(cols, axis=-1)            # (b, ho, wo, kh*kw*c), bf16
    return patches.reshape(b * ho * wo, kh * kw * c), (b, ho, wo)


def _check_rows(m):
    if m > MAX_FUSED_ROWS:
        raise NotImplementedError(
            f"B*H*W = {m} exceeds the single-tile fused-kernel limit "
            f"({MAX_FUSED_ROWS}); the tiled fallback path is not implemented.")


def conv_bn_relu(x_img, wmat, gamma, beta, *, k, stride, pad, post_bn=None):
    """Conv2d (bias cancels under the following BN) -> BatchNorm2d(train) -> ReLU
    [-> next layer's leading BatchNorm], as ONE fused Pallas kernel."""
    patches, (b, ho, wo) = _im2col(x_img, k, k, stride, pad)
    m, kk = patches.shape
    _check_rows(m)
    kp = wmat.shape[0]
    if kp != kk:                                         # pad K to the weight's padded K
        patches = jnp.pad(patches, ((0, 0), (0, kp - kk)))
    n = wmat.shape[1]
    inputs = [patches, wmat, gamma, beta]
    if post_bn is not None:
        inputs += list(post_bn)
    out = _single_tile_call(
        functools.partial(_conv_bn_relu_kernel, eps=BN_EPS, post_bn=post_bn is not None),
        inputs, jax.ShapeDtypeStruct((m, n), jnp.bfloat16))
    return out.reshape(b, ho, wo, n)


def skip_chain(x_img, p):
    """Both 1x1 skip conv+BN+ReLU layers fused into one kernel."""
    b, h, w, c = x_img.shape
    m = b * h * w
    _check_rows(m)
    x_flat = x_img.reshape(m, c)
    kp = p["skip1_w"].shape[0]
    if kp != c:
        x_flat = jnp.pad(x_flat, ((0, 0), (0, kp - c)))
    out = _single_tile_call(
        functools.partial(_skip_chain_kernel, eps=BN_EPS),
        [x_flat, p["skip1_w"], p["skip1_g"], p["skip1_be"],
         p["skip2_w"], p["skip2_g"], p["skip2_be"]],
        jax.ShapeDtypeStruct((m, SKIP_COEFF * 8), jnp.bfloat16))
    return out.reshape(b, h, w, SKIP_COEFF * 8)


def up_layer(z_img, w_stacked, bias4, *, cout, post_bn=None, combine=None):
    """ConvTranspose2d(k=4,s=2,p=1) + bias + ReLU via sub-pixel decomposition.
    `z_img` must already carry this layer's leading BatchNorm (applied in the
    previous layer's kernel epilogue so the zero padding stays a true zero)."""
    patches, (b, h, w) = _im2col(z_img, 3, 3, 1, 1)
    m = b * h * w
    _check_rows(m)
    inputs = [patches, w_stacked, bias4]
    if post_bn is not None:
        inputs += list(post_bn)
    if combine is not None:
        inputs += list(combine)
    out_cols = 4 if combine is not None else 4 * cout
    out_dtype = jnp.float32 if combine is not None else jnp.bfloat16
    out = _single_tile_call(
        functools.partial(_up_layer_kernel, eps=BN_EPS, cout=cout,
                          post_bn=post_bn is not None, combine=combine is not None),
        inputs, jax.ShapeDtypeStruct((m, out_cols), out_dtype))
    if combine is not None:
        # (M, 4) phase-grouped depth -> (B, 2h, 2w)
        return out.reshape(b, h, w, 2, 2).transpose(0, 1, 3, 2, 4).reshape(b, 2 * h, 2 * w)
    # (M, 4*cout) phase-grouped -> interleave to (B, 2h, 2w, cout)
    return (out.reshape(b, h, w, 2, 2, cout)
               .transpose(0, 1, 3, 2, 4, 5)
               .reshape(b, 2 * h, 2 * w, cout))


# --------------------------------------------------------------------------
# Parameters (deterministic synthetic init; matmul-ready layouts, bf16, one-time)
# --------------------------------------------------------------------------

def init_params(key):
    keys = iter(jax.random.split(key, 32))

    def conv_w(cout, cin, k):
        fan_in = cin * k * k
        bound = 1.0 / math.sqrt(fan_in)
        w = jax.random.uniform(next(keys), (cout, cin, k, k), jnp.float32, -bound, bound)
        # (kh, kw, cin, cout) flattened to (k*k*cin, cout): matches _im2col layout.
        wmat = jnp.transpose(w, (2, 3, 1, 0)).reshape(k * k * cin, cout)
        kp = _round_up(k * k * cin, 8)
        if kp != k * k * cin:
            wmat = jnp.zeros((kp, cout), jnp.float32).at[:k * k * cin].set(wmat)
        return wmat.astype(jnp.bfloat16)

    def convT_stacked(cin, cout):
        """ConvTranspose2d(k=4,s=2,p=1) as a phase-stacked (9*cin, 4*cout) weight
        consumed by a 3x3 stride-1 patch matrix (sub-pixel decomposition)."""
        fan_in = cout * 16
        bound = 1.0 / math.sqrt(fan_in)
        w = jax.random.uniform(next(keys), (cin, cout, 4, 4), jnp.float32, -bound, bound)
        b = jax.random.uniform(next(keys), (cout,), jnp.float32, -bound, bound)
        # For output row 2m+py the contributing input rows are window offsets dy
        # with kernel rows ky:  py=0 -> {dy0:ky3, dy1:ky1},  py=1 -> {dy1:ky2, dy2:ky0}
        tap = {0: {0: 3, 1: 1}, 1: {1: 2, 2: 0}}
        ws = jnp.zeros((9 * cin, 4 * cout), jnp.float32)
        for py in range(2):
            for px in range(2):
                p = py * 2 + px
                for dy, ky in tap[py].items():
                    for dx, kx in tap[px].items():
                        row = (dy * 3 + dx) * cin
                        ws = ws.at[row:row + cin, p * cout:(p + 1) * cout].set(w[:, :, ky, kx])
        bias4 = jnp.tile(b.reshape(1, cout), (1, 4))
        return ws.astype(jnp.bfloat16), bias4

    def bn(c):
        return jnp.ones((1, c), jnp.float32), jnp.zeros((1, c), jnp.float32)

    p = {}
    # NOTE: conv biases of conv->BN layers cancel exactly inside the training-mode
    # BatchNorm and are therefore not generated/applied.
    p["down1_w"] = conv_w(32, K_CHANNELS, 3);  p["down1_g"], p["down1_be"] = bn(32)
    p["down2_w"] = conv_w(64, 32, 3);          p["down2_g"], p["down2_be"] = bn(64)
    p["down3_w"] = conv_w(128, 64, 3);         p["down3_g"], p["down3_be"] = bn(128)
    p["same1_w"] = conv_w(128, 128, 3);        p["same1_g"], p["same1_be"] = bn(128)

    p["up1_g"], p["up1_be"] = bn(128)                      # applied in same1's epilogue
    p["up1_w"], p["up1_bias"] = convT_stacked(128, 64)
    g, b = bn(64)                                          # BN_up2: phase-tiled, applied in up1
    p["up2_g4"], p["up2_be4"] = jnp.tile(g, (1, 4)), jnp.tile(b, (1, 4))
    p["up2_w"], p["up2_bias"] = convT_stacked(64, 32)
    g, b = bn(32)                                          # BN_up3: phase-tiled, applied in up2
    p["up3_g4"], p["up3_be4"] = jnp.tile(g, (1, 4)), jnp.tile(b, (1, 4))
    p["up3_w"], p["up3_bias"] = convT_stacked(32, ENC_DEC_OUT)

    p["skip1_w"] = conv_w(SKIP_COEFF * 4, K_CHANNELS, 1)
    p["skip1_g"], p["skip1_be"] = bn(SKIP_COEFF * 4)
    p["skip2_w"] = conv_w(SKIP_COEFF * 8, SKIP_COEFF * 4, 1)
    p["skip2_g"], p["skip2_be"] = bn(SKIP_COEFF * 8)

    # layer_combine (1x1 conv over cat([u3, skip2])) -> block-diagonal per-phase
    # weights so the combine fuses into up3's phase-grouped output.
    cin_comb = ENC_DEC_OUT + SKIP_COEFF * 8
    bound = 1.0 / math.sqrt(cin_comb)
    comb_w = jax.random.uniform(next(keys), (1, cin_comb, 1, 1), jnp.float32, -bound, bound)
    comb_b = jax.random.uniform(next(keys), (1,), jnp.float32, -bound, bound)
    wflat = comb_w[0, :, 0, 0]
    wu, wsk = wflat[:ENC_DEC_OUT], wflat[ENC_DEC_OUT:]
    wu_bd = jnp.zeros((4 * ENC_DEC_OUT, 4), jnp.float32)
    ws_bd = jnp.zeros((4 * SKIP_COEFF * 8, 4), jnp.float32)
    for q in range(4):
        wu_bd = wu_bd.at[q * ENC_DEC_OUT:(q + 1) * ENC_DEC_OUT, q].set(wu)
        ws_bd = ws_bd.at[q * SKIP_COEFF * 8:(q + 1) * SKIP_COEFF * 8, q].set(wsk)
    p["comb_wu"] = wu_bd.astype(jnp.bfloat16)
    p["comb_ws"] = ws_bd.astype(jnp.bfloat16)
    p["comb_b"] = comb_b.reshape(1, 1)
    return p


# --------------------------------------------------------------------------
# Forward pass (mirrors CNN.forward after the external Utils preprocessing)
# --------------------------------------------------------------------------

def cnn_forward(params, bvals_nchw):
    """bvals_nchw: (B, K, H, W) float32 -> decodedDepths: (B, H, W) float32."""
    p = params
    # BVals = (BVals - mean(BVals)) / std(BVals)   (torch.std -> unbiased; plain JAX)
    mean = jnp.mean(bvals_nchw)
    std = jnp.std(bvals_nchw, ddof=1)
    x = (bvals_nchw - mean) / std
    x = jnp.transpose(x, (0, 2, 3, 1)).astype(jnp.bfloat16)   # NCHW -> NHWC, MXU dtype
    b, h, w, _ = x.shape

    d1 = conv_bn_relu(x, p["down1_w"], p["down1_g"], p["down1_be"], k=3, stride=2, pad=1)
    d2 = conv_bn_relu(d1, p["down2_w"], p["down2_g"], p["down2_be"], k=3, stride=2, pad=1)
    d3 = conv_bn_relu(d2, p["down3_w"], p["down3_g"], p["down3_be"], k=3, stride=2, pad=1)
    # same1 conv+BN+ReLU, fused with up1's leading BatchNorm (epilogue)
    s1n = conv_bn_relu(d3, p["same1_w"], p["same1_g"], p["same1_be"], k=3, stride=1, pad=1,
                       post_bn=(p["up1_g"], p["up1_be"]))

    # skip path (num_skip_layers == 2): both 1x1 conv+BN+ReLU layers in one kernel
    sk2 = skip_chain(x, p)                                     # (B, H, W, 32) bf16
    # phase-grouped reorder of sk2 so the 1x1 combine fuses into the up3 kernel
    hh, ww = h // 2, w // 2
    sk2r = (sk2.reshape(b, hh, 2, ww, 2, SKIP_COEFF * 8)
               .transpose(0, 1, 3, 2, 4, 5)
               .reshape(b * hh * ww, 4 * SKIP_COEFF * 8)).astype(jnp.bfloat16)

    u1n = up_layer(s1n, p["up1_w"], p["up1_bias"], cout=64,
                   post_bn=(p["up2_g4"], p["up2_be4"]))        # BN_up2 already applied
    u2n = up_layer(u1n, p["up2_w"], p["up2_bias"], cout=32,
                   post_bn=(p["up3_g4"], p["up3_be4"]))        # BN_up3 already applied
    out = up_layer(u2n, p["up3_w"], p["up3_bias"], cout=ENC_DEC_OUT,
                   combine=(sk2r, p["comb_wu"], p["comb_ws"], p["comb_b"]))
    return out                                                 # (B, H, W) == squeeze(out, 1)


# --------------------------------------------------------------------------
# Driver
# --------------------------------------------------------------------------

if __name__ == "__main__":
    key = jax.random.PRNGKey(0)
    k_param, k_in = jax.random.split(key)

    params = init_params(k_param)

    B, H, W = 2, 16, 16
    # BVals after permute(0, 3, 1, 2): (B, K, H, W), NCHW
    bvals = jax.random.uniform(k_in, (B, K_CHANNELS, H, W), jnp.float32,
                               minval=0.0, maxval=100.0)

    fwd = jax.jit(cnn_forward)
    decoded_depths = jax.block_until_ready(fwd(params, bvals))

    assert decoded_depths.shape == (B, H, W)
    assert decoded_depths.dtype == jnp.float32
    assert bool(jnp.all(jnp.isfinite(decoded_depths)))
    print("KERNEL_OK")
</pallas_src>

<mosaic_0001>
module attributes {stable_mosaic.version = 11 : i64} {
  func.func @_conv_bn_relu_kernel(%arg0: i32, %arg1: memref<128x32xbf16, #tpu.memory_space<vmem>>, %arg2: memref<32x32xbf16, #tpu.memory_space<vmem>>, %arg3: memref<1x32xf32, #tpu.memory_space<vmem>>, %arg4: memref<1x32xf32, #tpu.memory_space<vmem>>, %arg5: memref<128x32xbf16, #tpu.memory_space<vmem>>) attributes {dimension_semantics = [#tpu.dimension_semantics<arbitrary>], iteration_bounds = array<i64: 1>, scalar_prefetch = 0 : i64, scratch_operands = 0 : i64, tpu.core_type = #tpu.core_type<tc>, window_params = [{pipeline_mode = #tpu.pipeline_mode<synchronous>, transform_indices = @transform_0, window_bounds = array<i64: 128, 32>}, {pipeline_mode = #tpu.pipeline_mode<synchronous>, transform_indices = @transform_1, window_bounds = array<i64: 32, 32>}, {pipeline_mode = #tpu.pipeline_mode<synchronous>, transform_indices = @transform_2, window_bounds = array<i64: 1, 32>}, {pipeline_mode = #tpu.pipeline_mode<synchronous>, transform_indices = @transform_3, window_bounds = array<i64: 1, 32>}, {pipeline_mode = #tpu.pipeline_mode<synchronous>, transform_indices = @transform_4, window_bounds = array<i64: 128, 32>}]} {
    %c0 = arith.constant 0 : index
    %c0_0 = arith.constant 0 : index
    %0 = vector.load %arg1[%c0, %c0_0] : memref<128x32xbf16, #tpu.memory_space<vmem>>, vector<128x32xbf16>
    %c0_1 = arith.constant 0 : index
    %c0_2 = arith.constant 0 : index
    %1 = vector.load %arg2[%c0_1, %c0_2] : memref<32x32xbf16, #tpu.memory_space<vmem>>, vector<32x32xbf16>
    %cst = arith.constant dense<0.000000e+00> : vector<128x32xf32>
    %2 = tpu.matmul %0, %1, %cst {dimension_numbers = #tpu.dot_dimension_numbers<[1], [0], [0], [1], [0, 0, 1, 1], [], []>} : vector<128x32xbf16>, vector<32x32xbf16>, vector<128x32xf32> -> vector<128x32xf32>
    %c0_3 = arith.constant 0 : index
    %c0_4 = arith.constant 0 : index
    %3 = vector.load %arg3[%c0_3, %c0_4] : memref<1x32xf32, #tpu.memory_space<vmem>>, vector<1x32xf32>
    %c0_5 = arith.constant 0 : index
    %c0_6 = arith.constant 0 : index
    %4 = vector.load %arg4[%c0_5, %c0_6] : memref<1x32xf32, #tpu.memory_space<vmem>>, vector<1x32xf32>
    %cst_7 = arith.constant dense<0.000000e+00> : vector<32xf32>
    %5 = vector.multi_reduction <add>, %2, %cst_7 [0] : vector<128x32xf32> to vector<32xf32>
    %6 = vector.shape_cast %5 : vector<32xf32> to vector<1x32xf32>
    %cst_8 = arith.constant 7.812500e-03 : f32
    %7 = vector.broadcast %cst_8 : f32 to vector<1x32xf32>
    %8 = arith.mulf %6, %7 : vector<1x32xf32>
    %9 = vector.broadcast %8 : vector<1x32xf32> to vector<128x32xf32>
    %10 = arith.subf %2, %9 : vector<128x32xf32>
    %11 = arith.mulf %10, %10 : vector<128x32xf32>
    %cst_9 = arith.constant dense<0.000000e+00> : vector<32xf32>
    %12 = vector.multi_reduction <add>, %11, %cst_9 [0] : vector<128x32xf32> to vector<32xf32>
    %13 = vector.shape_cast %12 : vector<32xf32> to vector<1x32xf32>
    %cst_10 = arith.constant 7.812500e-03 : f32
    %14 = vector.broadcast %cst_10 : f32 to vector<1x32xf32>
    %15 = arith.mulf %13, %14 : vector<1x32xf32>
    %cst_11 = arith.constant 9.99999974E-6 : f32
    %16 = vector.broadcast %cst_11 : f32 to vector<1x32xf32>
    %17 = arith.addf %15, %16 : vector<1x32xf32>
    %18 = math.rsqrt %17 : vector<1x32xf32>
    %19 = arith.mulf %18, %3 : vector<1x32xf32>
    %20 = vector.broadcast %19 : vector<1x32xf32> to vector<128x32xf32>
    %21 = arith.mulf %10, %20 : vector<128x32xf32>
    %22 = vector.broadcast %4 : vector<1x32xf32> to vector<128x32xf32>
    %23 = arith.addf %21, %22 : vector<128x32xf32>
    %cst_12 = arith.constant 0.000000e+00 : f32
    %24 = vector.broadcast %cst_12 : f32 to vector<128x32xf32>
    %25 = arith.maximumf %23, %24 : vector<128x32xf32>
    %26 = arith.truncf %25 : vector<128x32xf32> to vector<128x32xbf16>
    %c0_13 = arith.constant 0 : index
    %c0_14 = arith.constant 0 : index
    %27 = vector.load %arg5[%c0_13, %c0_14] : memref<128x32xbf16, #tpu.memory_space<vmem>>, vector<128x32xbf16>
    tpu.vector_store %arg5[%c0_13, %c0_14], %26 {strides = array<i32>} : memref<128x32xbf16, #tpu.memory_space<vmem>>, vector<128x32xbf16>,
    return
  }
  func.func @transform_0(%arg0: i32) -> (i32, i32) {
    %c0_i32 = arith.constant 0 : i32
    %c0_i32_0 = arith.constant 0 : i32
    %c0_i32_1 = arith.constant 0 : i32
    return %c0_i32, %c0_i32_0 : i32, i32
  }
  func.func @transform_1(%arg0: i32) -> (i32, i32) {
    %c0_i32 = arith.constant 0 : i32
    %c0_i32_0 = arith.constant 0 : i32
    %c0_i32_1 = arith.constant 0 : i32
    return %c0_i32, %c0_i32_0 : i32, i32
  }
  func.func @transform_2(%arg0: i32) -> (i32, i32) {
    %c0_i32 = arith.constant 0 : i32
    %c0_i32_0 = arith.constant 0 : i32
    %c0_i32_1 = arith.constant 0 : i32
    return %c0_i32, %c0_i32_0 : i32, i32
  }
  func.func @transform_3(%arg0: i32) -> (i32, i32) {
    %c0_i32 = arith.constant 0 : i32
    %c0_i32_0 = arith.constant 0 : i32
    %c0_i32_1 = arith.constant 0 : i32
    return %c0_i32, %c0_i32_0 : i32, i32
  }
  func.func @transform_4(%arg0: i32) -> (i32, i32) {
    %c0_i32 = arith.constant 0 : i32
    %c0_i32_0 = arith.constant 0 : i32
    %c0_i32_1 = arith.constant 0 : i32
    return %c0_i32, %c0_i32_0 : i32, i32
  }
}

module attributes {stable_mosaic.version = 11 : i64} {
  func.func @_conv_bn_relu_kernel(%arg0: i32, %arg1: memref<32x288xbf16, #tpu.memory_space<vmem>>, %arg2: memref<288x64xbf16, #tpu.memory_space<vmem>>, %arg3: memref<1x64xf32, #tpu.memory_space<vmem>>, %arg4: memref<1x64xf32, #tpu.memory_space<vmem>>, %arg5: memref<32x64xbf16, #tpu.memory_space<vmem>>) attributes {dimension_semantics = [#tpu.dimension_semantics<arbitrary>], iteration_bounds = array<i64: 1>, scalar_prefetch = 0 : i64, scratch_operands = 0 : i64, tpu.core_type = #tpu.core_type<tc>, window_params = [{pipeline_mode = #tpu.pipeline_mode<synchronous>, transform_indices = @transform_0, window_bounds = array<i64: 32, 288>}, {pipeline_mode = #tpu.pipeline_mode<synchronous>, transform_indices = @transform_1, window_bounds = array<i64: 288, 64>}, {pipeline_mode = #tpu.pipeline_mode<synchronous>, transform_indices = @transform_2, window_bounds = array<i64: 1, 64>}, {pipeline_mode = #tpu.pipeline_mode<synchronous>, transform_indices = @transform_3, window_bounds = array<i64: 1, 64>}, {pipeline_mode = #tpu.pipeline_mode<synchronous>, transform_indices = @transform_4, window_bounds = array<i64: 32, 64>}]} {
    %c0 = arith.constant 0 : index
    %c0_0 = arith.constant 0 : index
    %0 = vector.load %arg1[%c0, %c0_0] : memref<32x288xbf16, #tpu.memory_space<vmem>>, vector<32x288xbf16>
    %c0_1 = arith.constant 0 : index
    %c0_2 = arith.constant 0 : index
    %1 = vector.load %arg2[%c0_1, %c0_2] : memref<288x64xbf16, #tpu.memory_space<vmem>>, vector<288x64xbf16>
    %cst = arith.constant dense<0.000000e+00> : vector<32x64xf32>
    %2 = tpu.matmul %0, %1, %cst {dimension_numbers = #tpu.dot_dimension_numbers<[1], [0], [0], [1], [0, 0, 1, 1], [], []>} : vector<32x288xbf16>, vector<288x64xbf16>, vector<32x64xf32> -> vector<32x64xf32>
    %c0_3 = arith.constant 0 : index
    %c0_4 = arith.constant 0 : index
    %3 = vector.load %arg3[%c0_3, %c0_4] : memref<1x64xf32, #tpu.memory_space<vmem>>, vector<1x64xf32>
    %c0_5 = arith.constant 0 : index
    %c0_6 = arith.constant 0 : index
    %4 = vector.load %arg4[%c0_5, %c0_6] : memref<1x64xf32, #tpu.memory_space<vmem>>, vector<1x64xf32>
    %cst_7 = arith.constant dense<0.000000e+00> : vector<64xf32>
    %5 = vector.multi_reduction <add>, %2, %cst_7 [0] : vector<32x64xf32> to vector<64xf32>
    %6 = vector.shape_cast %5 : vector<64xf32> to vector<1x64xf32>
    %cst_8 = arith.constant 3.125000e-02 : f32
    %7 = vector.broadcast %cst_8 : f32 to vector<1x64xf32>
    %8 = arith.mulf %6, %7 : vector<1x64xf32>
    %9 = vector.broadcast %8 : vector<1x64xf32> to vector<32x64xf32>
    %10 = arith.subf %2, %9 : vector<32x64xf32>
    %11 = arith.mulf %10, %10 : vector<32x64xf32>
    %cst_9 = arith.constant dense<0.000000e+00> : vector<64xf32>
    %12 = vector.multi_reduction <add>, %11, %cst_9 [0] : vector<32x64xf32> to vector<64xf32>
    %13 = vector.shape_cast %12 : vector<64xf32> to vector<1x64xf32>
    %cst_10 = arith.constant 3.125000e-02 : f32
    %14 = vector.broadcast %cst_10 : f32 to vector<1x64xf32>
    %15 = arith.mulf %13, %14 : vector<1x64xf32>
    %cst_11 = arith.constant 9.99999974E-6 : f32
    %16 = vector.broadcast %cst_11 : f32 to vector<1x64xf32>
    %17 = arith.addf %15, %16 : vector<1x64xf32>
    %18 = math.rsqrt %17 : vector<1x64xf32>
    %19 = arith.mulf %18, %3 : vector<1x64xf32>
    %20 = vector.broadcast %19 : vector<1x64xf32> to vector<32x64xf32>
    %21 = arith.mulf %10, %20 : vector<32x64xf32>
    %22 = vector.broadcast %4 : vector<1x64xf32> to vector<32x64xf32>
    %23 = arith.addf %21, %22 : vector<32x64xf32>
    %cst_12 = arith.constant 0.000000e+00 : f32
    %24 = vector.broadcast %cst_12 : f32 to vector<32x64xf32>
    %25 = arith.maximumf %23, %24 : vector<32x64xf32>
    %26 = arith.truncf %25 : vector<32x64xf32> to vector<32x64xbf16>
    %c0_13 = arith.constant 0 : index
    %c0_14 = arith.constant 0 : index
    %27 = vector.load %arg5[%c0_13, %c0_14] : memref<32x64xbf16, #tpu.memory_space<vmem>>, vector<32x64xbf16>
    tpu.vector_store %arg5[%c0_13, %c0_14], %26 {strides = array<i32>} : memref<32x64xbf16, #tpu.memory_space<vmem>>, vector<32x64xbf16>,
    return
  }
  func.func @transform_0(%arg0: i32) -> (i32, i32) {
    %c0_i32 = arith.constant 0 : i32
    %c0_i32_0 = arith.constant 0 : i32
    %c0_i32_1 = arith.constant 0 : i32
    return %c0_i32, %c0_i32_0 : i32, i32
  }
  func.func @transform_1(%arg0: i32) -> (i32, i32) {
    %c0_i32 = arith.constant 0 : i32
    %c0_i32_0 = arith.constant 0 : i32
    %c0_i32_1 = arith.constant 0 : i32
    return %c0_i32, %c0_i32_0 : i32, i32
  }
  func.func @transform_2(%arg0: i32) -> (i32, i32) {
    %c0_i32 = arith.constant 0 : i32
    %c0_i32_0 = arith.constant 0 : i32
    %c0_i32_1 = arith.constant 0 : i32
    return %c0_i32, %c0_i32_0 : i32, i32
  }
  func.func @transform_3(%arg0: i32) -> (i32, i32) {
    %c0_i32 = arith.constant 0 : i32
    %c0_i32_0 = arith.constant 0 : i32
    %c0_i32_1 = arith.constant 0 : i32
    return %c0_i32, %c0_i32_0 : i32, i32
  }
  func.func @transform_4(%arg0: i32) -> (i32, i32) {
    %c0_i32 = arith.constant 0 : i32
    %c0_i32_0 = arith.constant 0 : i32
    %c0_i32_1 = arith.constant 0 : i32
    return %c0_i32, %c0_i32_0 : i32, i32
  }
}

module attributes {stable_mosaic.version = 11 : i64} {
  func.func @_conv_bn_relu_kernel(%arg0: i32, %arg1: memref<8x576xbf16, #tpu.memory_space<vmem>>, %arg2: memref<576x128xbf16, #tpu.memory_space<vmem>>, %arg3: memref<1x128xf32, #tpu.memory_space<vmem>>, %arg4: memref<1x128xf32, #tpu.memory_space<vmem>>, %arg5: memref<8x128xbf16, #tpu.memory_space<vmem>>) attributes {dimension_semantics = [#tpu.dimension_semantics<arbitrary>], iteration_bounds = array<i64: 1>, scalar_prefetch = 0 : i64, scratch_operands = 0 : i64, tpu.core_type = #tpu.core_type<tc>, window_params = [{pipeline_mode = #tpu.pipeline_mode<synchronous>, transform_indices = @transform_0, window_bounds = array<i64: 8, 576>}, {pipeline_mode = #tpu.pipeline_mode<synchronous>, transform_indices = @transform_1, window_bounds = array<i64: 576, 128>}, {pipeline_mode = #tpu.pipeline_mode<synchronous>, transform_indices = @transform_2, window_bounds = array<i64: 1, 128>}, {pipeline_mode = #tpu.pipeline_mode<synchronous>, transform_indices = @transform_3, window_bounds = array<i64: 1, 128>}, {pipeline_mode = #tpu.pipeline_mode<synchronous>, transform_indices = @transform_4, window_bounds = array<i64: 8, 128>}]} {
    %c0 = arith.constant 0 : index
    %c0_0 = arith.constant 0 : index
    %0 = vector.load %arg1[%c0, %c0_0] : memref<8x576xbf16, #tpu.memory_space<vmem>>, vector<8x576xbf16>
    %c0_1 = arith.constant 0 : index
    %c0_2 = arith.constant 0 : index
    %1 = vector.load %arg2[%c0_1, %c0_2] : memref<576x128xbf16, #tpu.memory_space<vmem>>, vector<576x128xbf16>
    %cst = arith.constant dense<0.000000e+00> : vector<8x128xf32>
    %2 = tpu.matmul %0, %1, %cst {dimension_numbers = #tpu.dot_dimension_numbers<[1], [0], [0], [1], [0, 0, 1, 1], [], []>} : vector<8x576xbf16>, vector<576x128xbf16>, vector<8x128xf32> -> vector<8x128xf32>
    %c0_3 = arith.constant 0 : index
    %c0_4 = arith.constant 0 : index
    %3 = vector.load %arg3[%c0_3, %c0_4] : memref<1x128xf32, #tpu.memory_space<vmem>>, vector<1x128xf32>
    %c0_5 = arith.constant 0 : index
    %c0_6 = arith.constant 0 : index
    %4 = vector.load %arg4[%c0_5, %c0_6] : memref<1x128xf32, #tpu.memory_space<vmem>>, vector<1x128xf32>
    %cst_7 = arith.constant dense<0.000000e+00> : vector<128xf32>
    %5 = vector.multi_reduction <add>, %2, %cst_7 [0] : vector<8x128xf32> to vector<128xf32>
    %6 = vector.shape_cast %5 : vector<128xf32> to vector<1x128xf32>
    %cst_8 = arith.constant 1.250000e-01 : f32
    %7 = vector.broadcast %cst_8 : f32 to vector<1x128xf32>
    %8 = arith.mulf %6, %7 : vector<1x128xf32>
    %9 = vector.broadcast %8 : vector<1x128xf32> to vector<8x128xf32>
    %10 = arith.subf %2, %9 : vector<8x128xf32>
    %11 = arith.mulf %10, %10 : vector<8x128xf32>
    %cst_9 = arith.constant dense<0.000000e+00> : vector<128xf32>
    %12 = vector.multi_reduction <add>, %11, %cst_9 [0] : vector<8x128xf32> to vector<128xf32>
    %13 = vector.shape_cast %12 : vector<128xf32> to vector<1x128xf32>
    %cst_10 = arith.constant 1.250000e-01 : f32
    %14 = vector.broadcast %cst_10 : f32 to vector<1x128xf32>
    %15 = arith.mulf %13, %14 : vector<1x128xf32>
    %cst_11 = arith.constant 9.99999974E-6 : f32
    %16 = vector.broadcast %cst_11 : f32 to vector<1x128xf32>
    %17 = arith.addf %15, %16 : vector<1x128xf32>
    %18 = math.rsqrt %17 : vector<1x128xf32>
    %19 = arith.mulf %18, %3 : vector<1x128xf32>
    %20 = vector.broadcast %19 : vector<1x128xf32> to vector<8x128xf32>
    %21 = arith.mulf %10, %20 : vector<8x128xf32>
    %22 = vector.broadcast %4 : vector<1x128xf32> to vector<8x128xf32>
    %23 = arith.addf %21, %22 : vector<8x128xf32>
    %cst_12 = arith.constant 0.000000e+00 : f32
    %24 = vector.broadcast %cst_12 : f32 to vector<8x128xf32>
    %25 = arith.maximumf %23, %24 : vector<8x128xf32>
    %26 = arith.truncf %25 : vector<8x128xf32> to vector<8x128xbf16>
    %c0_13 = arith.constant 0 : index
    %c0_14 = arith.constant 0 : index
    %27 = vector.load %arg5[%c0_13, %c0_14] : memref<8x128xbf16, #tpu.memory_space<vmem>>, vector<8x128xbf16>
    tpu.vector_store %arg5[%c0_13, %c0_14], %26 {strides = array<i32>} : memref<8x128xbf16, #tpu.memory_space<vmem>>, vector<8x128xbf16>,
    return
  }
  func.func @transform_0(%arg0: i32) -> (i32, i32) {
    %c0_i32 = arith.constant 0 : i32
    %c0_i32_0 = arith.constant 0 : i32
    %c0_i32_1 = arith.constant 0 : i32
    return %c0_i32, %c0_i32_0 : i32, i32
  }
  func.func @transform_1(%arg0: i32) -> (i32, i32) {
    %c0_i32 = arith.constant 0 : i32
    %c0_i32_0 = arith.constant 0 : i32
    %c0_i32_1 = arith.constant 0 : i32
    return %c0_i32, %c0_i32_0 : i32, i32
  }
  func.func @transform_2(%arg0: i32) -> (i32, i32) {
    %c0_i32 = arith.constant 0 : i32
    %c0_i32_0 = arith.constant 0 : i32
    %c0_i32_1 = arith.constant 0 : i32
    return %c0_i32, %c0_i32_0 : i32, i32
  }
  func.func @transform_3(%arg0: i32) -> (i32, i32) {
    %c0_i32 = arith.constant 0 : i32
    %c0_i32_0 = arith.constant 0 : i32
    %c0_i32_1 = arith.constant 0 : i32
    return %c0_i32, %c0_i32_0 : i32, i32
  }
  func.func @transform_4(%arg0: i32) -> (i32, i32) {
    %c0_i32 = arith.constant 0 : i32
    %c0_i32_0 = arith.constant 0 : i32
    %c0_i32_1 = arith.constant 0 : i32
    return %c0_i32, %c0_i32_0 : i32, i32
  }
}

module attributes {stable_mosaic.version = 11 : i64} {
  func.func @_conv_bn_relu_kernel(%arg0: i32, %arg1: memref<8x1152xbf16, #tpu.memory_space<vmem>>, %arg2: memref<1152x128xbf16, #tpu.memory_space<vmem>>, %arg3: memref<1x128xf32, #tpu.memory_space<vmem>>, %arg4: memref<1x128xf32, #tpu.memory_space<vmem>>, %arg5: memref<1x128xf32, #tpu.memory_space<vmem>>, %arg6: memref<1x128xf32, #tpu.memory_space<vmem>>, %arg7: memref<8x128xbf16, #tpu.memory_space<vmem>>) attributes {dimension_semantics = [#tpu.dimension_semantics<arbitrary>], iteration_bounds = array<i64: 1>, scalar_prefetch = 0 : i64, scratch_operands = 0 : i64, tpu.core_type = #tpu.core_type<tc>, window_params = [{pipeline_mode = #tpu.pipeline_mode<synchronous>, transform_indices = @transform_0, window_bounds = array<i64: 8, 1152>}, {pipeline_mode = #tpu.pipeline_mode<synchronous>, transform_indices = @transform_1, window_bounds = array<i64: 1152, 128>}, {pipeline_mode = #tpu.pipeline_mode<synchronous>, transform_indices = @transform_2, window_bounds = array<i64: 1, 128>}, {pipeline_mode = #tpu.pipeline_mode<synchronous>, transform_indices = @transform_3, window_bounds = array<i64: 1, 128>}, {pipeline_mode = #tpu.pipeline_mode<synchronous>, transform_indices = @transform_4, window_bounds = array<i64: 1, 128>}, {pipeline_mode = #tpu.pipeline_mode<synchronous>, transform_indices = @transform_5, window_bounds = array<i64: 1, 128>}, {pipeline_mode = #tpu.pipeline_mode<synchronous>, transform_indices = @transform_6, window_bounds = array<i64: 8, 128>}]} {
    %c0 = arith.constant 0 : index
    %c0_0 = arith.constant 0 : index
    %0 = vector.load %arg1[%c0, %c0_0] : memref<8x1152xbf16, #tpu.memory_space<vmem>>, vector<8x1152xbf16>
    %c0_1 = arith.constant 0 : index
    %c0_2 = arith.constant 0 : index
    %1 = vector.load %arg2[%c0_1, %c0_2] : memref<1152x128xbf16, #tpu.memory_space<vmem>>, vector<1152x128xbf16>
    %cst = arith.constant dense<0.000000e+00> : vector<8x128xf32>
    %2 = tpu.matmul %0, %1, %cst {dimension_numbers = #tpu.dot_dimension_numbers<[1], [0], [0], [1], [0, 0, 1, 1], [], []>} : vector<8x1152xbf16>, vector<1152x128xbf16>, vector<8x128xf32> -> vector<8x128xf32>
    %c0_3 = arith.constant 0 : index
    %c0_4 = arith.constant 0 : index
    %3 = vector.load %arg3[%c0_3, %c0_4] : memref<1x128xf32, #tpu.memory_space<vmem>>, vector<1x128xf32>
    %c0_5 = arith.constant 0 : index
    %c0_6 = arith.constant 0 : index
    %4 = vector.load %arg4[%c0_5, %c0_6] : memref<1x128xf32, #tpu.memory_space<vmem>>, vector<1x128xf32>
    %cst_7 = arith.constant dense<0.000000e+00> : vector<128xf32>
    %5 = vector.multi_reduction <add>, %2, %cst_7 [0] : vector<8x128xf32> to vector<128xf32>
    %6 = vector.shape_cast %5 : vector<128xf32> to vector<1x128xf32>
    %cst_8 = arith.constant 1.250000e-01 : f32
    %7 = vector.broadcast %cst_8 : f32 to vector<1x128xf32>
    %8 = arith.mulf %6, %7 : vector<1x128xf32>
    %9 = vector.broadcast %8 : vector<1x128xf32> to vector<8x128xf32>
    %10 = arith.subf %2, %9 : vector<8x128xf32>
    %11 = arith.mulf %10, %10 : vector<8x128xf32>
    %cst_9 = arith.constant dense<0.000000e+00> : vector<128xf32>
    %12 = vector.multi_reduction <add>, %11, %cst_9 [0] : vector<8x128xf32> to vector<128xf32>
    %13 = vector.shape_cast %12 : vector<128xf32> to vector<1x128xf32>
    %cst_10 = arith.constant 1.250000e-01 : f32
    %14 = vector.broadcast %cst_10 : f32 to vector<1x128xf32>
    %15 = arith.mulf %13, %14 : vector<1x128xf32>
    %cst_11 = arith.constant 9.99999974E-6 : f32
    %16 = vector.broadcast %cst_11 : f32 to vector<1x128xf32>
    %17 = arith.addf %15, %16 : vector<1x128xf32>
    %18 = math.rsqrt %17 : vector<1x128xf32>
    %19 = arith.mulf %18, %3 : vector<1x128xf32>
    %20 = vector.broadcast %19 : vector<1x128xf32> to vector<8x128xf32>
    %21 = arith.mulf %10, %20 : vector<8x128xf32>
    %22 = vector.broadcast %4 : vector<1x128xf32> to vector<8x128xf32>
    %23 = arith.addf %21, %22 : vector<8x128xf32>
    %cst_12 = arith.constant 0.000000e+00 : f32
    %24 = vector.broadcast %cst_12 : f32 to vector<8x128xf32>
    %25 = arith.maximumf %23, %24 : vector<8x128xf32>
    %c0_13 = arith.constant 0 : index
    %c0_14 = arith.constant 0 : index
    %26 = vector.load %arg5[%c0_13, %c0_14] : memref<1x128xf32, #tpu.memory_space<vmem>>, vector<1x128xf32>
    %c0_15 = arith.constant 0 : index
    %c0_16 = arith.constant 0 : index
    %27 = vector.load %arg6[%c0_15, %c0_16] : memref<1x128xf32, #tpu.memory_space<vmem>>, vector<1x128xf32>
    %cst_17 = arith.constant dense<0.000000e+00> : vector<128xf32>
    %28 = vector.multi_reduction <add>, %25, %cst_17 [0] : vector<8x128xf32> to vector<128xf32>
    %29 = vector.shape_cast %28 : vector<128xf32> to vector<1x128xf32>
    %cst_18 = arith.constant 1.250000e-01 : f32
    %30 = vector.broadcast %cst_18 : f32 to vector<1x128xf32>
    %31 = arith.mulf %29, %30 : vector<1x128xf32>
    %32 = vector.broadcast %31 : vector<1x128xf32> to vector<8x128xf32>
    %33 = arith.subf %25, %32 : vector<8x128xf32>
    %34 = arith.mulf %33, %33 : vector<8x128xf32>
    %cst_19 = arith.constant dense<0.000000e+00> : vector<128xf32>
    %35 = vector.multi_reduction <add>, %34, %cst_19 [0] : vector<8x128xf32> to vector<128xf32>
    %36 = vector.shape_cast %35 : vector<128xf32> to vector<1x128xf32>
    %cst_20 = arith.constant 1.250000e-01 : f32
    %37 = vector.broadcast %cst_20 : f32 to vector<1x128xf32>
    %38 = arith.mulf %36, %37 : vector<1x128xf32>
    %cst_21 = arith.constant 9.99999974E-6 : f32
    %39 = vector.broadcast %cst_21 : f32 to vector<1x128xf32>
    %40 = arith.addf %38, %39 : vector<1x128xf32>
    %41 = math.rsqrt %40 : vector<1x128xf32>
    %42 = arith.mulf %41, %26 : vector<1x128xf32>
    %43 = vector.broadcast %42 : vector<1x128xf32> to vector<8x128xf32>
    %44 = arith.mulf %33, %43 : vector<8x128xf32>
    %45 = vector.broadcast %27 : vector<1x128xf32> to vector<8x128xf32>
    %46 = arith.addf %44, %45 : vector<8x128xf32>
    %47 = arith.truncf %46 : vector<8x128xf32> to vector<8x128xbf16>
    %c0_22 = arith.constant 0 : index
    %c0_23 = arith.constant 0 : index
    %48 = vector.load %arg7[%c0_22, %c0_23] : memref<8x128xbf16, #tpu.memory_space<vmem>>, vector<8x128xbf16>
    tpu.vector_store %arg7[%c0_22, %c0_23], %47 {strides = array<i32>} : memref<8x128xbf16, #tpu.memory_space<vmem>>, vector<8x128xbf16>,
    return
  }
  func.func @transform_0(%arg0: i32) -> (i32, i32) {
    %c0_i32 = arith.constant 0 : i32
    %c0_i32_0 = arith.constant 0 : i32
    %c0_i32_1 = arith.constant 0 : i32
    return %c0_i32, %c0_i32_0 : i32, i32
  }
  func.func @transform_1(%arg0: i32) -> (i32, i32) {
    %c0_i32 = arith.constant 0 : i32
    %c0_i32_0 = arith.constant 0 : i32
    %c0_i32_1 = arith.constant 0 : i32
    return %c0_i32, %c0_i32_0 : i32, i32
  }
  func.func @transform_2(%arg0: i32) -> (i32, i32) {
    %c0_i32 = arith.constant 0 : i32
    %c0_i32_0 = arith.constant 0 : i32
    %c0_i32_1 = arith.constant 0 : i32
    return %c0_i32, %c0_i32_0 : i32, i32
  }
  func.func @transform_3(%arg0: i32) -> (i32, i32) {
    %c0_i32 = arith.constant 0 : i32
    %c0_i32_0 = arith.constant 0 : i32
    %c0_i32_1 = arith.constant 0 : i32
    return %c0_i32, %c0_i32_0 : i32, i32
  }
  func.func @transform_4(%arg0: i32) -> (i32, i32) {
    %c0_i32 = arith.constant 0 : i32
    %c0_i32_0 = arith.constant 0 : i32
    %c0_i32_1 = arith.constant 0 : i32
    return %c0_i32, %c0_i32_0 : i32, i32
  }
  func.func @transform_5(%arg0: i32) -> (i32, i32) {
    %c0_i32 = arith.constant 0 : i32
    %c0_i32_0 = arith.constant 0 : i32
    %c0_i32_1 = arith.constant 0 : i32
    return %c0_i32, %c0_i32_0 : i32, i32
  }
  func.func @transform_6(%arg0: i32) -> (i32, i32) {
    %c0_i32 = arith.constant 0 : i32
    %c0_i32_0 = arith.constant 0 : i32
    %c0_i32_1 = arith.constant 0 : i32
    return %c0_i32, %c0_i32_0 : i32, i32
  }
}

module attributes {stable_mosaic.version = 11 : i64} {
  func.func @_up_layer_kernel(%arg0: i32, %arg1: memref<8x1152xbf16, #tpu.memory_space<vmem>>, %arg2: memref<1152x256xbf16, #tpu.memory_space<vmem>>, %arg3: memref<1x256xf32, #tpu.memory_space<vmem>>, %arg4: memref<1x256xf32, #tpu.memory_space<vmem>>, %arg5: memref<1x256xf32, #tpu.memory_space<vmem>>, %arg6: memref<8x256xbf16, #tpu.memory_space<vmem>>) attributes {dimension_semantics = [#tpu.dimension_semantics<arbitrary>], iteration_bounds = array<i64: 1>, scalar_prefetch = 0 : i64, scratch_operands = 0 : i64, tpu.core_type = #tpu.core_type<tc>, window_params = [{pipeline_mode = #tpu.pipeline_mode<synchronous>, transform_indices = @transform_0, window_bounds = array<i64: 8, 1152>}, {pipeline_mode = #tpu.pipeline_mode<synchronous>, transform_indices = @transform_1, window_bounds = array<i64: 1152, 256>}, {pipeline_mode = #tpu.pipeline_mode<synchronous>, transform_indices = @transform_2, window_bounds = array<i64: 1, 256>}, {pipeline_mode = #tpu.pipeline_mode<synchronous>, transform_indices = @transform_3, window_bounds = array<i64: 1, 256>}, {pipeline_mode = #tpu.pipeline_mode<synchronous>, transform_indices = @transform_4, window_bounds = array<i64: 1, 256>}, {pipeline_mode = #tpu.pipeline_mode<synchronous>, transform_indices = @transform_5, window_bounds = array<i64: 8, 256>}]} {
    %c0 = arith.constant 0 : index
    %c0_0 = arith.constant 0 : index
    %0 = vector.load %arg1[%c0, %c0_0] : memref<8x1152xbf16, #tpu.memory_space<vmem>>, vector<8x1152xbf16>
    %c0_1 = arith.constant 0 : index
    %c0_2 = arith.constant 0 : index
    %1 = vector.load %arg2[%c0_1, %c0_2] : memref<1152x256xbf16, #tpu.memory_space<vmem>>, vector<1152x256xbf16>
    %cst = arith.constant dense<0.000000e+00> : vector<8x256xf32>
    %2 = tpu.matmul %0, %1, %cst {dimension_numbers = #tpu.dot_dimension_numbers<[1], [0], [0], [1], [0, 0, 1, 1], [], []>} : vector<8x1152xbf16>, vector<1152x256xbf16>, vector<8x256xf32> -> vector<8x256xf32>
    %c0_3 = arith.constant 0 : index
    %c0_4 = arith.constant 0 : index
    %3 = vector.load %arg3[%c0_3, %c0_4] : memref<1x256xf32, #tpu.memory_space<vmem>>, vector<1x256xf32>
    %4 = vector.broadcast %3 : vector<1x256xf32> to vector<8x256xf32>
    %5 = arith.addf %2, %4 : vector<8x256xf32>
    %cst_5 = arith.constant 0.000000e+00 : f32
    %6 = vector.broadcast %cst_5 : f32 to vector<8x256xf32>
    %7 = arith.maximumf %5, %6 : vector<8x256xf32>
    %cst_6 = arith.constant dense<0.000000e+00> : vector<256xf32>
    %8 = vector.multi_reduction <add>, %7, %cst_6 [0] : vector<8x256xf32> to vector<256xf32>
    %9 = vector.shape_cast %8 : vector<256xf32> to vector<1x256xf32>
    %10 = vector.extract_strided_slice %9 {offsets = [0, 0], sizes = [1, 64], strides = [1, 1]} : vector<1x256xf32> to vector<1x64xf32>
    %11 = vector.extract_strided_slice %9 {offsets = [0, 64], sizes = [1, 64], strides = [1, 1]} : vector<1x256xf32> to vector<1x64xf32>
    %12 = arith.addf %10, %11 : vector<1x64xf32>
    %13 = vector.extract_strided_slice %9 {offsets = [0, 128], sizes = [1, 64], strides = [1, 1]} : vector<1x256xf32> to vector<1x64xf32>
    %14 = arith.addf %12, %13 : vector<1x64xf32>
    %15 = vector.extract_strided_slice %9 {offsets = [0, 192], sizes = [1, 64], strides = [1, 1]} : vector<1x256xf32> to vector<1x64xf32>
    %16 = arith.addf %14, %15 : vector<1x64xf32>
    %cst_7 = arith.constant 3.125000e-02 : f32
    %17 = vector.broadcast %cst_7 : f32 to vector<1x64xf32>
    %18 = arith.mulf %16, %17 : vector<1x64xf32>
    %19 = tpu.concatenate %18, %18, %18, %18 in 1 : vector<1x64xf32>, vector<1x64xf32>, vector<1x64xf32>, vector<1x64xf32> -> vector<1x256xf32>
    %20 = vector.broadcast %19 : vector<1x256xf32> to vector<8x256xf32>
    %21 = arith.subf %7, %20 : vector<8x256xf32>
    %22 = arith.mulf %21, %21 : vector<8x256xf32>
    %cst_8 = arith.constant dense<0.000000e+00> : vector<256xf32>
    %23 = vector.multi_reduction <add>, %22, %cst_8 [0] : vector<8x256xf32> to vector<256xf32>
    %24 = vector.shape_cast %23 : vector<256xf32> to vector<1x256xf32>
    %25 = vector.extract_strided_slice %24 {offsets = [0, 0], sizes = [1, 64], strides = [1, 1]} : vector<1x256xf32> to vector<1x64xf32>
    %26 = vector.extract_strided_slice %24 {offsets = [0, 64], sizes = [1, 64], strides = [1, 1]} : vector<1x256xf32> to vector<1x64xf32>
    %27 = arith.addf %25, %26 : vector<1x64xf32>
    %28 = vector.extract_strided_slice %24 {offsets = [0, 128], sizes = [1, 64], strides = [1, 1]} : vector<1x256xf32> to vector<1x64xf32>
    %29 = arith.addf %27, %28 : vector<1x64xf32>
    %30 = vector.extract_strided_slice %24 {offsets = [0, 192], sizes = [1, 64], strides = [1, 1]} : vector<1x256xf32> to vector<1x64xf32>
    %31 = arith.addf %29, %30 : vector<1x64xf32>
    %cst_9 = arith.constant 3.125000e-02 : f32
    %32 = vector.broadcast %cst_9 : f32 to vector<1x64xf32>
    %33 = arith.mulf %31, %32 : vector<1x64xf32>
    %cst_10 = arith.constant 9.99999974E-6 : f32
    %34 = vector.broadcast %cst_10 : f32 to vector<1x64xf32>
    %35 = arith.addf %33, %34 : vector<1x64xf32>
    %36 = math.rsqrt %35 : vector<1x64xf32>
    %37 = tpu.concatenate %36, %36, %36, %36 in 1 : vector<1x64xf32>, vector<1x64xf32>, vector<1x64xf32>, vector<1x64xf32> -> vector<1x256xf32>
    %c0_11 = arith.constant 0 : index
    %c0_12 = arith.constant 0 : index
    %38 = vector.load %arg4[%c0_11, %c0_12] : memref<1x256xf32, #tpu.memory_space<vmem>>, vector<1x256xf32>
    %39 = arith.mulf %37, %38 : vector<1x256xf32>
    %40 = vector.broadcast %39 : vector<1x256xf32> to vector<8x256xf32>
    %41 = arith.mulf %21, %40 : vector<8x256xf32>
    %c0_13 = arith.constant 0 : index
    %c0_14 = arith.constant 0 : index
    %42 = vector.load %arg5[%c0_13, %c0_14] : memref<1x256xf32, #tpu.memory_space<vmem>>, vector<1x256xf32>
    %43 = vector.broadcast %42 : vector<1x256xf32> to vector<8x256xf32>
    %44 = arith.addf %41, %43 : vector<8x256xf32>
    %45 = arith.truncf %44 : vector<8x256xf32> to vector<8x256xbf16>
    %c0_15 = arith.constant 0 : index
    %c0_16 = arith.constant 0 : index
    %46 = vector.load %arg6[%c0_15, %c0_16] : memref<8x256xbf16, #tpu.memory_space<vmem>>, vector<8x256xbf16>
    tpu.vector_store %arg6[%c0_15, %c0_16], %45 {strides = array<i32>} : memref<8x256xbf16, #tpu.memory_space<vmem>>, vector<8x256xbf16>,
    return
  }
  func.func @transform_0(%arg0: i32) -> (i32, i32) {
    %c0_i32 = arith.constant 0 : i32
    %c0_i32_0 = arith.constant 0 : i32
    %c0_i32_1 = arith.constant 0 : i32
    return %c0_i32, %c0_i32_0 : i32, i32
  }
  func.func @transform_1(%arg0: i32) -> (i32, i32) {
    %c0_i32 = arith.constant 0 : i32
    %c0_i32_0 = arith.constant 0 : i32
    %c0_i32_1 = arith.constant 0 : i32
    return %c0_i32, %c0_i32_0 : i32, i32
  }
  func.func @transform_2(%arg0: i32) -> (i32, i32) {
    %c0_i32 = arith.constant 0 : i32
    %c0_i32_0 = arith.constant 0 : i32
    %c0_i32_1 = arith.constant 0 : i32
    return %c0_i32, %c0_i32_0 : i32, i32
  }
  func.func @transform_3(%arg0: i32) -> (i32, i32) {
    %c0_i32 = arith.constant 0 : i32
    %c0_i32_0 = arith.constant 0 : i32
    %c0_i32_1 = arith.constant 0 : i32
    return %c0_i32, %c0_i32_0 : i32, i32
  }
  func.func @transform_4(%arg0: i32) -> (i32, i32) {
    %c0_i32 = arith.constant 0 : i32
    %c0_i32_0 = arith.constant 0 : i32
    %c0_i32_1 = arith.constant 0 : i32
    return %c0_i32, %c0_i32_0 : i32, i32
  }
  func.func @transform_5(%arg0: i32) -> (i32, i32) {
    %c0_i32 = arith.constant 0 : i32
    %c0_i32_0 = arith.constant 0 : i32
    %c0_i32_1 = arith.constant 0 : i32
    return %c0_i32, %c0_i32_0 : i32, i32
  }
}

module attributes {stable_mosaic.version = 11 : i64} {
  func.func @_up_layer_kernel(%arg0: i32, %arg1: memref<32x576xbf16, #tpu.memory_space<vmem>>, %arg2: memref<576x128xbf16, #tpu.memory_space<vmem>>, %arg3: memref<1x128xf32, #tpu.memory_space<vmem>>, %arg4: memref<1x128xf32, #tpu.memory_space<vmem>>, %arg5: memref<1x128xf32, #tpu.memory_space<vmem>>, %arg6: memref<32x128xbf16, #tpu.memory_space<vmem>>) attributes {dimension_semantics = [#tpu.dimension_semantics<arbitrary>], iteration_bounds = array<i64: 1>, scalar_prefetch = 0 : i64, scratch_operands = 0 : i64, tpu.core_type = #tpu.core_type<tc>, window_params = [{pipeline_mode = #tpu.pipeline_mode<synchronous>, transform_indices = @transform_0, window_bounds = array<i64: 32, 576>}, {pipeline_mode = #tpu.pipeline_mode<synchronous>, transform_indices = @transform_1, window_bounds = array<i64: 576, 128>}, {pipeline_mode = #tpu.pipeline_mode<synchronous>, transform_indices = @transform_2, window_bounds = array<i64: 1, 128>}, {pipeline_mode = #tpu.pipeline_mode<synchronous>, transform_indices = @transform_3, window_bounds = array<i64: 1, 128>}, {pipeline_mode = #tpu.pipeline_mode<synchronous>, transform_indices = @transform_4, window_bounds = array<i64: 1, 128>}, {pipeline_mode = #tpu.pipeline_mode<synchronous>, transform_indices = @transform_5, window_bounds = array<i64: 32, 128>}]} {
    %c0 = arith.constant 0 : index
    %c0_0 = arith.constant 0 : index
    %0 = vector.load %arg1[%c0, %c0_0] : memref<32x576xbf16, #tpu.memory_space<vmem>>, vector<32x576xbf16>
    %c0_1 = arith.constant 0 : index
    %c0_2 = arith.constant 0 : index
    %1 = vector.load %arg2[%c0_1, %c0_2] : memref<576x128xbf16, #tpu.memory_space<vmem>>, vector<576x128xbf16>
    %cst = arith.constant dense<0.000000e+00> : vector<32x128xf32>
    %2 = tpu.matmul %0, %1, %cst {dimension_numbers = #tpu.dot_dimension_numbers<[1], [0], [0], [1], [0, 0, 1, 1], [], []>} : vector<32x576xbf16>, vector<576x128xbf16>, vector<32x128xf32> -> vector<32x128xf32>
    %c0_3 = arith.constant 0 : index
    %c0_4 = arith.constant 0 : index
    %3 = vector.load %arg3[%c0_3, %c0_4] : memref<1x128xf32, #tpu.memory_space<vmem>>, vector<1x128xf32>
    %4 = vector.broadcast %3 : vector<1x128xf32> to vector<32x128xf32>
    %5 = arith.addf %2, %4 : vector<32x128xf32>
    %cst_5 = arith.constant 0.000000e+00 : f32
    %6 = vector.broadcast %cst_5 : f32 to vector<32x128xf32>
    %7 = arith.maximumf %5, %6 : vector<32x128xf32>
    %cst_6 = arith.constant dense<0.000000e+00> : vector<128xf32>
    %8 = vector.multi_reduction <add>, %7, %cst_6 [0] : vector<32x128xf32> to vector<128xf32>
    %9 = vector.shape_cast %8 : vector<128xf32> to vector<1x128xf32>
    %10 = vector.extract_strided_slice %9 {offsets = [0, 0], sizes = [1, 32], strides = [1, 1]} : vector<1x128xf32> to vector<1x32xf32>
    %11 = vector.extract_strided_slice %9 {offsets = [0, 32], sizes = [1, 32], strides = [1, 1]} : vector<1x128xf32> to vector<1x32xf32>
    %12 = arith.addf %10, %11 : vector<1x32xf32>
    %13 = vector.extract_strided_slice %9 {offsets = [0, 64], sizes = [1, 32], strides = [1, 1]} : vector<1x128xf32> to vector<1x32xf32>
    %14 = arith.addf %12, %13 : vector<1x32xf32>
    %15 = vector.extract_strided_slice %9 {offsets = [0, 96], sizes = [1, 32], strides = [1, 1]} : vector<1x128xf32> to vector<1x32xf32>
    %16 = arith.addf %14, %15 : vector<1x32xf32>
    %cst_7 = arith.constant 7.812500e-03 : f32
    %17 = vector.broadcast %cst_7 : f32 to vector<1x32xf32>
    %18 = arith.mulf %16, %17 : vector<1x32xf32>
    %19 = tpu.concatenate %18, %18, %18, %18 in 1 : vector<1x32xf32>, vector<1x32xf32>, vector<1x32xf32>, vector<1x32xf32> -> vector<1x128xf32>
    %20 = vector.broadcast %19 : vector<1x128xf32> to vector<32x128xf32>
    %21 = arith.subf %7, %20 : vector<32x128xf32>
    %22 = arith.mulf %21, %21 : vector<32x128xf32>
    %cst_8 = arith.constant dense<0.000000e+00> : vector<128xf32>
    %23 = vector.multi_reduction <add>, %22, %cst_8 [0] : vector<32x128xf32> to vector<128xf32>
    %24 = vector.shape_cast %23 : vector<128xf32> to vector<1x128xf32>
    %25 = vector.extract_strided_slice %24 {offsets = [0, 0], sizes = [1, 32], strides = [1, 1]} : vector<1x128xf32> to vector<1x32xf32>
    %26 = vector.extract_strided_slice %24 {offsets = [0, 32], sizes = [1, 32], strides = [1, 1]} : vector<1x128xf32> to vector<1x32xf32>
    %27 = arith.addf %25, %26 : vector<1x32xf32>
    %28 = vector.extract_strided_slice %24 {offsets = [0, 64], sizes = [1, 32], strides = [1, 1]} : vector<1x128xf32> to vector<1x32xf32>
    %29 = arith.addf %27, %28 : vector<1x32xf32>
    %30 = vector.extract_strided_slice %24 {offsets = [0, 96], sizes = [1, 32], strides = [1, 1]} : vector<1x128xf32> to vector<1x32xf32>
    %31 = arith.addf %29, %30 : vector<1x32xf32>
    %cst_9 = arith.constant 7.812500e-03 : f32
    %32 = vector.broadcast %cst_9 : f32 to vector<1x32xf32>
    %33 = arith.mulf %31, %32 : vector<1x32xf32>
    %cst_10 = arith.constant 9.99999974E-6 : f32
    %34 = vector.broadcast %cst_10 : f32 to vector<1x32xf32>
    %35 = arith.addf %33, %34 : vector<1x32xf32>
    %36 = math.rsqrt %35 : vector<1x32xf32>
    %37 = tpu.concatenate %36, %36, %36, %36 in 1 : vector<1x32xf32>, vector<1x32xf32>, vector<1x32xf32>, vector<1x32xf32> -> vector<1x128xf32>
    %c0_11 = arith.constant 0 : index
    %c0_12 = arith.constant 0 : index
    %38 = vector.load %arg4[%c0_11, %c0_12] : memref<1x128xf32, #tpu.memory_space<vmem>>, vector<1x128xf32>
    %39 = arith.mulf %37, %38 : vector<1x128xf32>
    %40 = vector.broadcast %39 : vector<1x128xf32> to vector<32x128xf32>
    %41 = arith.mulf %21, %40 : vector<32x128xf32>
    %c0_13 = arith.constant 0 : index
    %c0_14 = arith.constant 0 : index
    %42 = vector.load %arg5[%c0_13, %c0_14] : memref<1x128xf32, #tpu.memory_space<vmem>>, vector<1x128xf32>
    %43 = vector.broadcast %42 : vector<1x128xf32> to vector<32x128xf32>
    %44 = arith.addf %41, %43 : vector<32x128xf32>
    %45 = arith.truncf %44 : vector<32x128xf32> to vector<32x128xbf16>
    %c0_15 = arith.constant 0 : index
    %c0_16 = arith.constant 0 : index
    %46 = vector.load %arg6[%c0_15, %c0_16] : memref<32x128xbf16, #tpu.memory_space<vmem>>, vector<32x128xbf16>
    tpu.vector_store %arg6[%c0_15, %c0_16], %45 {strides = array<i32>} : memref<32x128xbf16, #tpu.memory_space<vmem>>, vector<32x128xbf16>,
    return
  }
  func.func @transform_0(%arg0: i32) -> (i32, i32) {
    %c0_i32 = arith.constant 0 : i32
    %c0_i32_0 = arith.constant 0 : i32
    %c0_i32_1 = arith.constant 0 : i32
    return %c0_i32, %c0_i32_0 : i32, i32
  }
  func.func @transform_1(%arg0: i32) -> (i32, i32) {
    %c0_i32 = arith.constant 0 : i32
    %c0_i32_0 = arith.constant 0 : i32
    %c0_i32_1 = arith.constant 0 : i32
    return %c0_i32, %c0_i32_0 : i32, i32
  }
  func.func @transform_2(%arg0: i32) -> (i32, i32) {
    %c0_i32 = arith.constant 0 : i32
    %c0_i32_0 = arith.constant 0 : i32
    %c0_i32_1 = arith.constant 0 : i32
    return %c0_i32, %c0_i32_0 : i32, i32
  }
  func.func @transform_3(%arg0: i32) -> (i32, i32) {
    %c0_i32 = arith.constant 0 : i32
    %c0_i32_0 = arith.constant 0 : i32
    %c0_i32_1 = arith.constant 0 : i32
    return %c0_i32, %c0_i32_0 : i32, i32
  }
  func.func @transform_4(%arg0: i32) -> (i32, i32) {
    %c0_i32 = arith.constant 0 : i32
    %c0_i32_0 = arith.constant 0 : i32
    %c0_i32_1 = arith.constant 0 : i32
    return %c0_i32, %c0_i32_0 : i32, i32
  }
  func.func @transform_5(%arg0: i32) -> (i32, i32) {
    %c0_i32 = arith.constant 0 : i32
    %c0_i32_0 = arith.constant 0 : i32
    %c0_i32_1 = arith.constant 0 : i32
    return %c0_i32, %c0_i32_0 : i32, i32
  }
}

module attributes {stable_mosaic.version = 11 : i64} {
  func.func @_skip_chain_kernel(%arg0: i32, %arg1: memref<512x8xbf16, #tpu.memory_space<vmem>>, %arg2: memref<8x16xbf16, #tpu.memory_space<vmem>>, %arg3: memref<1x16xf32, #tpu.memory_space<vmem>>, %arg4: memref<1x16xf32, #tpu.memory_space<vmem>>, %arg5: memref<16x32xbf16, #tpu.memory_space<vmem>>, %arg6: memref<1x32xf32, #tpu.memory_space<vmem>>, %arg7: memref<1x32xf32, #tpu.memory_space<vmem>>, %arg8: memref<512x32xbf16, #tpu.memory_space<vmem>>) attributes {dimension_semantics = [#tpu.dimension_semantics<arbitrary>], iteration_bounds = array<i64: 1>, scalar_prefetch = 0 : i64, scratch_operands = 0 : i64, tpu.core_type = #tpu.core_type<tc>, window_params = [{pipeline_mode = #tpu.pipeline_mode<synchronous>, transform_indices = @transform_0, window_bounds = array<i64: 512, 8>}, {pipeline_mode = #tpu.pipeline_mode<synchronous>, transform_indices = @transform_1, window_bounds = array<i64: 8, 16>}, {pipeline_mode = #tpu.pipeline_mode<synchronous>, transform_indices = @transform_2, window_bounds = array<i64: 1, 16>}, {pipeline_mode = #tpu.pipeline_mode<synchronous>, transform_indices = @transform_3, window_bounds = array<i64: 1, 16>}, {pipeline_mode = #tpu.pipeline_mode<synchronous>, transform_indices = @transform_4, window_bounds = array<i64: 16, 32>}, {pipeline_mode = #tpu.pipeline_mode<synchronous>, transform_indices = @transform_5, window_bounds = array<i64: 1, 32>}, {pipeline_mode = #tpu.pipeline_mode<synchronous>, transform_indices = @transform_6, window_bounds = array<i64: 1, 32>}, {pipeline_mode = #tpu.pipeline_mode<synchronous>, transform_indices = @transform_7, window_bounds = array<i64: 512, 32>}]} {
    %c0 = arith.constant 0 : index
    %c0_0 = arith.constant 0 : index
    %0 = vector.load %arg1[%c0, %c0_0] : memref<512x8xbf16, #tpu.memory_space<vmem>>, vector<512x8xbf16>
    %c0_1 = arith.constant 0 : index
    %c0_2 = arith.constant 0 : index
    %1 = vector.load %arg2[%c0_1, %c0_2] : memref<8x16xbf16, #tpu.memory_space<vmem>>, vector<8x16xbf16>
    %cst = arith.constant dense<0.000000e+00> : vector<512x16xf32>
    %2 = tpu.matmul %0, %1, %cst {dimension_numbers = #tpu.dot_dimension_numbers<[1], [0], [0], [1], [0, 0, 1, 1], [], []>} : vector<512x8xbf16>, vector<8x16xbf16>, vector<512x16xf32> -> vector<512x16xf32>
    %c0_3 = arith.constant 0 : index
    %c0_4 = arith.constant 0 : index
    %3 = vector.load %arg3[%c0_3, %c0_4] : memref<1x16xf32, #tpu.memory_space<vmem>>, vector<1x16xf32>
    %c0_5 = arith.constant 0 : index
    %c0_6 = arith.constant 0 : index
    %4 = vector.load %arg4[%c0_5, %c0_6] : memref<1x16xf32, #tpu.memory_space<vmem>>, vector<1x16xf32>
    %cst_7 = arith.constant dense<0.000000e+00> : vector<16xf32>
    %5 = vector.multi_reduction <add>, %2, %cst_7 [0] : vector<512x16xf32> to vector<16xf32>
    %6 = vector.shape_cast %5 : vector<16xf32> to vector<1x16xf32>
    %cst_8 = arith.constant 0.001953125 : f32
    %7 = vector.broadcast %cst_8 : f32 to vector<1x16xf32>
    %8 = arith.mulf %6, %7 : vector<1x16xf32>
    %9 = vector.broadcast %8 : vector<1x16xf32> to vector<512x16xf32>
    %10 = arith.subf %2, %9 : vector<512x16xf32>
    %11 = arith.mulf %10, %10 : vector<512x16xf32>
    %cst_9 = arith.constant dense<0.000000e+00> : vector<16xf32>
    %12 = vector.multi_reduction <add>, %11, %cst_9 [0] : vector<512x16xf32> to vector<16xf32>
    %13 = vector.shape_cast %12 : vector<16xf32> to vector<1x16xf32>
    %cst_10 = arith.constant 0.001953125 : f32
    %14 = vector.broadcast %cst_10 : f32 to vector<1x16xf32>
    %15 = arith.mulf %13, %14 : vector<1x16xf32>
    %cst_11 = arith.constant 9.99999974E-6 : f32
    %16 = vector.broadcast %cst_11 : f32 to vector<1x16xf32>
    %17 = arith.addf %15, %16 : vector<1x16xf32>
    %18 = math.rsqrt %17 : vector<1x16xf32>
    %19 = arith.mulf %18, %3 : vector<1x16xf32>
    %20 = vector.broadcast %19 : vector<1x16xf32> to vector<512x16xf32>
    %21 = arith.mulf %10, %20 : vector<512x16xf32>
    %22 = vector.broadcast %4 : vector<1x16xf32> to vector<512x16xf32>
    %23 = arith.addf %21, %22 : vector<512x16xf32>
    %cst_12 = arith.constant 0.000000e+00 : f32
    %24 = vector.broadcast %cst_12 : f32 to vector<512x16xf32>
    %25 = arith.maximumf %23, %24 : vector<512x16xf32>
    %26 = arith.truncf %25 : vector<512x16xf32> to vector<512x16xbf16>
    %c0_13 = arith.constant 0 : index
    %c0_14 = arith.constant 0 : index
    %27 = vector.load %arg5[%c0_13, %c0_14] : memref<16x32xbf16, #tpu.memory_space<vmem>>, vector<16x32xbf16>
    %cst_15 = arith.constant dense<0.000000e+00> : vector<512x32xf32>
    %28 = tpu.matmul %26, %27, %cst_15 {dimension_numbers = #tpu.dot_dimension_numbers<[1], [0], [0], [1], [0, 0, 1, 1], [], []>} : vector<512x16xbf16>, vector<16x32xbf16>, vector<512x32xf32> -> vector<512x32xf32>
    %c0_16 = arith.constant 0 : index
    %c0_17 = arith.constant 0 : index
    %29 = vector.load %arg6[%c0_16, %c0_17] : memref<1x32xf32, #tpu.memory_space<vmem>>, vector<1x32xf32>
    %c0_18 = arith.constant 0 : index
    %c0_19 = arith.constant 0 : index
    %30 = vector.load %arg7[%c0_18, %c0_19] : memref<1x32xf32, #tpu.memory_space<vmem>>, vector<1x32xf32>
    %cst_20 = arith.constant dense<0.000000e+00> : vector<32xf32>
    %31 = vector.multi_reduction <add>, %28, %cst_20 [0] : vector<512x32xf32> to vector<32xf32>
    %32 = vector.shape_cast %31 : vector<32xf32> to vector<1x32xf32>
    %cst_21 = arith.constant 0.001953125 : f32
    %33 = vector.broadcast %cst_21 : f32 to vector<1x32xf32>
    %34 = arith.mulf %32, %33 : vector<1x32xf32>
    %35 = vector.broadcast %34 : vector<1x32xf32> to vector<512x32xf32>
    %36 = arith.subf %28, %35 : vector<512x32xf32>
    %37 = arith.mulf %36, %36 : vector<512x32xf32>
    %cst_22 = arith.constant dense<0.000000e+00> : vector<32xf32>
    %38 = vector.multi_reduction <add>, %37, %cst_22 [0] : vector<512x32xf32> to vector<32xf32>
    %39 = vector.shape_cast %38 : vector<32xf32> to vector<1x32xf32>
    %cst_23 = arith.constant 0.001953125 : f32
    %40 = vector.broadcast %cst_23 : f32 to vector<1x32xf32>
    %41 = arith.mulf %39, %40 : vector<1x32xf32>
    %cst_24 = arith.constant 9.99999974E-6 : f32
    %42 = vector.broadcast %cst_24 : f32 to vector<1x32xf32>
    %43 = arith.addf %41, %42 : vector<1x32xf32>
    %44 = math.rsqrt %43 : vector<1x32xf32>
    %45 = arith.mulf %44, %29 : vector<1x32xf32>
    %46 = vector.broadcast %45 : vector<1x32xf32> to vector<512x32xf32>
    %47 = arith.mulf %36, %46 : vector<512x32xf32>
    %48 = vector.broadcast %30 : vector<1x32xf32> to vector<512x32xf32>
    %49 = arith.addf %47, %48 : vector<512x32xf32>
    %cst_25 = arith.constant 0.000000e+00 : f32
    %50 = vector.broadcast %cst_25 : f32 to vector<512x32xf32>
    %51 = arith.maximumf %49, %50 : vector<512x32xf32>
    %52 = arith.truncf %51 : vector<512x32xf32> to vector<512x32xbf16>
    %c0_26 = arith.constant 0 : index
    %c0_27 = arith.constant 0 : index
    %53 = vector.load %arg8[%c0_26, %c0_27] : memref<512x32xbf16, #tpu.memory_space<vmem>>, vector<512x32xbf16>
    tpu.vector_store %arg8[%c0_26, %c0_27], %52 {strides = array<i32>} : memref<512x32xbf16, #tpu.memory_space<vmem>>, vector<512x32xbf16>,
    return
  }
  func.func @transform_0(%arg0: i32) -> (i32, i32) {
    %c0_i32 = arith.constant 0 : i32
    %c0_i32_0 = arith.constant 0 : i32
    %c0_i32_1 = arith.constant 0 : i32
    return %c0_i32, %c0_i32_0 : i32, i32
  }
  func.func @transform_1(%arg0: i32) -> (i32, i32) {
    %c0_i32 = arith.constant 0 : i32
    %c0_i32_0 = arith.constant 0 : i32
    %c0_i32_1 = arith.constant 0 : i32
    return %c0_i32, %c0_i32_0 : i32, i32
  }
  func.func @transform_2(%arg0: i32) -> (i32, i32) {
    %c0_i32 = arith.constant 0 : i32
    %c0_i32_0 = arith.constant 0 : i32
    %c0_i32_1 = arith.constant 0 : i32
    return %c0_i32, %c0_i32_0 : i32, i32
  }
  func.func @transform_3(%arg0: i32) -> (i32, i32) {
    %c0_i32 = arith.constant 0 : i32
    %c0_i32_0 = arith.constant 0 : i32
    %c0_i32_1 = arith.constant 0 : i32
    return %c0_i32, %c0_i32_0 : i32, i32
  }
  func.func @transform_4(%arg0: i32) -> (i32, i32) {
    %c0_i32 = arith.constant 0 : i32
    %c0_i32_0 = arith.constant 0 : i32
    %c0_i32_1 = arith.constant 0 : i32
    return %c0_i32, %c0_i32_0 : i32, i32
  }
  func.func @transform_5(%arg0: i32) -> (i32, i32) {
    %c0_i32 = arith.constant 0 : i32
    %c0_i32_0 = arith.constant 0 : i32
    %c0_i32_1 = arith.constant 0 : i32
    return %c0_i32, %c0_i32_0 : i32, i32
  }
  func.func @transform_6(%arg0: i32) -> (i32, i32) {
    %c0_i32 = arith.constant 0 : i32
    %c0_i32_0 = arith.constant 0 : i32
    %c0_i32_1 = arith.constant 0 : i32
    return %c0_i32, %c0_i32_0 : i32, i32
  }
  func.func @transform_7(%arg0: i32) -> (i32, i32) {
    %c0_i32 = arith.constant 0 : i32
    %c0_i32_0 = arith.constant 0 : i32
    %c0_i32_1 = arith.constant 0 : i32
    return %c0_i32, %c0_i32_0 : i32, i32
  }
}

module attributes {stable_mosaic.version = 11 : i64} {
  func.func @_up_layer_kernel(%arg0: i32, %arg1: memref<128x288xbf16, #tpu.memory_space<vmem>>, %arg2: memref<288x32xbf16, #tpu.memory_space<vmem>>, %arg3: memref<1x32xf32, #tpu.memory_space<vmem>>, %arg4: memref<128x128xbf16, #tpu.memory_space<vmem>>, %arg5: memref<32x4xbf16, #tpu.memory_space<vmem>>, %arg6: memref<128x4xbf16, #tpu.memory_space<vmem>>, %arg7: memref<1x1xf32, #tpu.memory_space<vmem>>, %arg8: memref<128x4xf32, #tpu.memory_space<vmem>>) attributes {dimension_semantics = [#tpu.dimension_semantics<arbitrary>], iteration_bounds = array<i64: 1>, scalar_prefetch = 0 : i64, scratch_operands = 0 : i64, tpu.core_type = #tpu.core_type<tc>, window_params = [{pipeline_mode = #tpu.pipeline_mode<synchronous>, transform_indices = @transform_0, window_bounds = array<i64: 128, 288>}, {pipeline_mode = #tpu.pipeline_mode<synchronous>, transform_indices = @transform_1, window_bounds = array<i64: 288, 32>}, {pipeline_mode = #tpu.pipeline_mode<synchronous>, transform_indices = @transform_2, window_bounds = array<i64: 1, 32>}, {pipeline_mode = #tpu.pipeline_mode<synchronous>, transform_indices = @transform_3, window_bounds = array<i64: 128, 128>}, {pipeline_mode = #tpu.pipeline_mode<synchronous>, transform_indices = @transform_4, window_bounds = array<i64: 32, 4>}, {pipeline_mode = #tpu.pipeline_mode<synchronous>, transform_indices = @transform_5, window_bounds = array<i64: 128, 4>}, {pipeline_mode = #tpu.pipeline_mode<synchronous>, transform_indices = @transform_6, window_bounds = array<i64: 1, 1>}, {pipeline_mode = #tpu.pipeline_mode<synchronous>, transform_indices = @transform_7, window_bounds = array<i64: 128, 4>}]} {
    %c0 = arith.constant 0 : index
    %c0_0 = arith.constant 0 : index
    %0 = vector.load %arg1[%c0, %c0_0] : memref<128x288xbf16, #tpu.memory_space<vmem>>, vector<128x288xbf16>
    %c0_1 = arith.constant 0 : index
    %c0_2 = arith.constant 0 : index
    %1 = vector.load %arg2[%c0_1, %c0_2] : memref<288x32xbf16, #tpu.memory_space<vmem>>, vector<288x32xbf16>
    %cst = arith.constant dense<0.000000e+00> : vector<128x32xf32>
    %2 = tpu.matmul %0, %1, %cst {dimension_numbers = #tpu.dot_dimension_numbers<[1], [0], [0], [1], [0, 0, 1, 1], [], []>} : vector<128x288xbf16>, vector<288x32xbf16>, vector<128x32xf32> -> vector<128x32xf32>
    %c0_3 = arith.constant 0 : index
    %c0_4 = arith.constant 0 : index
    %3 = vector.load %arg3[%c0_3, %c0_4] : memref<1x32xf32, #tpu.memory_space<vmem>>, vector<1x32xf32>
    %4 = vector.broadcast %3 : vector<1x32xf32> to vector<128x32xf32>
    %5 = arith.addf %2, %4 : vector<128x32xf32>
    %cst_5 = arith.constant 0.000000e+00 : f32
    %6 = vector.broadcast %cst_5 : f32 to vector<128x32xf32>
    %7 = arith.maximumf %5, %6 : vector<128x32xf32>
    %8 = arith.truncf %7 : vector<128x32xf32> to vector<128x32xbf16>
    %c0_6 = arith.constant 0 : index
    %c0_7 = arith.constant 0 : index
    %9 = vector.load %arg5[%c0_6, %c0_7] : memref<32x4xbf16, #tpu.memory_space<vmem>>, vector<32x4xbf16>
    %cst_8 = arith.constant dense<0.000000e+00> : vector<128x4xf32>
    %10 = tpu.matmul %8, %9, %cst_8 {dimension_numbers = #tpu.dot_dimension_numbers<[1], [0], [0], [1], [0, 0, 1, 1], [], []>} : vector<128x32xbf16>, vector<32x4xbf16>, vector<128x4xf32> -> vector<128x4xf32>
    %c0_9 = arith.constant 0 : index
    %c0_10 = arith.constant 0 : index
    %11 = vector.load %arg4[%c0_9, %c0_10] : memref<128x128xbf16, #tpu.memory_space<vmem>>, vector<128x128xbf16>
    %c0_11 = arith.constant 0 : index
    %c0_12 = arith.constant 0 : index
    %12 = vector.load %arg6[%c0_11, %c0_12] : memref<128x4xbf16, #tpu.memory_space<vmem>>, vector<128x4xbf16>
    %cst_13 = arith.constant dense<0.000000e+00> : vector<128x4xf32>
    %13 = tpu.matmul %11, %12, %cst_13 {dimension_numbers = #tpu.dot_dimension_numbers<[1], [0], [0], [1], [0, 0, 1, 1], [], []>} : vector<128x128xbf16>, vector<128x4xbf16>, vector<128x4xf32> -> vector<128x4xf32>
    %14 = arith.addf %10, %13 : vector<128x4xf32>
    %c0_14 = arith.constant 0 : index
    %c0_15 = arith.constant 0 : index
    %15 = vector.load %arg7[%c0_14, %c0_15] : memref<1x1xf32, #tpu.memory_space<vmem>>, vector<1x1xf32>
    %16 = vector.broadcast %15 : vector<1x1xf32> to vector<128x4xf32>
    %17 = arith.addf %14, %16 : vector<128x4xf32>
    %c0_16 = arith.constant 0 : index
    %c0_17 = arith.constant 0 : index
    %18 = vector.load %arg8[%c0_16, %c0_17] : memref<128x4xf32, #tpu.memory_space<vmem>>, vector<128x4xf32>
    tpu.vector_store %arg8[%c0_16, %c0_17], %17 {strides = array<i32>} : memref<128x4xf32, #tpu.memory_space<vmem>>, vector<128x4xf32>,
    return
  }
  func.func @transform_0(%arg0: i32) -> (i32, i32) {
    %c0_i32 = arith.constant 0 : i32
    %c0_i32_0 = arith.constant 0 : i32
    %c0_i32_1 = arith.constant 0 : i32
    return %c0_i32, %c0_i32_0 : i32, i32
  }
  func.func @transform_1(%arg0: i32) -> (i32, i32) {
    %c0_i32 = arith.constant 0 : i32
    %c0_i32_0 = arith.constant 0 : i32
    %c0_i32_1 = arith.constant 0 : i32
    return %c0_i32, %c0_i32_0 : i32, i32
  }
  func.func @transform_2(%arg0: i32) -> (i32, i32) {
    %c0_i32 = arith.constant 0 : i32
    %c0_i32_0 = arith.constant 0 : i32
    %c0_i32_1 = arith.constant 0 : i32
    return %c0_i32, %c0_i32_0 : i32, i32
  }
  func.func @transform_3(%arg0: i32) -> (i32, i32) {
    %c0_i32 = arith.constant 0 : i32
    %c0_i32_0 = arith.constant 0 : i32
    %c0_i32_1 = arith.constant 0 : i32
    return %c0_i32, %c0_i32_0 : i32, i32
  }
  func.func @transform_4(%arg0: i32) -> (i32, i32) {
    %c0_i32 = arith.constant 0 : i32
    %c0_i32_0 = arith.constant 0 : i32
    %c0_i32_1 = arith.constant 0 : i32
    return %c0_i32, %c0_i32_0 : i32, i32
  }
  func.func @transform_5(%arg0: i32) -> (i32, i32) {
    %c0_i32 = arith.constant 0 : i32
    %c0_i32_0 = arith.constant 0 : i32
    %c0_i32_1 = arith.constant 0 : i32
    return %c0_i32, %c0_i32_0 : i32, i32
  }
  func.func @transform_6(%arg0: i32) -> (i32, i32) {
    %c0_i32 = arith.constant 0 : i32
    %c0_i32_0 = arith.constant 0 : i32
    %c0_i32_1 = arith.constant 0 : i32
    return %c0_i32, %c0_i32_0 : i32, i32
  }
  func.func @transform_7(%arg0: i32) -> (i32, i32) {
    %c0_i32 = arith.constant 0 : i32
    %c0_i32_0 = arith.constant 0 : i32
    %c0_i32_1 = arith.constant 0 : i32
    return %c0_i32, %c0_i32_0 : i32, i32
  }
}

</mosaic_0001>

<llo_original>
// kernel: cnn_forward.8
$region0: #{cnn_forward.8}
  #allocation0 [shape = 'u32[]', space=smem, size = 0x4, offset = 0x4, fixed_abs, tag = 'smem constant byte address 0x4 - core index']
  #allocation1 [shape = 'u32[144,128]{1,0:T(1,128)}', space=vmem, size = 0x12000, scoped, tag = 'internal scratch']
  %s0 = inlined_call_operand.vmem [shape: bf16[128,32], index: 0, kind: input, shape index: {}]
  %s1 = inlined_call_operand.vmem [shape: bf16[32,32], index: 1, kind: input, shape index: {}]
  %s2 = inlined_call_operand.vmem [shape: f32[1,32], index: 2, kind: input, shape index: {}]
  %s3 = inlined_call_operand.vmem [shape: f32[1,32], index: 3, kind: input, shape index: {}]
  %s4 = inlined_call_operand.vmem [shape: bf16[128,32], index: 4, kind: output, shape index: {}]
  %s5 = sld [smem:[#allocation0]]
  $region26: #{cnn_forward.8} parent=0
    _
  %s7 = ssub.s32 1, %s5
  %s8 = scalar_select 0, %s7, %s5
  // Predicated region
  $region2: #{cnn_forward.8} parent=0 // pred_check
    _
  $region3: #{cnn_forward.8} parent=0 // pred_check_branch
    %10 = sbr.rel (0) target = $region5
  $region4: #{cnn_forward.8} parent=0 // pred_region
    _
  $region5: #{cnn_forward.8} parent=0 // pred_fallthru
    _
  // Predicated region
  $region6: #{cnn_forward.8} parent=0 // pred_check
    _
  $region7: #{cnn_forward.8} parent=0 // pred_check_branch
    %12 = sbr.rel (0) target = $region9
  $region8: #{cnn_forward.8} parent=0 // pred_region
    _
  $region9: #{cnn_forward.8} parent=0 // pred_fallthru
    _
  // Predicated region
  $region10: #{cnn_forward.8} parent=0 // pred_check
    _
  $region11: #{cnn_forward.8} parent=0 // pred_check_branch
    %14 = sbr.rel (0) target = $region13
  $region12: #{cnn_forward.8} parent=0 // pred_region
    _
  $region13: #{cnn_forward.8} parent=0 // pred_fallthru
    _
  // Predicated region
  $region14: #{cnn_forward.8} parent=0 // pred_check
    _
  $region15: #{cnn_forward.8} parent=0 // pred_check_branch
    %16 = sbr.rel (0) target = $region17
  $region16: #{cnn_forward.8} parent=0 // pred_region
    _
  $region17: #{cnn_forward.8} parent=0 // pred_fallthru
    _
  %v18 = vld [vmem:[%s0] sm:$0xf]
  %v19 = vld [vmem:[%s0 + $0x4] sm:$0xf]
  %v20 = vld [vmem:[%s0 + $0x8] sm:$0xf]
  %v21 = vld [vmem:[%s0 + $0xc] sm:$0xf]
  %v22 = vld [vmem:[%s0 + $0x10] sm:$0xf]
  %v23 = vld [vmem:[%s0 + $0x14] sm:$0xf]
  %v24 = vld [vmem:[%s0 + $0x18] sm:$0xf]
  %v25 = vld [vmem:[%s0 + $0x1c] sm:$0xf]
  %v26 = vld [vmem:[%s0 + $0x20] sm:$0xf]
  %v27 = vld [vmem:[%s0 + $0x24] sm:$0xf]
  %v28 = vld [vmem:[%s0 + $0x28] sm:$0xf]
  %v29 = vld [vmem:[%s0 + $0x2c] sm:$0xf]
  %v30 = vld [vmem:[%s0 + $0x30] sm:$0xf]
  %v31 = vld [vmem:[%s0 + $0x34] sm:$0xf]
  %v32 = vld [vmem:[%s0 + $0x38] sm:$0xf]
  %v33 = vld [vmem:[%s0 + $0x3c] sm:$0xf]
  %v34 = vld [vmem:[%s1] sm:$0xf]
  %v35 = vld [vmem:[%s1 + $0x4] sm:$0xf]
  %v36 = vld [vmem:[%s1 + $0x8] sm:$0xf]
  %v37 = vld [vmem:[%s1 + $0xc] sm:$0xf]
  %v54 = vunpack.c.l.b16 %v18
  %v55 = vunpack.c.l.b16 %v19
  %v56 = vunpack.c.l.b16 %v20
  %v57 = vunpack.c.l.b16 %v21
  %v58 = vunpack.c.l.b16 %v22
  %v59 = vunpack.c.l.b16 %v23
  %v60 = vunpack.c.l.b16 %v24
  %v61 = vunpack.c.l.b16 %v25
  %v62 = vunpack.c.l.b16 %v26
  %v63 = vunpack.c.l.b16 %v27
  %v64 = vunpack.c.l.b16 %v28
  %v65 = vunpack.c.l.b16 %v29
  %v66 = vunpack.c.l.b16 %v30
  %v67 = vunpack.c.l.b16 %v31
  %v68 = vunpack.c.l.b16 %v32
  %v69 = vunpack.c.l.b16 %v33
  %v70 = vpack.c.b16 %v55, %v54
  %v71 = vpack.c.b16 %v57, %v56
  %v72 = vpack.c.b16 %v59, %v58
  %v73 = vpack.c.b16 %v61, %v60
  %v74 = vpack.c.b16 %v63, %v62
  %v75 = vpack.c.b16 %v65, %v64
  %v76 = vpack.c.b16 %v67, %v66
  %v77 = vpack.c.b16 %v69, %v68
  %v82 = vunpack.c.l.b16 %v34
  %v83 = vunpack.c.l.b16 %v35
  %v84 = vunpack.c.l.b16 %v36
  %v85 = vunpack.c.l.b16 %v37
  %v86 = vpack.c.b16 %v83, %v82
  %v87 = vpack.c.b16 %v85, %v84
  %vm90 = vcmask 261120
  %v92 = vsel %vm90, %v70, 0
  %v95 = vsel %vm90, %v71, 0
  %v98 = vsel %vm90, %v72, 0
  %v101 = vsel %vm90, %v73, 0
  %v104 = vsel %vm90, %v74, 0
  %v107 = vsel %vm90, %v75, 0
  %v110 = vsel %vm90, %v76, 0
  %v113 = vsel %vm90, %v77, 0
  %115 = vmatprep.subr.bf16.mxu0 0
  %116 = vmatpush1.bf16.msra.mxu0 %v86
  %117 = vmatprep.subr.bf16.mxu0 0
  %118 = vmatpush1.bf16.msra.mxu0 %v87
  %119 = vmatprep.subr.bf16.mxu0 0
  %120 = vmatpush1.bf16.msra.mxu0 0
  %121 = vmatprep.subr.bf16.mxu0 0
  %122 = vmatpush1.bf16.msra.mxu0 0
  %123 = vmatprep.subr.bf16.mxu0 0
  %124 = vmatpush1.bf16.msra.mxu0 0
  %125 = vmatprep.subr.bf16.mxu0 0
  %126 = vmatpush1.bf16.msra.mxu0 0
  %127 = vmatprep.subr.bf16.mxu0 0
  %128 = vmatpush1.bf16.msra.mxu0 0
  %129 = vmatprep.subr.bf16.mxu0 0
  %130 = vmatpush1.bf16.msra.mxu0 0
  %131 = vmatprep.subr.bf16.mxu0 0
  %132 = vmatpush1.bf16.msra.mxu0 0
  %133 = vmatprep.subr.bf16.mxu0 0
  %134 = vmatpush1.bf16.msra.mxu0 0
  %135 = vmatprep.subr.bf16.mxu0 0
  %136 = vmatpush1.bf16.msra.mxu0 0
  %137 = vmatprep.subr.bf16.mxu0 0
  %138 = vmatpush1.bf16.msra.mxu0 0
  %139 = vmatprep.subr.bf16.mxu0 0
  %140 = vmatpush1.bf16.msra.mxu0 0
  %141 = vmatprep.subr.bf16.mxu0 0
  %142 = vmatpush1.bf16.msra.mxu0 0
  %143 = vmatprep.subr.bf16.mxu0 0
  %144 = vmatpush1.bf16.msra.mxu0 0
  %145 = vmatprep.subr.bf16.mxu0 0
  %146 = vmatpush1.bf16.msra.mxu0 0
  %147 = vmatprep.mubr.bf16.mxu0 0
  %148 = vmatmul.mubr.bf16.gmra.mrb[0].mxu0 %v92
  %v149 = vpop.f32.mrb[0].mxu0
  %v150 = vadd.f32 0.0, %v149
  %v151 = vpop.f32.mrb[0].mxu0
  %v152 = vpop.f32.mrb[0].mxu0
  %v153 = vadd.f32 0.0, %v152
  %v154 = vpop.f32.mrb[0].mxu0
  %155 = vmatprep.mubr.bf16.mxu0 0
  %156 = vmatmul.mubr.bf16.gmra.mrb[0].mxu0 %v95
  %v157 = vpop.f32.mrb[0].mxu0
  %v158 = vadd.f32 0.0, %v157
  %v159 = vpop.f32.mrb[0].mxu0
  %v160 = vpop.f32.mrb[0].mxu0
  %v161 = vadd.f32 0.0, %v160
  %v162 = vpop.f32.mrb[0].mxu0
  %163 = vmatprep.mubr.bf16.mxu0 0
  %164 = vmatmul.mubr.bf16.gmra.mrb[0].mxu0 %v98
  %v165 = vpop.f32.mrb[0].mxu0
  %v166 = vadd.f32 0.0, %v165
  %v167 = vpop.f32.mrb[0].mxu0
  %v168 = vpop.f32.mrb[0].mxu0
  %v169 = vadd.f32 0.0, %v168
  %v170 = vpop.f32.mrb[0].mxu0
  %171 = vmatprep.mubr.bf16.mxu0 0
  %172 = vmatmul.mubr.bf16.gmra.mrb[0].mxu0 %v101
  %v173 = vpop.f32.mrb[0].mxu0
  %v174 = vadd.f32 0.0, %v173
  %v175 = vpop.f32.mrb[0].mxu0
  %v176 = vpop.f32.mrb[0].mxu0
  %v177 = vadd.f32 0.0, %v176
  %v178 = vpop.f32.mrb[0].mxu0
  %179 = vmatprep.mubr.bf16.mxu0 0
  %180 = vmatmul.mubr.bf16.gmra.mrb[0].mxu0 %v104
  %v181 = vpop.f32.mrb[0].mxu0
  %v182 = vadd.f32 0.0, %v181
  %v183 = vpop.f32.mrb[0].mxu0
  %v184 = vpop.f32.mrb[0].mxu0
  %v185 = vadd.f32 0.0, %v184
  %v186 = vpop.f32.mrb[0].mxu0
  %187 = vmatprep.mubr.bf16.mxu0 0
  %188 = vmatmul.mubr.bf16.gmra.mrb[0].mxu0 %v107
  %v189 = vpop.f32.mrb[0].mxu0
  %v190 = vadd.f32 0.0, %v189
  %v191 = vpop.f32.mrb[0].mxu0
  %v192 = vpop.f32.mrb[0].mxu0
  %v193 = vadd.f32 0.0, %v192
  %v194 = vpop.f32.mrb[0].mxu0
  %195 = vmatprep.mubr.bf16.mxu0 0
  %196 = vmatmul.mubr.bf16.gmra.mrb[0].mxu0 %v110
  %v197 = vpop.f32.mrb[0].mxu0
  %v198 = vadd.f32 0.0, %v197
  %v199 = vpop.f32.mrb[0].mxu0
  %v200 = vpop.f32.mrb[0].mxu0
  %v201 = vadd.f32 0.0, %v200
  %v202 = vpop.f32.mrb[0].mxu0
  %203 = vmatprep.mubr.bf16.mxu0 0
  %204 = vmatmul.mubr.bf16.gmra.mrb[0].mxu0 %v113
  %v205 = vpop.f32.mrb[0].mxu0
  %v206 = vadd.f32 0.0, %v205
  %v207 = vpop.f32.mrb[0].mxu0
  %v208 = vpop.f32.mrb[0].mxu0
  %v209 = vadd.f32 0.0, %v208
  %v210 = vpop.f32.mrb[0].mxu0
  %211 = vdwg.mxu0
  %v212 = vld [vmem:[%s2] sm:$0x1]
  %v213 = vld [vmem:[%s3] sm:$0x1]
  %v214 = vsel %vm90, %v150, 0.0
  %v215 = vsel %vm90, %v153, 0.0
  %v216 = vadd.f32 %v214, %v215
  %v217 = vsel %vm90, %v158, 0.0
  %v218 = vadd.f32 %v216, %v217
  %v219 = vsel %vm90, %v161, 0.0
  %v220 = vadd.f32 %v218, %v219
  %v221 = vsel %vm90, %v166, 0.0
  %v222 = vadd.f32 %v220, %v221
  %v223 = vsel %vm90, %v169, 0.0
  %v224 = vadd.f32 %v222, %v223
  %v225 = vsel %vm90, %v174, 0.0
  %v226 = vadd.f32 %v224, %v225
  %v227 = vsel %vm90, %v177, 0.0
  %v228 = vadd.f32 %v226, %v227
  %v229 = vsel %vm90, %v182, 0.0
  %v230 = vadd.f32 %v228, %v229
  %v231 = vsel %vm90, %v185, 0.0
  %v232 = vadd.f32 %v230, %v231
  %v233 = vsel %vm90, %v190, 0.0
  %v234 = vadd.f32 %v232, %v233
  %v235 = vsel %vm90, %v193, 0.0
  %v236 = vadd.f32 %v234, %v235
  %v237 = vsel %vm90, %v198, 0.0
  %v238 = vadd.f32 %v236, %v237
  %v239 = vsel %vm90, %v201, 0.0
  %v240 = vadd.f32 %v238, %v239
  %v241 = vsel %vm90, %v206, 0.0
  %v242 = vadd.f32 %v240, %v241
  %v243 = vsel %vm90, %v209, 0.0
  %v244 = vadd.f32 %v242, %v243
  %v245 = vrot.slane %v244, 4
  %v246 = vadd.f32 %v244, %v245
  %v247 = vrot.slane %v246, 2
  %v248 = vadd.f32 %v246, %v247
  %v249 = vrot.slane %v248, 1
  %v250 = vadd.f32 %v248, %v249
  %v251 = vmul.f32 %v250, 0.0078125
  %v252 = vsub.f32 %v150, %v251
  %v253 = vsub.f32 %v153, %v251
  %v254 = vsub.f32 %v158, %v251
  %v255 = vsub.f32 %v161, %v251
  %v256 = vsub.f32 %v166, %v251
  %v257 = vsub.f32 %v169, %v251
  %v258 = vsub.f32 %v174, %v251
  %v259 = vsub.f32 %v177, %v251
  %v260 = vsub.f32 %v182, %v251
  %v261 = vsub.f32 %v185, %v251
  %v262 = vsub.f32 %v190, %v251
  %v263 = vsub.f32 %v193, %v251
  %v264 = vsub.f32 %v198, %v251
  %v265 = vsub.f32 %v201, %v251
  %v266 = vsub.f32 %v206, %v251
  %v267 = vsub.f32 %v209, %v251
  %v268 = vmul.f32 %v252, %v252
  %v269 = vmul.f32 %v253, %v253
  %v270 = vmul.f32 %v254, %v254
  %v271 = vmul.f32 %v255, %v255
  %v272 = vmul.f32 %v256, %v256
  %v273 = vmul.f32 %v257, %v257
  %v274 = vmul.f32 %v258, %v258
  %v275 = vmul.f32 %v259, %v259
  %v276 = vmul.f32 %v260, %v260
  %v277 = vmul.f32 %v261, %v261
  %v278 = vmul.f32 %v262, %v262
  %v279 = vmul.f32 %v263, %v263
  %v280 = vmul.f32 %v264, %v264
  %v281 = vmul.f32 %v265, %v265
  %v282 = vmul.f32 %v266, %v266
  %v283 = vmul.f32 %v267, %v267
  %v284 = vsel %vm90, %v268, 0.0
  %v285 = vsel %vm90, %v269, 0.0
  %v286 = vadd.f32 %v284, %v285
  %v287 = vsel %vm90, %v270, 0.0
  %v288 = vadd.f32 %v286, %v287
  %v289 = vsel %vm90, %v271, 0.0
  %v290 = vadd.f32 %v288, %v289
  %v291 = vsel %vm90, %v272, 0.0
  %v292 = vadd.f32 %v290, %v291
  %v293 = vsel %vm90, %v273, 0.0
  %v294 = vadd.f32 %v292, %v293
  %v295 = vsel %vm90, %v274, 0.0
  %v296 = vadd.f32 %v294, %v295
  %v297 = vsel %vm90, %v275, 0.0
  %v298 = vadd.f32 %v296, %v297
  %v299 = vsel %vm90, %v276, 0.0
  %v300 = vadd.f32 %v298, %v299
  %v301 = vsel %vm90, %v277, 0.0
  %v302 = vadd.f32 %v300, %v301
  %v303 = vsel %vm90, %v278, 0.0
  %v304 = vadd.f32 %v302, %v303
  %v305 = vsel %vm90, %v279, 0.0
  %v306 = vadd.f32 %v304, %v305
  %v307 = vsel %vm90, %v280, 0.0
  %v308 = vadd.f32 %v306, %v307
  %v309 = vsel %vm90, %v281, 0.0
  %v310 = vadd.f32 %v308, %v309
  %v311 = vsel %vm90, %v282, 0.0
  %v312 = vadd.f32 %v310, %v311
  %v313 = vsel %vm90, %v283, 0.0
  %v314 = vadd.f32 %v312, %v313
  %v315 = vrot.slane %v314, 4
  %v316 = vadd.f32 %v314, %v315
  %v317 = vrot.slane %v316, 2
  %v318 = vadd.f32 %v316, %v317
  %v319 = vrot.slane %v318, 1
  %v320 = vadd.f32 %v318, %v319
  %v321 = vmul.f32 %v320, 0.0078125
  %v322 = vadd.f32 %v321, 1e-05
  %v323 = vrsqrt.pop %v322
  %v324 = vmul.f32 %v323, %v212
  %v325 = vlaneseq
  %v326 = vshrl.u32 %v325, 7
  %v327 = vsub.s32 0, %v326
  %v328 = vrot.slane %v324, %v327
  %v329 = vmul.f32 %v252, %v328
  %v330 = vmul.f32 %v253, %v328
  %v331 = vmul.f32 %v254, %v328
  %v332 = vmul.f32 %v255, %v328
  %v333 = vmul.f32 %v256, %v328
  %v334 = vmul.f32 %v257, %v328
  %v335 = vmul.f32 %v258, %v328
  %v336 = vmul.f32 %v259, %v328
  %v337 = vmul.f32 %v260, %v328
  %v338 = vmul.f32 %v261, %v328
  %v339 = vmul.f32 %v262, %v328
  %v340 = vmul.f32 %v263, %v328
  %v341 = vmul.f32 %v264, %v328
  %v342 = vmul.f32 %v265, %v328
  %v343 = vmul.f32 %v266, %v328
  %v344 = vmul.f32 %v267, %v328
  %v346 = vlaneseq
  %v347 = vshrl.u32 %v346, 7
  %v348 = vsub.s32 0, %v347
  %v349 = vrot.slane %v213, %v348
  %v351 = vadd.f32 %v329, %v349
  %v352 = vadd.f32 %v330, %v349
  %v353 = vadd.f32 %v331, %v349
  %v354 = vadd.f32 %v332, %v349
  %v355 = vadd.f32 %v333, %v349
  %v356 = vadd.f32 %v334, %v349
  %v357 = vadd.f32 %v335, %v349
  %v358 = vadd.f32 %v336, %v349
  %v359 = vadd.f32 %v337, %v349
  %v360 = vadd.f32 %v338, %v349
  %v361 = vadd.f32 %v339, %v349
  %v362 = vadd.f32 %v340, %v349
  %v363 = vadd.f32 %v341, %v349
  %v364 = vadd.f32 %v342, %v349
  %v365 = vadd.f32 %v343, %v349
  %v366 = vadd.f32 %v344, %v349
  %v367 = vmax.f32 %v351, 0.0
  %v368 = vmax.f32 %v352, 0.0
  %v369 = vmax.f32 %v353, 0.0
  %v370 = vmax.f32 %v354, 0.0
  %v371 = vmax.f32 %v355, 0.0
  %v372 = vmax.f32 %v356, 0.0
  %v373 = vmax.f32 %v357, 0.0
  %v374 = vmax.f32 %v358, 0.0
  %v375 = vmax.f32 %v359, 0.0
  %v376 = vmax.f32 %v360, 0.0
  %v377 = vmax.f32 %v361, 0.0
  %v378 = vmax.f32 %v362, 0.0
  %v379 = vmax.f32 %v363, 0.0
  %v380 = vmax.f32 %v364, 0.0
  %v381 = vmax.f32 %v365, 0.0
  %v382 = vmax.f32 %v366, 0.0
  %v383 = vpack.c.bf16 %v368, %v367
  %v384 = vpack.c.bf16 %v370, %v369
  %v385 = vpack.c.bf16 %v372, %v371
  %v386 = vpack.c.bf16 %v374, %v373
  %v387 = vpack.c.bf16 %v376, %v375
  %v388 = vpack.c.bf16 %v378, %v377
  %v389 = vpack.c.bf16 %v380, %v379
  %v390 = vpack.c.bf16 %v382, %v381
  %v399 = vunpack.c.l.b16 %v383
  %v400 = vunpack.c.h.b16 %v383
  %v401 = vunpack.c.l.b16 %v384
  %v402 = vunpack.c.h.b16 %v384
  %v403 = vunpack.c.l.b16 %v385
  %v404 = vunpack.c.h.b16 %v385
  %v405 = vunpack.c.l.b16 %v386
  %v406 = vunpack.c.h.b16 %v386
  %v407 = vunpack.c.l.b16 %v387
  %v408 = vunpack.c.h.b16 %v387
  %v409 = vunpack.c.l.b16 %v388
  %v410 = vunpack.c.h.b16 %v388
  %v411 = vunpack.c.l.b16 %v389
  %v412 = vunpack.c.h.b16 %v389
  %v413 = vunpack.c.l.b16 %v390
  %v414 = vunpack.c.h.b16 %v390
  %v415 = vpack.c.b16 %v399, %v399
  %v416 = vpack.c.b16 %v400, %v400
  %v417 = vpack.c.b16 %v401, %v401
  %v418 = vpack.c.b16 %v402, %v402
  %v419 = vpack.c.b16 %v403, %v403
  %v420 = vpack.c.b16 %v404, %v404
  %v421 = vpack.c.b16 %v405, %v405
  %v422 = vpack.c.b16 %v406, %v406
  %v423 = vpack.c.b16 %v407, %v407
  %v424 = vpack.c.b16 %v408, %v408
  %v425 = vpack.c.b16 %v409, %v409
  %v426 = vpack.c.b16 %v410, %v410
  %v427 = vpack.c.b16 %v411, %v411
  %v428 = vpack.c.b16 %v412, %v412
  %v429 = vpack.c.b16 %v413, %v413
  %v430 = vpack.c.b16 %v414, %v414
  %vm447 = vcmask 257024
  %448 = vst.msk [vmem:[%s4] sm:$0xf] %vm447, %v415
  %449 = vst.msk [vmem:[%s4 + $0x4] sm:$0xf] %vm447, %v416
  %450 = vst.msk [vmem:[%s4 + $0x8] sm:$0xf] %vm447, %v417
  %451 = vst.msk [vmem:[%s4 + $0xc] sm:$0xf] %vm447, %v418
  %452 = vst.msk [vmem:[%s4 + $0x10] sm:$0xf] %vm447, %v419
  %453 = vst.msk [vmem:[%s4 + $0x14] sm:$0xf] %vm447, %v420
  %454 = vst.msk [vmem:[%s4 + $0x18] sm:$0xf] %vm447, %v421
  %455 = vst.msk [vmem:[%s4 + $0x1c] sm:$0xf] %vm447, %v422
  %456 = vst.msk [vmem:[%s4 + $0x20] sm:$0xf] %vm447, %v423
  %457 = vst.msk [vmem:[%s4 + $0x24] sm:$0xf] %vm447, %v424
  %458 = vst.msk [vmem:[%s4 + $0x28] sm:$0xf] %vm447, %v425
  %459 = vst.msk [vmem:[%s4 + $0x2c] sm:$0xf] %vm447, %v426
  %460 = vst.msk [vmem:[%s4 + $0x30] sm:$0xf] %vm447, %v427
  %461 = vst.msk [vmem:[%s4 + $0x34] sm:$0xf] %vm447, %v428
  %462 = vst.msk [vmem:[%s4 + $0x38] sm:$0xf] %vm447, %v429
  %463 = vst.msk [vmem:[%s4 + $0x3c] sm:$0xf] %vm447, %v430
  // Predicated region
  $region18: #{cnn_forward.8} parent=0 // pred_check
    _
  $region19: #{cnn_forward.8} parent=0 // pred_check_branch
    %465 = sbr.rel (0) target = $region21
  $region20: #{cnn_forward.8} parent=0 // pred_region
    _
  $region21: #{cnn_forward.8} parent=0 // pred_fallthru
    _
  // Predicated region
  $region22: #{cnn_forward.8} parent=0 // pred_check
    _
  $region23: #{cnn_forward.8} parent=0 // pred_check_branch
    %467 = sbr.rel (0) target = $region25
  $region24: #{cnn_forward.8} parent=0 // pred_region
    _
  $region25: #{cnn_forward.8} parent=0 // pred_fallthru
    _

// kernel: cnn_forward.9
$region0: #{cnn_forward.9}
  #allocation0 [shape = 'u32[]', space=smem, size = 0x4, offset = 0x4, fixed_abs, tag = 'smem constant byte address 0x4 - core index']
  #allocation1 [shape = 'u32[144,128]{1,0:T(1,128)}', space=vmem, size = 0x12000, scoped, tag = 'internal scratch']
  %s0 = inlined_call_operand.vmem [shape: bf16[32,288], index: 0, kind: input, shape index: {}]
  %s1 = inlined_call_operand.vmem [shape: bf16[288,64], index: 1, kind: input, shape index: {}]
  %s2 = inlined_call_operand.vmem [shape: f32[1,64], index: 2, kind: input, shape index: {}]
  %s3 = inlined_call_operand.vmem [shape: f32[1,64], index: 3, kind: input, shape index: {}]
  %s4 = inlined_call_operand.vmem [shape: bf16[32,64], index: 4, kind: output, shape index: {}]
  %s5 = sld [smem:[#allocation0]]
  $region26: #{cnn_forward.9} parent=0
    _
  %s7 = ssub.s32 1, %s5
  %s8 = scalar_select 0, %s7, %s5
  // Predicated region
  $region2: #{cnn_forward.9} parent=0 // pred_check
    _
  $region3: #{cnn_forward.9} parent=0 // pred_check_branch
    %10 = sbr.rel (0) target = $region5
  $region4: #{cnn_forward.9} parent=0 // pred_region
    _
  $region5: #{cnn_forward.9} parent=0 // pred_fallthru
    _
  // Predicated region
  $region6: #{cnn_forward.9} parent=0 // pred_check
    _
  $region7: #{cnn_forward.9} parent=0 // pred_check_branch
    %12 = sbr.rel (0) target = $region9
  $region8: #{cnn_forward.9} parent=0 // pred_region
    _
  $region9: #{cnn_forward.9} parent=0 // pred_fallthru
    _
  // Predicated region
  $region10: #{cnn_forward.9} parent=0 // pred_check
    _
  $region11: #{cnn_forward.9} parent=0 // pred_check_branch
    %14 = sbr.rel (0) target = $region13
  $region12: #{cnn_forward.9} parent=0 // pred_region
    _
  $region13: #{cnn_forward.9} parent=0 // pred_fallthru
    _
  // Predicated region
  $region14: #{cnn_forward.9} parent=0 // pred_check
    _
  $region15: #{cnn_forward.9} parent=0 // pred_check_branch
    %16 = sbr.rel (0) target = $region17
  $region16: #{cnn_forward.9} parent=0 // pred_region
    _
  $region17: #{cnn_forward.9} parent=0 // pred_fallthru
    _
  %v18 = vld [vmem:[%s0] sm:$0xff]
  %v19 = vld [vmem:[%s0 + $0x8] sm:$0xf]
  %v20 = vld [vmem:[%s0 + $0xc] sm:$0xff]
  %v21 = vld [vmem:[%s0 + $0x14] sm:$0xf]
  %v22 = vld [vmem:[%s0 + $0x18] sm:$0xff]
  %v23 = vld [vmem:[%s0 + $0x20] sm:$0xf]
  %v24 = vld [vmem:[%s0 + $0x24] sm:$0xff]
  %v25 = vld [vmem:[%s0 + $0x2c] sm:$0xf]
  %v26 = vld [vmem:[%s1] sm:$0xf]
  %v27 = vld [vmem:[%s1 + $0x4] sm:$0xf]
  %v28 = vld [vmem:[%s1 + $0x8] sm:$0xf]
  %v29 = vld [vmem:[%s1 + $0xc] sm:$0xf]
  %v30 = vld [vmem:[%s1 + $0x10] sm:$0xf]
  %v31 = vld [vmem:[%s1 + $0x14] sm:$0xf]
  %v32 = vld [vmem:[%s1 + $0x18] sm:$0xf]
  %v33 = vld [vmem:[%s1 + $0x1c] sm:$0xf]
  %v34 = vld [vmem:[%s1 + $0x20] sm:$0xf]
  %v35 = vld [vmem:[%s1 + $0x24] sm:$0xf]
  %v36 = vld [vmem:[%s1 + $0x28] sm:$0xf]
  %v37 = vld [vmem:[%s1 + $0x2c] sm:$0xf]
  %v38 = vld [vmem:[%s1 + $0x30] sm:$0xf]
  %v39 = vld [vmem:[%s1 + $0x34] sm:$0xf]
  %v40 = vld [vmem:[%s1 + $0x38] sm:$0xf]
  %v41 = vld [vmem:[%s1 + $0x3c] sm:$0xf]
  %v42 = vld [vmem:[%s1 + $0x40] sm:$0xf]
  %v43 = vld [vmem:[%s1 + $0x44] sm:$0xf]
  %v44 = vld [vmem:[%s1 + $0x48] sm:$0xf]
  %v45 = vld [vmem:[%s1 + $0x4c] sm:$0xf]
  %v46 = vld [vmem:[%s1 + $0x50] sm:$0xf]
  %v47 = vld [vmem:[%s1 + $0x54] sm:$0xf]
  %v48 = vld [vmem:[%s1 + $0x58] sm:$0xf]
  %v49 = vld [vmem:[%s1 + $0x5c] sm:$0xf]
  %v50 = vld [vmem:[%s1 + $0x60] sm:$0xf]
  %v51 = vld [vmem:[%s1 + $0x64] sm:$0xf]
  %v52 = vld [vmem:[%s1 + $0x68] sm:$0xf]
  %v53 = vld [vmem:[%s1 + $0x6c] sm:$0xf]
  %v54 = vld [vmem:[%s1 + $0x70] sm:$0xf]
  %v55 = vld [vmem:[%s1 + $0x74] sm:$0xf]
  %v56 = vld [vmem:[%s1 + $0x78] sm:$0xf]
  %v57 = vld [vmem:[%s1 + $0x7c] sm:$0xf]
  %v58 = vld [vmem:[%s1 + $0x80] sm:$0xf]
  %v59 = vld [vmem:[%s1 + $0x84] sm:$0xf]
  %v60 = vld [vmem:[%s1 + $0x88] sm:$0xf]
  %v61 = vld [vmem:[%s1 + $0x8c] sm:$0xf]
  %v70 = vunpack.c.l.b16 %v18
  %v71 = vunpack.c.h.b16 %v18
  %v72 = vunpack.c.l.b16 %v19
  %v73 = vunpack.c.l.b16 %v20
  %v74 = vunpack.c.h.b16 %v20
  %v75 = vunpack.c.l.b16 %v21
  %v76 = vunpack.c.l.b16 %v22
  %v77 = vunpack.c.h.b16 %v22
  %v78 = vunpack.c.l.b16 %v23
  %v79 = vunpack.c.l.b16 %v24
  %v80 = vunpack.c.h.b16 %v24
  %v81 = vunpack.c.l.b16 %v25
  %v82 = vpack.c.b16 %v73, %v70
  %v83 = vpack.c.b16 %v74, %v71
  %v84 = vpack.c.b16 %v75, %v72
  %v85 = vpack.c.b16 %v79, %v76
  %v86 = vpack.c.b16 %v80, %v77
  %v87 = vpack.c.b16 %v81, %v78
  %v128 = vunpack.c.l.b16 %v26
  %v129 = vunpack.c.l.b16 %v27
  %v130 = vunpack.c.l.b16 %v28
  %v131 = vunpack.c.l.b16 %v29
  %v132 = vunpack.c.l.b16 %v30
  %v133 = vunpack.c.l.b16 %v31
  %v134 = vunpack.c.l.b16 %v32
  %v135 = vunpack.c.l.b16 %v33
  %v136 = vunpack.c.l.b16 %v34
  %v137 = vunpack.c.l.b16 %v35
  %v138 = vunpack.c.l.b16 %v36
  %v139 = vunpack.c.l.b16 %v37
  %v140 = vunpack.c.l.b16 %v38
  %v141 = vunpack.c.l.b16 %v39
  %v142 = vunpack.c.l.b16 %v40
  %v143 = vunpack.c.l.b16 %v41
  %v144 = vunpack.c.l.b16 %v42
  %v145 = vunpack.c.l.b16 %v43
  %v146 = vunpack.c.l.b16 %v44
  %v147 = vunpack.c.l.b16 %v45
  %v148 = vunpack.c.l.b16 %v46
  %v149 = vunpack.c.l.b16 %v47
  %v150 = vunpack.c.l.b16 %v48
  %v151 = vunpack.c.l.b16 %v49
  %v152 = vunpack.c.l.b16 %v50
  %v153 = vunpack.c.l.b16 %v51
  %v154 = vunpack.c.l.b16 %v52
  %v155 = vunpack.c.l.b16 %v53
  %v156 = vunpack.c.l.b16 %v54
  %v157 = vunpack.c.l.b16 %v55
  %v158 = vunpack.c.l.b16 %v56
  %v159 = vunpack.c.l.b16 %v57
  %v160 = vunpack.c.l.b16 %v58
  %v161 = vunpack.c.l.b16 %v59
  %v162 = vunpack.c.l.b16 %v60
  %v163 = vunpack.c.l.b16 %v61
  %v164 = vpack.c.b16 %v129, %v128
  %v165 = vpack.c.b16 %v131, %v130
  %v166 = vpack.c.b16 %v133, %v132
  %v167 = vpack.c.b16 %v135, %v134
  %v168 = vpack.c.b16 %v137, %v136
  %v169 = vpack.c.b16 %v139, %v138
  %v170 = vpack.c.b16 %v141, %v140
  %v171 = vpack.c.b16 %v143, %v142
  %v172 = vpack.c.b16 %v145, %v144
  %v173 = vpack.c.b16 %v147, %v146
  %v174 = vpack.c.b16 %v149, %v148
  %v175 = vpack.c.b16 %v151, %v150
  %v176 = vpack.c.b16 %v153, %v152
  %v177 = vpack.c.b16 %v155, %v154
  %v178 = vpack.c.b16 %v157, %v156
  %v179 = vpack.c.b16 %v159, %v158
  %v180 = vpack.c.b16 %v161, %v160
  %v181 = vpack.c.b16 %v163, %v162
  %vm200 = vcmask 261120
  %v202 = vsel %vm200, %v84, 0
  %v205 = vsel %vm200, %v87, 0
  %207 = vmatprep.subr.bf16.mxu0 0
  %208 = vmatpush1.bf16.msra.mxu0 %v164
  %209 = vmatprep.subr.bf16.mxu0 0
  %210 = vmatpush1.bf16.msra.mxu0 %v165
  %211 = vmatprep.subr.bf16.mxu0 0
  %212 = vmatpush1.bf16.msra.mxu0 %v166
  %213 = vmatprep.subr.bf16.mxu0 0
  %214 = vmatpush1.bf16.msra.mxu0 %v167
  %215 = vmatprep.subr.bf16.mxu0 0
  %216 = vmatpush1.bf16.msra.mxu0 %v168
  %217 = vmatprep.subr.bf16.mxu0 0
  %218 = vmatpush1.bf16.msra.mxu0 %v169
  %219 = vmatprep.subr.bf16.mxu0 0
  %220 = vmatpush1.bf16.msra.mxu0 %v170
  %221 = vmatprep.subr.bf16.mxu0 0
  %222 = vmatpush1.bf16.msra.mxu0 %v171
  %223 = vmatprep.subr.bf16.mxu0 0
  %224 = vmatpush1.bf16.msra.mxu0 %v172
  %225 = vmatprep.subr.bf16.mxu0 0
  %226 = vmatpush1.bf16.msra.mxu0 %v173
  %227 = vmatprep.subr.bf16.mxu0 0
  %228 = vmatpush1.bf16.msra.mxu0 %v174
  %229 = vmatprep.subr.bf16.mxu0 0
  %230 = vmatpush1.bf16.msra.mxu0 %v175
  %231 = vmatprep.subr.bf16.mxu0 0
  %232 = vmatpush1.bf16.msra.mxu0 %v176
  %233 = vmatprep.subr.bf16.mxu0 0
  %234 = vmatpush1.bf16.msra.mxu0 %v177
  %235 = vmatprep.subr.bf16.mxu0 0
  %236 = vmatpush1.bf16.msra.mxu0 %v178
  %237 = vmatprep.subr.bf16.mxu0 0
  %238 = vmatpush1.bf16.msra.mxu0 %v179
  %239 = vmatprep.mubr.bf16.mxu0 %v83
  %240 = vmatmul.mubr.bf16.gmra.mrb[0].mxu0 %v82
  %v241 = vpop.f32.mrb[0].mxu0
  %v242 = vadd.f32 0.0, %v241
  %v243 = vpop.f32.mrb[0].mxu0
  %v244 = vpop.f32.mrb[0].mxu0
  %v245 = vadd.f32 0.0, %v244
  %v246 = vpop.f32.mrb[0].mxu0
  %247 = vmatprep.mubr.bf16.mxu0 %v86
  %248 = vmatmul.mubr.bf16.gmra.mrb[0].mxu0 %v85
  %v249 = vpop.f32.mrb[0].mxu0
  %v250 = vadd.f32 0.0, %v249
  %v251 = vpop.f32.mrb[0].mxu0
  %v252 = vpop.f32.mrb[0].mxu0
  %v253 = vadd.f32 0.0, %v252
  %v254 = vpop.f32.mrb[0].mxu0
  %255 = vdwg.mxu0
  %256 = vmatprep.subr.bf16.mxu0 0
  %257 = vmatpush1.bf16.msra.mxu0 %v180
  %258 = vmatprep.subr.bf16.mxu0 0
  %259 = vmatpush1.bf16.msra.mxu0 %v181
  %260 = vmatprep.subr.bf16.mxu0 0
  %261 = vmatpush1.bf16.msra.mxu0 0
  %262 = vmatprep.subr.bf16.mxu0 0
  %263 = vmatpush1.bf16.msra.mxu0 0
  %264 = vmatprep.subr.bf16.mxu0 0
  %265 = vmatpush1.bf16.msra.mxu0 0
  %266 = vmatprep.subr.bf16.mxu0 0
  %267 = vmatpush1.bf16.msra.mxu0 0
  %268 = vmatprep.subr.bf16.mxu0 0
  %269 = vmatpush1.bf16.msra.mxu0 0
  %270 = vmatprep.subr.bf16.mxu0 0
  %271 = vmatpush1.bf16.msra.mxu0 0
  %272 = vmatprep.subr.bf16.mxu0 0
  %273 = vmatpush1.bf16.msra.mxu0 0
  %274 = vmatprep.subr.bf16.mxu0 0
  %275 = vmatpush1.bf16.msra.mxu0 0
  %276 = vmatprep.subr.bf16.mxu0 0
  %277 = vmatpush1.bf16.msra.mxu0 0
  %278 = vmatprep.subr.bf16.mxu0 0
  %279 = vmatpush1.bf16.msra.mxu0 0
  %280 = vmatprep.subr.bf16.mxu0 0
  %281 = vmatpush1.bf16.msra.mxu0 0
  %282 = vmatprep.subr.bf16.mxu0 0
  %283 = vmatpush1.bf16.msra.mxu0 0
  %284 = vmatprep.subr.bf16.mxu0 0
  %285 = vmatpush1.bf16.msra.mxu0 0
  %286 = vmatprep.subr.bf16.mxu0 0
  %287 = vmatpush1.bf16.msra.mxu0 0
  %288 = vmatprep.mubr.bf16.mxu0 0
  %289 = vmatmul.mubr.bf16.gmra.mrb[0].mxu0 %v202
  %v290 = vpop.f32.mrb[0].mxu0
  %v291 = vadd.f32 %v242, %v290
  %v292 = vpop.f32.mrb[0].mxu0
  %v293 = vpop.f32.mrb[0].mxu0
  %v294 = vadd.f32 %v245, %v293
  %v295 = vpop.f32.mrb[0].mxu0
  %296 = vmatprep.mubr.bf16.mxu0 0
  %297 = vmatmul.mubr.bf16.gmra.mrb[0].mxu0 %v205
  %v298 = vpop.f32.mrb[0].mxu0
  %v299 = vadd.f32 %v250, %v298
  %v300 = vpop.f32.mrb[0].mxu0
  %v301 = vpop.f32.mrb[0].mxu0
  %v302 = vadd.f32 %v253, %v301
  %v303 = vpop.f32.mrb[0].mxu0
  %304 = vdwg.mxu0
  %v305 = vld [vmem:[%s2] sm:$0x1]
  %v306 = vld [vmem:[%s3] sm:$0x1]
  %vm307 = vcmask 523264
  %v308 = vsel %vm307, %v291, 0.0
  %v309 = vsel %vm307, %v294, 0.0
  %v310 = vadd.f32 %v308, %v309
  %v311 = vsel %vm307, %v299, 0.0
  %v312 = vadd.f32 %v310, %v311
  %v313 = vsel %vm307, %v302, 0.0
  %v314 = vadd.f32 %v312, %v313
  %v315 = vrot.slane %v314, 4
  %v316 = vadd.f32 %v314, %v315
  %v317 = vrot.slane %v316, 2
  %v318 = vadd.f32 %v316, %v317
  %v319 = vrot.slane %v318, 1
  %v320 = vadd.f32 %v318, %v319
  %v321 = vmul.f32 %v320, 0.03125
  %v322 = vsub.f32 %v291, %v321
  %v323 = vsub.f32 %v294, %v321
  %v324 = vsub.f32 %v299, %v321
  %v325 = vsub.f32 %v302, %v321
  %v326 = vmul.f32 %v322, %v322
  %v327 = vmul.f32 %v323, %v323
  %v328 = vmul.f32 %v324, %v324
  %v329 = vmul.f32 %v325, %v325
  %v330 = vsel %vm307, %v326, 0.0
  %v331 = vsel %vm307, %v327, 0.0
  %v332 = vadd.f32 %v330, %v331
  %v333 = vsel %vm307, %v328, 0.0
  %v334 = vadd.f32 %v332, %v333
  %v335 = vsel %vm307, %v329, 0.0
  %v336 = vadd.f32 %v334, %v335
  %v337 = vrot.slane %v336, 4
  %v338 = vadd.f32 %v336, %v337
  %v339 = vrot.slane %v338, 2
  %v340 = vadd.f32 %v338, %v339
  %v341 = vrot.slane %v340, 1
  %v342 = vadd.f32 %v340, %v341
  %v343 = vmul.f32 %v342, 0.03125
  %v344 = vadd.f32 %v343, 1e-05
  %v345 = vrsqrt.pop %v344
  %v346 = vmul.f32 %v345, %v305
  %v347 = vlaneseq
  %v348 = vshrl.u32 %v347, 7
  %v349 = vsub.s32 0, %v348
  %v350 = vrot.slane %v346, %v349
  %v351 = vmul.f32 %v322, %v350
  %v352 = vmul.f32 %v323, %v350
  %v353 = vmul.f32 %v324, %v350
  %v354 = vmul.f32 %v325, %v350
  %v356 = vlaneseq
  %v357 = vshrl.u32 %v356, 7
  %v358 = vsub.s32 0, %v357
  %v359 = vrot.slane %v306, %v358
  %v361 = vadd.f32 %v351, %v359
  %v362 = vadd.f32 %v352, %v359
  %v363 = vadd.f32 %v353, %v359
  %v364 = vadd.f32 %v354, %v359
  %v365 = vmax.f32 %v361, 0.0
  %v366 = vmax.f32 %v362, 0.0
  %v367 = vmax.f32 %v363, 0.0
  %v368 = vmax.f32 %v364, 0.0
  %v369 = vpack.c.bf16 %v366, %v365
  %v370 = vpack.c.bf16 %v368, %v367
  %v373 = vunpack.c.l.b16 %v369
  %v374 = vunpack.c.h.b16 %v369
  %v375 = vunpack.c.l.b16 %v370
  %v376 = vunpack.c.h.b16 %v370
  %v377 = vpack.c.b16 %v373, %v373
  %v378 = vpack.c.b16 %v374, %v374
  %v379 = vpack.c.b16 %v375, %v375
  %v380 = vpack.c.b16 %v376, %v376
  %vm385 = vcmask 519168
  %386 = vst.msk [vmem:[%s4] sm:$0xf] %vm385, %v377
  %387 = vst.msk [vmem:[%s4 + $0x4] sm:$0xf] %vm385, %v378
  %388 = vst.msk [vmem:[%s4 + $0x8] sm:$0xf] %vm385, %v379
  %389 = vst.msk [vmem:[%s4 + $0xc] sm:$0xf] %vm385, %v380
  // Predicated region
  $region18: #{cnn_forward.9} parent=0 // pred_check
    _
  $region19: #{cnn_forward.9} parent=0 // pred_check_branch
    %391 = sbr.rel (0) target = $region21
  $region20: #{cnn_forward.9} parent=0 // pred_region
    _
  $region21: #{cnn_forward.9} parent=0 // pred_fallthru
    _
  // Predicated region
  $region22: #{cnn_forward.9} parent=0 // pred_check
    _
  $region23: #{cnn_forward.9} parent=0 // pred_check_branch
    %393 = sbr.rel (0) target = $region25
  $region24: #{cnn_forward.9} parent=0 // pred_region
    _
  $region25: #{cnn_forward.9} parent=0 // pred_fallthru
    _

// kernel: cnn_forward.10
$region0: #{cnn_forward.10}
  #allocation0 [shape = 'u32[]', space=smem, size = 0x4, offset = 0x4, fixed_abs, tag = 'smem constant byte address 0x4 - core index']
  #allocation1 [shape = 'u32[144,128]{1,0:T(1,128)}', space=vmem, size = 0x12000, scoped, tag = 'internal scratch']
  %s0 = inlined_call_operand.vmem [shape: bf16[8,576], index: 0, kind: input, shape index: {}]
  %s1 = inlined_call_operand.vmem [shape: bf16[576,128], index: 1, kind: input, shape index: {}]
  %s2 = inlined_call_operand.vmem [shape: f32[1,128], index: 2, kind: input, shape index: {}]
  %s3 = inlined_call_operand.vmem [shape: f32[1,128], index: 3, kind: input, shape index: {}]
  %s4 = inlined_call_operand.vmem [shape: bf16[8,128], index: 4, kind: output, shape index: {}]
  %s5 = sld [smem:[#allocation0]]
  $region26: #{cnn_forward.10} parent=0
    _
  %s7 = ssub.s32 1, %s5
  %s8 = scalar_select 0, %s7, %s5
  // Predicated region
  $region2: #{cnn_forward.10} parent=0 // pred_check
    _
  $region3: #{cnn_forward.10} parent=0 // pred_check_branch
    %10 = sbr.rel (0) target = $region5
  $region4: #{cnn_forward.10} parent=0 // pred_region
    _
  $region5: #{cnn_forward.10} parent=0 // pred_fallthru
    _
  // Predicated region
  $region6: #{cnn_forward.10} parent=0 // pred_check
    _
  $region7: #{cnn_forward.10} parent=0 // pred_check_branch
    %12 = sbr.rel (0) target = $region9
  $region8: #{cnn_forward.10} parent=0 // pred_region
    _
  $region9: #{cnn_forward.10} parent=0 // pred_fallthru
    _
  // Predicated region
  $region10: #{cnn_forward.10} parent=0 // pred_check
    _
  $region11: #{cnn_forward.10} parent=0 // pred_check_branch
    %14 = sbr.rel (0) target = $region13
  $region12: #{cnn_forward.10} parent=0 // pred_region
    _
  $region13: #{cnn_forward.10} parent=0 // pred_fallthru
    _
  // Predicated region
  $region14: #{cnn_forward.10} parent=0 // pred_check
    _
  $region15: #{cnn_forward.10} parent=0 // pred_check_branch
    %16 = sbr.rel (0) target = $region17
  $region16: #{cnn_forward.10} parent=0 // pred_region
    _
  $region17: #{cnn_forward.10} parent=0 // pred_fallthru
    _
  %v18 = vld [vmem:[%s0] sm:$0xff]
  %v19 = vld [vmem:[%s0 + $0x8] sm:$0xff]
  %v20 = vld [vmem:[%s0 + $0x10] sm:$0xf]
  %v21 = vld [vmem:[%s1] sm:$0xf]
  %v22 = vld [vmem:[%s1 + $0x4] sm:$0xf]
  %v23 = vld [vmem:[%s1 + $0x8] sm:$0xf]
  %v24 = vld [vmem:[%s1 + $0xc] sm:$0xf]
  %v25 = vld [vmem:[%s1 + $0x10] sm:$0xf]
  %v26 = vld [vmem:[%s1 + $0x14] sm:$0xf]
  %v27 = vld [vmem:[%s1 + $0x18] sm:$0xf]
  %v28 = vld [vmem:[%s1 + $0x1c] sm:$0xf]
  %v29 = vld [vmem:[%s1 + $0x20] sm:$0xf]
  %v30 = vld [vmem:[%s1 + $0x24] sm:$0xf]
  %v31 = vld [vmem:[%s1 + $0x28] sm:$0xf]
  %v32 = vld [vmem:[%s1 + $0x2c] sm:$0xf]
  %v33 = vld [vmem:[%s1 + $0x30] sm:$0xf]
  %v34 = vld [vmem:[%s1 + $0x34] sm:$0xf]
  %v35 = vld [vmem:[%s1 + $0x38] sm:$0xf]
  %v36 = vld [vmem:[%s1 + $0x3c] sm:$0xf]
  %v37 = vld [vmem:[%s1 + $0x40] sm:$0xf]
  %v38 = vld [vmem:[%s1 + $0x44] sm:$0xf]
  %v39 = vld [vmem:[%s1 + $0x48] sm:$0xf]
  %v40 = vld [vmem:[%s1 + $0x4c] sm:$0xf]
  %v41 = vld [vmem:[%s1 + $0x50] sm:$0xf]
  %v42 = vld [vmem:[%s1 + $0x54] sm:$0xf]
  %v43 = vld [vmem:[%s1 + $0x58] sm:$0xf]
  %v44 = vld [vmem:[%s1 + $0x5c] sm:$0xf]
  %v45 = vld [vmem:[%s1 + $0x60] sm:$0xf]
  %v46 = vld [vmem:[%s1 + $0x64] sm:$0xf]
  %v47 = vld [vmem:[%s1 + $0x68] sm:$0xf]
  %v48 = vld [vmem:[%s1 + $0x6c] sm:$0xf]
  %v49 = vld [vmem:[%s1 + $0x70] sm:$0xf]
  %v50 = vld [vmem:[%s1 + $0x74] sm:$0xf]
  %v51 = vld [vmem:[%s1 + $0x78] sm:$0xf]
  %v52 = vld [vmem:[%s1 + $0x7c] sm:$0xf]
  %v53 = vld [vmem:[%s1 + $0x80] sm:$0xf]
  %v54 = vld [vmem:[%s1 + $0x84] sm:$0xf]
  %v55 = vld [vmem:[%s1 + $0x88] sm:$0xf]
  %v56 = vld [vmem:[%s1 + $0x8c] sm:$0xf]
  %v57 = vld [vmem:[%s1 + $0x90] sm:$0xf]
  %v58 = vld [vmem:[%s1 + $0x94] sm:$0xf]
  %v59 = vld [vmem:[%s1 + $0x98] sm:$0xf]
  %v60 = vld [vmem:[%s1 + $0x9c] sm:$0xf]
  %v61 = vld [vmem:[%s1 + $0xa0] sm:$0xf]
  %v62 = vld [vmem:[%s1 + $0xa4] sm:$0xf]
  %v63 = vld [vmem:[%s1 + $0xa8] sm:$0xf]
  %v64 = vld [vmem:[%s1 + $0xac] sm:$0xf]
  %v65 = vld [vmem:[%s1 + $0xb0] sm:$0xf]
  %v66 = vld [vmem:[%s1 + $0xb4] sm:$0xf]
  %v67 = vld [vmem:[%s1 + $0xb8] sm:$0xf]
  %v68 = vld [vmem:[%s1 + $0xbc] sm:$0xf]
  %v69 = vld [vmem:[%s1 + $0xc0] sm:$0xf]
  %v70 = vld [vmem:[%s1 + $0xc4] sm:$0xf]
  %v71 = vld [vmem:[%s1 + $0xc8] sm:$0xf]
  %v72 = vld [vmem:[%s1 + $0xcc] sm:$0xf]
  %v73 = vld [vmem:[%s1 + $0xd0] sm:$0xf]
  %v74 = vld [vmem:[%s1 + $0xd4] sm:$0xf]
  %v75 = vld [vmem:[%s1 + $0xd8] sm:$0xf]
  %v76 = vld [vmem:[%s1 + $0xdc] sm:$0xf]
  %v77 = vld [vmem:[%s1 + $0xe0] sm:$0xf]
  %v78 = vld [vmem:[%s1 + $0xe4] sm:$0xf]
  %v79 = vld [vmem:[%s1 + $0xe8] sm:$0xf]
  %v80 = vld [vmem:[%s1 + $0xec] sm:$0xf]
  %v81 = vld [vmem:[%s1 + $0xf0] sm:$0xf]
  %v82 = vld [vmem:[%s1 + $0xf4] sm:$0xf]
  %v83 = vld [vmem:[%s1 + $0xf8] sm:$0xf]
  %v84 = vld [vmem:[%s1 + $0xfc] sm:$0xf]
  %v85 = vld [vmem:[%s1 + $0x100] sm:$0xf]
  %v86 = vld [vmem:[%s1 + $0x104] sm:$0xf]
  %v87 = vld [vmem:[%s1 + $0x108] sm:$0xf]
  %v88 = vld [vmem:[%s1 + $0x10c] sm:$0xf]
  %v89 = vld [vmem:[%s1 + $0x110] sm:$0xf]
  %v90 = vld [vmem:[%s1 + $0x114] sm:$0xf]
  %v91 = vld [vmem:[%s1 + $0x118] sm:$0xf]
  %v92 = vld [vmem:[%s1 + $0x11c] sm:$0xf]
  %v96 = vunpack.c.l.b16 %v18
  %v97 = vunpack.c.h.b16 %v18
  %v98 = vunpack.c.l.b16 %v19
  %v99 = vunpack.c.h.b16 %v19
  %v100 = vunpack.c.l.b16 %v20
  %v101 = vpack.c.b16 %v96, %v96
  %v102 = vpack.c.b16 %v97, %v97
  %v103 = vpack.c.b16 %v98, %v98
  %v104 = vpack.c.b16 %v99, %v99
  %v105 = vpack.c.b16 %v100, %v100
  %v182 = vunpack.c.l.b16 %v21
  %v183 = vunpack.c.l.b16 %v22
  %v184 = vunpack.c.l.b16 %v23
  %v185 = vunpack.c.l.b16 %v24
  %v186 = vunpack.c.l.b16 %v25
  %v187 = vunpack.c.l.b16 %v26
  %v188 = vunpack.c.l.b16 %v27
  %v189 = vunpack.c.l.b16 %v28
  %v190 = vunpack.c.l.b16 %v29
  %v191 = vunpack.c.l.b16 %v30
  %v192 = vunpack.c.l.b16 %v31
  %v193 = vunpack.c.l.b16 %v32
  %v194 = vunpack.c.l.b16 %v33
  %v195 = vunpack.c.l.b16 %v34
  %v196 = vunpack.c.l.b16 %v35
  %v197 = vunpack.c.l.b16 %v36
  %v198 = vunpack.c.l.b16 %v37
  %v199 = vunpack.c.l.b16 %v38
  %v200 = vunpack.c.l.b16 %v39
  %v201 = vunpack.c.l.b16 %v40
  %v202 = vunpack.c.l.b16 %v41
  %v203 = vunpack.c.l.b16 %v42
  %v204 = vunpack.c.l.b16 %v43
  %v205 = vunpack.c.l.b16 %v44
  %v206 = vunpack.c.l.b16 %v45
  %v207 = vunpack.c.l.b16 %v46
  %v208 = vunpack.c.l.b16 %v47
  %v209 = vunpack.c.l.b16 %v48
  %v210 = vunpack.c.l.b16 %v49
  %v211 = vunpack.c.l.b16 %v50
  %v212 = vunpack.c.l.b16 %v51
  %v213 = vunpack.c.l.b16 %v52
  %v214 = vunpack.c.l.b16 %v53
  %v215 = vunpack.c.l.b16 %v54
  %v216 = vunpack.c.l.b16 %v55
  %v217 = vunpack.c.l.b16 %v56
  %v218 = vunpack.c.l.b16 %v57
  %v219 = vunpack.c.l.b16 %v58
  %v220 = vunpack.c.l.b16 %v59
  %v221 = vunpack.c.l.b16 %v60
  %v222 = vunpack.c.l.b16 %v61
  %v223 = vunpack.c.l.b16 %v62
  %v224 = vunpack.c.l.b16 %v63
  %v225 = vunpack.c.l.b16 %v64
  %v226 = vunpack.c.l.b16 %v65
  %v227 = vunpack.c.l.b16 %v66
  %v228 = vunpack.c.l.b16 %v67
  %v229 = vunpack.c.l.b16 %v68
  %v230 = vunpack.c.l.b16 %v69
  %v231 = vunpack.c.l.b16 %v70
  %v232 = vunpack.c.l.b16 %v71
  %v233 = vunpack.c.l.b16 %v72
  %v234 = vunpack.c.l.b16 %v73
  %v235 = vunpack.c.l.b16 %v74
  %v236 = vunpack.c.l.b16 %v75
  %v237 = vunpack.c.l.b16 %v76
  %v238 = vunpack.c.l.b16 %v77
  %v239 = vunpack.c.l.b16 %v78
  %v240 = vunpack.c.l.b16 %v79
  %v241 = vunpack.c.l.b16 %v80
  %v242 = vunpack.c.l.b16 %v81
  %v243 = vunpack.c.l.b16 %v82
  %v244 = vunpack.c.l.b16 %v83
  %v245 = vunpack.c.l.b16 %v84
  %v246 = vunpack.c.l.b16 %v85
  %v247 = vunpack.c.l.b16 %v86
  %v248 = vunpack.c.l.b16 %v87
  %v249 = vunpack.c.l.b16 %v88
  %v250 = vunpack.c.l.b16 %v89
  %v251 = vunpack.c.l.b16 %v90
  %v252 = vunpack.c.l.b16 %v91
  %v253 = vunpack.c.l.b16 %v92
  %v254 = vpack.c.b16 %v183, %v182
  %v255 = vpack.c.b16 %v185, %v184
  %v256 = vpack.c.b16 %v187, %v186
  %v257 = vpack.c.b16 %v189, %v188
  %v258 = vpack.c.b16 %v191, %v190
  %v259 = vpack.c.b16 %v193, %v192
  %v260 = vpack.c.b16 %v195, %v194
  %v261 = vpack.c.b16 %v197, %v196
  %v262 = vpack.c.b16 %v199, %v198
  %v263 = vpack.c.b16 %v201, %v200
  %v264 = vpack.c.b16 %v203, %v202
  %v265 = vpack.c.b16 %v205, %v204
  %v266 = vpack.c.b16 %v207, %v206
  %v267 = vpack.c.b16 %v209, %v208
  %v268 = vpack.c.b16 %v211, %v210
  %v269 = vpack.c.b16 %v213, %v212
  %v270 = vpack.c.b16 %v215, %v214
  %v271 = vpack.c.b16 %v217, %v216
  %v272 = vpack.c.b16 %v219, %v218
  %v273 = vpack.c.b16 %v221, %v220
  %v274 = vpack.c.b16 %v223, %v222
  %v275 = vpack.c.b16 %v225, %v224
  %v276 = vpack.c.b16 %v227, %v226
  %v277 = vpack.c.b16 %v229, %v228
  %v278 = vpack.c.b16 %v231, %v230
  %v279 = vpack.c.b16 %v233, %v232
  %v280 = vpack.c.b16 %v235, %v234
  %v281 = vpack.c.b16 %v237, %v236
  %v282 = vpack.c.b16 %v239, %v238
  %v283 = vpack.c.b16 %v241, %v240
  %v284 = vpack.c.b16 %v243, %v242
  %v285 = vpack.c.b16 %v245, %v244
  %v286 = vpack.c.b16 %v247, %v246
  %v287 = vpack.c.b16 %v249, %v248
  %v288 = vpack.c.b16 %v251, %v250
  %v289 = vpack.c.b16 %v253, %v252
  %vm326 = vcmask 523264
  %v328 = vsel %vm326, %v105, 0
  %330 = vmatprep.subr.bf16.mxu0 0
  %331 = vmatpush1.bf16.msra.mxu0 %v254
  %332 = vmatprep.subr.bf16.mxu0 0
  %333 = vmatpush1.bf16.msra.mxu0 %v255
  %334 = vmatprep.subr.bf16.mxu0 0
  %335 = vmatpush1.bf16.msra.mxu0 %v256
  %336 = vmatprep.subr.bf16.mxu0 0
  %337 = vmatpush1.bf16.msra.mxu0 %v257
  %338 = vmatprep.subr.bf16.mxu0 0
  %339 = vmatpush1.bf16.msra.mxu0 %v258
  %340 = vmatprep.subr.bf16.mxu0 0
  %341 = vmatpush1.bf16.msra.mxu0 %v259
  %342 = vmatprep.subr.bf16.mxu0 0
  %343 = vmatpush1.bf16.msra.mxu0 %v260
  %344 = vmatprep.subr.bf16.mxu0 0
  %345 = vmatpush1.bf16.msra.mxu0 %v261
  %346 = vmatprep.subr.bf16.mxu0 0
  %347 = vmatpush1.bf16.msra.mxu0 %v262
  %348 = vmatprep.subr.bf16.mxu0 0
  %349 = vmatpush1.bf16.msra.mxu0 %v263
  %350 = vmatprep.subr.bf16.mxu0 0
  %351 = vmatpush1.bf16.msra.mxu0 %v264
  %352 = vmatprep.subr.bf16.mxu0 0
  %353 = vmatpush1.bf16.msra.mxu0 %v265
  %354 = vmatprep.subr.bf16.mxu0 0
  %355 = vmatpush1.bf16.msra.mxu0 %v266
  %356 = vmatprep.subr.bf16.mxu0 0
  %357 = vmatpush1.bf16.msra.mxu0 %v267
  %358 = vmatprep.subr.bf16.mxu0 0
  %359 = vmatpush1.bf16.msra.mxu0 %v268
  %360 = vmatprep.subr.bf16.mxu0 0
  %361 = vmatpush1.bf16.msra.mxu0 %v269
  %362 = vmatprep.mubr.bf16.mxu0 %v102
  %363 = vmatmul.mubr.bf16.gmra.mrb[0].mxu0 %v101
  %v364 = vpop.f32.mrb[0].mxu0
  %v365 = vadd.f32 0.0, %v364
  %v366 = vpop.f32.mrb[0].mxu0
  %v367 = vpop.f32.mrb[0].mxu0
  %v368 = vpop.f32.mrb[0].mxu0
  %369 = vdwg.mxu0
  %370 = vmatprep.subr.bf16.mxu0 0
  %371 = vmatpush1.bf16.msra.mxu0 %v270
  %372 = vmatprep.subr.bf16.mxu0 0
  %373 = vmatpush1.bf16.msra.mxu0 %v271
  %374 = vmatprep.subr.bf16.mxu0 0
  %375 = vmatpush1.bf16.msra.mxu0 %v272
  %376 = vmatprep.subr.bf16.mxu0 0
  %377 = vmatpush1.bf16.msra.mxu0 %v273
  %378 = vmatprep.subr.bf16.mxu0 0
  %379 = vmatpush1.bf16.msra.mxu0 %v274
  %380 = vmatprep.subr.bf16.mxu0 0
  %381 = vmatpush1.bf16.msra.mxu0 %v275
  %382 = vmatprep.subr.bf16.mxu0 0
  %383 = vmatpush1.bf16.msra.mxu0 %v276
  %384 = vmatprep.subr.bf16.mxu0 0
  %385 = vmatpush1.bf16.msra.mxu0 %v277
  %386 = vmatprep.subr.bf16.mxu0 0
  %387 = vmatpush1.bf16.msra.mxu0 %v278
  %388 = vmatprep.subr.bf16.mxu0 0
  %389 = vmatpush1.bf16.msra.mxu0 %v279
  %390 = vmatprep.subr.bf16.mxu0 0
  %391 = vmatpush1.bf16.msra.mxu0 %v280
  %392 = vmatprep.subr.bf16.mxu0 0
  %393 = vmatpush1.bf16.msra.mxu0 %v281
  %394 = vmatprep.subr.bf16.mxu0 0
  %395 = vmatpush1.bf16.msra.mxu0 %v282
  %396 = vmatprep.subr.bf16.mxu0 0
  %397 = vmatpush1.bf16.msra.mxu0 %v283
  %398 = vmatprep.subr.bf16.mxu0 0
  %399 = vmatpush1.bf16.msra.mxu0 %v284
  %400 = vmatprep.subr.bf16.mxu0 0
  %401 = vmatpush1.bf16.msra.mxu0 %v285
  %402 = vmatprep.mubr.bf16.mxu0 %v104
  %403 = vmatmul.mubr.bf16.gmra.mrb[0].mxu0 %v103
  %v404 = vpop.f32.mrb[0].mxu0
  %v405 = vadd.f32 %v365, %v404
  %v406 = vpop.f32.mrb[0].mxu0
  %v407 = vpop.f32.mrb[0].mxu0
  %v408 = vpop.f32.mrb[0].mxu0
  %409 = vdwg.mxu0
  %410 = vmatprep.subr.bf16.mxu0 0
  %411 = vmatpush1.bf16.msra.mxu0 %v286
  %412 = vmatprep.subr.bf16.mxu0 0
  %413 = vmatpush1.bf16.msra.mxu0 %v287
  %414 = vmatprep.subr.bf16.mxu0 0
  %415 = vmatpush1.bf16.msra.mxu0 %v288
  %416 = vmatprep.subr.bf16.mxu0 0
  %417 = vmatpush1.bf16.msra.mxu0 %v289
  %418 = vmatprep.subr.bf16.mxu0 0
  %419 = vmatpush1.bf16.msra.mxu0 0
  %420 = vmatprep.subr.bf16.mxu0 0
  %421 = vmatpush1.bf16.msra.mxu0 0
  %422 = vmatprep.subr.bf16.mxu0 0
  %423 = vmatpush1.bf16.msra.mxu0 0
  %424 = vmatprep.subr.bf16.mxu0 0
  %425 = vmatpush1.bf16.msra.mxu0 0
  %426 = vmatprep.subr.bf16.mxu0 0
  %427 = vmatpush1.bf16.msra.mxu0 0
  %428 = vmatprep.subr.bf16.mxu0 0
  %429 = vmatpush1.bf16.msra.mxu0 0
  %430 = vmatprep.subr.bf16.mxu0 0
  %431 = vmatpush1.bf16.msra.mxu0 0
  %432 = vmatprep.subr.bf16.mxu0 0
  %433 = vmatpush1.bf16.msra.mxu0 0
  %434 = vmatprep.subr.bf16.mxu0 0
  %435 = vmatpush1.bf16.msra.mxu0 0
  %436 = vmatprep.subr.bf16.mxu0 0
  %437 = vmatpush1.bf16.msra.mxu0 0
  %438 = vmatprep.subr.bf16.mxu0 0
  %439 = vmatpush1.bf16.msra.mxu0 0
  %440 = vmatprep.subr.bf16.mxu0 0
  %441 = vmatpush1.bf16.msra.mxu0 0
  %442 = vmatprep.mubr.bf16.mxu0 0
  %443 = vmatmul.mubr.bf16.gmra.mrb[0].mxu0 %v328
  %v444 = vpop.f32.mrb[0].mxu0
  %v445 = vadd.f32 %v405, %v444
  %v446 = vpop.f32.mrb[0].mxu0
  %v447 = vpop.f32.mrb[0].mxu0
  %v448 = vpop.f32.mrb[0].mxu0
  %449 = vdwg.mxu0
  %v450 = vld [vmem:[%s2] sm:$0x1]
  %v451 = vld [vmem:[%s3] sm:$0x1]
  %v452 = vrot.slane %v445, 4
  %v453 = vadd.f32 %v445, %v452
  %v454 = vrot.slane %v453, 2
  %v455 = vadd.f32 %v453, %v454
  %v456 = vrot.slane %v455, 1
  %v457 = vadd.f32 %v455, %v456
  %v458 = vmul.f32 %v457, 0.125
  %v459 = vsub.f32 %v445, %v458
  %v460 = vmul.f32 %v459, %v459
  %v461 = vrot.slane %v460, 4
  %v462 = vadd.f32 %v460, %v461
  %v463 = vrot.slane %v462, 2
  %v464 = vadd.f32 %v462, %v463
  %v465 = vrot.slane %v464, 1
  %v466 = vadd.f32 %v464, %v465
  %v467 = vmul.f32 %v466, 0.125
  %v468 = vadd.f32 %v467, 1e-05
  %v469 = vrsqrt.pop %v468
  %v470 = vmul.f32 %v469, %v450
  %v471 = vlaneseq
  %v472 = vshrl.u32 %v471, 7
  %v473 = vsub.s32 0, %v472
  %v474 = vrot.slane %v470, %v473
  %v475 = vmul.f32 %v459, %v474
  %v477 = vlaneseq
  %v478 = vshrl.u32 %v477, 7
  %v479 = vsub.s32 0, %v478
  %v480 = vrot.slane %v451, %v479
  %v482 = vadd.f32 %v475, %v480
  %v483 = vmax.f32 %v482, 0.0
  %v484 = vpack.c.bf16 %v483, %v483
  %485 = vst [vmem:[%s4] sm:$0xf] %v484
  // Predicated region
  $region18: #{cnn_forward.10} parent=0 // pred_check
    _
  $region19: #{cnn_forward.10} parent=0 // pred_check_branch
    %487 = sbr.rel (0) target = $region21
  $region20: #{cnn_forward.10} parent=0 // pred_region
    _
  $region21: #{cnn_forward.10} parent=0 // pred_fallthru
    _
  // Predicated region
  $region22: #{cnn_forward.10} parent=0 // pred_check
    _
  $region23: #{cnn_forward.10} parent=0 // pred_check_branch
    %489 = sbr.rel (0) target = $region25
  $region24: #{cnn_forward.10} parent=0 // pred_region
    _
  $region25: #{cnn_forward.10} parent=0 // pred_fallthru
    _

// kernel: cnn_forward.11
$region0: #{cnn_forward.11}
  #allocation0 [shape = 'u32[]', space=smem, size = 0x4, offset = 0x4, fixed_abs, tag = 'smem constant byte address 0x4 - core index']
  #allocation1 [shape = 'u32[144,128]{1,0:T(1,128)}', space=vmem, size = 0x12000, scoped, tag = 'internal scratch']
  %s0 = inlined_call_operand.vmem [shape: bf16[8,1152], index: 0, kind: input, shape index: {}]
  %s1 = inlined_call_operand.vmem [shape: bf16[1152,128], index: 1, kind: input, shape index: {}]
  %s2 = inlined_call_operand.vmem [shape: f32[1,128], index: 2, kind: input, shape index: {}]
  %s3 = inlined_call_operand.vmem [shape: f32[1,128], index: 3, kind: input, shape index: {}]
  %s4 = inlined_call_operand.vmem [shape: f32[1,128], index: 4, kind: input, shape index: {}]
  %s5 = inlined_call_operand.vmem [shape: f32[1,128], index: 5, kind: input, shape index: {}]
  %s6 = inlined_call_operand.vmem [shape: bf16[8,128], index: 6, kind: output, shape index: {}]
  %s7 = sld [smem:[#allocation0]]
  $region34: #{cnn_forward.11} parent=0
    _
  %s9 = ssub.s32 1, %s7
  %s10 = scalar_select 0, %s9, %s7
  // Predicated region
  $region2: #{cnn_forward.11} parent=0 // pred_check
    _
  $region3: #{cnn_forward.11} parent=0 // pred_check_branch
    %12 = sbr.rel (0) target = $region5
  $region4: #{cnn_forward.11} parent=0 // pred_region
    _
  $region5: #{cnn_forward.11} parent=0 // pred_fallthru
    _
  // Predicated region
  $region6: #{cnn_forward.11} parent=0 // pred_check
    _
  $region7: #{cnn_forward.11} parent=0 // pred_check_branch
    %14 = sbr.rel (0) target = $region9
  $region8: #{cnn_forward.11} parent=0 // pred_region
    _
  $region9: #{cnn_forward.11} parent=0 // pred_fallthru
    _
  // Predicated region
  $region10: #{cnn_forward.11} parent=0 // pred_check
    _
  $region11: #{cnn_forward.11} parent=0 // pred_check_branch
    %16 = sbr.rel (0) target = $region13
  $region12: #{cnn_forward.11} parent=0 // pred_region
    _
  $region13: #{cnn_forward.11} parent=0 // pred_fallthru
    _
  // Predicated region
  $region14: #{cnn_forward.11} parent=0 // pred_check
    _
  $region15: #{cnn_forward.11} parent=0 // pred_check_branch
    %18 = sbr.rel (0) target = $region17
  $region16: #{cnn_forward.11} parent=0 // pred_region
    _
  $region17: #{cnn_forward.11} parent=0 // pred_fallthru
    _
  // Predicated region
  $region18: #{cnn_forward.11} parent=0 // pred_check
    _
  $region19: #{cnn_forward.11} parent=0 // pred_check_branch
    %20 = sbr.rel (0) target = $region21
  $region20: #{cnn_forward.11} parent=0 // pred_region
    _
  $region21: #{cnn_forward.11} parent=0 // pred_fallthru
    _
  // Predicated region
  $region22: #{cnn_forward.11} parent=0 // pred_check
    _
  $region23: #{cnn_forward.11} parent=0 // pred_check_branch
    %22 = sbr.rel (0) target = $region25
  $region24: #{cnn_forward.11} parent=0 // pred_region
    _
  $region25: #{cnn_forward.11} parent=0 // pred_fallthru
    _
  %v24 = vld [vmem:[%s0] sm:$0xff]
  %v25 = vld [vmem:[%s0 + $0x8] sm:$0xff]
  %v26 = vld [vmem:[%s0 + $0x10] sm:$0xff]
  %v27 = vld [vmem:[%s0 + $0x18] sm:$0xff]
  %v28 = vld [vmem:[%s0 + $0x20] sm:$0xf]
  %v29 = vld [vmem:[%s1] sm:$0xf]
  %v30 = vld [vmem:[%s1 + $0x4] sm:$0xf]
  %v31 = vld [vmem:[%s1 + $0x8] sm:$0xf]
  %v32 = vld [vmem:[%s1 + $0xc] sm:$0xf]
  %v33 = vld [vmem:[%s1 + $0x10] sm:$0xf]
  %v34 = vld [vmem:[%s1 + $0x14] sm:$0xf]
  %v35 = vld [vmem:[%s1 + $0x18] sm:$0xf]
  %v36 = vld [vmem:[%s1 + $0x1c] sm:$0xf]
  %v37 = vld [vmem:[%s1 + $0x20] sm:$0xf]
  %v38 = vld [vmem:[%s1 + $0x24] sm:$0xf]
  %v39 = vld [vmem:[%s1 + $0x28] sm:$0xf]
  %v40 = vld [vmem:[%s1 + $0x2c] sm:$0xf]
  %v41 = vld [vmem:[%s1 + $0x30] sm:$0xf]
  %v42 = vld [vmem:[%s1 + $0x34] sm:$0xf]
  %v43 = vld [vmem:[%s1 + $0x38] sm:$0xf]
  %v44 = vld [vmem:[%s1 + $0x3c] sm:$0xf]
  %v45 = vld [vmem:[%s1 + $0x40] sm:$0xf]
  %v46 = vld [vmem:[%s1 + $0x44] sm:$0xf]
  %v47 = vld [vmem:[%s1 + $0x48] sm:$0xf]
  %v48 = vld [vmem:[%s1 + $0x4c] sm:$0xf]
  %v49 = vld [vmem:[%s1 + $0x50] sm:$0xf]
  %v50 = vld [vmem:[%s1 + $0x54] sm:$0xf]
  %v51 = vld [vmem:[%s1 + $0x58] sm:$0xf]
  %v52 = vld [vmem:[%s1 + $0x5c] sm:$0xf]
  %v53 = vld [vmem:[%s1 + $0x60] sm:$0xf]
  %v54 = vld [vmem:[%s1 + $0x64] sm:$0xf]
  %v55 = vld [vmem:[%s1 + $0x68] sm:$0xf]
  %v56 = vld [vmem:[%s1 + $0x6c] sm:$0xf]
  %v57 = vld [vmem:[%s1 + $0x70] sm:$0xf]
  %v58 = vld [vmem:[%s1 + $0x74] sm:$0xf]
  %v59 = vld [vmem:[%s1 + $0x78] sm:$0xf]
  %v60 = vld [vmem:[%s1 + $0x7c] sm:$0xf]
  %v61 = vld [vmem:[%s1 + $0x80] sm:$0xf]
  %v62 = vld [vmem:[%s1 + $0x84] sm:$0xf]
  %v63 = vld [vmem:[%s1 + $0x88] sm:$0xf]
  %v64 = vld [vmem:[%s1 + $0x8c] sm:$0xf]
  %v65 = vld [vmem:[%s1 + $0x90] sm:$0xf]
  %v66 = vld [vmem:[%s1 + $0x94] sm:$0xf]
  %v67 = vld [vmem:[%s1 + $0x98] sm:$0xf]
  %v68 = vld [vmem:[%s1 + $0x9c] sm:$0xf]
  %v69 = vld [vmem:[%s1 + $0xa0] sm:$0xf]
  %v70 = vld [vmem:[%s1 + $0xa4] sm:$0xf]
  %v71 = vld [vmem:[%s1 + $0xa8] sm:$0xf]
  %v72 = vld [vmem:[%s1 + $0xac] sm:$0xf]
  %v73 = vld [vmem:[%s1 + $0xb0] sm:$0xf]
  %v74 = vld [vmem:[%s1 + $0xb4] sm:$0xf]
  %v75 = vld [vmem:[%s1 + $0xb8] sm:$0xf]
  %v76 = vld [vmem:[%s1 + $0xbc] sm:$0xf]
  %v77 = vld [vmem:[%s1 + $0xc0] sm:$0xf]
  %v78 = vld [vmem:[%s1 + $0xc4] sm:$0xf]
  %v79 = vld [vmem:[%s1 + $0xc8] sm:$0xf]
  %v80 = vld [vmem:[%s1 + $0xcc] sm:$0xf]
  %v81 = vld [vmem:[%s1 + $0xd0] sm:$0xf]
  %v82 = vld [vmem:[%s1 + $0xd4] sm:$0xf]
  %v83 = vld [vmem:[%s1 + $0xd8] sm:$0xf]
  %v84 = vld [vmem:[%s1 + $0xdc] sm:$0xf]
  %v85 = vld [vmem:[%s1 + $0xe0] sm:$0xf]
  %v86 = vld [vmem:[%s1 + $0xe4] sm:$0xf]
  %v87 = vld [vmem:[%s1 + $0xe8] sm:$0xf]
  %v88 = vld [vmem:[%s1 + $0xec] sm:$0xf]
  %v89 = vld [vmem:[%s1 + $0xf0] sm:$0xf]
  %v90 = vld [vmem:[%s1 + $0xf4] sm:$0xf]
  %v91 = vld [vmem:[%s1 + $0xf8] sm:$0xf]
  %v92 = vld [vmem:[%s1 + $0xfc] sm:$0xf]
  %v93 = vld [vmem:[%s1 + $0x100] sm:$0xf]
  %v94 = vld [vmem:[%s1 + $0x104] sm:$0xf]
  %v95 = vld [vmem:[%s1 + $0x108] sm:$0xf]
  %v96 = vld [vmem:[%s1 + $0x10c] sm:$0xf]
  %v97 = vld [vmem:[%s1 + $0x110] sm:$0xf]
  %v98 = vld [vmem:[%s1 + $0x114] sm:$0xf]
  %v99 = vld [vmem:[%s1 + $0x118] sm:$0xf]
  %v100 = vld [vmem:[%s1 + $0x11c] sm:$0xf]
  %v101 = vld [vmem:[%s1 + $0x120] sm:$0xf]
  %v102 = vld [vmem:[%s1 + $0x124] sm:$0xf]
  %v103 = vld [vmem:[%s1 + $0x128] sm:$0xf]
  %v104 = vld [vmem:[%s1 + $0x12c] sm:$0xf]
  %v105 = vld [vmem:[%s1 + $0x130] sm:$0xf]
  %v106 = vld [vmem:[%s1 + $0x134] sm:$0xf]
  %v107 = vld [vmem:[%s1 + $0x138] sm:$0xf]
  %v108 = vld [vmem:[%s1 + $0x13c] sm:$0xf]
  %v109 = vld [vmem:[%s1 + $0x140] sm:$0xf]
  %v110 = vld [vmem:[%s1 + $0x144] sm:$0xf]
  %v111 = vld [vmem:[%s1 + $0x148] sm:$0xf]
  %v112 = vld [vmem:[%s1 + $0x14c] sm:$0xf]
  %v113 = vld [vmem:[%s1 + $0x150] sm:$0xf]
  %v114 = vld [vmem:[%s1 + $0x154] sm:$0xf]
  %v115 = vld [vmem:[%s1 + $0x158] sm:$0xf]
  %v116 = vld [vmem:[%s1 + $0x15c] sm:$0xf]
  %v117 = vld [vmem:[%s1 + $0x160] sm:$0xf]
  %v118 = vld [vmem:[%s1 + $0x164] sm:$0xf]
  %v119 = vld [vmem:[%s1 + $0x168] sm:$0xf]
  %v120 = vld [vmem:[%s1 + $0x16c] sm:$0xf]
  %v121 = vld [vmem:[%s1 + $0x170] sm:$0xf]
  %v122 = vld [vmem:[%s1 + $0x174] sm:$0xf]
  %v123 = vld [vmem:[%s1 + $0x178] sm:$0xf]
  %v124 = vld [vmem:[%s1 + $0x17c] sm:$0xf]
  %v125 = vld [vmem:[%s1 + $0x180] sm:$0xf]
  %v126 = vld [vmem:[%s1 + $0x184] sm:$0xf]
  %v127 = vld [vmem:[%s1 + $0x188] sm:$0xf]
  %v128 = vld [vmem:[%s1 + $0x18c] sm:$0xf]
  %v129 = vld [vmem:[%s1 + $0x190] sm:$0xf]
  %v130 = vld [vmem:[%s1 + $0x194] sm:$0xf]
  %v131 = vld [vmem:[%s1 + $0x198] sm:$0xf]
  %v132 = vld [vmem:[%s1 + $0x19c] sm:$0xf]
  %v133 = vld [vmem:[%s1 + $0x1a0] sm:$0xf]
  %v134 = vld [vmem:[%s1 + $0x1a4] sm:$0xf]
  %v135 = vld [vmem:[%s1 + $0x1a8] sm:$0xf]
  %v136 = vld [vmem:[%s1 + $0x1ac] sm:$0xf]
  %v137 = vld [vmem:[%s1 + $0x1b0] sm:$0xf]
  %v138 = vld [vmem:[%s1 + $0x1b4] sm:$0xf]
  %v139 = vld [vmem:[%s1 + $0x1b8] sm:$0xf]
  %v140 = vld [vmem:[%s1 + $0x1bc] sm:$0xf]
  %v141 = vld [vmem:[%s1 + $0x1c0] sm:$0xf]
  %v142 = vld [vmem:[%s1 + $0x1c4] sm:$0xf]
  %v143 = vld [vmem:[%s1 + $0x1c8] sm:$0xf]
  %v144 = vld [vmem:[%s1 + $0x1cc] sm:$0xf]
  %v145 = vld [vmem:[%s1 + $0x1d0] sm:$0xf]
  %v146 = vld [vmem:[%s1 + $0x1d4] sm:$0xf]
  %v147 = vld [vmem:[%s1 + $0x1d8] sm:$0xf]
  %v148 = vld [vmem:[%s1 + $0x1dc] sm:$0xf]
  %v149 = vld [vmem:[%s1 + $0x1e0] sm:$0xf]
  %v150 = vld [vmem:[%s1 + $0x1e4] sm:$0xf]
  %v151 = vld [vmem:[%s1 + $0x1e8] sm:$0xf]
  %v152 = vld [vmem:[%s1 + $0x1ec] sm:$0xf]
  %v153 = vld [vmem:[%s1 + $0x1f0] sm:$0xf]
  %v154 = vld [vmem:[%s1 + $0x1f4] sm:$0xf]
  %v155 = vld [vmem:[%s1 + $0x1f8] sm:$0xf]
  %v156 = vld [vmem:[%s1 + $0x1fc] sm:$0xf]
  %v157 = vld [vmem:[%s1 + $0x200] sm:$0xf]
  %v158 = vld [vmem:[%s1 + $0x204] sm:$0xf]
  %v159 = vld [vmem:[%s1 + $0x208] sm:$0xf]
  %v160 = vld [vmem:[%s1 + $0x20c] sm:$0xf]
  %v161 = vld [vmem:[%s1 + $0x210] sm:$0xf]
  %v162 = vld [vmem:[%s1 + $0x214] sm:$0xf]
  %v163 = vld [vmem:[%s1 + $0x218] sm:$0xf]
  %v164 = vld [vmem:[%s1 + $0x21c] sm:$0xf]
  %v165 = vld [vmem:[%s1 + $0x220] sm:$0xf]
  %v166 = vld [vmem:[%s1 + $0x224] sm:$0xf]
  %v167 = vld [vmem:[%s1 + $0x228] sm:$0xf]
  %v168 = vld [vmem:[%s1 + $0x22c] sm:$0xf]
  %v169 = vld [vmem:[%s1 + $0x230] sm:$0xf]
  %v170 = vld [vmem:[%s1 + $0x234] sm:$0xf]
  %v171 = vld [vmem:[%s1 + $0x238] sm:$0xf]
  %v172 = vld [vmem:[%s1 + $0x23c] sm:$0xf]
  %v178 = vunpack.c.l.b16 %v24
  %v179 = vunpack.c.h.b16 %v24
  %v180 = vunpack.c.l.b16 %v25
  %v181 = vunpack.c.h.b16 %v25
  %v182 = vunpack.c.l.b16 %v26
  %v183 = vunpack.c.h.b16 %v26
  %v184 = vunpack.c.l.b16 %v27
  %v185 = vunpack.c.h.b16 %v27
  %v186 = vunpack.c.l.b16 %v28
  %v187 = vpack.c.b16 %v178, %v178
  %v188 = vpack.c.b16 %v179, %v179
  %v189 = vpack.c.b16 %v180, %v180
  %v190 = vpack.c.b16 %v181, %v181
  %v191 = vpack.c.b16 %v182, %v182
  %v192 = vpack.c.b16 %v183, %v183
  %v193 = vpack.c.b16 %v184, %v184
  %v194 = vpack.c.b16 %v185, %v185
  %v195 = vpack.c.b16 %v186, %v186
  %v349 = vunpack.c.l.b16 %v29
  %v350 = vunpack.c.l.b16 %v30
  %v351 = vunpack.c.l.b16 %v31
  %v352 = vunpack.c.l.b16 %v32
  %v353 = vunpack.c.l.b16 %v33
  %v354 = vunpack.c.l.b16 %v34
  %v355 = vunpack.c.l.b16 %v35
  %v356 = vunpack.c.l.b16 %v36
  %v357 = vunpack.c.l.b16 %v37
  %v358 = vunpack.c.l.b16 %v38
  %v359 = vunpack.c.l.b16 %v39
  %v360 = vunpack.c.l.b16 %v40
  %v361 = vunpack.c.l.b16 %v41
  %v362 = vunpack.c.l.b16 %v42
  %v363 = vunpack.c.l.b16 %v43
  %v364 = vunpack.c.l.b16 %v44
  %v365 = vunpack.c.l.b16 %v45
  %v366 = vunpack.c.l.b16 %v46
  %v367 = vunpack.c.l.b16 %v47
  %v368 = vunpack.c.l.b16 %v48
  %v369 = vunpack.c.l.b16 %v49
  %v370 = vunpack.c.l.b16 %v50
  %v371 = vunpack.c.l.b16 %v51
  %v372 = vunpack.c.l.b16 %v52
  %v373 = vunpack.c.l.b16 %v53
  %v374 = vunpack.c.l.b16 %v54
  %v375 = vunpack.c.l.b16 %v55
  %v376 = vunpack.c.l.b16 %v56
  %v377 = vunpack.c.l.b16 %v57
  %v378 = vunpack.c.l.b16 %v58
  %v379 = vunpack.c.l.b16 %v59
  %v380 = vunpack.c.l.b16 %v60
  %v381 = vunpack.c.l.b16 %v61
  %v382 = vunpack.c.l.b16 %v62
  %v383 = vunpack.c.l.b16 %v63
  %v384 = vunpack.c.l.b16 %v64
  %v385 = vunpack.c.l.b16 %v65
  %v386 = vunpack.c.l.b16 %v66
  %v387 = vunpack.c.l.b16 %v67
  %v388 = vunpack.c.l.b16 %v68
  %v389 = vunpack.c.l.b16 %v69
  %v390 = vunpack.c.l.b16 %v70
  %v391 = vunpack.c.l.b16 %v71
  %v392 = vunpack.c.l.b16 %v72
  %v393 = vunpack.c.l.b16 %v73
  %v394 = vunpack.c.l.b16 %v74
  %v395 = vunpack.c.l.b16 %v75
  %v396 = vunpack.c.l.b16 %v76
  %v397 = vunpack.c.l.b16 %v77
  %v398 = vunpack.c.l.b16 %v78
  %v399 = vunpack.c.l.b16 %v79
  %v400 = vunpack.c.l.b16 %v80
  %v401 = vunpack.c.l.b16 %v81
  %v402 = vunpack.c.l.b16 %v82
  %v403 = vunpack.c.l.b16 %v83
  %v404 = vunpack.c.l.b16 %v84
  %v405 = vunpack.c.l.b16 %v85
  %v406 = vunpack.c.l.b16 %v86
  %v407 = vunpack.c.l.b16 %v87
  %v408 = vunpack.c.l.b16 %v88
  %v409 = vunpack.c.l.b16 %v89
  %v410 = vunpack.c.l.b16 %v90
  %v411 = vunpack.c.l.b16 %v91
  %v412 = vunpack.c.l.b16 %v92
  %v413 = vunpack.c.l.b16 %v93
  %v414 = vunpack.c.l.b16 %v94
  %v415 = vunpack.c.l.b16 %v95
  %v416 = vunpack.c.l.b16 %v96
  %v417 = vunpack.c.l.b16 %v97
  %v418 = vunpack.c.l.b16 %v98
  %v419 = vunpack.c.l.b16 %v99
  %v420 = vunpack.c.l.b16 %v100
  %v421 = vunpack.c.l.b16 %v101
  %v422 = vunpack.c.l.b16 %v102
  %v423 = vunpack.c.l.b16 %v103
  %v424 = vunpack.c.l.b16 %v104
  %v425 = vunpack.c.l.b16 %v105
  %v426 = vunpack.c.l.b16 %v106
  %v427 = vunpack.c.l.b16 %v107
  %v428 = vunpack.c.l.b16 %v108
  %v429 = vunpack.c.l.b16 %v109
  %v430 = vunpack.c.l.b16 %v110
  %v431 = vunpack.c.l.b16 %v111
  %v432 = vunpack.c.l.b16 %v112
  %v433 = vunpack.c.l.b16 %v113
  %v434 = vunpack.c.l.b16 %v114
  %v435 = vunpack.c.l.b16 %v115
  %v436 = vunpack.c.l.b16 %v116
  %v437 = vunpack.c.l.b16 %v117
  %v438 = vunpack.c.l.b16 %v118
  %v439 = vunpack.c.l.b16 %v119
  %v440 = vunpack.c.l.b16 %v120
  %v441 = vunpack.c.l.b16 %v121
  %v442 = vunpack.c.l.b16 %v122
  %v443 = vunpack.c.l.b16 %v123
  %v444 = vunpack.c.l.b16 %v124
  %v445 = vunpack.c.l.b16 %v125
  %v446 = vunpack.c.l.b16 %v126
  %v447 = vunpack.c.l.b16 %v127
  %v448 = vunpack.c.l.b16 %v128
  %v449 = vunpack.c.l.b16 %v129
  %v450 = vunpack.c.l.b16 %v130
  %v451 = vunpack.c.l.b16 %v131
  %v452 = vunpack.c.l.b16 %v132
  %v453 = vunpack.c.l.b16 %v133
  %v454 = vunpack.c.l.b16 %v134
  %v455 = vunpack.c.l.b16 %v135
  %v456 = vunpack.c.l.b16 %v136
  %v457 = vunpack.c.l.b16 %v137
  %v458 = vunpack.c.l.b16 %v138
  %v459 = vunpack.c.l.b16 %v139
  %v460 = vunpack.c.l.b16 %v140
  %v461 = vunpack.c.l.b16 %v141
  %v462 = vunpack.c.l.b16 %v142
  %v463 = vunpack.c.l.b16 %v143
  %v464 = vunpack.c.l.b16 %v144
  %v465 = vunpack.c.l.b16 %v145
  %v466 = vunpack.c.l.b16 %v146
  %v467 = vunpack.c.l.b16 %v147
  %v468 = vunpack.c.l.b16 %v148
  %v469 = vunpack.c.l.b16 %v149
  %v470 = vunpack.c.l.b16 %v150
  %v471 = vunpack.c.l.b16 %v151
  %v472 = vunpack.c.l.b16 %v152
  %v473 = vunpack.c.l.b16 %v153
  %v474 = vunpack.c.l.b16 %v154
  %v475 = vunpack.c.l.b16 %v155
  %v476 = vunpack.c.l.b16 %v156
  %v477 = vunpack.c.l.b16 %v157
  %v478 = vunpack.c.l.b16 %v158
  %v479 = vunpack.c.l.b16 %v159
  %v480 = vunpack.c.l.b16 %v160
  %v481 = vunpack.c.l.b16 %v161
  %v482 = vunpack.c.l.b16 %v162
  %v483 = vunpack.c.l.b16 %v163
  %v484 = vunpack.c.l.b16 %v164
  %v485 = vunpack.c.l.b16 %v165
  %v486 = vunpack.c.l.b16 %v166
  %v487 = vunpack.c.l.b16 %v167
  %v488 = vunpack.c.l.b16 %v168
  %v489 = vunpack.c.l.b16 %v169
  %v490 = vunpack.c.l.b16 %v170
  %v491 = vunpack.c.l.b16 %v171
  %v492 = vunpack.c.l.b16 %v172
  %v493 = vpack.c.b16 %v350, %v349
  %v494 = vpack.c.b16 %v352, %v351
  %v495 = vpack.c.b16 %v354, %v353
  %v496 = vpack.c.b16 %v356, %v355
  %v497 = vpack.c.b16 %v358, %v357
  %v498 = vpack.c.b16 %v360, %v359
  %v499 = vpack.c.b16 %v362, %v361
  %v500 = vpack.c.b16 %v364, %v363
  %v501 = vpack.c.b16 %v366, %v365
  %v502 = vpack.c.b16 %v368, %v367
  %v503 = vpack.c.b16 %v370, %v369
  %v504 = vpack.c.b16 %v372, %v371
  %v505 = vpack.c.b16 %v374, %v373
  %v506 = vpack.c.b16 %v376, %v375
  %v507 = vpack.c.b16 %v378, %v377
  %v508 = vpack.c.b16 %v380, %v379
  %v509 = vpack.c.b16 %v382, %v381
  %v510 = vpack.c.b16 %v384, %v383
  %v511 = vpack.c.b16 %v386, %v385
  %v512 = vpack.c.b16 %v388, %v387
  %v513 = vpack.c.b16 %v390, %v389
  %v514 = vpack.c.b16 %v392, %v391
  %v515 = vpack.c.b16 %v394, %v393
  %v516 = vpack.c.b16 %v396, %v395
  %v517 = vpack.c.b16 %v398, %v397
  %v518 = vpack.c.b16 %v400, %v399
  %v519 = vpack.c.b16 %v402, %v401
  %v520 = vpack.c.b16 %v404, %v403
  %v521 = vpack.c.b16 %v406, %v405
  %v522 = vpack.c.b16 %v408, %v407
  %v523 = vpack.c.b16 %v410, %v409
  %v524 = vpack.c.b16 %v412, %v411
  %v525 = vpack.c.b16 %v414, %v413
  %v526 = vpack.c.b16 %v416, %v415
  %v527 = vpack.c.b16 %v418, %v417
  %v528 = vpack.c.b16 %v420, %v419
  %v529 = vpack.c.b16 %v422, %v421
  %v530 = vpack.c.b16 %v424, %v423
  %v531 = vpack.c.b16 %v426, %v425
  %v532 = vpack.c.b16 %v428, %v427
  %v533 = vpack.c.b16 %v430, %v429
  %v534 = vpack.c.b16 %v432, %v431
  %v535 = vpack.c.b16 %v434, %v433
  %v536 = vpack.c.b16 %v436, %v435
  %v537 = vpack.c.b16 %v438, %v437
  %v538 = vpack.c.b16 %v440, %v439
  %v539 = vpack.c.b16 %v442, %v441
  %v540 = vpack.c.b16 %v444, %v443
  %v541 = vpack.c.b16 %v446, %v445
  %v542 = vpack.c.b16 %v448, %v447
  %v543 = vpack.c.b16 %v450, %v449
  %v544 = vpack.c.b16 %v452, %v451
  %v545 = vpack.c.b16 %v454, %v453
  %v546 = vpack.c.b16 %v456, %v455
  %v547 = vpack.c.b16 %v458, %v457
  %v548 = vpack.c.b16 %v460, %v459
  %v549 = vpack.c.b16 %v462, %v461
  %v550 = vpack.c.b16 %v464, %v463
  %v551 = vpack.c.b16 %v466, %v465
  %v552 = vpack.c.b16 %v468, %v467
  %v553 = vpack.c.b16 %v470, %v469
  %v554 = vpack.c.b16 %v472, %v471
  %v555 = vpack.c.b16 %v474, %v473
  %v556 = vpack.c.b16 %v476, %v475
  %v557 = vpack.c.b16 %v478, %v477
  %v558 = vpack.c.b16 %v480, %v479
  %v559 = vpack.c.b16 %v482, %v481
  %v560 = vpack.c.b16 %v484, %v483
  %v561 = vpack.c.b16 %v486, %v485
  %v562 = vpack.c.b16 %v488, %v487
  %v563 = vpack.c.b16 %v490, %v489
  %v564 = vpack.c.b16 %v492, %v491
  %637 = vmatprep.subr.bf16.mxu0 0
  %638 = vmatpush1.bf16.msra.mxu0 %v493
  %639 = vmatprep.subr.bf16.mxu0 0
  %640 = vmatpush1.bf16.msra.mxu0 %v494
  %641 = vmatprep.subr.bf16.mxu0 0
  %642 = vmatpush1.bf16.msra.mxu0 %v495
  %643 = vmatprep.subr.bf16.mxu0 0
  %644 = vmatpush1.bf16.msra.mxu0 %v496
  %645 = vmatprep.subr.bf16.mxu0 0
  %646 = vmatpush1.bf16.msra.mxu0 %v497
  %647 = vmatprep.subr.bf16.mxu0 0
  %648 = vmatpush1.bf16.msra.mxu0 %v498
  %649 = vmatprep.subr.bf16.mxu0 0
  %650 = vmatpush1.bf16.msra.mxu0 %v499
  %651 = vmatprep.subr.bf16.mxu0 0
  %652 = vmatpush1.bf16.msra.mxu0 %v500
  %653 = vmatprep.subr.bf16.mxu0 0
  %654 = vmatpush1.bf16.msra.mxu0 %v501
  %655 = vmatprep.subr.bf16.mxu0 0
  %656 = vmatpush1.bf16.msra.mxu0 %v502
  %657 = vmatprep.subr.bf16.mxu0 0
  %658 = vmatpush1.bf16.msra.mxu0 %v503
  %659 = vmatprep.subr.bf16.mxu0 0
  %660 = vmatpush1.bf16.msra.mxu0 %v504
  %661 = vmatprep.subr.bf16.mxu0 0
  %662 = vmatpush1.bf16.msra.mxu0 %v505
  %663 = vmatprep.subr.bf16.mxu0 0
  %664 = vmatpush1.bf16.msra.mxu0 %v506
  %665 = vmatprep.subr.bf16.mxu0 0
  %666 = vmatpush1.bf16.msra.mxu0 %v507
  %667 = vmatprep.subr.bf16.mxu0 0
  %668 = vmatpush1.bf16.msra.mxu0 %v508
  %669 = vmatprep.mubr.bf16.mxu0 %v188
  %670 = vmatmul.mubr.bf16.gmra.mrb[0].mxu0 %v187
  %v671 = vpop.f32.mrb[0].mxu0
  %v672 = vadd.f32 0.0, %v671
  %v673 = vpop.f32.mrb[0].mxu0
  %v674 = vpop.f32.mrb[0].mxu0
  %v675 = vpop.f32.mrb[0].mxu0
  %676 = vdwg.mxu0
  %677 = vmatprep.subr.bf16.mxu0 0
  %678 = vmatpush1.bf16.msra.mxu0 %v509
  %679 = vmatprep.subr.bf16.mxu0 0
  %680 = vmatpush1.bf16.msra.mxu0 %v510
  %681 = vmatprep.subr.bf16.mxu0 0
  %682 = vmatpush1.bf16.msra.mxu0 %v511
  %683 = vmatprep.subr.bf16.mxu0 0
  %684 = vmatpush1.bf16.msra.mxu0 %v512
  %685 = vmatprep.subr.bf16.mxu0 0
  %686 = vmatpush1.bf16.msra.mxu0 %v513
  %687 = vmatprep.subr.bf16.mxu0 0
  %688 = vmatpush1.bf16.msra.mxu0 %v514
  %689 = vmatprep.subr.bf16.mxu0 0
  %690 = vmatpush1.bf16.msra.mxu0 %v515
  %691 = vmatprep.subr.bf16.mxu0 0
  %692 = vmatpush1.bf16.msra.mxu0 %v516
  %693 = vmatprep.subr.bf16.mxu0 0
  %694 = vmatpush1.bf16.msra.mxu0 %v517
  %695 = vmatprep.subr.bf16.mxu0 0
  %696 = vmatpush1.bf16.msra.mxu0 %v518
  %697 = vmatprep.subr.bf16.mxu0 0
  %698 = vmatpush1.bf16.msra.mxu0 %v519
  %699 = vmatprep.subr.bf16.mxu0 0
  %700 = vmatpush1.bf16.msra.mxu0 %v520
  %701 = vmatprep.subr.bf16.mxu0 0
  %702 = vmatpush1.bf16.msra.mxu0 %v521
  %703 = vmatprep.subr.bf16.mxu0 0
  %704 = vmatpush1.bf16.msra.mxu0 %v522
  %705 = vmatprep.subr.bf16.mxu0 0
  %706 = vmatpush1.bf16.msra.mxu0 %v523
  %707 = vmatprep.subr.bf16.mxu0 0
  %708 = vmatpush1.bf16.msra.mxu0 %v524
  %709 = vmatprep.mubr.bf16.mxu0 %v190
  %710 = vmatmul.mubr.bf16.gmra.mrb[0].mxu0 %v189
  %v711 = vpop.f32.mrb[0].mxu0
  %v712 = vadd.f32 %v672, %v711
  %v713 = vpop.f32.mrb[0].mxu0
  %v714 = vpop.f32.mrb[0].mxu0
  %v715 = vpop.f32.mrb[0].mxu0
  %716 = vdwg.mxu0
  %717 = vmatprep.subr.bf16.mxu0 0
  %718 = vmatpush1.bf16.msra.mxu0 %v525
  %719 = vmatprep.subr.bf16.mxu0 0
  %720 = vmatpush1.bf16.msra.mxu0 %v526
  %721 = vmatprep.subr.bf16.mxu0 0
  %722 = vmatpush1.bf16.msra.mxu0 %v527
  %723 = vmatprep.subr.bf16.mxu0 0
  %724 = vmatpush1.bf16.msra.mxu0 %v528
  %725 = vmatprep.subr.bf16.mxu0 0
  %726 = vmatpush1.bf16.msra.mxu0 %v529
  %727 = vmatprep.subr.bf16.mxu0 0
  %728 = vmatpush1.bf16.msra.mxu0 %v530
  %729 = vmatprep.subr.bf16.mxu0 0
  %730 = vmatpush1.bf16.msra.mxu0 %v531
  %731 = vmatprep.subr.bf16.mxu0 0
  %732 = vmatpush1.bf16.msra.mxu0 %v532
  %733 = vmatprep.subr.bf16.mxu0 0
  %734 = vmatpush1.bf16.msra.mxu0 %v533
  %735 = vmatprep.subr.bf16.mxu0 0
  %736 = vmatpush1.bf16.msra.mxu0 %v534
  %737 = vmatprep.subr.bf16.mxu0 0
  %738 = vmatpush1.bf16.msra.mxu0 %v535
  %739 = vmatprep.subr.bf16.mxu0 0
  %740 = vmatpush1.bf16.msra.mxu0 %v536
  %741 = vmatprep.subr.bf16.mxu0 0
  %742 = vmatpush1.bf16.msra.mxu0 %v537
  %743 = vmatprep.subr.bf16.mxu0 0
  %744 = vmatpush1.bf16.msra.mxu0 %v538
  %745 = vmatprep.subr.bf16.mxu0 0
  %746 = vmatpush1.bf16.msra.mxu0 %v539
  %747 = vmatprep.subr.bf16.mxu0 0
  %748 = vmatpush1.bf16.msra.mxu0 %v540
  %749 = vmatprep.mubr.bf16.mxu0 %v192
  %750 = vmatmul.mubr.bf16.gmra.mrb[0].mxu0 %v191
  %v751 = vpop.f32.mrb[0].mxu0
  %v752 = vadd.f32 %v712, %v751
  %v753 = vpop.f32.mrb[0].mxu0
  %v754 = vpop.f32.mrb[0].mxu0
  %v755 = vpop.f32.mrb[0].mxu0
  %756 = vdwg.mxu0
  %757 = vmatprep.subr.bf16.mxu0 0
  %758 = vmatpush1.bf16.msra.mxu0 %v541
  %759 = vmatprep.subr.bf16.mxu0 0
  %760 = vmatpush1.bf16.msra.mxu0 %v542
  %761 = vmatprep.subr.bf16.mxu0 0
  %762 = vmatpush1.bf16.msra.mxu0 %v543
  %763 = vmatprep.subr.bf16.mxu0 0
  %764 = vmatpush1.bf16.msra.mxu0 %v544
  %765 = vmatprep.subr.bf16.mxu0 0
  %766 = vmatpush1.bf16.msra.mxu0 %v545
  %767 = vmatprep.subr.bf16.mxu0 0
  %768 = vmatpush1.bf16.msra.mxu0 %v546
  %769 = vmatprep.subr.bf16.mxu0 0
  %770 = vmatpush1.bf16.msra.mxu0 %v547
  %771 = vmatprep.subr.bf16.mxu0 0
  %772 = vmatpush1.bf16.msra.mxu0 %v548
  %773 = vmatprep.subr.bf16.mxu0 0
  %774 = vmatpush1.bf16.msra.mxu0 %v549
  %775 = vmatprep.subr.bf16.mxu0 0
  %776 = vmatpush1.bf16.msra.mxu0 %v550
  %777 = vmatprep.subr.bf16.mxu0 0
  %778 = vmatpush1.bf16.msra.mxu0 %v551
  %779 = vmatprep.subr.bf16.mxu0 0
  %780 = vmatpush1.bf16.msra.mxu0 %v552
  %781 = vmatprep.subr.bf16.mxu0 0
  %782 = vmatpush1.bf16.msra.mxu0 %v553
  %783 = vmatprep.subr.bf16.mxu0 0
  %784 = vmatpush1.bf16.msra.mxu0 %v554
  %785 = vmatprep.subr.bf16.mxu0 0
  %786 = vmatpush1.bf16.msra.mxu0 %v555
  %787 = vmatprep.subr.bf16.mxu0 0
  %788 = vmatpush1.bf16.msra.mxu0 %v556
  %789 = vmatprep.mubr.bf16.mxu0 %v194
  %790 = vmatmul.mubr.bf16.gmra.mrb[0].mxu0 %v193
  %v791 = vpop.f32.mrb[0].mxu0
  %v792 = vadd.f32 %v752, %v791
  %v793 = vpop.f32.mrb[0].mxu0
  %v794 = vpop.f32.mrb[0].mxu0
  %v795 = vpop.f32.mrb[0].mxu0
  %796 = vdwg.mxu0
  %797 = vmatprep.subr.bf16.mxu0 0
  %798 = vmatpush1.bf16.msra.mxu0 %v557
  %799 = vmatprep.subr.bf16.mxu0 0
  %800 = vmatpush1.bf16.msra.mxu0 %v558
  %801 = vmatprep.subr.bf16.mxu0 0
  %802 = vmatpush1.bf16.msra.mxu0 %v559
  %803 = vmatprep.subr.bf16.mxu0 0
  %804 = vmatpush1.bf16.msra.mxu0 %v560
  %805 = vmatprep.subr.bf16.mxu0 0
  %806 = vmatpush1.bf16.msra.mxu0 %v561
  %807 = vmatprep.subr.bf16.mxu0 0
  %808 = vmatpush1.bf16.msra.mxu0 %v562
  %809 = vmatprep.subr.bf16.mxu0 0
  %810 = vmatpush1.bf16.msra.mxu0 %v563
  %811 = vmatprep.subr.bf16.mxu0 0
  %812 = vmatpush1.bf16.msra.mxu0 %v564
  %813 = vmatprep.subr.bf16.mxu0 0
  %814 = vmatpush1.bf16.msra.mxu0 0
  %815 = vmatprep.subr.bf16.mxu0 0
  %816 = vmatpush1.bf16.msra.mxu0 0
  %817 = vmatprep.subr.bf16.mxu0 0
  %818 = vmatpush1.bf16.msra.mxu0 0
  %819 = vmatprep.subr.bf16.mxu0 0
  %820 = vmatpush1.bf16.msra.mxu0 0
  %821 = vmatprep.subr.bf16.mxu0 0
  %822 = vmatpush1.bf16.msra.mxu0 0
  %823 = vmatprep.subr.bf16.mxu0 0
  %824 = vmatpush1.bf16.msra.mxu0 0
  %825 = vmatprep.subr.bf16.mxu0 0
  %826 = vmatpush1.bf16.msra.mxu0 0
  %827 = vmatprep.subr.bf16.mxu0 0
  %828 = vmatpush1.bf16.msra.mxu0 0
  %829 = vmatprep.mubr.bf16.mxu0 0
  %830 = vmatmul.mubr.bf16.gmra.mrb[0].mxu0 %v195
  %v831 = vpop.f32.mrb[0].mxu0
  %v832 = vadd.f32 %v792, %v831
  %v833 = vpop.f32.mrb[0].mxu0
  %v834 = vpop.f32.mrb[0].mxu0
  %v835 = vpop.f32.mrb[0].mxu0
  %836 = vdwg.mxu0
  %v837 = vld [vmem:[%s2] sm:$0x1]
  %v838 = vld [vmem:[%s3] sm:$0x1]
  %v839 = vrot.slane %v832, 4
  %v840 = vadd.f32 %v832, %v839
  %v841 = vrot.slane %v840, 2
  %v842 = vadd.f32 %v840, %v841
  %v843 = vrot.slane %v842, 1
  %v844 = vadd.f32 %v842, %v843
  %v845 = vmul.f32 %v844, 0.125
  %v846 = vsub.f32 %v832, %v845
  %v847 = vmul.f32 %v846, %v846
  %v848 = vrot.slane %v847, 4
  %v849 = vadd.f32 %v847, %v848
  %v850 = vrot.slane %v849, 2
  %v851 = vadd.f32 %v849, %v850
  %v852 = vrot.slane %v851, 1
  %v853 = vadd.f32 %v851, %v852
  %v854 = vmul.f32 %v853, 0.125
  %v855 = vadd.f32 %v854, 1e-05
  %v856 = vrsqrt.pop %v855
  %v857 = vmul.f32 %v856, %v837
  %v858 = vlaneseq
  %v859 = vshrl.u32 %v858, 7
  %v860 = vsub.s32 0, %v859
  %v861 = vrot.slane %v857, %v860
  %v862 = vmul.f32 %v846, %v861
  %v864 = vlaneseq
  %v865 = vshrl.u32 %v864, 7
  %v866 = vsub.s32 0, %v865
  %v867 = vrot.slane %v838, %v866
  %v869 = vadd.f32 %v862, %v867
  %v870 = vmax.f32 %v869, 0.0
  %v871 = vld [vmem:[%s4] sm:$0x1]
  %v872 = vld [vmem:[%s5] sm:$0x1]
  %v873 = vrot.slane %v870, 4
  %v874 = vadd.f32 %v870, %v873
  %v875 = vrot.slane %v874, 2
  %v876 = vadd.f32 %v874, %v875
  %v877 = vrot.slane %v876, 1
  %v878 = vadd.f32 %v876, %v877
  %v879 = vmul.f32 %v878, 0.125
  %v880 = vsub.f32 %v870, %v879
  %v881 = vmul.f32 %v880, %v880
  %v882 = vrot.slane %v881, 4
  %v883 = vadd.f32 %v881, %v882
  %v884 = vrot.slane %v883, 2
  %v885 = vadd.f32 %v883, %v884
  %v886 = vrot.slane %v885, 1
  %v887 = vadd.f32 %v885, %v886
  %v888 = vmul.f32 %v887, 0.125
  %v889 = vadd.f32 %v888, 1e-05
  %v890 = vrsqrt.pop %v889
  %v891 = vmul.f32 %v890, %v871
  %v892 = vlaneseq
  %v893 = vshrl.u32 %v892, 7
  %v894 = vsub.s32 0, %v893
  %v895 = vrot.slane %v891, %v894
  %v896 = vmul.f32 %v880, %v895
  %v898 = vlaneseq
  %v899 = vshrl.u32 %v898, 7
  %v900 = vsub.s32 0, %v899
  %v901 = vrot.slane %v872, %v900
  %v903 = vadd.f32 %v896, %v901
  %v904 = vpack.c.bf16 %v903, %v903
  %905 = vst [vmem:[%s6] sm:$0xf] %v904
  // Predicated region
  $region26: #{cnn_forward.11} parent=0 // pred_check
    _
  $region27: #{cnn_forward.11} parent=0 // pred_check_branch
    %907 = sbr.rel (0) target = $region29
  $region28: #{cnn_forward.11} parent=0 // pred_region
    _
  $region29: #{cnn_forward.11} parent=0 // pred_fallthru
    _
  // Predicated region
  $region30: #{cnn_forward.11} parent=0 // pred_check
    _
  $region31: #{cnn_forward.11} parent=0 // pred_check_branch
    %909 = sbr.rel (0) target = $region33
  $region32: #{cnn_forward.11} parent=0 // pred_region
    _
  $region33: #{cnn_forward.11} parent=0 // pred_fallthru
    _

// kernel: cnn_forward.13
$region0: #{cnn_forward.13}
  #allocation0 [shape = 'u32[]', space=smem, size = 0x4, offset = 0x4, fixed_abs, tag = 'smem constant byte address 0x4 - core index']
  #allocation1 [shape = 'u32[144,128]{1,0:T(1,128)}', space=vmem, size = 0x12000, scoped, tag = 'internal scratch']
  %s0 = inlined_call_operand.vmem [shape: bf16[8,1152], index: 0, kind: input, shape index: {}]
  %s1 = inlined_call_operand.vmem [shape: bf16[1152,256], index: 1, kind: input, shape index: {}]
  %s2 = inlined_call_operand.vmem [shape: f32[1,256], index: 2, kind: input, shape index: {}]
  %s3 = inlined_call_operand.vmem [shape: f32[1,256], index: 3, kind: input, shape index: {}]
  %s4 = inlined_call_operand.vmem [shape: f32[1,256], index: 4, kind: input, shape index: {}]
  %s5 = inlined_call_operand.vmem [shape: bf16[8,256], index: 5, kind: output, shape index: {}]
  %s6 = sld [smem:[#allocation0]]
  $region30: #{cnn_forward.13} parent=0
    _
  %s8 = ssub.s32 1, %s6
  %s9 = scalar_select 0, %s8, %s6
  // Predicated region
  $region2: #{cnn_forward.13} parent=0 // pred_check
    _
  $region3: #{cnn_forward.13} parent=0 // pred_check_branch
    %11 = sbr.rel (0) target = $region5
  $region4: #{cnn_forward.13} parent=0 // pred_region
    _
  $region5: #{cnn_forward.13} parent=0 // pred_fallthru
    _
  // Predicated region
  $region6: #{cnn_forward.13} parent=0 // pred_check
    _
  $region7: #{cnn_forward.13} parent=0 // pred_check_branch
    %13 = sbr.rel (0) target = $region9
  $region8: #{cnn_forward.13} parent=0 // pred_region
    _
  $region9: #{cnn_forward.13} parent=0 // pred_fallthru
    _
  // Predicated region
  $region10: #{cnn_forward.13} parent=0 // pred_check
    _
  $region11: #{cnn_forward.13} parent=0 // pred_check_branch
    %15 = sbr.rel (0) target = $region13
  $region12: #{cnn_forward.13} parent=0 // pred_region
    _
  $region13: #{cnn_forward.13} parent=0 // pred_fallthru
    _
  // Predicated region
  $region14: #{cnn_forward.13} parent=0 // pred_check
    _
  $region15: #{cnn_forward.13} parent=0 // pred_check_branch
    %17 = sbr.rel (0) target = $region17
  $region16: #{cnn_forward.13} parent=0 // pred_region
    _
  $region17: #{cnn_forward.13} parent=0 // pred_fallthru
    _
  // Predicated region
  $region18: #{cnn_forward.13} parent=0 // pred_check
    _
  $region19: #{cnn_forward.13} parent=0 // pred_check_branch
    %19 = sbr.rel (0) target = $region21
  $region20: #{cnn_forward.13} parent=0 // pred_region
    _
  $region21: #{cnn_forward.13} parent=0 // pred_fallthru
    _
  %v21 = vld [vmem:[%s0] sm:$0xff]
  %v22 = vld [vmem:[%s0 + $0x8] sm:$0xff]
  %v23 = vld [vmem:[%s0 + $0x10] sm:$0xff]
  %v24 = vld [vmem:[%s0 + $0x18] sm:$0xff]
  %v25 = vld [vmem:[%s0 + $0x20] sm:$0xf]
  %v26 = vld [vmem:[%s1] sm:$0xff]
  %v27 = vld [vmem:[%s1 + $0x8] sm:$0xff]
  %v28 = vld [vmem:[%s1 + $0x10] sm:$0xff]
  %v29 = vld [vmem:[%s1 + $0x18] sm:$0xff]
  %v30 = vld [vmem:[%s1 + $0x20] sm:$0xff]
  %v31 = vld [vmem:[%s1 + $0x28] sm:$0xff]
  %v32 = vld [vmem:[%s1 + $0x30] sm:$0xff]
  %v33 = vld [vmem:[%s1 + $0x38] sm:$0xff]
  %v34 = vld [vmem:[%s1 + $0x40] sm:$0xff]
  %v35 = vld [vmem:[%s1 + $0x48] sm:$0xff]
  %v36 = vld [vmem:[%s1 + $0x50] sm:$0xff]
  %v37 = vld [vmem:[%s1 + $0x58] sm:$0xff]
  %v38 = vld [vmem:[%s1 + $0x60] sm:$0xff]
  %v39 = vld [vmem:[%s1 + $0x68] sm:$0xff]
  %v40 = vld [vmem:[%s1 + $0x70] sm:$0xff]
  %v41 = vld [vmem:[%s1 + $0x78] sm:$0xff]
  %v42 = vld [vmem:[%s1 + $0x80] sm:$0xff]
  %v43 = vld [vmem:[%s1 + $0x88] sm:$0xff]
  %v44 = vld [vmem:[%s1 + $0x90] sm:$0xff]
  %v45 = vld [vmem:[%s1 + $0x98] sm:$0xff]
  %v46 = vld [vmem:[%s1 + $0xa0] sm:$0xff]
  %v47 = vld [vmem:[%s1 + $0xa8] sm:$0xff]
  %v48 = vld [vmem:[%s1 + $0xb0] sm:$0xff]
  %v49 = vld [vmem:[%s1 + $0xb8] sm:$0xff]
  %v50 = vld [vmem:[%s1 + $0xc0] sm:$0xff]
  %v51 = vld [vmem:[%s1 + $0xc8] sm:$0xff]
  %v52 = vld [vmem:[%s1 + $0xd0] sm:$0xff]
  %v53 = vld [vmem:[%s1 + $0xd8] sm:$0xff]
  %v54 = vld [vmem:[%s1 + $0xe0] sm:$0xff]
  %v55 = vld [vmem:[%s1 + $0xe8] sm:$0xff]
  %v56 = vld [vmem:[%s1 + $0xf0] sm:$0xff]
  %v57 = vld [vmem:[%s1 + $0xf8] sm:$0xff]
  %v58 = vld [vmem:[%s1 + $0x100] sm:$0xff]
  %v59 = vld [vmem:[%s1 + $0x108] sm:$0xff]
  %v60 = vld [vmem:[%s1 + $0x110] sm:$0xff]
  %v61 = vld [vmem:[%s1 + $0x118] sm:$0xff]
  %v62 = vld [vmem:[%s1 + $0x120] sm:$0xff]
  %v63 = vld [vmem:[%s1 + $0x128] sm:$0xff]
  %v64 = vld [vmem:[%s1 + $0x130] sm:$0xff]
  %v65 = vld [vmem:[%s1 + $0x138] sm:$0xff]
  %v66 = vld [vmem:[%s1 + $0x140] sm:$0xff]
  %v67 = vld [vmem:[%s1 + $0x148] sm:$0xff]
  %v68 = vld [vmem:[%s1 + $0x150] sm:$0xff]
  %v69 = vld [vmem:[%s1 + $0x158] sm:$0xff]
  %v70 = vld [vmem:[%s1 + $0x160] sm:$0xff]
  %v71 = vld [vmem:[%s1 + $0x168] sm:$0xff]
  %v72 = vld [vmem:[%s1 + $0x170] sm:$0xff]
  %v73 = vld [vmem:[%s1 + $0x178] sm:$0xff]
  %v74 = vld [vmem:[%s1 + $0x180] sm:$0xff]
  %v75 = vld [vmem:[%s1 + $0x188] sm:$0xff]
  %v76 = vld [vmem:[%s1 + $0x190] sm:$0xff]
  %v77 = vld [vmem:[%s1 + $0x198] sm:$0xff]
  %v78 = vld [vmem:[%s1 + $0x1a0] sm:$0xff]
  %v79 = vld [vmem:[%s1 + $0x1a8] sm:$0xff]
  %v80 = vld [vmem:[%s1 + $0x1b0] sm:$0xff]
  %v81 = vld [vmem:[%s1 + $0x1b8] sm:$0xff]
  %v82 = vld [vmem:[%s1 + $0x1c0] sm:$0xff]
  %v83 = vld [vmem:[%s1 + $0x1c8] sm:$0xff]
  %v84 = vld [vmem:[%s1 + $0x1d0] sm:$0xff]
  %v85 = vld [vmem:[%s1 + $0x1d8] sm:$0xff]
  %v86 = vld [vmem:[%s1 + $0x1e0] sm:$0xff]
  %v87 = vld [vmem:[%s1 + $0x1e8] sm:$0xff]
  %v88 = vld [vmem:[%s1 + $0x1f0] sm:$0xff]
  %v89 = vld [vmem:[%s1 + $0x1f8] sm:$0xff]
  %v90 = vld [vmem:[%s1 + $0x200] sm:$0xff]
  %v91 = vld [vmem:[%s1 + $0x208] sm:$0xff]
  %v92 = vld [vmem:[%s1 + $0x210] sm:$0xff]
  %v93 = vld [vmem:[%s1 + $0x218] sm:$0xff]
  %v94 = vld [vmem:[%s1 + $0x220] sm:$0xff]
  %v95 = vld [vmem:[%s1 + $0x228] sm:$0xff]
  %v96 = vld [vmem:[%s1 + $0x230] sm:$0xff]
  %v97 = vld [vmem:[%s1 + $0x238] sm:$0xff]
  %v98 = vld [vmem:[%s1 + $0x240] sm:$0xff]
  %v99 = vld [vmem:[%s1 + $0x248] sm:$0xff]
  %v100 = vld [vmem:[%s1 + $0x250] sm:$0xff]
  %v101 = vld [vmem:[%s1 + $0x258] sm:$0xff]
  %v102 = vld [vmem:[%s1 + $0x260] sm:$0xff]
  %v103 = vld [vmem:[%s1 + $0x268] sm:$0xff]
  %v104 = vld [vmem:[%s1 + $0x270] sm:$0xff]
  %v105 = vld [vmem:[%s1 + $0x278] sm:$0xff]
  %v106 = vld [vmem:[%s1 + $0x280] sm:$0xff]
  %v107 = vld [vmem:[%s1 + $0x288] sm:$0xff]
  %v108 = vld [vmem:[%s1 + $0x290] sm:$0xff]
  %v109 = vld [vmem:[%s1 + $0x298] sm:$0xff]
  %v110 = vld [vmem:[%s1 + $0x2a0] sm:$0xff]
  %v111 = vld [vmem:[%s1 + $0x2a8] sm:$0xff]
  %v112 = vld [vmem:[%s1 + $0x2b0] sm:$0xff]
  %v113 = vld [vmem:[%s1 + $0x2b8] sm:$0xff]
  %v114 = vld [vmem:[%s1 + $0x2c0] sm:$0xff]
  %v115 = vld [vmem:[%s1 + $0x2c8] sm:$0xff]
  %v116 = vld [vmem:[%s1 + $0x2d0] sm:$0xff]
  %v117 = vld [vmem:[%s1 + $0x2d8] sm:$0xff]
  %v118 = vld [vmem:[%s1 + $0x2e0] sm:$0xff]
  %v119 = vld [vmem:[%s1 + $0x2e8] sm:$0xff]
  %v120 = vld [vmem:[%s1 + $0x2f0] sm:$0xff]
  %v121 = vld [vmem:[%s1 + $0x2f8] sm:$0xff]
  %v122 = vld [vmem:[%s1 + $0x300] sm:$0xff]
  %v123 = vld [vmem:[%s1 + $0x308] sm:$0xff]
  %v124 = vld [vmem:[%s1 + $0x310] sm:$0xff]
  %v125 = vld [vmem:[%s1 + $0x318] sm:$0xff]
  %v126 = vld [vmem:[%s1 + $0x320] sm:$0xff]
  %v127 = vld [vmem:[%s1 + $0x328] sm:$0xff]
  %v128 = vld [vmem:[%s1 + $0x330] sm:$0xff]
  %v129 = vld [vmem:[%s1 + $0x338] sm:$0xff]
  %v130 = vld [vmem:[%s1 + $0x340] sm:$0xff]
  %v131 = vld [vmem:[%s1 + $0x348] sm:$0xff]
  %v132 = vld [vmem:[%s1 + $0x350] sm:$0xff]
  %v133 = vld [vmem:[%s1 + $0x358] sm:$0xff]
  %v134 = vld [vmem:[%s1 + $0x360] sm:$0xff]
  %v135 = vld [vmem:[%s1 + $0x368] sm:$0xff]
  %v136 = vld [vmem:[%s1 + $0x370] sm:$0xff]
  %v137 = vld [vmem:[%s1 + $0x378] sm:$0xff]
  %v138 = vld [vmem:[%s1 + $0x380] sm:$0xff]
  %v139 = vld [vmem:[%s1 + $0x388] sm:$0xff]
  %v140 = vld [vmem:[%s1 + $0x390] sm:$0xff]
  %v141 = vld [vmem:[%s1 + $0x398] sm:$0xff]
  %v142 = vld [vmem:[%s1 + $0x3a0] sm:$0xff]
  %v143 = vld [vmem:[%s1 + $0x3a8] sm:$0xff]
  %v144 = vld [vmem:[%s1 + $0x3b0] sm:$0xff]
  %v145 = vld [vmem:[%s1 + $0x3b8] sm:$0xff]
  %v146 = vld [vmem:[%s1 + $0x3c0] sm:$0xff]
  %v147 = vld [vmem:[%s1 + $0x3c8] sm:$0xff]
  %v148 = vld [vmem:[%s1 + $0x3d0] sm:$0xff]
  %v149 = vld [vmem:[%s1 + $0x3d8] sm:$0xff]
  %v150 = vld [vmem:[%s1 + $0x3e0] sm:$0xff]
  %v151 = vld [vmem:[%s1 + $0x3e8] sm:$0xff]
  %v152 = vld [vmem:[%s1 + $0x3f0] sm:$0xff]
  %v153 = vld [vmem:[%s1 + $0x3f8] sm:$0xff]
  %v154 = vld [vmem:[%s1 + $0x400] sm:$0xff]
  %v155 = vld [vmem:[%s1 + $0x408] sm:$0xff]
  %v156 = vld [vmem:[%s1 + $0x410] sm:$0xff]
  %v157 = vld [vmem:[%s1 + $0x418] sm:$0xff]
  %v158 = vld [vmem:[%s1 + $0x420] sm:$0xff]
  %v159 = vld [vmem:[%s1 + $0x428] sm:$0xff]
  %v160 = vld [vmem:[%s1 + $0x430] sm:$0xff]
  %v161 = vld [vmem:[%s1 + $0x438] sm:$0xff]
  %v162 = vld [vmem:[%s1 + $0x440] sm:$0xff]
  %v163 = vld [vmem:[%s1 + $0x448] sm:$0xff]
  %v164 = vld [vmem:[%s1 + $0x450] sm:$0xff]
  %v165 = vld [vmem:[%s1 + $0x458] sm:$0xff]
  %v166 = vld [vmem:[%s1 + $0x460] sm:$0xff]
  %v167 = vld [vmem:[%s1 + $0x468] sm:$0xff]
  %v168 = vld [vmem:[%s1 + $0x470] sm:$0xff]
  %v169 = vld [vmem:[%s1 + $0x478] sm:$0xff]
  %v170 = vld [vmem:[%s2] sm:$0x3]
  %v172 = vlaneseq
  %v173 = vshrl.u32 %v172, 7
  %v174 = vsub.s32 0, %v173
  %v175 = vrot.slane %v170, %v174
  %v176 = vlaneseq
  %v177 = vshrl.u32 %v176, 7
  %v178 = vsub.s32 1, %v177
  %v179 = vrot.slane %v170, %v178
  %v187 = vunpack.c.l.b16 %v21
  %v188 = vunpack.c.h.b16 %v21
  %v189 = vunpack.c.l.b16 %v22
  %v190 = vunpack.c.h.b16 %v22
  %v191 = vunpack.c.l.b16 %v23
  %v192 = vunpack.c.h.b16 %v23
  %v193 = vunpack.c.l.b16 %v24
  %v194 = vunpack.c.h.b16 %v24
  %v195 = vunpack.c.l.b16 %v25
  %v196 = vpack.c.b16 %v187, %v187
  %v197 = vpack.c.b16 %v188, %v188
  %v198 = vpack.c.b16 %v189, %v189
  %v199 = vpack.c.b16 %v190, %v190
  %v200 = vpack.c.b16 %v191, %v191
  %v201 = vpack.c.b16 %v192, %v192
  %v202 = vpack.c.b16 %v193, %v193
  %v203 = vpack.c.b16 %v194, %v194
  %v204 = vpack.c.b16 %v195, %v195
  %v358 = vunpack.c.l.b16 %v26
  %v359 = vunpack.c.h.b16 %v26
  %v360 = vunpack.c.l.b16 %v27
  %v361 = vunpack.c.h.b16 %v27
  %v362 = vunpack.c.l.b16 %v28
  %v363 = vunpack.c.h.b16 %v28
  %v364 = vunpack.c.l.b16 %v29
  %v365 = vunpack.c.h.b16 %v29
  %v366 = vunpack.c.l.b16 %v30
  %v367 = vunpack.c.h.b16 %v30
  %v368 = vunpack.c.l.b16 %v31
  %v369 = vunpack.c.h.b16 %v31
  %v370 = vunpack.c.l.b16 %v32
  %v371 = vunpack.c.h.b16 %v32
  %v372 = vunpack.c.l.b16 %v33
  %v373 = vunpack.c.h.b16 %v33
  %v374 = vunpack.c.l.b16 %v34
  %v375 = vunpack.c.h.b16 %v34
  %v376 = vunpack.c.l.b16 %v35
  %v377 = vunpack.c.h.b16 %v35
  %v378 = vunpack.c.l.b16 %v36
  %v379 = vunpack.c.h.b16 %v36
  %v380 = vunpack.c.l.b16 %v37
  %v381 = vunpack.c.h.b16 %v37
  %v382 = vunpack.c.l.b16 %v38
  %v383 = vunpack.c.h.b16 %v38
  %v384 = vunpack.c.l.b16 %v39
  %v385 = vunpack.c.h.b16 %v39
  %v386 = vunpack.c.l.b16 %v40
  %v387 = vunpack.c.h.b16 %v40
  %v388 = vunpack.c.l.b16 %v41
  %v389 = vunpack.c.h.b16 %v41
  %v390 = vunpack.c.l.b16 %v42
  %v391 = vunpack.c.h.b16 %v42
  %v392 = vunpack.c.l.b16 %v43
  %v393 = vunpack.c.h.b16 %v43
  %v394 = vunpack.c.l.b16 %v44
  %v395 = vunpack.c.h.b16 %v44
  %v396 = vunpack.c.l.b16 %v45
  %v397 = vunpack.c.h.b16 %v45
  %v398 = vunpack.c.l.b16 %v46
  %v399 = vunpack.c.h.b16 %v46
  %v400 = vunpack.c.l.b16 %v47
  %v401 = vunpack.c.h.b16 %v47
  %v402 = vunpack.c.l.b16 %v48
  %v403 = vunpack.c.h.b16 %v48
  %v404 = vunpack.c.l.b16 %v49
  %v405 = vunpack.c.h.b16 %v49
  %v406 = vunpack.c.l.b16 %v50
  %v407 = vunpack.c.h.b16 %v50
  %v408 = vunpack.c.l.b16 %v51
  %v409 = vunpack.c.h.b16 %v51
  %v410 = vunpack.c.l.b16 %v52
  %v411 = vunpack.c.h.b16 %v52
  %v412 = vunpack.c.l.b16 %v53
  %v413 = vunpack.c.h.b16 %v53
  %v414 = vunpack.c.l.b16 %v54
  %v415 = vunpack.c.h.b16 %v54
  %v416 = vunpack.c.l.b16 %v55
  %v417 = vunpack.c.h.b16 %v55
  %v418 = vunpack.c.l.b16 %v56
  %v419 = vunpack.c.h.b16 %v56
  %v420 = vunpack.c.l.b16 %v57
  %v421 = vunpack.c.h.b16 %v57
  %v422 = vunpack.c.l.b16 %v58
  %v423 = vunpack.c.h.b16 %v58
  %v424 = vunpack.c.l.b16 %v59
  %v425 = vunpack.c.h.b16 %v59
  %v426 = vunpack.c.l.b16 %v60
  %v427 = vunpack.c.h.b16 %v60
  %v428 = vunpack.c.l.b16 %v61
  %v429 = vunpack.c.h.b16 %v61
  %v430 = vunpack.c.l.b16 %v62
  %v431 = vunpack.c.h.b16 %v62
  %v432 = vunpack.c.l.b16 %v63
  %v433 = vunpack.c.h.b16 %v63
  %v434 = vunpack.c.l.b16 %v64
  %v435 = vunpack.c.h.b16 %v64
  %v436 = vunpack.c.l.b16 %v65
  %v437 = vunpack.c.h.b16 %v65
  %v438 = vunpack.c.l.b16 %v66
  %v439 = vunpack.c.h.b16 %v66
  %v440 = vunpack.c.l.b16 %v67
  %v441 = vunpack.c.h.b16 %v67
  %v442 = vunpack.c.l.b16 %v68
  %v443 = vunpack.c.h.b16 %v68
  %v444 = vunpack.c.l.b16 %v69
  %v445 = vunpack.c.h.b16 %v69
  %v446 = vunpack.c.l.b16 %v70
  %v447 = vunpack.c.h.b16 %v70
  %v448 = vunpack.c.l.b16 %v71
  %v449 = vunpack.c.h.b16 %v71
  %v450 = vunpack.c.l.b16 %v72
  %v451 = vunpack.c.h.b16 %v72
  %v452 = vunpack.c.l.b16 %v73
  %v453 = vunpack.c.h.b16 %v73
  %v454 = vunpack.c.l.b16 %v74
  %v455 = vunpack.c.h.b16 %v74
  %v456 = vunpack.c.l.b16 %v75
  %v457 = vunpack.c.h.b16 %v75
  %v458 = vunpack.c.l.b16 %v76
  %v459 = vunpack.c.h.b16 %v76
  %v460 = vunpack.c.l.b16 %v77
  %v461 = vunpack.c.h.b16 %v77
  %v462 = vunpack.c.l.b16 %v78
  %v463 = vunpack.c.h.b16 %v78
  %v464 = vunpack.c.l.b16 %v79
  %v465 = vunpack.c.h.b16 %v79
  %v466 = vunpack.c.l.b16 %v80
  %v467 = vunpack.c.h.b16 %v80
  %v468 = vunpack.c.l.b16 %v81
  %v469 = vunpack.c.h.b16 %v81
  %v470 = vunpack.c.l.b16 %v82
  %v471 = vunpack.c.h.b16 %v82
  %v472 = vunpack.c.l.b16 %v83
  %v473 = vunpack.c.h.b16 %v83
  %v474 = vunpack.c.l.b16 %v84
  %v475 = vunpack.c.h.b16 %v84
  %v476 = vunpack.c.l.b16 %v85
  %v477 = vunpack.c.h.b16 %v85
  %v478 = vunpack.c.l.b16 %v86
  %v479 = vunpack.c.h.b16 %v86
  %v480 = vunpack.c.l.b16 %v87
  %v481 = vunpack.c.h.b16 %v87
  %v482 = vunpack.c.l.b16 %v88
  %v483 = vunpack.c.h.b16 %v88
  %v484 = vunpack.c.l.b16 %v89
  %v485 = vunpack.c.h.b16 %v89
  %v486 = vunpack.c.l.b16 %v90
  %v487 = vunpack.c.h.b16 %v90
  %v488 = vunpack.c.l.b16 %v91
  %v489 = vunpack.c.h.b16 %v91
  %v490 = vunpack.c.l.b16 %v92
  %v491 = vunpack.c.h.b16 %v92
  %v492 = vunpack.c.l.b16 %v93
  %v493 = vunpack.c.h.b16 %v93
  %v494 = vunpack.c.l.b16 %v94
  %v495 = vunpack.c.h.b16 %v94
  %v496 = vunpack.c.l.b16 %v95
  %v497 = vunpack.c.h.b16 %v95
  %v498 = vunpack.c.l.b16 %v96
  %v499 = vunpack.c.h.b16 %v96
  %v500 = vunpack.c.l.b16 %v97
  %v501 = vunpack.c.h.b16 %v97
  %v502 = vunpack.c.l.b16 %v98
  %v503 = vunpack.c.h.b16 %v98
  %v504 = vunpack.c.l.b16 %v99
  %v505 = vunpack.c.h.b16 %v99
  %v506 = vunpack.c.l.b16 %v100
  %v507 = vunpack.c.h.b16 %v100
  %v508 = vunpack.c.l.b16 %v101
  %v509 = vunpack.c.h.b16 %v101
  %v510 = vunpack.c.l.b16 %v102
  %v511 = vunpack.c.h.b16 %v102
  %v512 = vunpack.c.l.b16 %v103
  %v513 = vunpack.c.h.b16 %v103
  %v514 = vunpack.c.l.b16 %v104
  %v515 = vunpack.c.h.b16 %v104
  %v516 = vunpack.c.l.b16 %v105
  %v517 = vunpack.c.h.b16 %v105
  %v518 = vunpack.c.l.b16 %v106
  %v519 = vunpack.c.h.b16 %v106
  %v520 = vunpack.c.l.b16 %v107
  %v521 = vunpack.c.h.b16 %v107
  %v522 = vunpack.c.l.b16 %v108
  %v523 = vunpack.c.h.b16 %v108
  %v524 = vunpack.c.l.b16 %v109
  %v525 = vunpack.c.h.b16 %v109
  %v526 = vunpack.c.l.b16 %v110
  %v527 = vunpack.c.h.b16 %v110
  %v528 = vunpack.c.l.b16 %v111
  %v529 = vunpack.c.h.b16 %v111
  %v530 = vunpack.c.l.b16 %v112
  %v531 = vunpack.c.h.b16 %v112
  %v532 = vunpack.c.l.b16 %v113
  %v533 = vunpack.c.h.b16 %v113
  %v534 = vunpack.c.l.b16 %v114
  %v535 = vunpack.c.h.b16 %v114
  %v536 = vunpack.c.l.b16 %v115
  %v537 = vunpack.c.h.b16 %v115
  %v538 = vunpack.c.l.b16 %v116
  %v539 = vunpack.c.h.b16 %v116
  %v540 = vunpack.c.l.b16 %v117
  %v541 = vunpack.c.h.b16 %v117
  %v542 = vunpack.c.l.b16 %v118
  %v543 = vunpack.c.h.b16 %v118
  %v544 = vunpack.c.l.b16 %v119
  %v545 = vunpack.c.h.b16 %v119
  %v546 = vunpack.c.l.b16 %v120
  %v547 = vunpack.c.h.b16 %v120
  %v548 = vunpack.c.l.b16 %v121
  %v549 = vunpack.c.h.b16 %v121
  %v550 = vunpack.c.l.b16 %v122
  %v551 = vunpack.c.h.b16 %v122
  %v552 = vunpack.c.l.b16 %v123
  %v553 = vunpack.c.h.b16 %v123
  %v554 = vunpack.c.l.b16 %v124
  %v555 = vunpack.c.h.b16 %v124
  %v556 = vunpack.c.l.b16 %v125
  %v557 = vunpack.c.h.b16 %v125
  %v558 = vunpack.c.l.b16 %v126
  %v559 = vunpack.c.h.b16 %v126
  %v560 = vunpack.c.l.b16 %v127
  %v561 = vunpack.c.h.b16 %v127
  %v562 = vunpack.c.l.b16 %v128
  %v563 = vunpack.c.h.b16 %v128
  %v564 = vunpack.c.l.b16 %v129
  %v565 = vunpack.c.h.b16 %v129
  %v566 = vunpack.c.l.b16 %v130
  %v567 = vunpack.c.h.b16 %v130
  %v568 = vunpack.c.l.b16 %v131
  %v569 = vunpack.c.h.b16 %v131
  %v570 = vunpack.c.l.b16 %v132
  %v571 = vunpack.c.h.b16 %v132
  %v572 = vunpack.c.l.b16 %v133
  %v573 = vunpack.c.h.b16 %v133
  %v574 = vunpack.c.l.b16 %v134
  %v575 = vunpack.c.h.b16 %v134
  %v576 = vunpack.c.l.b16 %v135
  %v577 = vunpack.c.h.b16 %v135
  %v578 = vunpack.c.l.b16 %v136
  %v579 = vunpack.c.h.b16 %v136
  %v580 = vunpack.c.l.b16 %v137
  %v581 = vunpack.c.h.b16 %v137
  %v582 = vunpack.c.l.b16 %v138
  %v583 = vunpack.c.h.b16 %v138
  %v584 = vunpack.c.l.b16 %v139
  %v585 = vunpack.c.h.b16 %v139
  %v586 = vunpack.c.l.b16 %v140
  %v587 = vunpack.c.h.b16 %v140
  %v588 = vunpack.c.l.b16 %v141
  %v589 = vunpack.c.h.b16 %v141
  %v590 = vunpack.c.l.b16 %v142
  %v591 = vunpack.c.h.b16 %v142
  %v592 = vunpack.c.l.b16 %v143
  %v593 = vunpack.c.h.b16 %v143
  %v594 = vunpack.c.l.b16 %v144
  %v595 = vunpack.c.h.b16 %v144
  %v596 = vunpack.c.l.b16 %v145
  %v597 = vunpack.c.h.b16 %v145
  %v598 = vunpack.c.l.b16 %v146
  %v599 = vunpack.c.h.b16 %v146
  %v600 = vunpack.c.l.b16 %v147
  %v601 = vunpack.c.h.b16 %v147
  %v602 = vunpack.c.l.b16 %v148
  %v603 = vunpack.c.h.b16 %v148
  %v604 = vunpack.c.l.b16 %v149
  %v605 = vunpack.c.h.b16 %v149
  %v606 = vunpack.c.l.b16 %v150
  %v607 = vunpack.c.h.b16 %v150
  %v608 = vunpack.c.l.b16 %v151
  %v609 = vunpack.c.h.b16 %v151
  %v610 = vunpack.c.l.b16 %v152
  %v611 = vunpack.c.h.b16 %v152
  %v612 = vunpack.c.l.b16 %v153
  %v613 = vunpack.c.h.b16 %v153
  %v614 = vunpack.c.l.b16 %v154
  %v615 = vunpack.c.h.b16 %v154
  %v616 = vunpack.c.l.b16 %v155
  %v617 = vunpack.c.h.b16 %v155
  %v618 = vunpack.c.l.b16 %v156
  %v619 = vunpack.c.h.b16 %v156
  %v620 = vunpack.c.l.b16 %v157
  %v621 = vunpack.c.h.b16 %v157
  %v622 = vunpack.c.l.b16 %v158
  %v623 = vunpack.c.h.b16 %v158
  %v624 = vunpack.c.l.b16 %v159
  %v625 = vunpack.c.h.b16 %v159
  %v626 = vunpack.c.l.b16 %v160
  %v627 = vunpack.c.h.b16 %v160
  %v628 = vunpack.c.l.b16 %v161
  %v629 = vunpack.c.h.b16 %v161
  %v630 = vunpack.c.l.b16 %v162
  %v631 = vunpack.c.h.b16 %v162
  %v632 = vunpack.c.l.b16 %v163
  %v633 = vunpack.c.h.b16 %v163
  %v634 = vunpack.c.l.b16 %v164
  %v635 = vunpack.c.h.b16 %v164
  %v636 = vunpack.c.l.b16 %v165
  %v637 = vunpack.c.h.b16 %v165
  %v638 = vunpack.c.l.b16 %v166
  %v639 = vunpack.c.h.b16 %v166
  %v640 = vunpack.c.l.b16 %v167
  %v641 = vunpack.c.h.b16 %v167
  %v642 = vunpack.c.l.b16 %v168
  %v643 = vunpack.c.h.b16 %v168
  %v644 = vunpack.c.l.b16 %v169
  %v645 = vunpack.c.h.b16 %v169
  %v646 = vpack.c.b16 %v360, %v358
  %v647 = vpack.c.b16 %v361, %v359
  %v648 = vpack.c.b16 %v364, %v362
  %v649 = vpack.c.b16 %v365, %v363
  %v650 = vpack.c.b16 %v368, %v366
  %v651 = vpack.c.b16 %v369, %v367
  %v652 = vpack.c.b16 %v372, %v370
  %v653 = vpack.c.b16 %v373, %v371
  %v654 = vpack.c.b16 %v376, %v374
  %v655 = vpack.c.b16 %v377, %v375
  %v656 = vpack.c.b16 %v380, %v378
  %v657 = vpack.c.b16 %v381, %v379
  %v658 = vpack.c.b16 %v384, %v382
  %v659 = vpack.c.b16 %v385, %v383
  %v660 = vpack.c.b16 %v388, %v386
  %v661 = vpack.c.b16 %v389, %v387
  %v662 = vpack.c.b16 %v392, %v390
  %v663 = vpack.c.b16 %v393, %v391
  %v664 = vpack.c.b16 %v396, %v394
  %v665 = vpack.c.b16 %v397, %v395
  %v666 = vpack.c.b16 %v400, %v398
  %v667 = vpack.c.b16 %v401, %v399
  %v668 = vpack.c.b16 %v404, %v402
  %v669 = vpack.c.b16 %v405, %v403
  %v670 = vpack.c.b16 %v408, %v406
  %v671 = vpack.c.b16 %v409, %v407
  %v672 = vpack.c.b16 %v412, %v410
  %v673 = vpack.c.b16 %v413, %v411
  %v674 = vpack.c.b16 %v416, %v414
  %v675 = vpack.c.b16 %v417, %v415
  %v676 = vpack.c.b16 %v420, %v418
  %v677 = vpack.c.b16 %v421, %v419
  %v678 = vpack.c.b16 %v424, %v422
  %v679 = vpack.c.b16 %v425, %v423
  %v680 = vpack.c.b16 %v428, %v426
  %v681 = vpack.c.b16 %v429, %v427
  %v682 = vpack.c.b16 %v432, %v430
  %v683 = vpack.c.b16 %v433, %v431
  %v684 = vpack.c.b16 %v436, %v434
  %v685 = vpack.c.b16 %v437, %v435
  %v686 = vpack.c.b16 %v440, %v438
  %v687 = vpack.c.b16 %v441, %v439
  %v688 = vpack.c.b16 %v444, %v442
  %v689 = vpack.c.b16 %v445, %v443
  %v690 = vpack.c.b16 %v448, %v446
  %v691 = vpack.c.b16 %v449, %v447
  %v692 = vpack.c.b16 %v452, %v450
  %v693 = vpack.c.b16 %v453, %v451
  %v694 = vpack.c.b16 %v456, %v454
  %v695 = vpack.c.b16 %v457, %v455
  %v696 = vpack.c.b16 %v460, %v458
  %v697 = vpack.c.b16 %v461, %v459
  %v698 = vpack.c.b16 %v464, %v462
  %v699 = vpack.c.b16 %v465, %v463
  %v700 = vpack.c.b16 %v468, %v466
  %v701 = vpack.c.b16 %v469, %v467
  %v702 = vpack.c.b16 %v472, %v470
  %v703 = vpack.c.b16 %v473, %v471
  %v704 = vpack.c.b16 %v476, %v474
  %v705 = vpack.c.b16 %v477, %v475
  %v706 = vpack.c.b16 %v480, %v478
  %v707 = vpack.c.b16 %v481, %v479
  %v708 = vpack.c.b16 %v484, %v482
  %v709 = vpack.c.b16 %v485, %v483
  %v710 = vpack.c.b16 %v488, %v486
  %v711 = vpack.c.b16 %v489, %v487
  %v712 = vpack.c.b16 %v492, %v490
  %v713 = vpack.c.b16 %v493, %v491
  %v714 = vpack.c.b16 %v496, %v494
  %v715 = vpack.c.b16 %v497, %v495
  %v716 = vpack.c.b16 %v500, %v498
  %v717 = vpack.c.b16 %v501, %v499
  %v718 = vpack.c.b16 %v504, %v502
  %v719 = vpack.c.b16 %v505, %v503
  %v720 = vpack.c.b16 %v508, %v506
  %v721 = vpack.c.b16 %v509, %v507
  %v722 = vpack.c.b16 %v512, %v510
  %v723 = vpack.c.b16 %v513, %v511
  %v724 = vpack.c.b16 %v516, %v514
  %v725 = vpack.c.b16 %v517, %v515
  %v726 = vpack.c.b16 %v520, %v518
  %v727 = vpack.c.b16 %v521, %v519
  %v728 = vpack.c.b16 %v524, %v522
  %v729 = vpack.c.b16 %v525, %v523
  %v730 = vpack.c.b16 %v528, %v526
  %v731 = vpack.c.b16 %v529, %v527
  %v732 = vpack.c.b16 %v532, %v530
  %v733 = vpack.c.b16 %v533, %v531
  %v734 = vpack.c.b16 %v536, %v534
  %v735 = vpack.c.b16 %v537, %v535
  %v736 = vpack.c.b16 %v540, %v538
  %v737 = vpack.c.b16 %v541, %v539
  %v738 = vpack.c.b16 %v544, %v542
  %v739 = vpack.c.b16 %v545, %v543
  %v740 = vpack.c.b16 %v548, %v546
  %v741 = vpack.c.b16 %v549, %v547
  %v742 = vpack.c.b16 %v552, %v550
  %v743 = vpack.c.b16 %v553, %v551
  %v744 = vpack.c.b16 %v556, %v554
  %v745 = vpack.c.b16 %v557, %v555
  %v746 = vpack.c.b16 %v560, %v558
  %v747 = vpack.c.b16 %v561, %v559
  %v748 = vpack.c.b16 %v564, %v562
  %v749 = vpack.c.b16 %v565, %v563
  %v750 = vpack.c.b16 %v568, %v566
  %v751 = vpack.c.b16 %v569, %v567
  %v752 = vpack.c.b16 %v572, %v570
  %v753 = vpack.c.b16 %v573, %v571
  %v754 = vpack.c.b16 %v576, %v574
  %v755 = vpack.c.b16 %v577, %v575
  %v756 = vpack.c.b16 %v580, %v578
  %v757 = vpack.c.b16 %v581, %v579
  %v758 = vpack.c.b16 %v584, %v582
  %v759 = vpack.c.b16 %v585, %v583
  %v760 = vpack.c.b16 %v588, %v586
  %v761 = vpack.c.b16 %v589, %v587
  %v762 = vpack.c.b16 %v592, %v590
  %v763 = vpack.c.b16 %v593, %v591
  %v764 = vpack.c.b16 %v596, %v594
  %v765 = vpack.c.b16 %v597, %v595
  %v766 = vpack.c.b16 %v600, %v598
  %v767 = vpack.c.b16 %v601, %v599
  %v768 = vpack.c.b16 %v604, %v602
  %v769 = vpack.c.b16 %v605, %v603
  %v770 = vpack.c.b16 %v608, %v606
  %v771 = vpack.c.b16 %v609, %v607
  %v772 = vpack.c.b16 %v612, %v610
  %v773 = vpack.c.b16 %v613, %v611
  %v774 = vpack.c.b16 %v616, %v614
  %v775 = vpack.c.b16 %v617, %v615
  %v776 = vpack.c.b16 %v620, %v618
  %v777 = vpack.c.b16 %v621, %v619
  %v778 = vpack.c.b16 %v624, %v622
  %v779 = vpack.c.b16 %v625, %v623
  %v780 = vpack.c.b16 %v628, %v626
  %v781 = vpack.c.b16 %v629, %v627
  %v782 = vpack.c.b16 %v632, %v630
  %v783 = vpack.c.b16 %v633, %v631
  %v784 = vpack.c.b16 %v636, %v634
  %v785 = vpack.c.b16 %v637, %v635
  %v786 = vpack.c.b16 %v640, %v638
  %v787 = vpack.c.b16 %v641, %v639
  %v788 = vpack.c.b16 %v644, %v642
  %v789 = vpack.c.b16 %v645, %v643
  %934 = vmatprep.subr.bf16.mxu0 %v647
  %935 = vmatpush1.bf16.msra.mxu0 %v646
  %936 = vmatprep.subr.bf16.mxu0 %v649
  %937 = vmatpush1.bf16.msra.mxu0 %v648
  %938 = vmatprep.subr.bf16.mxu0 %v651
  %939 = vmatpush1.bf16.msra.mxu0 %v650
  %940 = vmatprep.subr.bf16.mxu0 %v653
  %941 = vmatpush1.bf16.msra.mxu0 %v652
  %942 = vmatprep.subr.bf16.mxu0 %v655
  %943 = vmatpush1.bf16.msra.mxu0 %v654
  %944 = vmatprep.subr.bf16.mxu0 %v657
  %945 = vmatpush1.bf16.msra.mxu0 %v656
  %946 = vmatprep.subr.bf16.mxu0 %v659
  %947 = vmatpush1.bf16.msra.mxu0 %v658
  %948 = vmatprep.subr.bf16.mxu0 %v661
  %949 = vmatpush1.bf16.msra.mxu0 %v660
  %950 = vmatprep.subr.bf16.mxu0 %v663
  %951 = vmatpush1.bf16.msra.mxu0 %v662
  %952 = vmatprep.subr.bf16.mxu0 %v665
  %953 = vmatpush1.bf16.msra.mxu0 %v664
  %954 = vmatprep.subr.bf16.mxu0 %v667
  %955 = vmatpush1.bf16.msra.mxu0 %v666
  %956 = vmatprep.subr.bf16.mxu0 %v669
  %957 = vmatpush1.bf16.msra.mxu0 %v668
  %958 = vmatprep.subr.bf16.mxu0 %v671
  %959 = vmatpush1.bf16.msra.mxu0 %v670
  %960 = vmatprep.subr.bf16.mxu0 %v673
  %961 = vmatpush1.bf16.msra.mxu0 %v672
  %962 = vmatprep.subr.bf16.mxu0 %v675
  %963 = vmatpush1.bf16.msra.mxu0 %v674
  %964 = vmatprep.subr.bf16.mxu0 %v677
  %965 = vmatpush1.bf16.msra.mxu0 %v676
  %966 = vmatprep.mubr.bf16.mxu0 %v197
  %967 = vmatmul.mubr.bf16.gmra.mrb[0].mxu0 %v196
  %v968 = vpop.f32.mrb[0].mxu0
  %v969 = vadd.f32 %v175, %v968
  %v970 = vpop.f32.mrb[0].mxu0
  %v971 = vadd.f32 %v179, %v970
  %v972 = vpop.f32.mrb[0].mxu0
  %v973 = vpop.f32.mrb[0].mxu0
  %974 = vdwg.mxu0
  %975 = vmatprep.subr.bf16.mxu0 %v679
  %976 = vmatpush1.bf16.msra.mxu0 %v678
  %977 = vmatprep.subr.bf16.mxu0 %v681
  %978 = vmatpush1.bf16.msra.mxu0 %v680
  %979 = vmatprep.subr.bf16.mxu0 %v683
  %980 = vmatpush1.bf16.msra.mxu0 %v682
  %981 = vmatprep.subr.bf16.mxu0 %v685
  %982 = vmatpush1.bf16.msra.mxu0 %v684
  %983 = vmatprep.subr.bf16.mxu0 %v687
  %984 = vmatpush1.bf16.msra.mxu0 %v686
  %985 = vmatprep.subr.bf16.mxu0 %v689
  %986 = vmatpush1.bf16.msra.mxu0 %v688
  %987 = vmatprep.subr.bf16.mxu0 %v691
  %988 = vmatpush1.bf16.msra.mxu0 %v690
  %989 = vmatprep.subr.bf16.mxu0 %v693
  %990 = vmatpush1.bf16.msra.mxu0 %v692
  %991 = vmatprep.subr.bf16.mxu0 %v695
  %992 = vmatpush1.bf16.msra.mxu0 %v694
  %993 = vmatprep.subr.bf16.mxu0 %v697
  %994 = vmatpush1.bf16.msra.mxu0 %v696
  %995 = vmatprep.subr.bf16.mxu0 %v699
  %996 = vmatpush1.bf16.msra.mxu0 %v698
  %997 = vmatprep.subr.bf16.mxu0 %v701
  %998 = vmatpush1.bf16.msra.mxu0 %v700
  %999 = vmatprep.subr.bf16.mxu0 %v703
  %1000 = vmatpush1.bf16.msra.mxu0 %v702
  %1001 = vmatprep.subr.bf16.mxu0 %v705
  %1002 = vmatpush1.bf16.msra.mxu0 %v704
  %1003 = vmatprep.subr.bf16.mxu0 %v707
  %1004 = vmatpush1.bf16.msra.mxu0 %v706
  %1005 = vmatprep.subr.bf16.mxu0 %v709
  %1006 = vmatpush1.bf16.msra.mxu0 %v708
  %1007 = vmatprep.mubr.bf16.mxu0 %v199
  %1008 = vmatmul.mubr.bf16.gmra.mrb[0].mxu0 %v198
  %v1009 = vpop.f32.mrb[0].mxu0
  %v1010 = vadd.f32 %v969, %v1009
  %v1011 = vpop.f32.mrb[0].mxu0
  %v1012 = vadd.f32 %v971, %v1011
  %v1013 = vpop.f32.mrb[0].mxu0
  %v1014 = vpop.f32.mrb[0].mxu0
  %1015 = vdwg.mxu0
  %1016 = vmatprep.subr.bf16.mxu0 %v711
  %1017 = vmatpush1.bf16.msra.mxu0 %v710
  %1018 = vmatprep.subr.bf16.mxu0 %v713
  %1019 = vmatpush1.bf16.msra.mxu0 %v712
  %1020 = vmatprep.subr.bf16.mxu0 %v715
  %1021 = vmatpush1.bf16.msra.mxu0 %v714
  %1022 = vmatprep.subr.bf16.mxu0 %v717
  %1023 = vmatpush1.bf16.msra.mxu0 %v716
  %1024 = vmatprep.subr.bf16.mxu0 %v719
  %1025 = vmatpush1.bf16.msra.mxu0 %v718
  %1026 = vmatprep.subr.bf16.mxu0 %v721
  %1027 = vmatpush1.bf16.msra.mxu0 %v720
  %1028 = vmatprep.subr.bf16.mxu0 %v723
  %1029 = vmatpush1.bf16.msra.mxu0 %v722
  %1030 = vmatprep.subr.bf16.mxu0 %v725
  %1031 = vmatpush1.bf16.msra.mxu0 %v724
  %1032 = vmatprep.subr.bf16.mxu0 %v727
  %1033 = vmatpush1.bf16.msra.mxu0 %v726
  %1034 = vmatprep.subr.bf16.mxu0 %v729
  %1035 = vmatpush1.bf16.msra.mxu0 %v728
  %1036 = vmatprep.subr.bf16.mxu0 %v731
  %1037 = vmatpush1.bf16.msra.mxu0 %v730
  %1038 = vmatprep.subr.bf16.mxu0 %v733
  %1039 = vmatpush1.bf16.msra.mxu0 %v732
  %1040 = vmatprep.subr.bf16.mxu0 %v735
  %1041 = vmatpush1.bf16.msra.mxu0 %v734
  %1042 = vmatprep.subr.bf16.mxu0 %v737
  %1043 = vmatpush1.bf16.msra.mxu0 %v736
  %1044 = vmatprep.subr.bf16.mxu0 %v739
  %1045 = vmatpush1.bf16.msra.mxu0 %v738
  %1046 = vmatprep.subr.bf16.mxu0 %v741
  %1047 = vmatpush1.bf16.msra.mxu0 %v740
  %1048 = vmatprep.mubr.bf16.mxu0 %v201
  %1049 = vmatmul.mubr.bf16.gmra.mrb[0].mxu0 %v200
  %v1050 = vpop.f32.mrb[0].mxu0
  %v1051 = vadd.f32 %v1010, %v1050
  %v1052 = vpop.f32.mrb[0].mxu0
  %v1053 = vadd.f32 %v1012, %v1052
  %v1054 = vpop.f32.mrb[0].mxu0
  %v1055 = vpop.f32.mrb[0].mxu0
  %1056 = vdwg.mxu0
  %1057 = vmatprep.subr.bf16.mxu0 %v743
  %1058 = vmatpush1.bf16.msra.mxu0 %v742
  %1059 = vmatprep.subr.bf16.mxu0 %v745
  %1060 = vmatpush1.bf16.msra.mxu0 %v744
  %1061 = vmatprep.subr.bf16.mxu0 %v747
  %1062 = vmatpush1.bf16.msra.mxu0 %v746
  %1063 = vmatprep.subr.bf16.mxu0 %v749
  %1064 = vmatpush1.bf16.msra.mxu0 %v748
  %1065 = vmatprep.subr.bf16.mxu0 %v751
  %1066 = vmatpush1.bf16.msra.mxu0 %v750
  %1067 = vmatprep.subr.bf16.mxu0 %v753
  %1068 = vmatpush1.bf16.msra.mxu0 %v752
  %1069 = vmatprep.subr.bf16.mxu0 %v755
  %1070 = vmatpush1.bf16.msra.mxu0 %v754
  %1071 = vmatprep.subr.bf16.mxu0 %v757
  %1072 = vmatpush1.bf16.msra.mxu0 %v756
  %1073 = vmatprep.subr.bf16.mxu0 %v759
  %1074 = vmatpush1.bf16.msra.mxu0 %v758
  %1075 = vmatprep.subr.bf16.mxu0 %v761
  %1076 = vmatpush1.bf16.msra.mxu0 %v760
  %1077 = vmatprep.subr.bf16.mxu0 %v763
  %1078 = vmatpush1.bf16.msra.mxu0 %v762
  %1079 = vmatprep.subr.bf16.mxu0 %v765
  %1080 = vmatpush1.bf16.msra.mxu0 %v764
  %1081 = vmatprep.subr.bf16.mxu0 %v767
  %1082 = vmatpush1.bf16.msra.mxu0 %v766
  %1083 = vmatprep.subr.bf16.mxu0 %v769
  %1084 = vmatpush1.bf16.msra.mxu0 %v768
  %1085 = vmatprep.subr.bf16.mxu0 %v771
  %1086 = vmatpush1.bf16.msra.mxu0 %v770
  %1087 = vmatprep.subr.bf16.mxu0 %v773
  %1088 = vmatpush1.bf16.msra.mxu0 %v772
  %1089 = vmatprep.mubr.bf16.mxu0 %v203
  %1090 = vmatmul.mubr.bf16.gmra.mrb[0].mxu0 %v202
  %v1091 = vpop.f32.mrb[0].mxu0
  %v1092 = vadd.f32 %v1051, %v1091
  %v1093 = vpop.f32.mrb[0].mxu0
  %v1094 = vadd.f32 %v1053, %v1093
  %v1095 = vpop.f32.mrb[0].mxu0
  %v1096 = vpop.f32.mrb[0].mxu0
  %1097 = vdwg.mxu0
  %1098 = vmatprep.subr.bf16.mxu0 %v775
  %1099 = vmatpush1.bf16.msra.mxu0 %v774
  %1100 = vmatprep.subr.bf16.mxu0 %v777
  %1101 = vmatpush1.bf16.msra.mxu0 %v776
  %1102 = vmatprep.subr.bf16.mxu0 %v779
  %1103 = vmatpush1.bf16.msra.mxu0 %v778
  %1104 = vmatprep.subr.bf16.mxu0 %v781
  %1105 = vmatpush1.bf16.msra.mxu0 %v780
  %1106 = vmatprep.subr.bf16.mxu0 %v783
  %1107 = vmatpush1.bf16.msra.mxu0 %v782
  %1108 = vmatprep.subr.bf16.mxu0 %v785
  %1109 = vmatpush1.bf16.msra.mxu0 %v784
  %1110 = vmatprep.subr.bf16.mxu0 %v787
  %1111 = vmatpush1.bf16.msra.mxu0 %v786
  %1112 = vmatprep.subr.bf16.mxu0 %v789
  %1113 = vmatpush1.bf16.msra.mxu0 %v788
  %1114 = vmatprep.subr.bf16.mxu0 0
  %1115 = vmatpush1.bf16.msra.mxu0 0
  %1116 = vmatprep.subr.bf16.mxu0 0
  %1117 = vmatpush1.bf16.msra.mxu0 0
  %1118 = vmatprep.subr.bf16.mxu0 0
  %1119 = vmatpush1.bf16.msra.mxu0 0
  %1120 = vmatprep.subr.bf16.mxu0 0
  %1121 = vmatpush1.bf16.msra.mxu0 0
  %1122 = vmatprep.subr.bf16.mxu0 0
  %1123 = vmatpush1.bf16.msra.mxu0 0
  %1124 = vmatprep.subr.bf16.mxu0 0
  %1125 = vmatpush1.bf16.msra.mxu0 0
  %1126 = vmatprep.subr.bf16.mxu0 0
  %1127 = vmatpush1.bf16.msra.mxu0 0
  %1128 = vmatprep.subr.bf16.mxu0 0
  %1129 = vmatpush1.bf16.msra.mxu0 0
  %1130 = vmatprep.mubr.bf16.mxu0 0
  %1131 = vmatmul.mubr.bf16.gmra.mrb[0].mxu0 %v204
  %v1132 = vpop.f32.mrb[0].mxu0
  %v1133 = vadd.f32 %v1092, %v1132
  %v1134 = vpop.f32.mrb[0].mxu0
  %v1135 = vadd.f32 %v1094, %v1134
  %v1136 = vpop.f32.mrb[0].mxu0
  %v1137 = vpop.f32.mrb[0].mxu0
  %1138 = vdwg.mxu0
  %v1139 = vmax.f32 %v1133, 0.0
  %v1140 = vmax.f32 %v1135, 0.0
  %v1141 = vrot.slane %v1139, 4
  %v1142 = vadd.f32 %v1139, %v1141
  %v1143 = vrot.slane %v1142, 2
  %v1144 = vadd.f32 %v1142, %v1143
  %v1145 = vrot.slane %v1144, 1
  %v1146 = vadd.f32 %v1144, %v1145
  %v1147 = vrot.slane %v1140, 4
  %v1148 = vadd.f32 %v1140, %v1147
  %v1149 = vrot.slane %v1148, 2
  %v1150 = vadd.f32 %v1148, %v1149
  %v1151 = vrot.slane %v1150, 1
  %v1152 = vadd.f32 %v1150, %v1151
  %1154 = vrot.lane.b32.xlu0 %v1146, 64
  %v1155 = vpop.permute.xlu0 %1154
  %v1157 = vadd.f32 %v1146, %v1155
  %v1158 = vadd.f32 %v1157, %v1152
  %1160 = vrot.lane.b32.xlu0 %v1152, 64
  %v1161 = vpop.permute.xlu0 %1160
  %v1163 = vadd.f32 %v1158, %v1161
  %v1164 = vmul.f32 %v1163, 0.03125
  %1166 = vrot.lane.b32.xlu0 %v1164, 64
  %v1167 = vpop.permute.xlu0 %1166
  %vm1169 = vcmask 523264
  %v1170 = vsel %vm1169, %v1164, %v1167
  %v1171 = vlaneseq
  %v1172 = vshrl.u32 %v1171, 7
  %v1173 = vsub.s32 0, %v1172
  %v1174 = vrot.slane %v1170, %v1173
  %v1175 = vsub.f32 %v1139, %v1174
  %v1176 = vsub.f32 %v1140, %v1174
  %v1177 = vmul.f32 %v1175, %v1175
  %v1178 = vmul.f32 %v1176, %v1176
  %v1179 = vrot.slane %v1177, 4
  %v1180 = vadd.f32 %v1177, %v1179
  %v1181 = vrot.slane %v1180, 2
  %v1182 = vadd.f32 %v1180, %v1181
  %v1183 = vrot.slane %v1182, 1
  %v1184 = vadd.f32 %v1182, %v1183
  %v1185 = vrot.slane %v1178, 4
  %v1186 = vadd.f32 %v1178, %v1185
  %v1187 = vrot.slane %v1186, 2
  %v1188 = vadd.f32 %v1186, %v1187
  %v1189 = vrot.slane %v1188, 1
  %v1190 = vadd.f32 %v1188, %v1189
  %1192 = vrot.lane.b32.xlu0 %v1184, 64
  %v1193 = vpop.permute.xlu0 %1192
  %v1195 = vadd.f32 %v1184, %v1193
  %v1196 = vadd.f32 %v1195, %v1190
  %1198 = vrot.lane.b32.xlu0 %v1190, 64
  %v1199 = vpop.permute.xlu0 %1198
  %v1201 = vadd.f32 %v1196, %v1199
  %v1202 = vmul.f32 %v1201, 0.03125
  %v1203 = vadd.f32 %v1202, 1e-05
  %v1204 = vrsqrt.pop %v1203
  %1206 = vrot.lane.b32.xlu0 %v1204, 64
  %v1207 = vpop.permute.xlu0 %1206
  %v1209 = vsel %vm1169, %v1204, %v1207
  %v1210 = vld [vmem:[%s3] sm:$0x3]
  %v1212 = vlaneseq
  %v1213 = vshrl.u32 %v1212, 7
  %v1214 = vsub.s32 0, %v1213
  %v1215 = vrot.slane %v1210, %v1214
  %v1216 = vlaneseq
  %v1217 = vshrl.u32 %v1216, 7
  %v1218 = vsub.s32 1, %v1217
  %v1219 = vrot.slane %v1210, %v1218
  %v1222 = vmul.f32 %v1209, %v1215
  %v1223 = vmul.f32 %v1209, %v1219
  %v1224 = vlaneseq
  %v1225 = vshrl.u32 %v1224, 7
  %v1226 = vsub.s32 0, %v1225
  %v1227 = vrot.slane %v1222, %v1226
  %v1228 = vlaneseq
  %v1229 = vshrl.u32 %v1228, 7
  %v1230 = vsub.s32 0, %v1229
  %v1231 = vrot.slane %v1223, %v1230
  %v1232 = vmul.f32 %v1175, %v1227
  %v1233 = vmul.f32 %v1176, %v1231
  %v1234 = vld [vmem:[%s4] sm:$0x3]
  %v1236 = vlaneseq
  %v1237 = vshrl.u32 %v1236, 7
  %v1238 = vsub.s32 0, %v1237
  %v1239 = vrot.slane %v1234, %v1238
  %v1240 = vlaneseq
  %v1241 = vshrl.u32 %v1240, 7
  %v1242 = vsub.s32 1, %v1241
  %v1243 = vrot.slane %v1234, %v1242
  %v1246 = vadd.f32 %v1232, %v1239
  %v1247 = vadd.f32 %v1233, %v1243
  %v1248 = vpack.c.bf16 %v1246, %v1246
  %v1249 = vpack.c.bf16 %v1247, %v1247
  %v1252 = vunpack.c.l.b16 %v1248
  %v1253 = vunpack.c.l.b16 %v1249
  %v1254 = vpack.c.b16 %v1253, %v1252
  %1256 = vst [vmem:[%s5] sm:$0xff] %v1254
  // Predicated region
  $region22: #{cnn_forward.13} parent=0 // pred_check
    _
  $region23: #{cnn_forward.13} parent=0 // pred_check_branch
    %1258 = sbr.rel (0) target = $region25
  $region24: #{cnn_forward.13} parent=0 // pred_region
    _
  $region25: #{cnn_forward.13} parent=0 // pred_fallthru
    _
  // Predicated region
  $region26: #{cnn_forward.13} parent=0 // pred_check
    _
  $region27: #{cnn_forward.13} parent=0 // pred_check_branch
    %1260 = sbr.rel (0) target = $region29
  $region28: #{cnn_forward.13} parent=0 // pred_region
    _
  $region29: #{cnn_forward.13} parent=0 // pred_fallthru
    _

// kernel: cnn_forward.14
$region0: #{cnn_forward.14}
  #allocation0 [shape = 'u32[]', space=smem, size = 0x4, offset = 0x4, fixed_abs, tag = 'smem constant byte address 0x4 - core index']
  #allocation1 [shape = 'u32[144,128]{1,0:T(1,128)}', space=vmem, size = 0x12000, scoped, tag = 'internal scratch']
  %s0 = inlined_call_operand.vmem [shape: bf16[32,576], index: 0, kind: input, shape index: {}]
  %s1 = inlined_call_operand.vmem [shape: bf16[576,128], index: 1, kind: input, shape index: {}]
  %s2 = inlined_call_operand.vmem [shape: f32[1,128], index: 2, kind: input, shape index: {}]
  %s3 = inlined_call_operand.vmem [shape: f32[1,128], index: 3, kind: input, shape index: {}]
  %s4 = inlined_call_operand.vmem [shape: f32[1,128], index: 4, kind: input, shape index: {}]
  %s5 = inlined_call_operand.vmem [shape: bf16[32,128], index: 5, kind: output, shape index: {}]
  %s6 = sld [smem:[#allocation0]]
  $region30: #{cnn_forward.14} parent=0
    _
  %s8 = ssub.s32 1, %s6
  %s9 = scalar_select 0, %s8, %s6
  // Predicated region
  $region2: #{cnn_forward.14} parent=0 // pred_check
    _
  $region3: #{cnn_forward.14} parent=0 // pred_check_branch
    %11 = sbr.rel (0) target = $region5
  $region4: #{cnn_forward.14} parent=0 // pred_region
    _
  $region5: #{cnn_forward.14} parent=0 // pred_fallthru
    _
  // Predicated region
  $region6: #{cnn_forward.14} parent=0 // pred_check
    _
  $region7: #{cnn_forward.14} parent=0 // pred_check_branch
    %13 = sbr.rel (0) target = $region9
  $region8: #{cnn_forward.14} parent=0 // pred_region
    _
  $region9: #{cnn_forward.14} parent=0 // pred_fallthru
    _
  // Predicated region
  $region10: #{cnn_forward.14} parent=0 // pred_check
    _
  $region11: #{cnn_forward.14} parent=0 // pred_check_branch
    %15 = sbr.rel (0) target = $region13
  $region12: #{cnn_forward.14} parent=0 // pred_region
    _
  $region13: #{cnn_forward.14} parent=0 // pred_fallthru
    _
  // Predicated region
  $region14: #{cnn_forward.14} parent=0 // pred_check
    _
  $region15: #{cnn_forward.14} parent=0 // pred_check_branch
    %17 = sbr.rel (0) target = $region17
  $region16: #{cnn_forward.14} parent=0 // pred_region
    _
  $region17: #{cnn_forward.14} parent=0 // pred_fallthru
    _
  // Predicated region
  $region18: #{cnn_forward.14} parent=0 // pred_check
    _
  $region19: #{cnn_forward.14} parent=0 // pred_check_branch
    %19 = sbr.rel (0) target = $region21
  $region20: #{cnn_forward.14} parent=0 // pred_region
    _
  $region21: #{cnn_forward.14} parent=0 // pred_fallthru
    _
  %v21 = vld [vmem:[%s0] sm:$0xff]
  %v22 = vld [vmem:[%s0 + $0x8] sm:$0xff]
  %v23 = vld [vmem:[%s0 + $0x10] sm:$0xf]
  %v24 = vld [vmem:[%s0 + $0x14] sm:$0xff]
  %v25 = vld [vmem:[%s0 + $0x1c] sm:$0xff]
  %v26 = vld [vmem:[%s0 + $0x24] sm:$0xf]
  %v27 = vld [vmem:[%s0 + $0x28] sm:$0xff]
  %v28 = vld [vmem:[%s0 + $0x30] sm:$0xff]
  %v29 = vld [vmem:[%s0 + $0x38] sm:$0xf]
  %v30 = vld [vmem:[%s0 + $0x3c] sm:$0xff]
  %v31 = vld [vmem:[%s0 + $0x44] sm:$0xff]
  %v32 = vld [vmem:[%s0 + $0x4c] sm:$0xf]
  %v33 = vld [vmem:[%s1] sm:$0xf]
  %v34 = vld [vmem:[%s1 + $0x4] sm:$0xf]
  %v35 = vld [vmem:[%s1 + $0x8] sm:$0xf]
  %v36 = vld [vmem:[%s1 + $0xc] sm:$0xf]
  %v37 = vld [vmem:[%s1 + $0x10] sm:$0xf]
  %v38 = vld [vmem:[%s1 + $0x14] sm:$0xf]
  %v39 = vld [vmem:[%s1 + $0x18] sm:$0xf]
  %v40 = vld [vmem:[%s1 + $0x1c] sm:$0xf]
  %v41 = vld [vmem:[%s1 + $0x20] sm:$0xf]
  %v42 = vld [vmem:[%s1 + $0x24] sm:$0xf]
  %v43 = vld [vmem:[%s1 + $0x28] sm:$0xf]
  %v44 = vld [vmem:[%s1 + $0x2c] sm:$0xf]
  %v45 = vld [vmem:[%s1 + $0x30] sm:$0xf]
  %v46 = vld [vmem:[%s1 + $0x34] sm:$0xf]
  %v47 = vld [vmem:[%s1 + $0x38] sm:$0xf]
  %v48 = vld [vmem:[%s1 + $0x3c] sm:$0xf]
  %v49 = vld [vmem:[%s1 + $0x40] sm:$0xf]
  %v50 = vld [vmem:[%s1 + $0x44] sm:$0xf]
  %v51 = vld [vmem:[%s1 + $0x48] sm:$0xf]
  %v52 = vld [vmem:[%s1 + $0x4c] sm:$0xf]
  %v53 = vld [vmem:[%s1 + $0x50] sm:$0xf]
  %v54 = vld [vmem:[%s1 + $0x54] sm:$0xf]
  %v55 = vld [vmem:[%s1 + $0x58] sm:$0xf]
  %v56 = vld [vmem:[%s1 + $0x5c] sm:$0xf]
  %v57 = vld [vmem:[%s1 + $0x60] sm:$0xf]
  %v58 = vld [vmem:[%s1 + $0x64] sm:$0xf]
  %v59 = vld [vmem:[%s1 + $0x68] sm:$0xf]
  %v60 = vld [vmem:[%s1 + $0x6c] sm:$0xf]
  %v61 = vld [vmem:[%s1 + $0x70] sm:$0xf]
  %v62 = vld [vmem:[%s1 + $0x74] sm:$0xf]
  %v63 = vld [vmem:[%s1 + $0x78] sm:$0xf]
  %v64 = vld [vmem:[%s1 + $0x7c] sm:$0xf]
  %v65 = vld [vmem:[%s1 + $0x80] sm:$0xf]
  %v66 = vld [vmem:[%s1 + $0x84] sm:$0xf]
  %v67 = vld [vmem:[%s1 + $0x88] sm:$0xf]
  %v68 = vld [vmem:[%s1 + $0x8c] sm:$0xf]
  %v69 = vld [vmem:[%s1 + $0x90] sm:$0xf]
  %v70 = vld [vmem:[%s1 + $0x94] sm:$0xf]
  %v71 = vld [vmem:[%s1 + $0x98] sm:$0xf]
  %v72 = vld [vmem:[%s1 + $0x9c] sm:$0xf]
  %v73 = vld [vmem:[%s1 + $0xa0] sm:$0xf]
  %v74 = vld [vmem:[%s1 + $0xa4] sm:$0xf]
  %v75 = vld [vmem:[%s1 + $0xa8] sm:$0xf]
  %v76 = vld [vmem:[%s1 + $0xac] sm:$0xf]
  %v77 = vld [vmem:[%s1 + $0xb0] sm:$0xf]
  %v78 = vld [vmem:[%s1 + $0xb4] sm:$0xf]
  %v79 = vld [vmem:[%s1 + $0xb8] sm:$0xf]
  %v80 = vld [vmem:[%s1 + $0xbc] sm:$0xf]
  %v81 = vld [vmem:[%s1 + $0xc0] sm:$0xf]
  %v82 = vld [vmem:[%s1 + $0xc4] sm:$0xf]
  %v83 = vld [vmem:[%s1 + $0xc8] sm:$0xf]
  %v84 = vld [vmem:[%s1 + $0xcc] sm:$0xf]
  %v85 = vld [vmem:[%s1 + $0xd0] sm:$0xf]
  %v86 = vld [vmem:[%s1 + $0xd4] sm:$0xf]
  %v87 = vld [vmem:[%s1 + $0xd8] sm:$0xf]
  %v88 = vld [vmem:[%s1 + $0xdc] sm:$0xf]
  %v89 = vld [vmem:[%s1 + $0xe0] sm:$0xf]
  %v90 = vld [vmem:[%s1 + $0xe4] sm:$0xf]
  %v91 = vld [vmem:[%s1 + $0xe8] sm:$0xf]
  %v92 = vld [vmem:[%s1 + $0xec] sm:$0xf]
  %v93 = vld [vmem:[%s1 + $0xf0] sm:$0xf]
  %v94 = vld [vmem:[%s1 + $0xf4] sm:$0xf]
  %v95 = vld [vmem:[%s1 + $0xf8] sm:$0xf]
  %v96 = vld [vmem:[%s1 + $0xfc] sm:$0xf]
  %v97 = vld [vmem:[%s1 + $0x100] sm:$0xf]
  %v98 = vld [vmem:[%s1 + $0x104] sm:$0xf]
  %v99 = vld [vmem:[%s1 + $0x108] sm:$0xf]
  %v100 = vld [vmem:[%s1 + $0x10c] sm:$0xf]
  %v101 = vld [vmem:[%s1 + $0x110] sm:$0xf]
  %v102 = vld [vmem:[%s1 + $0x114] sm:$0xf]
  %v103 = vld [vmem:[%s1 + $0x118] sm:$0xf]
  %v104 = vld [vmem:[%s1 + $0x11c] sm:$0xf]
  %v105 = vld [vmem:[%s2] sm:$0x1]
  %v107 = vlaneseq
  %v108 = vshrl.u32 %v107, 7
  %v109 = vsub.s32 0, %v108
  %v110 = vrot.slane %v105, %v109
  %v124 = vunpack.c.l.b16 %v21
  %v125 = vunpack.c.h.b16 %v21
  %v126 = vunpack.c.l.b16 %v22
  %v127 = vunpack.c.h.b16 %v22
  %v128 = vunpack.c.l.b16 %v23
  %v129 = vunpack.c.l.b16 %v24
  %v130 = vunpack.c.h.b16 %v24
  %v131 = vunpack.c.l.b16 %v25
  %v132 = vunpack.c.h.b16 %v25
  %v133 = vunpack.c.l.b16 %v26
  %v134 = vunpack.c.l.b16 %v27
  %v135 = vunpack.c.h.b16 %v27
  %v136 = vunpack.c.l.b16 %v28
  %v137 = vunpack.c.h.b16 %v28
  %v138 = vunpack.c.l.b16 %v29
  %v139 = vunpack.c.l.b16 %v30
  %v140 = vunpack.c.h.b16 %v30
  %v141 = vunpack.c.l.b16 %v31
  %v142 = vunpack.c.h.b16 %v31
  %v143 = vunpack.c.l.b16 %v32
  %v144 = vpack.c.b16 %v129, %v124
  %v145 = vpack.c.b16 %v130, %v125
  %v146 = vpack.c.b16 %v131, %v126
  %v147 = vpack.c.b16 %v132, %v127
  %v148 = vpack.c.b16 %v133, %v128
  %v149 = vpack.c.b16 %v139, %v134
  %v150 = vpack.c.b16 %v140, %v135
  %v151 = vpack.c.b16 %v141, %v136
  %v152 = vpack.c.b16 %v142, %v137
  %v153 = vpack.c.b16 %v143, %v138
  %v234 = vunpack.c.l.b16 %v33
  %v235 = vunpack.c.l.b16 %v34
  %v236 = vunpack.c.l.b16 %v35
  %v237 = vunpack.c.l.b16 %v36
  %v238 = vunpack.c.l.b16 %v37
  %v239 = vunpack.c.l.b16 %v38
  %v240 = vunpack.c.l.b16 %v39
  %v241 = vunpack.c.l.b16 %v40
  %v242 = vunpack.c.l.b16 %v41
  %v243 = vunpack.c.l.b16 %v42
  %v244 = vunpack.c.l.b16 %v43
  %v245 = vunpack.c.l.b16 %v44
  %v246 = vunpack.c.l.b16 %v45
  %v247 = vunpack.c.l.b16 %v46
  %v248 = vunpack.c.l.b16 %v47
  %v249 = vunpack.c.l.b16 %v48
  %v250 = vunpack.c.l.b16 %v49
  %v251 = vunpack.c.l.b16 %v50
  %v252 = vunpack.c.l.b16 %v51
  %v253 = vunpack.c.l.b16 %v52
  %v254 = vunpack.c.l.b16 %v53
  %v255 = vunpack.c.l.b16 %v54
  %v256 = vunpack.c.l.b16 %v55
  %v257 = vunpack.c.l.b16 %v56
  %v258 = vunpack.c.l.b16 %v57
  %v259 = vunpack.c.l.b16 %v58
  %v260 = vunpack.c.l.b16 %v59
  %v261 = vunpack.c.l.b16 %v60
  %v262 = vunpack.c.l.b16 %v61
  %v263 = vunpack.c.l.b16 %v62
  %v264 = vunpack.c.l.b16 %v63
  %v265 = vunpack.c.l.b16 %v64
  %v266 = vunpack.c.l.b16 %v65
  %v267 = vunpack.c.l.b16 %v66
  %v268 = vunpack.c.l.b16 %v67
  %v269 = vunpack.c.l.b16 %v68
  %v270 = vunpack.c.l.b16 %v69
  %v271 = vunpack.c.l.b16 %v70
  %v272 = vunpack.c.l.b16 %v71
  %v273 = vunpack.c.l.b16 %v72
  %v274 = vunpack.c.l.b16 %v73
  %v275 = vunpack.c.l.b16 %v74
  %v276 = vunpack.c.l.b16 %v75
  %v277 = vunpack.c.l.b16 %v76
  %v278 = vunpack.c.l.b16 %v77
  %v279 = vunpack.c.l.b16 %v78
  %v280 = vunpack.c.l.b16 %v79
  %v281 = vunpack.c.l.b16 %v80
  %v282 = vunpack.c.l.b16 %v81
  %v283 = vunpack.c.l.b16 %v82
  %v284 = vunpack.c.l.b16 %v83
  %v285 = vunpack.c.l.b16 %v84
  %v286 = vunpack.c.l.b16 %v85
  %v287 = vunpack.c.l.b16 %v86
  %v288 = vunpack.c.l.b16 %v87
  %v289 = vunpack.c.l.b16 %v88
  %v290 = vunpack.c.l.b16 %v89
  %v291 = vunpack.c.l.b16 %v90
  %v292 = vunpack.c.l.b16 %v91
  %v293 = vunpack.c.l.b16 %v92
  %v294 = vunpack.c.l.b16 %v93
  %v295 = vunpack.c.l.b16 %v94
  %v296 = vunpack.c.l.b16 %v95
  %v297 = vunpack.c.l.b16 %v96
  %v298 = vunpack.c.l.b16 %v97
  %v299 = vunpack.c.l.b16 %v98
  %v300 = vunpack.c.l.b16 %v99
  %v301 = vunpack.c.l.b16 %v100
  %v302 = vunpack.c.l.b16 %v101
  %v303 = vunpack.c.l.b16 %v102
  %v304 = vunpack.c.l.b16 %v103
  %v305 = vunpack.c.l.b16 %v104
  %v306 = vpack.c.b16 %v235, %v234
  %v307 = vpack.c.b16 %v237, %v236
  %v308 = vpack.c.b16 %v239, %v238
  %v309 = vpack.c.b16 %v241, %v240
  %v310 = vpack.c.b16 %v243, %v242
  %v311 = vpack.c.b16 %v245, %v244
  %v312 = vpack.c.b16 %v247, %v246
  %v313 = vpack.c.b16 %v249, %v248
  %v314 = vpack.c.b16 %v251, %v250
  %v315 = vpack.c.b16 %v253, %v252
  %v316 = vpack.c.b16 %v255, %v254
  %v317 = vpack.c.b16 %v257, %v256
  %v318 = vpack.c.b16 %v259, %v258
  %v319 = vpack.c.b16 %v261, %v260
  %v320 = vpack.c.b16 %v263, %v262
  %v321 = vpack.c.b16 %v265, %v264
  %v322 = vpack.c.b16 %v267, %v266
  %v323 = vpack.c.b16 %v269, %v268
  %v324 = vpack.c.b16 %v271, %v270
  %v325 = vpack.c.b16 %v273, %v272
  %v326 = vpack.c.b16 %v275, %v274
  %v327 = vpack.c.b16 %v277, %v276
  %v328 = vpack.c.b16 %v279, %v278
  %v329 = vpack.c.b16 %v281, %v280
  %v330 = vpack.c.b16 %v283, %v282
  %v331 = vpack.c.b16 %v285, %v284
  %v332 = vpack.c.b16 %v287, %v286
  %v333 = vpack.c.b16 %v289, %v288
  %v334 = vpack.c.b16 %v291, %v290
  %v335 = vpack.c.b16 %v293, %v292
  %v336 = vpack.c.b16 %v295, %v294
  %v337 = vpack.c.b16 %v297, %v296
  %v338 = vpack.c.b16 %v299, %v298
  %v339 = vpack.c.b16 %v301, %v300
  %v340 = vpack.c.b16 %v303, %v302
  %v341 = vpack.c.b16 %v305, %v304
  %vm378 = vcmask 523264
  %v380 = vsel %vm378, %v148, 0
  %v383 = vsel %vm378, %v153, 0
  %385 = vmatprep.subr.bf16.mxu0 0
  %386 = vmatpush1.bf16.msra.mxu0 %v306
  %387 = vmatprep.subr.bf16.mxu0 0
  %388 = vmatpush1.bf16.msra.mxu0 %v307
  %389 = vmatprep.subr.bf16.mxu0 0
  %390 = vmatpush1.bf16.msra.mxu0 %v308
  %391 = vmatprep.subr.bf16.mxu0 0
  %392 = vmatpush1.bf16.msra.mxu0 %v309
  %393 = vmatprep.subr.bf16.mxu0 0
  %394 = vmatpush1.bf16.msra.mxu0 %v310
  %395 = vmatprep.subr.bf16.mxu0 0
  %396 = vmatpush1.bf16.msra.mxu0 %v311
  %397 = vmatprep.subr.bf16.mxu0 0
  %398 = vmatpush1.bf16.msra.mxu0 %v312
  %399 = vmatprep.subr.bf16.mxu0 0
  %400 = vmatpush1.bf16.msra.mxu0 %v313
  %401 = vmatprep.subr.bf16.mxu0 0
  %402 = vmatpush1.bf16.msra.mxu0 %v314
  %403 = vmatprep.subr.bf16.mxu0 0
  %404 = vmatpush1.bf16.msra.mxu0 %v315
  %405 = vmatprep.subr.bf16.mxu0 0
  %406 = vmatpush1.bf16.msra.mxu0 %v316
  %407 = vmatprep.subr.bf16.mxu0 0
  %408 = vmatpush1.bf16.msra.mxu0 %v317
  %409 = vmatprep.subr.bf16.mxu0 0
  %410 = vmatpush1.bf16.msra.mxu0 %v318
  %411 = vmatprep.subr.bf16.mxu0 0
  %412 = vmatpush1.bf16.msra.mxu0 %v319
  %413 = vmatprep.subr.bf16.mxu0 0
  %414 = vmatpush1.bf16.msra.mxu0 %v320
  %415 = vmatprep.subr.bf16.mxu0 0
  %416 = vmatpush1.bf16.msra.mxu0 %v321
  %417 = vmatprep.mubr.bf16.mxu0 %v145
  %418 = vmatmul.mubr.bf16.gmra.mrb[0].mxu0 %v144
  %v419 = vpop.f32.mrb[0].mxu0
  %v420 = vadd.f32 %v110, %v419
  %v421 = vpop.f32.mrb[0].mxu0
  %v422 = vpop.f32.mrb[0].mxu0
  %v423 = vadd.f32 %v110, %v422
  %v424 = vpop.f32.mrb[0].mxu0
  %425 = vmatprep.mubr.bf16.mxu0 %v150
  %426 = vmatmul.mubr.bf16.gmra.mrb[0].mxu0 %v149
  %v427 = vpop.f32.mrb[0].mxu0
  %v428 = vadd.f32 %v110, %v427
  %v429 = vpop.f32.mrb[0].mxu0
  %v430 = vpop.f32.mrb[0].mxu0
  %v431 = vadd.f32 %v110, %v430
  %v432 = vpop.f32.mrb[0].mxu0
  %433 = vdwg.mxu0
  %434 = vmatprep.subr.bf16.mxu0 0
  %435 = vmatpush1.bf16.msra.mxu0 %v322
  %436 = vmatprep.subr.bf16.mxu0 0
  %437 = vmatpush1.bf16.msra.mxu0 %v323
  %438 = vmatprep.subr.bf16.mxu0 0
  %439 = vmatpush1.bf16.msra.mxu0 %v324
  %440 = vmatprep.subr.bf16.mxu0 0
  %441 = vmatpush1.bf16.msra.mxu0 %v325
  %442 = vmatprep.subr.bf16.mxu0 0
  %443 = vmatpush1.bf16.msra.mxu0 %v326
  %444 = vmatprep.subr.bf16.mxu0 0
  %445 = vmatpush1.bf16.msra.mxu0 %v327
  %446 = vmatprep.subr.bf16.mxu0 0
  %447 = vmatpush1.bf16.msra.mxu0 %v328
  %448 = vmatprep.subr.bf16.mxu0 0
  %449 = vmatpush1.bf16.msra.mxu0 %v329
  %450 = vmatprep.subr.bf16.mxu0 0
  %451 = vmatpush1.bf16.msra.mxu0 %v330
  %452 = vmatprep.subr.bf16.mxu0 0
  %453 = vmatpush1.bf16.msra.mxu0 %v331
  %454 = vmatprep.subr.bf16.mxu0 0
  %455 = vmatpush1.bf16.msra.mxu0 %v332
  %456 = vmatprep.subr.bf16.mxu0 0
  %457 = vmatpush1.bf16.msra.mxu0 %v333
  %458 = vmatprep.subr.bf16.mxu0 0
  %459 = vmatpush1.bf16.msra.mxu0 %v334
  %460 = vmatprep.subr.bf16.mxu0 0
  %461 = vmatpush1.bf16.msra.mxu0 %v335
  %462 = vmatprep.subr.bf16.mxu0 0
  %463 = vmatpush1.bf16.msra.mxu0 %v336
  %464 = vmatprep.subr.bf16.mxu0 0
  %465 = vmatpush1.bf16.msra.mxu0 %v337
  %466 = vmatprep.mubr.bf16.mxu0 %v147
  %467 = vmatmul.mubr.bf16.gmra.mrb[0].mxu0 %v146
  %v468 = vpop.f32.mrb[0].mxu0
  %v469 = vadd.f32 %v420, %v468
  %v470 = vpop.f32.mrb[0].mxu0
  %v471 = vpop.f32.mrb[0].mxu0
  %v472 = vadd.f32 %v423, %v471
  %v473 = vpop.f32.mrb[0].mxu0
  %474 = vmatprep.mubr.bf16.mxu0 %v152
  %475 = vmatmul.mubr.bf16.gmra.mrb[0].mxu0 %v151
  %v476 = vpop.f32.mrb[0].mxu0
  %v477 = vadd.f32 %v428, %v476
  %v478 = vpop.f32.mrb[0].mxu0
  %v479 = vpop.f32.mrb[0].mxu0
  %v480 = vadd.f32 %v431, %v479
  %v481 = vpop.f32.mrb[0].mxu0
  %482 = vdwg.mxu0
  %483 = vmatprep.subr.bf16.mxu0 0
  %484 = vmatpush1.bf16.msra.mxu0 %v338
  %485 = vmatprep.subr.bf16.mxu0 0
  %486 = vmatpush1.bf16.msra.mxu0 %v339
  %487 = vmatprep.subr.bf16.mxu0 0
  %488 = vmatpush1.bf16.msra.mxu0 %v340
  %489 = vmatprep.subr.bf16.mxu0 0
  %490 = vmatpush1.bf16.msra.mxu0 %v341
  %491 = vmatprep.subr.bf16.mxu0 0
  %492 = vmatpush1.bf16.msra.mxu0 0
  %493 = vmatprep.subr.bf16.mxu0 0
  %494 = vmatpush1.bf16.msra.mxu0 0
  %495 = vmatprep.subr.bf16.mxu0 0
  %496 = vmatpush1.bf16.msra.mxu0 0
  %497 = vmatprep.subr.bf16.mxu0 0
  %498 = vmatpush1.bf16.msra.mxu0 0
  %499 = vmatprep.subr.bf16.mxu0 0
  %500 = vmatpush1.bf16.msra.mxu0 0
  %501 = vmatprep.subr.bf16.mxu0 0
  %502 = vmatpush1.bf16.msra.mxu0 0
  %503 = vmatprep.subr.bf16.mxu0 0
  %504 = vmatpush1.bf16.msra.mxu0 0
  %505 = vmatprep.subr.bf16.mxu0 0
  %506 = vmatpush1.bf16.msra.mxu0 0
  %507 = vmatprep.subr.bf16.mxu0 0
  %508 = vmatpush1.bf16.msra.mxu0 0
  %509 = vmatprep.subr.bf16.mxu0 0
  %510 = vmatpush1.bf16.msra.mxu0 0
  %511 = vmatprep.subr.bf16.mxu0 0
  %512 = vmatpush1.bf16.msra.mxu0 0
  %513 = vmatprep.subr.bf16.mxu0 0
  %514 = vmatpush1.bf16.msra.mxu0 0
  %515 = vmatprep.mubr.bf16.mxu0 0
  %516 = vmatmul.mubr.bf16.gmra.mrb[0].mxu0 %v380
  %v517 = vpop.f32.mrb[0].mxu0
  %v518 = vadd.f32 %v469, %v517
  %v519 = vpop.f32.mrb[0].mxu0
  %v520 = vpop.f32.mrb[0].mxu0
  %v521 = vadd.f32 %v472, %v520
  %v522 = vpop.f32.mrb[0].mxu0
  %523 = vmatprep.mubr.bf16.mxu0 0
  %524 = vmatmul.mubr.bf16.gmra.mrb[0].mxu0 %v383
  %v525 = vpop.f32.mrb[0].mxu0
  %v526 = vadd.f32 %v477, %v525
  %v527 = vpop.f32.mrb[0].mxu0
  %v528 = vpop.f32.mrb[0].mxu0
  %v529 = vadd.f32 %v480, %v528
  %v530 = vpop.f32.mrb[0].mxu0
  %531 = vdwg.mxu0
  %v532 = vmax.f32 %v518, 0.0
  %v533 = vmax.f32 %v521, 0.0
  %v534 = vmax.f32 %v526, 0.0
  %v535 = vmax.f32 %v529, 0.0
  %v536 = vadd.f32 %v532, %v533
  %v537 = vadd.f32 %v536, %v534
  %v538 = vadd.f32 %v537, %v535
  %v539 = vrot.slane %v538, 4
  %v540 = vadd.f32 %v538, %v539
  %v541 = vrot.slane %v540, 2
  %v542 = vadd.f32 %v540, %v541
  %v543 = vrot.slane %v542, 1
  %v544 = vadd.f32 %v542, %v543
  %546 = vrot.lane.b32.xlu0 %v544, 96
  %v547 = vpop.permute.xlu0 %546
  %v549 = vadd.f32 %v544, %v547
  %550 = vrot.lane.b32.xlu0 %v544, 64
  %v551 = vpop.permute.xlu0 %550
  %v553 = vadd.f32 %v549, %v551
  %554 = vrot.lane.b32.xlu0 %v544, 32
  %v555 = vpop.permute.xlu0 %554
  %v557 = vadd.f32 %v553, %v555
  %v558 = vmul.f32 %v557, 0.0078125
  %560 = vrot.lane.b32.xlu0 %v558, 32
  %v561 = vpop.permute.xlu0 %560
  %563 = vrot.lane.b32.xlu0 %v558, 64
  %v564 = vpop.permute.xlu0 %563
  %566 = vrot.lane.b32.xlu0 %v558, 96
  %v567 = vpop.permute.xlu0 %566
  %vm569 = vcmask 261120
  %v570 = vsel %vm569, %v558, %v561
  %v571 = vsel %vm378, %v570, %v564
  %vm572 = vcmask 785408
  %v573 = vsel %vm572, %v571, %v567
  %v574 = vlaneseq
  %v575 = vshrl.u32 %v574, 7
  %v576 = vsub.s32 0, %v575
  %v577 = vrot.slane %v573, %v576
  %v578 = vsub.f32 %v532, %v577
  %v579 = vsub.f32 %v533, %v577
  %v580 = vsub.f32 %v534, %v577
  %v581 = vsub.f32 %v535, %v577
  %v582 = vmul.f32 %v578, %v578
  %v583 = vmul.f32 %v579, %v579
  %v584 = vmul.f32 %v580, %v580
  %v585 = vmul.f32 %v581, %v581
  %v586 = vadd.f32 %v582, %v583
  %v587 = vadd.f32 %v586, %v584
  %v588 = vadd.f32 %v587, %v585
  %v589 = vrot.slane %v588, 4
  %v590 = vadd.f32 %v588, %v589
  %v591 = vrot.slane %v590, 2
  %v592 = vadd.f32 %v590, %v591
  %v593 = vrot.slane %v592, 1
  %v594 = vadd.f32 %v592, %v593
  %596 = vrot.lane.b32.xlu0 %v594, 96
  %v597 = vpop.permute.xlu0 %596
  %v599 = vadd.f32 %v594, %v597
  %600 = vrot.lane.b32.xlu0 %v594, 64
  %v601 = vpop.permute.xlu0 %600
  %v603 = vadd.f32 %v599, %v601
  %604 = vrot.lane.b32.xlu0 %v594, 32
  %v605 = vpop.permute.xlu0 %604
  %v607 = vadd.f32 %v603, %v605
  %v608 = vmul.f32 %v607, 0.0078125
  %v609 = vadd.f32 %v608, 1e-05
  %v610 = vrsqrt.pop %v609
  %612 = vrot.lane.b32.xlu0 %v610, 32
  %v613 = vpop.permute.xlu0 %612
  %615 = vrot.lane.b32.xlu0 %v610, 64
  %v616 = vpop.permute.xlu0 %615
  %618 = vrot.lane.b32.xlu0 %v610, 96
  %v619 = vpop.permute.xlu0 %618
  %v621 = vsel %vm569, %v610, %v613
  %v622 = vsel %vm378, %v621, %v616
  %v623 = vsel %vm572, %v622, %v619
  %v624 = vld [vmem:[%s3] sm:$0x1]
  %v625 = vmul.f32 %v623, %v624
  %v626 = vlaneseq
  %v627 = vshrl.u32 %v626, 7
  %v628 = vsub.s32 0, %v627
  %v629 = vrot.slane %v625, %v628
  %v630 = vmul.f32 %v578, %v629
  %v631 = vmul.f32 %v579, %v629
  %v632 = vmul.f32 %v580, %v629
  %v633 = vmul.f32 %v581, %v629
  %v634 = vld [vmem:[%s4] sm:$0x1]
  %v636 = vlaneseq
  %v637 = vshrl.u32 %v636, 7
  %v638 = vsub.s32 0, %v637
  %v639 = vrot.slane %v634, %v638
  %v641 = vadd.f32 %v630, %v639
  %v642 = vadd.f32 %v631, %v639
  %v643 = vadd.f32 %v632, %v639
  %v644 = vadd.f32 %v633, %v639
  %v645 = vpack.c.bf16 %v642, %v641
  %v646 = vpack.c.bf16 %v644, %v643
  %v649 = vunpack.c.l.b16 %v645
  %v650 = vunpack.c.h.b16 %v645
  %v651 = vunpack.c.l.b16 %v646
  %v652 = vunpack.c.h.b16 %v646
  %v653 = vpack.c.b16 %v649, %v649
  %v654 = vpack.c.b16 %v650, %v650
  %v655 = vpack.c.b16 %v651, %v651
  %v656 = vpack.c.b16 %v652, %v652
  %661 = vst [vmem:[%s5] sm:$0xf] %v653
  %662 = vst [vmem:[%s5 + $0x4] sm:$0xf] %v654
  %663 = vst [vmem:[%s5 + $0x8] sm:$0xf] %v655
  %664 = vst [vmem:[%s5 + $0xc] sm:$0xf] %v656
  // Predicated region
  $region22: #{cnn_forward.14} parent=0 // pred_check
    _
  $region23: #{cnn_forward.14} parent=0 // pred_check_branch
    %666 = sbr.rel (0) target = $region25
  $region24: #{cnn_forward.14} parent=0 // pred_region
    _
  $region25: #{cnn_forward.14} parent=0 // pred_fallthru
    _
  // Predicated region
  $region26: #{cnn_forward.14} parent=0 // pred_check
    _
  $region27: #{cnn_forward.14} parent=0 // pred_check_branch
    %668 = sbr.rel (0) target = $region29
  $region28: #{cnn_forward.14} parent=0 // pred_region
    _
  $region29: #{cnn_forward.14} parent=0 // pred_fallthru
    _

// kernel: cnn_forward.15
$region0: #{cnn_forward.15}
  #allocation0 [shape = 'u32[]', space=smem, size = 0x4, offset = 0x4, fixed_abs, tag = 'smem constant byte address 0x4 - core index']
  #allocation1 [shape = 'u32[144,128]{1,0:T(1,128)}', space=vmem, size = 0x12000, scoped, tag = 'internal scratch']
  #allocation2 [shape = 'f32[1,1]{1,0:T(1,128)S(1)}', space=vmem, size = 0x200, scoped, tag = 'scoped memory for cnn_forward.15']
  %s0 = inlined_call_operand.vmem [shape: bf16[128,288], index: 0, kind: input, shape index: {}]
  %s1 = inlined_call_operand.vmem [shape: bf16[288,32], index: 1, kind: input, shape index: {}]
  %s2 = inlined_call_operand.vmem [shape: f32[1,32], index: 2, kind: input, shape index: {}]
  %s3 = inlined_call_operand.vmem [shape: bf16[128,128], index: 3, kind: input, shape index: {}]
  %s4 = inlined_call_operand.vmem [shape: bf16[32,4], index: 4, kind: input, shape index: {}]
  %s5 = inlined_call_operand.vmem [shape: bf16[128,4], index: 5, kind: input, shape index: {}]
  %s6 = inlined_call_operand.<no memory space> [shape: f32[1,1], index: 6, kind: input, shape index: {}]
  %s7 = inlined_call_operand.vmem [shape: f32[128,4], index: 7, kind: output, shape index: {}]
  %s8 = sld [smem:[#allocation0]]
  $region38: #{cnn_forward.15} parent=0
    _
  %s10 = ssub.s32 1, %s8
  %s11 = scalar_select 0, %s10, %s8
  %v12 = vstv %s6
  %13 = vst [vmem:[#allocation2] sm:$0x1] %v12
  // Predicated region
  $region2: #{cnn_forward.15} parent=0 // pred_check
    _
  $region3: #{cnn_forward.15} parent=0 // pred_check_branch
    %15 = sbr.rel (0) target = $region5
  $region4: #{cnn_forward.15} parent=0 // pred_region
    _
  $region5: #{cnn_forward.15} parent=0 // pred_fallthru
    _
  // Predicated region
  $region6: #{cnn_forward.15} parent=0 // pred_check
    _
  $region7: #{cnn_forward.15} parent=0 // pred_check_branch
    %17 = sbr.rel (0) target = $region9
  $region8: #{cnn_forward.15} parent=0 // pred_region
    _
  $region9: #{cnn_forward.15} parent=0 // pred_fallthru
    _
  // Predicated region
  $region10: #{cnn_forward.15} parent=0 // pred_check
    _
  $region11: #{cnn_forward.15} parent=0 // pred_check_branch
    %19 = sbr.rel (0) target = $region13
  $region12: #{cnn_forward.15} parent=0 // pred_region
    _
  $region13: #{cnn_forward.15} parent=0 // pred_fallthru
    _
  // Predicated region
  $region14: #{cnn_forward.15} parent=0 // pred_check
    _
  $region15: #{cnn_forward.15} parent=0 // pred_check_branch
    %21 = sbr.rel (0) target = $region17
  $region16: #{cnn_forward.15} parent=0 // pred_region
    _
  $region17: #{cnn_forward.15} parent=0 // pred_fallthru
    _
  // Predicated region
  $region18: #{cnn_forward.15} parent=0 // pred_check
    _
  $region19: #{cnn_forward.15} parent=0 // pred_check_branch
    %23 = sbr.rel (0) target = $region21
  $region20: #{cnn_forward.15} parent=0 // pred_region
    _
  $region21: #{cnn_forward.15} parent=0 // pred_fallthru
    _
  // Predicated region
  $region22: #{cnn_forward.15} parent=0 // pred_check
    _
  $region23: #{cnn_forward.15} parent=0 // pred_check_branch
    %25 = sbr.rel (0) target = $region25
  $region24: #{cnn_forward.15} parent=0 // pred_region
    _
  $region25: #{cnn_forward.15} parent=0 // pred_fallthru
    _
  // Predicated region
  $region26: #{cnn_forward.15} parent=0 // pred_check
    _
  $region27: #{cnn_forward.15} parent=0 // pred_check_branch
    %27 = sbr.rel (0) target = $region29
  $region28: #{cnn_forward.15} parent=0 // pred_region
    _
  $region29: #{cnn_forward.15} parent=0 // pred_fallthru
    _
  %v29 = vld [vmem:[%s0] sm:$0xff]
  %v30 = vld [vmem:[%s0 + $0x8] sm:$0xf]
  %v31 = vld [vmem:[%s0 + $0xc] sm:$0xff]
  %v32 = vld [vmem:[%s0 + $0x14] sm:$0xf]
  %v33 = vld [vmem:[%s0 + $0x18] sm:$0xff]
  %v34 = vld [vmem:[%s0 + $0x20] sm:$0xf]
  %v35 = vld [vmem:[%s0 + $0x24] sm:$0xff]
  %v36 = vld [vmem:[%s0 + $0x2c] sm:$0xf]
  %v37 = vld [vmem:[%s0 + $0x30] sm:$0xff]
  %v38 = vld [vmem:[%s0 + $0x38] sm:$0xf]
  %v39 = vld [vmem:[%s0 + $0x3c] sm:$0xff]
  %v40 = vld [vmem:[%s0 + $0x44] sm:$0xf]
  %v41 = vld [vmem:[%s0 + $0x48] sm:$0xff]
  %v42 = vld [vmem:[%s0 + $0x50] sm:$0xf]
  %v43 = vld [vmem:[%s0 + $0x54] sm:$0xff]
  %v44 = vld [vmem:[%s0 + $0x5c] sm:$0xf]
  %v45 = vld [vmem:[%s0 + $0x60] sm:$0xff]
  %v46 = vld [vmem:[%s0 + $0x68] sm:$0xf]
  %v47 = vld [vmem:[%s0 + $0x6c] sm:$0xff]
  %v48 = vld [vmem:[%s0 + $0x74] sm:$0xf]
  %v49 = vld [vmem:[%s0 + $0x78] sm:$0xff]
  %v50 = vld [vmem:[%s0 + $0x80] sm:$0xf]
  %v51 = vld [vmem:[%s0 + $0x84] sm:$0xff]
  %v52 = vld [vmem:[%s0 + $0x8c] sm:$0xf]
  %v53 = vld [vmem:[%s0 + $0x90] sm:$0xff]
  %v54 = vld [vmem:[%s0 + $0x98] sm:$0xf]
  %v55 = vld [vmem:[%s0 + $0x9c] sm:$0xff]
  %v56 = vld [vmem:[%s0 + $0xa4] sm:$0xf]
  %v57 = vld [vmem:[%s0 + $0xa8] sm:$0xff]
  %v58 = vld [vmem:[%s0 + $0xb0] sm:$0xf]
  %v59 = vld [vmem:[%s0 + $0xb4] sm:$0xff]
  %v60 = vld [vmem:[%s0 + $0xbc] sm:$0xf]
  %v61 = vld [vmem:[%s1] sm:$0xf]
  %v62 = vld [vmem:[%s1 + $0x4] sm:$0xf]
  %v63 = vld [vmem:[%s1 + $0x8] sm:$0xf]
  %v64 = vld [vmem:[%s1 + $0xc] sm:$0xf]
  %v65 = vld [vmem:[%s1 + $0x10] sm:$0xf]
  %v66 = vld [vmem:[%s1 + $0x14] sm:$0xf]
  %v67 = vld [vmem:[%s1 + $0x18] sm:$0xf]
  %v68 = vld [vmem:[%s1 + $0x1c] sm:$0xf]
  %v69 = vld [vmem:[%s1 + $0x20] sm:$0xf]
  %v70 = vld [vmem:[%s1 + $0x24] sm:$0xf]
  %v71 = vld [vmem:[%s1 + $0x28] sm:$0xf]
  %v72 = vld [vmem:[%s1 + $0x2c] sm:$0xf]
  %v73 = vld [vmem:[%s1 + $0x30] sm:$0xf]
  %v74 = vld [vmem:[%s1 + $0x34] sm:$0xf]
  %v75 = vld [vmem:[%s1 + $0x38] sm:$0xf]
  %v76 = vld [vmem:[%s1 + $0x3c] sm:$0xf]
  %v77 = vld [vmem:[%s1 + $0x40] sm:$0xf]
  %v78 = vld [vmem:[%s1 + $0x44] sm:$0xf]
  %v79 = vld [vmem:[%s1 + $0x48] sm:$0xf]
  %v80 = vld [vmem:[%s1 + $0x4c] sm:$0xf]
  %v81 = vld [vmem:[%s1 + $0x50] sm:$0xf]
  %v82 = vld [vmem:[%s1 + $0x54] sm:$0xf]
  %v83 = vld [vmem:[%s1 + $0x58] sm:$0xf]
  %v84 = vld [vmem:[%s1 + $0x5c] sm:$0xf]
  %v85 = vld [vmem:[%s1 + $0x60] sm:$0xf]
  %v86 = vld [vmem:[%s1 + $0x64] sm:$0xf]
  %v87 = vld [vmem:[%s1 + $0x68] sm:$0xf]
  %v88 = vld [vmem:[%s1 + $0x6c] sm:$0xf]
  %v89 = vld [vmem:[%s1 + $0x70] sm:$0xf]
  %v90 = vld [vmem:[%s1 + $0x74] sm:$0xf]
  %v91 = vld [vmem:[%s1 + $0x78] sm:$0xf]
  %v92 = vld [vmem:[%s1 + $0x7c] sm:$0xf]
  %v93 = vld [vmem:[%s1 + $0x80] sm:$0xf]
  %v94 = vld [vmem:[%s1 + $0x84] sm:$0xf]
  %v95 = vld [vmem:[%s1 + $0x88] sm:$0xf]
  %v96 = vld [vmem:[%s1 + $0x8c] sm:$0xf]
  %v97 = vld [vmem:[%s2] sm:$0x1]
  %v99 = vlaneseq
  %v100 = vshrl.u32 %v99, 7
  %v101 = vsub.s32 0, %v100
  %v102 = vrot.slane %v97, %v101
  %v136 = vunpack.c.l.b16 %v29
  %v137 = vunpack.c.h.b16 %v29
  %v138 = vunpack.c.l.b16 %v30
  %v139 = vunpack.c.l.b16 %v31
  %v140 = vunpack.c.h.b16 %v31
  %v141 = vunpack.c.l.b16 %v32
  %v142 = vunpack.c.l.b16 %v33
  %v143 = vunpack.c.h.b16 %v33
  %v144 = vunpack.c.l.b16 %v34
  %v145 = vunpack.c.l.b16 %v35
  %v146 = vunpack.c.h.b16 %v35
  %v147 = vunpack.c.l.b16 %v36
  %v148 = vunpack.c.l.b16 %v37
  %v149 = vunpack.c.h.b16 %v37
  %v150 = vunpack.c.l.b16 %v38
  %v151 = vunpack.c.l.b16 %v39
  %v152 = vunpack.c.h.b16 %v39
  %v153 = vunpack.c.l.b16 %v40
  %v154 = vunpack.c.l.b16 %v41
  %v155 = vunpack.c.h.b16 %v41
  %v156 = vunpack.c.l.b16 %v42
  %v157 = vunpack.c.l.b16 %v43
  %v158 = vunpack.c.h.b16 %v43
  %v159 = vunpack.c.l.b16 %v44
  %v160 = vunpack.c.l.b16 %v45
  %v161 = vunpack.c.h.b16 %v45
  %v162 = vunpack.c.l.b16 %v46
  %v163 = vunpack.c.l.b16 %v47
  %v164 = vunpack.c.h.b16 %v47
  %v165 = vunpack.c.l.b16 %v48
  %v166 = vunpack.c.l.b16 %v49
  %v167 = vunpack.c.h.b16 %v49
  %v168 = vunpack.c.l.b16 %v50
  %v169 = vunpack.c.l.b16 %v51
  %v170 = vunpack.c.h.b16 %v51
  %v171 = vunpack.c.l.b16 %v52
  %v172 = vunpack.c.l.b16 %v53
  %v173 = vunpack.c.h.b16 %v53
  %v174 = vunpack.c.l.b16 %v54
  %v175 = vunpack.c.l.b16 %v55
  %v176 = vunpack.c.h.b16 %v55
  %v177 = vunpack.c.l.b16 %v56
  %v178 = vunpack.c.l.b16 %v57
  %v179 = vunpack.c.h.b16 %v57
  %v180 = vunpack.c.l.b16 %v58
  %v181 = vunpack.c.l.b16 %v59
  %v182 = vunpack.c.h.b16 %v59
  %v183 = vunpack.c.l.b16 %v60
  %v184 = vpack.c.b16 %v139, %v136
  %v185 = vpack.c.b16 %v140, %v137
  %v186 = vpack.c.b16 %v141, %v138
  %v187 = vpack.c.b16 %v145, %v142
  %v188 = vpack.c.b16 %v146, %v143
  %v189 = vpack.c.b16 %v147, %v144
  %v190 = vpack.c.b16 %v151, %v148
  %v191 = vpack.c.b16 %v152, %v149
  %v192 = vpack.c.b16 %v153, %v150
  %v193 = vpack.c.b16 %v157, %v154
  %v194 = vpack.c.b16 %v158, %v155
  %v195 = vpack.c.b16 %v159, %v156
  %v196 = vpack.c.b16 %v163, %v160
  %v197 = vpack.c.b16 %v164, %v161
  %v198 = vpack.c.b16 %v165, %v162
  %v199 = vpack.c.b16 %v169, %v166
  %v200 = vpack.c.b16 %v170, %v167
  %v201 = vpack.c.b16 %v171, %v168
  %v202 = vpack.c.b16 %v175, %v172
  %v203 = vpack.c.b16 %v176, %v173
  %v204 = vpack.c.b16 %v177, %v174
  %v205 = vpack.c.b16 %v181, %v178
  %v206 = vpack.c.b16 %v182, %v179
  %v207 = vpack.c.b16 %v183, %v180
  %v260 = vunpack.c.l.b16 %v61
  %v261 = vunpack.c.l.b16 %v62
  %v262 = vunpack.c.l.b16 %v63
  %v263 = vunpack.c.l.b16 %v64
  %v264 = vunpack.c.l.b16 %v65
  %v265 = vunpack.c.l.b16 %v66
  %v266 = vunpack.c.l.b16 %v67
  %v267 = vunpack.c.l.b16 %v68
  %v268 = vunpack.c.l.b16 %v69
  %v269 = vunpack.c.l.b16 %v70
  %v270 = vunpack.c.l.b16 %v71
  %v271 = vunpack.c.l.b16 %v72
  %v272 = vunpack.c.l.b16 %v73
  %v273 = vunpack.c.l.b16 %v74
  %v274 = vunpack.c.l.b16 %v75
  %v275 = vunpack.c.l.b16 %v76
  %v276 = vunpack.c.l.b16 %v77
  %v277 = vunpack.c.l.b16 %v78
  %v278 = vunpack.c.l.b16 %v79
  %v279 = vunpack.c.l.b16 %v80
  %v280 = vunpack.c.l.b16 %v81
  %v281 = vunpack.c.l.b16 %v82
  %v282 = vunpack.c.l.b16 %v83
  %v283 = vunpack.c.l.b16 %v84
  %v284 = vunpack.c.l.b16 %v85
  %v285 = vunpack.c.l.b16 %v86
  %v286 = vunpack.c.l.b16 %v87
  %v287 = vunpack.c.l.b16 %v88
  %v288 = vunpack.c.l.b16 %v89
  %v289 = vunpack.c.l.b16 %v90
  %v290 = vunpack.c.l.b16 %v91
  %v291 = vunpack.c.l.b16 %v92
  %v292 = vunpack.c.l.b16 %v93
  %v293 = vunpack.c.l.b16 %v94
  %v294 = vunpack.c.l.b16 %v95
  %v295 = vunpack.c.l.b16 %v96
  %v296 = vpack.c.b16 %v261, %v260
  %v297 = vpack.c.b16 %v263, %v262
  %v298 = vpack.c.b16 %v265, %v264
  %v299 = vpack.c.b16 %v267, %v266
  %v300 = vpack.c.b16 %v269, %v268
  %v301 = vpack.c.b16 %v271, %v270
  %v302 = vpack.c.b16 %v273, %v272
  %v303 = vpack.c.b16 %v275, %v274
  %v304 = vpack.c.b16 %v277, %v276
  %v305 = vpack.c.b16 %v279, %v278
  %v306 = vpack.c.b16 %v281, %v280
  %v307 = vpack.c.b16 %v283, %v282
  %v308 = vpack.c.b16 %v285, %v284
  %v309 = vpack.c.b16 %v287, %v286
  %v310 = vpack.c.b16 %v289, %v288
  %v311 = vpack.c.b16 %v291, %v290
  %v312 = vpack.c.b16 %v293, %v292
  %v313 = vpack.c.b16 %v295, %v294
  %vm332 = vcmask 261120
  %v334 = vsel %vm332, %v186, 0
  %v337 = vsel %vm332, %v189, 0
  %v340 = vsel %vm332, %v192, 0
  %v343 = vsel %vm332, %v195, 0
  %v346 = vsel %vm332, %v198, 0
  %v349 = vsel %vm332, %v201, 0
  %v352 = vsel %vm332, %v204, 0
  %v355 = vsel %vm332, %v207, 0
  %357 = vmatprep.subr.bf16.mxu0 0
  %358 = vmatpush1.bf16.msra.mxu0 %v296
  %359 = vmatprep.subr.bf16.mxu0 0
  %360 = vmatpush1.bf16.msra.mxu0 %v297
  %361 = vmatprep.subr.bf16.mxu0 0
  %362 = vmatpush1.bf16.msra.mxu0 %v298
  %363 = vmatprep.subr.bf16.mxu0 0
  %364 = vmatpush1.bf16.msra.mxu0 %v299
  %365 = vmatprep.subr.bf16.mxu0 0
  %366 = vmatpush1.bf16.msra.mxu0 %v300
  %367 = vmatprep.subr.bf16.mxu0 0
  %368 = vmatpush1.bf16.msra.mxu0 %v301
  %369 = vmatprep.subr.bf16.mxu0 0
  %370 = vmatpush1.bf16.msra.mxu0 %v302
  %371 = vmatprep.subr.bf16.mxu0 0
  %372 = vmatpush1.bf16.msra.mxu0 %v303
  %373 = vmatprep.subr.bf16.mxu0 0
  %374 = vmatpush1.bf16.msra.mxu0 %v304
  %375 = vmatprep.subr.bf16.mxu0 0
  %376 = vmatpush1.bf16.msra.mxu0 %v305
  %377 = vmatprep.subr.bf16.mxu0 0
  %378 = vmatpush1.bf16.msra.mxu0 %v306
  %379 = vmatprep.subr.bf16.mxu0 0
  %380 = vmatpush1.bf16.msra.mxu0 %v307
  %381 = vmatprep.subr.bf16.mxu0 0
  %382 = vmatpush1.bf16.msra.mxu0 %v308
  %383 = vmatprep.subr.bf16.mxu0 0
  %384 = vmatpush1.bf16.msra.mxu0 %v309
  %385 = vmatprep.subr.bf16.mxu0 0
  %386 = vmatpush1.bf16.msra.mxu0 %v310
  %387 = vmatprep.subr.bf16.mxu0 0
  %388 = vmatpush1.bf16.msra.mxu0 %v311
  %389 = vmatprep.mubr.bf16.mxu0 %v185
  %390 = vmatmul.mubr.bf16.gmra.mrb[0].mxu0 %v184
  %v391 = vpop.f32.mrb[0].mxu0
  %v392 = vadd.f32 %v102, %v391
  %v393 = vpop.f32.mrb[0].mxu0
  %v394 = vpop.f32.mrb[0].mxu0
  %v395 = vadd.f32 %v102, %v394
  %v396 = vpop.f32.mrb[0].mxu0
  %397 = vmatprep.mubr.bf16.mxu0 %v188
  %398 = vmatmul.mubr.bf16.gmra.mrb[0].mxu0 %v187
  %v399 = vpop.f32.mrb[0].mxu0
  %v400 = vadd.f32 %v102, %v399
  %v401 = vpop.f32.mrb[0].mxu0
  %v402 = vpop.f32.mrb[0].mxu0
  %v403 = vadd.f32 %v102, %v402
  %v404 = vpop.f32.mrb[0].mxu0
  %405 = vmatprep.mubr.bf16.mxu0 %v191
  %406 = vmatmul.mubr.bf16.gmra.mrb[0].mxu0 %v190
  %v407 = vpop.f32.mrb[0].mxu0
  %v408 = vadd.f32 %v102, %v407
  %v409 = vpop.f32.mrb[0].mxu0
  %v410 = vpop.f32.mrb[0].mxu0
  %v411 = vadd.f32 %v102, %v410
  %v412 = vpop.f32.mrb[0].mxu0
  %413 = vmatprep.mubr.bf16.mxu0 %v194
  %414 = vmatmul.mubr.bf16.gmra.mrb[0].mxu0 %v193
  %v415 = vpop.f32.mrb[0].mxu0
  %v416 = vadd.f32 %v102, %v415
  %v417 = vpop.f32.mrb[0].mxu0
  %v418 = vpop.f32.mrb[0].mxu0
  %v419 = vadd.f32 %v102, %v418
  %v420 = vpop.f32.mrb[0].mxu0
  %421 = vmatprep.mubr.bf16.mxu0 %v197
  %422 = vmatmul.mubr.bf16.gmra.mrb[0].mxu0 %v196
  %v423 = vpop.f32.mrb[0].mxu0
  %v424 = vadd.f32 %v102, %v423
  %v425 = vpop.f32.mrb[0].mxu0
  %v426 = vpop.f32.mrb[0].mxu0
  %v427 = vadd.f32 %v102, %v426
  %v428 = vpop.f32.mrb[0].mxu0
  %429 = vmatprep.mubr.bf16.mxu0 %v200
  %430 = vmatmul.mubr.bf16.gmra.mrb[0].mxu0 %v199
  %v431 = vpop.f32.mrb[0].mxu0
  %v432 = vadd.f32 %v102, %v431
  %v433 = vpop.f32.mrb[0].mxu0
  %v434 = vpop.f32.mrb[0].mxu0
  %v435 = vadd.f32 %v102, %v434
  %v436 = vpop.f32.mrb[0].mxu0
  %437 = vmatprep.mubr.bf16.mxu0 %v203
  %438 = vmatmul.mubr.bf16.gmra.mrb[0].mxu0 %v202
  %v439 = vpop.f32.mrb[0].mxu0
  %v440 = vadd.f32 %v102, %v439
  %v441 = vpop.f32.mrb[0].mxu0
  %v442 = vpop.f32.mrb[0].mxu0
  %v443 = vadd.f32 %v102, %v442
  %v444 = vpop.f32.mrb[0].mxu0
  %445 = vmatprep.mubr.bf16.mxu0 %v206
  %446 = vmatmul.mubr.bf16.gmra.mrb[0].mxu0 %v205
  %v447 = vpop.f32.mrb[0].mxu0
  %v448 = vadd.f32 %v102, %v447
  %v449 = vpop.f32.mrb[0].mxu0
  %v450 = vpop.f32.mrb[0].mxu0
  %v451 = vadd.f32 %v102, %v450
  %v452 = vpop.f32.mrb[0].mxu0
  %453 = vdwg.mxu0
  %454 = vmatprep.subr.bf16.mxu0 0
  %455 = vmatpush1.bf16.msra.mxu0 %v312
  %456 = vmatprep.subr.bf16.mxu0 0
  %457 = vmatpush1.bf16.msra.mxu0 %v313
  %458 = vmatprep.subr.bf16.mxu0 0
  %459 = vmatpush1.bf16.msra.mxu0 0
  %460 = vmatprep.subr.bf16.mxu0 0
  %461 = vmatpush1.bf16.msra.mxu0 0
  %462 = vmatprep.subr.bf16.mxu0 0
  %463 = vmatpush1.bf16.msra.mxu0 0
  %464 = vmatprep.subr.bf16.mxu0 0
  %465 = vmatpush1.bf16.msra.mxu0 0
  %466 = vmatprep.subr.bf16.mxu0 0
  %467 = vmatpush1.bf16.msra.mxu0 0
  %468 = vmatprep.subr.bf16.mxu0 0
  %469 = vmatpush1.bf16.msra.mxu0 0
  %470 = vmatprep.subr.bf16.mxu0 0
  %471 = vmatpush1.bf16.msra.mxu0 0
  %472 = vmatprep.subr.bf16.mxu0 0
  %473 = vmatpush1.bf16.msra.mxu0 0
  %474 = vmatprep.subr.bf16.mxu0 0
  %475 = vmatpush1.bf16.msra.mxu0 0
  %476 = vmatprep.subr.bf16.mxu0 0
  %477 = vmatpush1.bf16.msra.mxu0 0
  %478 = vmatprep.subr.bf16.mxu0 0
  %479 = vmatpush1.bf16.msra.mxu0 0
  %480 = vmatprep.subr.bf16.mxu0 0
  %481 = vmatpush1.bf16.msra.mxu0 0
  %482 = vmatprep.subr.bf16.mxu0 0
  %483 = vmatpush1.bf16.msra.mxu0 0
  %484 = vmatprep.subr.bf16.mxu0 0
  %485 = vmatpush1.bf16.msra.mxu0 0
  %486 = vmatprep.mubr.bf16.mxu0 0
  %487 = vmatmul.mubr.bf16.gmra.mrb[0].mxu0 %v334
  %v488 = vpop.f32.mrb[0].mxu0
  %v489 = vadd.f32 %v392, %v488
  %v490 = vpop.f32.mrb[0].mxu0
  %v491 = vpop.f32.mrb[0].mxu0
  %v492 = vadd.f32 %v395, %v491
  %v493 = vpop.f32.mrb[0].mxu0
  %494 = vmatprep.mubr.bf16.mxu0 0
  %495 = vmatmul.mubr.bf16.gmra.mrb[0].mxu0 %v337
  %v496 = vpop.f32.mrb[0].mxu0
  %v497 = vadd.f32 %v400, %v496
  %v498 = vpop.f32.mrb[0].mxu0
  %v499 = vpop.f32.mrb[0].mxu0
  %v500 = vadd.f32 %v403, %v499
  %v501 = vpop.f32.mrb[0].mxu0
  %502 = vmatprep.mubr.bf16.mxu0 0
  %503 = vmatmul.mubr.bf16.gmra.mrb[0].mxu0 %v340
  %v504 = vpop.f32.mrb[0].mxu0
  %v505 = vadd.f32 %v408, %v504
  %v506 = vpop.f32.mrb[0].mxu0
  %v507 = vpop.f32.mrb[0].mxu0
  %v508 = vadd.f32 %v411, %v507
  %v509 = vpop.f32.mrb[0].mxu0
  %510 = vmatprep.mubr.bf16.mxu0 0
  %511 = vmatmul.mubr.bf16.gmra.mrb[0].mxu0 %v343
  %v512 = vpop.f32.mrb[0].mxu0
  %v513 = vadd.f32 %v416, %v512
  %v514 = vpop.f32.mrb[0].mxu0
  %v515 = vpop.f32.mrb[0].mxu0
  %v516 = vadd.f32 %v419, %v515
  %v517 = vpop.f32.mrb[0].mxu0
  %518 = vmatprep.mubr.bf16.mxu0 0
  %519 = vmatmul.mubr.bf16.gmra.mrb[0].mxu0 %v346
  %v520 = vpop.f32.mrb[0].mxu0
  %v521 = vadd.f32 %v424, %v520
  %v522 = vpop.f32.mrb[0].mxu0
  %v523 = vpop.f32.mrb[0].mxu0
  %v524 = vadd.f32 %v427, %v523
  %v525 = vpop.f32.mrb[0].mxu0
  %526 = vmatprep.mubr.bf16.mxu0 0
  %527 = vmatmul.mubr.bf16.gmra.mrb[0].mxu0 %v349
  %v528 = vpop.f32.mrb[0].mxu0
  %v529 = vadd.f32 %v432, %v528
  %v530 = vpop.f32.mrb[0].mxu0
  %v531 = vpop.f32.mrb[0].mxu0
  %v532 = vadd.f32 %v435, %v531
  %v533 = vpop.f32.mrb[0].mxu0
  %534 = vmatprep.mubr.bf16.mxu0 0
  %535 = vmatmul.mubr.bf16.gmra.mrb[0].mxu0 %v352
  %v536 = vpop.f32.mrb[0].mxu0
  %v537 = vadd.f32 %v440, %v536
  %v538 = vpop.f32.mrb[0].mxu0
  %v539 = vpop.f32.mrb[0].mxu0
  %v540 = vadd.f32 %v443, %v539
  %v541 = vpop.f32.mrb[0].mxu0
  %542 = vmatprep.mubr.bf16.mxu0 0
  %543 = vmatmul.mubr.bf16.gmra.mrb[0].mxu0 %v355
  %v544 = vpop.f32.mrb[0].mxu0
  %v545 = vadd.f32 %v448, %v544
  %v546 = vpop.f32.mrb[0].mxu0
  %v547 = vpop.f32.mrb[0].mxu0
  %v548 = vadd.f32 %v451, %v547
  %v549 = vpop.f32.mrb[0].mxu0
  %550 = vdwg.mxu0
  %v551 = vmax.f32 %v489, 0.0
  %v552 = vmax.f32 %v492, 0.0
  %v553 = vmax.f32 %v497, 0.0
  %v554 = vmax.f32 %v500, 0.0
  %v555 = vmax.f32 %v505, 0.0
  %v556 = vmax.f32 %v508, 0.0
  %v557 = vmax.f32 %v513, 0.0
  %v558 = vmax.f32 %v516, 0.0
  %v559 = vmax.f32 %v521, 0.0
  %v560 = vmax.f32 %v524, 0.0
  %v561 = vmax.f32 %v529, 0.0
  %v562 = vmax.f32 %v532, 0.0
  %v563 = vmax.f32 %v537, 0.0
  %v564 = vmax.f32 %v540, 0.0
  %v565 = vmax.f32 %v545, 0.0
  %v566 = vmax.f32 %v548, 0.0
  %v567 = vpack.c.bf16 %v552, %v551
  %v568 = vpack.c.bf16 %v554, %v553
  %v569 = vpack.c.bf16 %v556, %v555
  %v570 = vpack.c.bf16 %v558, %v557
  %v571 = vpack.c.bf16 %v560, %v559
  %v572 = vpack.c.bf16 %v562, %v561
  %v573 = vpack.c.bf16 %v564, %v563
  %v574 = vpack.c.bf16 %v566, %v565
  %v575 = vld [vmem:[%s4] sm:$0xf]
  %v576 = vld [vmem:[%s4 + $0x4] sm:$0xf]
  %v577 = vld [vmem:[%s4 + $0x8] sm:$0xf]
  %v578 = vld [vmem:[%s4 + $0xc] sm:$0xf]
  %v579 = vld [vmem:[%s3] sm:$0xf]
  %v580 = vld [vmem:[%s3 + $0x4] sm:$0xf]
  %v581 = vld [vmem:[%s3 + $0x8] sm:$0xf]
  %v582 = vld [vmem:[%s3 + $0xc] sm:$0xf]
  %v583 = vld [vmem:[%s3 + $0x10] sm:$0xf]
  %v584 = vld [vmem:[%s3 + $0x14] sm:$0xf]
  %v585 = vld [vmem:[%s3 + $0x18] sm:$0xf]
  %v586 = vld [vmem:[%s3 + $0x1c] sm:$0xf]
  %v587 = vld [vmem:[%s3 + $0x20] sm:$0xf]
  %v588 = vld [vmem:[%s3 + $0x24] sm:$0xf]
  %v589 = vld [vmem:[%s3 + $0x28] sm:$0xf]
  %v590 = vld [vmem:[%s3 + $0x2c] sm:$0xf]
  %v591 = vld [vmem:[%s3 + $0x30] sm:$0xf]
  %v592 = vld [vmem:[%s3 + $0x34] sm:$0xf]
  %v593 = vld [vmem:[%s3 + $0x38] sm:$0xf]
  %v594 = vld [vmem:[%s3 + $0x3c] sm:$0xf]
  %v595 = vld [vmem:[%s5] sm:$0xf]
  %v596 = vld [vmem:[%s5 + $0x4] sm:$0xf]
  %v597 = vld [vmem:[%s5 + $0x8] sm:$0xf]
  %v598 = vld [vmem:[%s5 + $0xc] sm:$0xf]
  %v599 = vld [vmem:[%s5 + $0x10] sm:$0xf]
  %v600 = vld [vmem:[%s5 + $0x14] sm:$0xf]
  %v601 = vld [vmem:[%s5 + $0x18] sm:$0xf]
  %v602 = vld [vmem:[%s5 + $0x1c] sm:$0xf]
  %v603 = vld [vmem:[%s5 + $0x20] sm:$0xf]
  %v604 = vld [vmem:[%s5 + $0x24] sm:$0xf]
  %v605 = vld [vmem:[%s5 + $0x28] sm:$0xf]
  %v606 = vld [vmem:[%s5 + $0x2c] sm:$0xf]
  %v607 = vld [vmem:[%s5 + $0x30] sm:$0xf]
  %v608 = vld [vmem:[%s5 + $0x34] sm:$0xf]
  %v609 = vld [vmem:[%s5 + $0x38] sm:$0xf]
  %v610 = vld [vmem:[%s5 + $0x3c] sm:$0xf]
  %v627 = vunpack.c.l.b16 %v579
  %v628 = vunpack.c.l.b16 %v580
  %v629 = vunpack.c.l.b16 %v581
  %v630 = vunpack.c.l.b16 %v582
  %v631 = vunpack.c.l.b16 %v583
  %v632 = vunpack.c.l.b16 %v584
  %v633 = vunpack.c.l.b16 %v585
  %v634 = vunpack.c.l.b16 %v586
  %v635 = vunpack.c.l.b16 %v587
  %v636 = vunpack.c.l.b16 %v588
  %v637 = vunpack.c.l.b16 %v589
  %v638 = vunpack.c.l.b16 %v590
  %v639 = vunpack.c.l.b16 %v591
  %v640 = vunpack.c.l.b16 %v592
  %v641 = vunpack.c.l.b16 %v593
  %v642 = vunpack.c.l.b16 %v594
  %v643 = vpack.c.b16 %v628, %v627
  %v644 = vpack.c.b16 %v630, %v629
  %v645 = vpack.c.b16 %v632, %v631
  %v646 = vpack.c.b16 %v634, %v633
  %v647 = vpack.c.b16 %v636, %v635
  %v648 = vpack.c.b16 %v638, %v637
  %v649 = vpack.c.b16 %v640, %v639
  %v650 = vpack.c.b16 %v642, %v641
  %v675 = vunpack.c.l.b16 %v595
  %v676 = vunpack.c.l.b16 %v596
  %v677 = vunpack.c.l.b16 %v597
  %v678 = vunpack.c.l.b16 %v598
  %v679 = vunpack.c.l.b16 %v599
  %v680 = vunpack.c.l.b16 %v600
  %v681 = vunpack.c.l.b16 %v601
  %v682 = vunpack.c.l.b16 %v602
  %v683 = vunpack.c.l.b16 %v603
  %v684 = vunpack.c.l.b16 %v604
  %v685 = vunpack.c.l.b16 %v605
  %v686 = vunpack.c.l.b16 %v606
  %v687 = vunpack.c.l.b16 %v607
  %v688 = vunpack.c.l.b16 %v608
  %v689 = vunpack.c.l.b16 %v609
  %v690 = vunpack.c.l.b16 %v610
  %v691 = vpack.c.b16 %v676, %v675
  %v692 = vpack.c.b16 %v678, %v677
  %v693 = vpack.c.b16 %v680, %v679
  %v694 = vpack.c.b16 %v682, %v681
  %v695 = vpack.c.b16 %v684, %v683
  %v696 = vpack.c.b16 %v686, %v685
  %v697 = vpack.c.b16 %v688, %v687
  %v698 = vpack.c.b16 %v690, %v689
  %707 = vmatprep.subr.bf16.mxu0 0
  %708 = vmatpush1.bf16.msra.mxu0 %v691
  %709 = vmatprep.subr.bf16.mxu0 0
  %710 = vmatpush1.bf16.msra.mxu0 %v692
  %711 = vmatprep.subr.bf16.mxu0 0
  %712 = vmatpush1.bf16.msra.mxu0 %v693
  %713 = vmatprep.subr.bf16.mxu0 0
  %714 = vmatpush1.bf16.msra.mxu0 %v694
  %715 = vmatprep.subr.bf16.mxu0 0
  %716 = vmatpush1.bf16.msra.mxu0 %v695
  %717 = vmatprep.subr.bf16.mxu0 0
  %718 = vmatpush1.bf16.msra.mxu0 %v696
  %719 = vmatprep.subr.bf16.mxu0 0
  %720 = vmatpush1.bf16.msra.mxu0 %v697
  %721 = vmatprep.subr.bf16.mxu0 0
  %722 = vmatpush1.bf16.msra.mxu0 %v698
  %723 = vmatprep.subr.bf16.mxu0 0
  %724 = vmatpush1.bf16.msra.mxu0 0
  %725 = vmatprep.subr.bf16.mxu0 0
  %726 = vmatpush1.bf16.msra.mxu0 0
  %727 = vmatprep.subr.bf16.mxu0 0
  %728 = vmatpush1.bf16.msra.mxu0 0
  %729 = vmatprep.subr.bf16.mxu0 0
  %730 = vmatpush1.bf16.msra.mxu0 0
  %731 = vmatprep.subr.bf16.mxu0 0
  %732 = vmatpush1.bf16.msra.mxu0 0
  %733 = vmatprep.subr.bf16.mxu0 0
  %734 = vmatpush1.bf16.msra.mxu0 0
  %735 = vmatprep.subr.bf16.mxu0 0
  %736 = vmatpush1.bf16.msra.mxu0 0
  %737 = vmatprep.subr.bf16.mxu0 0
  %738 = vmatpush1.bf16.msra.mxu0 0
  %739 = vmatprep.mubr.bf16.mxu0 0
  %740 = vmatmul.mubr.bf16.gmra.mrb[0].mxu0 %v643
  %v741 = vpop.f32.mrb[0].mxu0
  %v742 = vadd.f32 0.0, %v741
  %v743 = vpop.f32.mrb[0].mxu0
  %v744 = vpop.f32.mrb[0].mxu0
  %v745 = vadd.f32 0.0, %v744
  %v746 = vpop.f32.mrb[0].mxu0
  %747 = vmatprep.mubr.bf16.mxu0 0
  %748 = vmatmul.mubr.bf16.gmra.mrb[0].mxu0 %v644
  %v749 = vpop.f32.mrb[0].mxu0
  %v750 = vadd.f32 0.0, %v749
  %v751 = vpop.f32.mrb[0].mxu0
  %v752 = vpop.f32.mrb[0].mxu0
  %v753 = vadd.f32 0.0, %v752
  %v754 = vpop.f32.mrb[0].mxu0
  %755 = vmatprep.mubr.bf16.mxu0 0
  %756 = vmatmul.mubr.bf16.gmra.mrb[0].mxu0 %v645
  %v757 = vpop.f32.mrb[0].mxu0
  %v758 = vadd.f32 0.0, %v757
  %v759 = vpop.f32.mrb[0].mxu0
  %v760 = vpop.f32.mrb[0].mxu0
  %v761 = vadd.f32 0.0, %v760
  %v762 = vpop.f32.mrb[0].mxu0
  %763 = vmatprep.mubr.bf16.mxu0 0
  %764 = vmatmul.mubr.bf16.gmra.mrb[0].mxu0 %v646
  %v765 = vpop.f32.mrb[0].mxu0
  %v766 = vadd.f32 0.0, %v765
  %v767 = vpop.f32.mrb[0].mxu0
  %v768 = vpop.f32.mrb[0].mxu0
  %v769 = vadd.f32 0.0, %v768
  %v770 = vpop.f32.mrb[0].mxu0
  %771 = vmatprep.mubr.bf16.mxu0 0
  %772 = vmatmul.mubr.bf16.gmra.mrb[0].mxu0 %v647
  %v773 = vpop.f32.mrb[0].mxu0
  %v774 = vadd.f32 0.0, %v773
  %v775 = vpop.f32.mrb[0].mxu0
  %v776 = vpop.f32.mrb[0].mxu0
  %v777 = vadd.f32 0.0, %v776
  %v778 = vpop.f32.mrb[0].mxu0
  %779 = vmatprep.mubr.bf16.mxu0 0
  %780 = vmatmul.mubr.bf16.gmra.mrb[0].mxu0 %v648
  %v781 = vpop.f32.mrb[0].mxu0
  %v782 = vadd.f32 0.0, %v781
  %v783 = vpop.f32.mrb[0].mxu0
  %v784 = vpop.f32.mrb[0].mxu0
  %v785 = vadd.f32 0.0, %v784
  %v786 = vpop.f32.mrb[0].mxu0
  %787 = vmatprep.mubr.bf16.mxu0 0
  %788 = vmatmul.mubr.bf16.gmra.mrb[0].mxu0 %v649
  %v789 = vpop.f32.mrb[0].mxu0
  %v790 = vadd.f32 0.0, %v789
  %v791 = vpop.f32.mrb[0].mxu0
  %v792 = vpop.f32.mrb[0].mxu0
  %v793 = vadd.f32 0.0, %v792
  %v794 = vpop.f32.mrb[0].mxu0
  %795 = vmatprep.mubr.bf16.mxu0 0
  %796 = vmatmul.mubr.bf16.gmra.mrb[0].mxu0 %v650
  %v797 = vpop.f32.mrb[0].mxu0
  %v798 = vadd.f32 0.0, %v797
  %v799 = vpop.f32.mrb[0].mxu0
  %v800 = vpop.f32.mrb[0].mxu0
  %v801 = vadd.f32 0.0, %v800
  %v802 = vpop.f32.mrb[0].mxu0
  %803 = vdwg.mxu0
  %v808 = vunpack.c.l.b16 %v575
  %v809 = vunpack.c.l.b16 %v576
  %v810 = vunpack.c.l.b16 %v577
  %v811 = vunpack.c.l.b16 %v578
  %v812 = vpack.c.b16 %v809, %v808
  %v813 = vpack.c.b16 %v811, %v810
  %v817 = vsel %vm332, %v567, 0
  %v820 = vsel %vm332, %v568, 0
  %v823 = vsel %vm332, %v569, 0
  %v826 = vsel %vm332, %v570, 0
  %v829 = vsel %vm332, %v571, 0
  %v832 = vsel %vm332, %v572, 0
  %v835 = vsel %vm332, %v573, 0
  %v838 = vsel %vm332, %v574, 0
  %840 = vmatprep.subr.bf16.mxu0 0
  %841 = vmatpush1.bf16.msra.mxu0 %v812
  %842 = vmatprep.subr.bf16.mxu0 0
  %843 = vmatpush1.bf16.msra.mxu0 %v813
  %844 = vmatprep.subr.bf16.mxu0 0
  %845 = vmatpush1.bf16.msra.mxu0 0
  %846 = vmatprep.subr.bf16.mxu0 0
  %847 = vmatpush1.bf16.msra.mxu0 0
  %848 = vmatprep.subr.bf16.mxu0 0
  %849 = vmatpush1.bf16.msra.mxu0 0
  %850 = vmatprep.subr.bf16.mxu0 0
  %851 = vmatpush1.bf16.msra.mxu0 0
  %852 = vmatprep.subr.bf16.mxu0 0
  %853 = vmatpush1.bf16.msra.mxu0 0
  %854 = vmatprep.subr.bf16.mxu0 0
  %855 = vmatpush1.bf16.msra.mxu0 0
  %856 = vmatprep.subr.bf16.mxu0 0
  %857 = vmatpush1.bf16.msra.mxu0 0
  %858 = vmatprep.subr.bf16.mxu0 0
  %859 = vmatpush1.bf16.msra.mxu0 0
  %860 = vmatprep.subr.bf16.mxu0 0
  %861 = vmatpush1.bf16.msra.mxu0 0
  %862 = vmatprep.subr.bf16.mxu0 0
  %863 = vmatpush1.bf16.msra.mxu0 0
  %864 = vmatprep.subr.bf16.mxu0 0
  %865 = vmatpush1.bf16.msra.mxu0 0
  %866 = vmatprep.subr.bf16.mxu0 0
  %867 = vmatpush1.bf16.msra.mxu0 0
  %868 = vmatprep.subr.bf16.mxu0 0
  %869 = vmatpush1.bf16.msra.mxu0 0
  %870 = vmatprep.subr.bf16.mxu0 0
  %871 = vmatpush1.bf16.msra.mxu0 0
  %872 = vmatprep.mubr.bf16.mxu0 0
  %873 = vmatmul.mubr.bf16.gmra.mrb[0].mxu0 %v817
  %v874 = vpop.f32.mrb[0].mxu0
  %v875 = vadd.f32 %v742, %v874
  %v876 = vpop.f32.mrb[0].mxu0
  %v877 = vpop.f32.mrb[0].mxu0
  %v878 = vadd.f32 %v745, %v877
  %v879 = vpop.f32.mrb[0].mxu0
  %880 = vmatprep.mubr.bf16.mxu0 0
  %881 = vmatmul.mubr.bf16.gmra.mrb[0].mxu0 %v820
  %v882 = vpop.f32.mrb[0].mxu0
  %v883 = vadd.f32 %v750, %v882
  %v884 = vpop.f32.mrb[0].mxu0
  %v885 = vpop.f32.mrb[0].mxu0
  %v886 = vadd.f32 %v753, %v885
  %v887 = vpop.f32.mrb[0].mxu0
  %888 = vmatprep.mubr.bf16.mxu0 0
  %889 = vmatmul.mubr.bf16.gmra.mrb[0].mxu0 %v823
  %v890 = vpop.f32.mrb[0].mxu0
  %v891 = vadd.f32 %v758, %v890
  %v892 = vpop.f32.mrb[0].mxu0
  %v893 = vpop.f32.mrb[0].mxu0
  %v894 = vadd.f32 %v761, %v893
  %v895 = vpop.f32.mrb[0].mxu0
  %896 = vmatprep.mubr.bf16.mxu0 0
  %897 = vmatmul.mubr.bf16.gmra.mrb[0].mxu0 %v826
  %v898 = vpop.f32.mrb[0].mxu0
  %v899 = vadd.f32 %v766, %v898
  %v900 = vpop.f32.mrb[0].mxu0
  %v901 = vpop.f32.mrb[0].mxu0
  %v902 = vadd.f32 %v769, %v901
  %v903 = vpop.f32.mrb[0].mxu0
  %904 = vmatprep.mubr.bf16.mxu0 0
  %905 = vmatmul.mubr.bf16.gmra.mrb[0].mxu0 %v829
  %v906 = vpop.f32.mrb[0].mxu0
  %v907 = vadd.f32 %v774, %v906
  %v908 = vpop.f32.mrb[0].mxu0
  %v909 = vpop.f32.mrb[0].mxu0
  %v910 = vadd.f32 %v777, %v909
  %v911 = vpop.f32.mrb[0].mxu0
  %912 = vmatprep.mubr.bf16.mxu0 0
  %913 = vmatmul.mubr.bf16.gmra.mrb[0].mxu0 %v832
  %v914 = vpop.f32.mrb[0].mxu0
  %v915 = vadd.f32 %v782, %v914
  %v916 = vpop.f32.mrb[0].mxu0
  %v917 = vpop.f32.mrb[0].mxu0
  %v918 = vadd.f32 %v785, %v917
  %v919 = vpop.f32.mrb[0].mxu0
  %920 = vmatprep.mubr.bf16.mxu0 0
  %921 = vmatmul.mubr.bf16.gmra.mrb[0].mxu0 %v835
  %v922 = vpop.f32.mrb[0].mxu0
  %v923 = vadd.f32 %v790, %v922
  %v924 = vpop.f32.mrb[0].mxu0
  %v925 = vpop.f32.mrb[0].mxu0
  %v926 = vadd.f32 %v793, %v925
  %v927 = vpop.f32.mrb[0].mxu0
  %928 = vmatprep.mubr.bf16.mxu0 0
  %929 = vmatmul.mubr.bf16.gmra.mrb[0].mxu0 %v838
  %v930 = vpop.f32.mrb[0].mxu0
  %v931 = vadd.f32 %v798, %v930
  %v932 = vpop.f32.mrb[0].mxu0
  %v933 = vpop.f32.mrb[0].mxu0
  %v934 = vadd.f32 %v801, %v933
  %v935 = vpop.f32.mrb[0].mxu0
  %936 = vdwg.mxu0
  %v937 = vld [vmem:[#allocation2] sm:$0x1]
  %v939 = vlaneseq
  %v940 = vshrl.u32 %v939, 7
  %v941 = vsub.s32 0, %v940
  %v942 = vrot.slane %v937, %v941
  %943 = vset.pattern.permute.xlu0 0
  %944 = vperm.xlu0 %943, %v942
  %v945 = vpop.permute.xlu0 %944
  %v947 = vadd.f32 %v875, %v945
  %v948 = vadd.f32 %v878, %v945
  %v949 = vadd.f32 %v883, %v945
  %v950 = vadd.f32 %v886, %v945
  %v951 = vadd.f32 %v891, %v945
  %v952 = vadd.f32 %v894, %v945
  %v953 = vadd.f32 %v899, %v945
  %v954 = vadd.f32 %v902, %v945
  %v955 = vadd.f32 %v907, %v945
  %v956 = vadd.f32 %v910, %v945
  %v957 = vadd.f32 %v915, %v945
  %v958 = vadd.f32 %v918, %v945
  %v959 = vadd.f32 %v923, %v945
  %v960 = vadd.f32 %v926, %v945
  %v961 = vadd.f32 %v931, %v945
  %v962 = vadd.f32 %v934, %v945
  %vm963 = vcmask 31744
  %964 = vst.msk [vmem:[%s7] sm:$0xff] %vm963, %v947
  %965 = vst.msk [vmem:[%s7 + $0x8] sm:$0xff] %vm963, %v948
  %966 = vst.msk [vmem:[%s7 + $0x10] sm:$0xff] %vm963, %v949
  %967 = vst.msk [vmem:[%s7 + $0x18] sm:$0xff] %vm963, %v950
  %968 = vst.msk [vmem:[%s7 + $0x20] sm:$0xff] %vm963, %v951
  %969 = vst.msk [vmem:[%s7 + $0x28] sm:$0xff] %vm963, %v952
  %970 = vst.msk [vmem:[%s7 + $0x30] sm:$0xff] %vm963, %v953
  %971 = vst.msk [vmem:[%s7 + $0x38] sm:$0xff] %vm963, %v954
  %972 = vst.msk [vmem:[%s7 + $0x40] sm:$0xff] %vm963, %v955
  %973 = vst.msk [vmem:[%s7 + $0x48] sm:$0xff] %vm963, %v956
  %974 = vst.msk [vmem:[%s7 + $0x50] sm:$0xff] %vm963, %v957
  %975 = vst.msk [vmem:[%s7 + $0x58] sm:$0xff] %vm963, %v958
  %976 = vst.msk [vmem:[%s7 + $0x60] sm:$0xff] %vm963, %v959
  %977 = vst.msk [vmem:[%s7 + $0x68] sm:$0xff] %vm963, %v960
  %978 = vst.msk [vmem:[%s7 + $0x70] sm:$0xff] %vm963, %v961
  %979 = vst.msk [vmem:[%s7 + $0x78] sm:$0xff] %vm963, %v962
  // Predicated region
  $region30: #{cnn_forward.15} parent=0 // pred_check
    _
  $region31: #{cnn_forward.15} parent=0 // pred_check_branch
    %981 = sbr.rel (0) target = $region33
  $region32: #{cnn_forward.15} parent=0 // pred_region
    _
  $region33: #{cnn_forward.15} parent=0 // pred_fallthru
    _
  // Predicated region
  $region34: #{cnn_forward.15} parent=0 // pred_check
    _
  $region35: #{cnn_forward.15} parent=0 // pred_check_branch
    %983 = sbr.rel (0) target = $region37
  $region36: #{cnn_forward.15} parent=0 // pred_region
    _
  $region37: #{cnn_forward.15} parent=0 // pred_fallthru
    _

// kernel: cnn_forward.12
$region0: #{cnn_forward.12}
  #allocation0 [shape = 'u32[]', space=smem, size = 0x4, offset = 0x4, fixed_abs, tag = 'smem constant byte address 0x4 - core index']
  #allocation1 [shape = 'u32[144,128]{1,0:T(1,128)}', space=vmem, size = 0x12000, scoped, tag = 'internal scratch']
  %s0 = inlined_call_operand.vmem [shape: bf16[512,8], index: 0, kind: input, shape index: {}]
  %s1 = inlined_call_operand.vmem [shape: bf16[8,16], index: 1, kind: input, shape index: {}]
  %s2 = inlined_call_operand.vmem [shape: f32[1,16], index: 2, kind: input, shape index: {}]
  %s3 = inlined_call_operand.vmem [shape: f32[1,16], index: 3, kind: input, shape index: {}]
  %s4 = inlined_call_operand.vmem [shape: bf16[16,32], index: 4, kind: input, shape index: {}]
  %s5 = inlined_call_operand.vmem [shape: f32[1,32], index: 5, kind: input, shape index: {}]
  %s6 = inlined_call_operand.vmem [shape: f32[1,32], index: 6, kind: input, shape index: {}]
  %s7 = inlined_call_operand.vmem [shape: bf16[512,32], index: 7, kind: output, shape index: {}]
  %s8 = sld [smem:[#allocation0]]
  $region38: #{cnn_forward.12} parent=0
    _
  %s10 = ssub.s32 1, %s8
  %s11 = scalar_select 0, %s10, %s8
  // Predicated region
  $region2: #{cnn_forward.12} parent=0 // pred_check
    _
  $region3: #{cnn_forward.12} parent=0 // pred_check_branch
    %13 = sbr.rel (0) target = $region5
  $region4: #{cnn_forward.12} parent=0 // pred_region
    _
  $region5: #{cnn_forward.12} parent=0 // pred_fallthru
    _
  // Predicated region
  $region6: #{cnn_forward.12} parent=0 // pred_check
    _
  $region7: #{cnn_forward.12} parent=0 // pred_check_branch
    %15 = sbr.rel (0) target = $region9
  $region8: #{cnn_forward.12} parent=0 // pred_region
    _
  $region9: #{cnn_forward.12} parent=0 // pred_fallthru
    _
  // Predicated region
  $region10: #{cnn_forward.12} parent=0 // pred_check
    _
  $region11: #{cnn_forward.12} parent=0 // pred_check_branch
    %17 = sbr.rel (0) target = $region13
  $region12: #{cnn_forward.12} parent=0 // pred_region
    _
  $region13: #{cnn_forward.12} parent=0 // pred_fallthru
    _
  // Predicated region
  $region14: #{cnn_forward.12} parent=0 // pred_check
    _
  $region15: #{cnn_forward.12} parent=0 // pred_check_branch
    %19 = sbr.rel (0) target = $region17
  $region16: #{cnn_forward.12} parent=0 // pred_region
    _
  $region17: #{cnn_forward.12} parent=0 // pred_fallthru
    _
  // Predicated region
  $region18: #{cnn_forward.12} parent=0 // pred_check
    _
  $region19: #{cnn_forward.12} parent=0 // pred_check_branch
    %21 = sbr.rel (0) target = $region21
  $region20: #{cnn_forward.12} parent=0 // pred_region
    _
  $region21: #{cnn_forward.12} parent=0 // pred_fallthru
    _
  // Predicated region
  $region22: #{cnn_forward.12} parent=0 // pred_check
    _
  $region23: #{cnn_forward.12} parent=0 // pred_check_branch
    %23 = sbr.rel (0) target = $region25
  $region24: #{cnn_forward.12} parent=0 // pred_region
    _
  $region25: #{cnn_forward.12} parent=0 // pred_fallthru
    _
  // Predicated region
  $region26: #{cnn_forward.12} parent=0 // pred_check
    _
  $region27: #{cnn_forward.12} parent=0 // pred_check_branch
    %25 = sbr.rel (0) target = $region29
  $region28: #{cnn_forward.12} parent=0 // pred_region
    _
  $region29: #{cnn_forward.12} parent=0 // pred_fallthru
    _
  %v27 = vld [vmem:[%s0] sm:$0xf]
  %v28 = vld [vmem:[%s0 + $0x4] sm:$0xf]
  %v29 = vld [vmem:[%s0 + $0x8] sm:$0xf]
  %v30 = vld [vmem:[%s0 + $0xc] sm:$0xf]
  %v31 = vld [vmem:[%s0 + $0x10] sm:$0xf]
  %v32 = vld [vmem:[%s0 + $0x14] sm:$0xf]
  %v33 = vld [vmem:[%s0 + $0x18] sm:$0xf]
  %v34 = vld [vmem:[%s0 + $0x1c] sm:$0xf]
  %v35 = vld [vmem:[%s0 + $0x20] sm:$0xf]
  %v36 = vld [vmem:[%s0 + $0x24] sm:$0xf]
  %v37 = vld [vmem:[%s0 + $0x28] sm:$0xf]
  %v38 = vld [vmem:[%s0 + $0x2c] sm:$0xf]
  %v39 = vld [vmem:[%s0 + $0x30] sm:$0xf]
  %v40 = vld [vmem:[%s0 + $0x34] sm:$0xf]
  %v41 = vld [vmem:[%s0 + $0x38] sm:$0xf]
  %v42 = vld [vmem:[%s0 + $0x3c] sm:$0xf]
  %v43 = vld [vmem:[%s0 + $0x40] sm:$0xf]
  %v44 = vld [vmem:[%s0 + $0x44] sm:$0xf]
  %v45 = vld [vmem:[%s0 + $0x48] sm:$0xf]
  %v46 = vld [vmem:[%s0 + $0x4c] sm:$0xf]
  %v47 = vld [vmem:[%s0 + $0x50] sm:$0xf]
  %v48 = vld [vmem:[%s0 + $0x54] sm:$0xf]
  %v49 = vld [vmem:[%s0 + $0x58] sm:$0xf]
  %v50 = vld [vmem:[%s0 + $0x5c] sm:$0xf]
  %v51 = vld [vmem:[%s0 + $0x60] sm:$0xf]
  %v52 = vld [vmem:[%s0 + $0x64] sm:$0xf]
  %v53 = vld [vmem:[%s0 + $0x68] sm:$0xf]
  %v54 = vld [vmem:[%s0 + $0x6c] sm:$0xf]
  %v55 = vld [vmem:[%s0 + $0x70] sm:$0xf]
  %v56 = vld [vmem:[%s0 + $0x74] sm:$0xf]
  %v57 = vld [vmem:[%s0 + $0x78] sm:$0xf]
  %v58 = vld [vmem:[%s0 + $0x7c] sm:$0xf]
  %v59 = vld [vmem:[%s0 + $0x80] sm:$0xf]
  %v60 = vld [vmem:[%s0 + $0x84] sm:$0xf]
  %v61 = vld [vmem:[%s0 + $0x88] sm:$0xf]
  %v62 = vld [vmem:[%s0 + $0x8c] sm:$0xf]
  %v63 = vld [vmem:[%s0 + $0x90] sm:$0xf]
  %v64 = vld [vmem:[%s0 + $0x94] sm:$0xf]
  %v65 = vld [vmem:[%s0 + $0x98] sm:$0xf]
  %v66 = vld [vmem:[%s0 + $0x9c] sm:$0xf]
  %v67 = vld [vmem:[%s0 + $0xa0] sm:$0xf]
  %v68 = vld [vmem:[%s0 + $0xa4] sm:$0xf]
  %v69 = vld [vmem:[%s0 + $0xa8] sm:$0xf]
  %v70 = vld [vmem:[%s0 + $0xac] sm:$0xf]
  %v71 = vld [vmem:[%s0 + $0xb0] sm:$0xf]
  %v72 = vld [vmem:[%s0 + $0xb4] sm:$0xf]
  %v73 = vld [vmem:[%s0 + $0xb8] sm:$0xf]
  %v74 = vld [vmem:[%s0 + $0xbc] sm:$0xf]
  %v75 = vld [vmem:[%s0 + $0xc0] sm:$0xf]
  %v76 = vld [vmem:[%s0 + $0xc4] sm:$0xf]
  %v77 = vld [vmem:[%s0 + $0xc8] sm:$0xf]
  %v78 = vld [vmem:[%s0 + $0xcc] sm:$0xf]
  %v79 = vld [vmem:[%s0 + $0xd0] sm:$0xf]
  %v80 = vld [vmem:[%s0 + $0xd4] sm:$0xf]
  %v81 = vld [vmem:[%s0 + $0xd8] sm:$0xf]
  %v82 = vld [vmem:[%s0 + $0xdc] sm:$0xf]
  %v83 = vld [vmem:[%s0 + $0xe0] sm:$0xf]
  %v84 = vld [vmem:[%s0 + $0xe4] sm:$0xf]
  %v85 = vld [vmem:[%s0 + $0xe8] sm:$0xf]
  %v86 = vld [vmem:[%s0 + $0xec] sm:$0xf]
  %v87 = vld [vmem:[%s0 + $0xf0] sm:$0xf]
  %v88 = vld [vmem:[%s0 + $0xf4] sm:$0xf]
  %v89 = vld [vmem:[%s0 + $0xf8] sm:$0xf]
  %v90 = vld [vmem:[%s0 + $0xfc] sm:$0xf]
  %v91 = vld [vmem:[%s1] sm:$0xf]
  %v156 = vunpack.c.l.b16 %v27
  %v157 = vunpack.c.l.b16 %v28
  %v158 = vunpack.c.l.b16 %v29
  %v159 = vunpack.c.l.b16 %v30
  %v160 = vunpack.c.l.b16 %v31
  %v161 = vunpack.c.l.b16 %v32
  %v162 = vunpack.c.l.b16 %v33
  %v163 = vunpack.c.l.b16 %v34
  %v164 = vunpack.c.l.b16 %v35
  %v165 = vunpack.c.l.b16 %v36
  %v166 = vunpack.c.l.b16 %v37
  %v167 = vunpack.c.l.b16 %v38
  %v168 = vunpack.c.l.b16 %v39
  %v169 = vunpack.c.l.b16 %v40
  %v170 = vunpack.c.l.b16 %v41
  %v171 = vunpack.c.l.b16 %v42
  %v172 = vunpack.c.l.b16 %v43
  %v173 = vunpack.c.l.b16 %v44
  %v174 = vunpack.c.l.b16 %v45
  %v175 = vunpack.c.l.b16 %v46
  %v176 = vunpack.c.l.b16 %v47
  %v177 = vunpack.c.l.b16 %v48
  %v178 = vunpack.c.l.b16 %v49
  %v179 = vunpack.c.l.b16 %v50
  %v180 = vunpack.c.l.b16 %v51
  %v181 = vunpack.c.l.b16 %v52
  %v182 = vunpack.c.l.b16 %v53
  %v183 = vunpack.c.l.b16 %v54
  %v184 = vunpack.c.l.b16 %v55
  %v185 = vunpack.c.l.b16 %v56
  %v186 = vunpack.c.l.b16 %v57
  %v187 = vunpack.c.l.b16 %v58
  %v188 = vunpack.c.l.b16 %v59
  %v189 = vunpack.c.l.b16 %v60
  %v190 = vunpack.c.l.b16 %v61
  %v191 = vunpack.c.l.b16 %v62
  %v192 = vunpack.c.l.b16 %v63
  %v193 = vunpack.c.l.b16 %v64
  %v194 = vunpack.c.l.b16 %v65
  %v195 = vunpack.c.l.b16 %v66
  %v196 = vunpack.c.l.b16 %v67
  %v197 = vunpack.c.l.b16 %v68
  %v198 = vunpack.c.l.b16 %v69
  %v199 = vunpack.c.l.b16 %v70
  %v200 = vunpack.c.l.b16 %v71
  %v201 = vunpack.c.l.b16 %v72
  %v202 = vunpack.c.l.b16 %v73
  %v203 = vunpack.c.l.b16 %v74
  %v204 = vunpack.c.l.b16 %v75
  %v205 = vunpack.c.l.b16 %v76
  %v206 = vunpack.c.l.b16 %v77
  %v207 = vunpack.c.l.b16 %v78
  %v208 = vunpack.c.l.b16 %v79
  %v209 = vunpack.c.l.b16 %v80
  %v210 = vunpack.c.l.b16 %v81
  %v211 = vunpack.c.l.b16 %v82
  %v212 = vunpack.c.l.b16 %v83
  %v213 = vunpack.c.l.b16 %v84
  %v214 = vunpack.c.l.b16 %v85
  %v215 = vunpack.c.l.b16 %v86
  %v216 = vunpack.c.l.b16 %v87
  %v217 = vunpack.c.l.b16 %v88
  %v218 = vunpack.c.l.b16 %v89
  %v219 = vunpack.c.l.b16 %v90
  %v220 = vpack.c.b16 %v157, %v156
  %v221 = vpack.c.b16 %v159, %v158
  %v222 = vpack.c.b16 %v161, %v160
  %v223 = vpack.c.b16 %v163, %v162
  %v224 = vpack.c.b16 %v165, %v164
  %v225 = vpack.c.b16 %v167, %v166
  %v226 = vpack.c.b16 %v169, %v168
  %v227 = vpack.c.b16 %v171, %v170
  %v228 = vpack.c.b16 %v173, %v172
  %v229 = vpack.c.b16 %v175, %v174
  %v230 = vpack.c.b16 %v177, %v176
  %v231 = vpack.c.b16 %v179, %v178
  %v232 = vpack.c.b16 %v181, %v180
  %v233 = vpack.c.b16 %v183, %v182
  %v234 = vpack.c.b16 %v185, %v184
  %v235 = vpack.c.b16 %v187, %v186
  %v236 = vpack.c.b16 %v189, %v188
  %v237 = vpack.c.b16 %v191, %v190
  %v238 = vpack.c.b16 %v193, %v192
  %v239 = vpack.c.b16 %v195, %v194
  %v240 = vpack.c.b16 %v197, %v196
  %v241 = vpack.c.b16 %v199, %v198
  %v242 = vpack.c.b16 %v201, %v200
  %v243 = vpack.c.b16 %v203, %v202
  %v244 = vpack.c.b16 %v205, %v204
  %v245 = vpack.c.b16 %v207, %v206
  %v246 = vpack.c.b16 %v209, %v208
  %v247 = vpack.c.b16 %v211, %v210
  %v248 = vpack.c.b16 %v213, %v212
  %v249 = vpack.c.b16 %v215, %v214
  %v250 = vpack.c.b16 %v217, %v216
  %v251 = vpack.c.b16 %v219, %v218
  %vm252 = vcmask 64512
  %v254 = vsel %vm252, %v220, 0
  %v257 = vsel %vm252, %v221, 0
  %v260 = vsel %vm252, %v222, 0
  %v263 = vsel %vm252, %v223, 0
  %v266 = vsel %vm252, %v224, 0
  %v269 = vsel %vm252, %v225, 0
  %v272 = vsel %vm252, %v226, 0
  %v275 = vsel %vm252, %v227, 0
  %v278 = vsel %vm252, %v228, 0
  %v281 = vsel %vm252, %v229, 0
  %v284 = vsel %vm252, %v230, 0
  %v287 = vsel %vm252, %v231, 0
  %v290 = vsel %vm252, %v232, 0
  %v293 = vsel %vm252, %v233, 0
  %v296 = vsel %vm252, %v234, 0
  %v299 = vsel %vm252, %v235, 0
  %v302 = vsel %vm252, %v236, 0
  %v305 = vsel %vm252, %v237, 0
  %v308 = vsel %vm252, %v238, 0
  %v311 = vsel %vm252, %v239, 0
  %v314 = vsel %vm252, %v240, 0
  %v317 = vsel %vm252, %v241, 0
  %v320 = vsel %vm252, %v242, 0
  %v323 = vsel %vm252, %v243, 0
  %v326 = vsel %vm252, %v244, 0
  %v329 = vsel %vm252, %v245, 0
  %v332 = vsel %vm252, %v246, 0
  %v335 = vsel %vm252, %v247, 0
  %v338 = vsel %vm252, %v248, 0
  %v341 = vsel %vm252, %v249, 0
  %v344 = vsel %vm252, %v250, 0
  %v347 = vsel %vm252, %v251, 0
  %vm349 = vcmask 1043456
  %v351 = vsel %vm349, %v91, 0
  %353 = vmatprep.subr.bf16.mxu0 0
  %354 = vmatpush1.bf16.msra.mxu0 %v351
  %355 = vmatprep.subr.bf16.mxu0 0
  %356 = vmatpush1.bf16.msra.mxu0 0
  %357 = vmatprep.subr.bf16.mxu0 0
  %358 = vmatpush1.bf16.msra.mxu0 0
  %359 = vmatprep.subr.bf16.mxu0 0
  %360 = vmatpush1.bf16.msra.mxu0 0
  %361 = vmatprep.subr.bf16.mxu0 0
  %362 = vmatpush1.bf16.msra.mxu0 0
  %363 = vmatprep.subr.bf16.mxu0 0
  %364 = vmatpush1.bf16.msra.mxu0 0
  %365 = vmatprep.subr.bf16.mxu0 0
  %366 = vmatpush1.bf16.msra.mxu0 0
  %367 = vmatprep.subr.bf16.mxu0 0
  %368 = vmatpush1.bf16.msra.mxu0 0
  %369 = vmatprep.subr.bf16.mxu0 0
  %370 = vmatpush1.bf16.msra.mxu0 0
  %371 = vmatprep.subr.bf16.mxu0 0
  %372 = vmatpush1.bf16.msra.mxu0 0
  %373 = vmatprep.subr.bf16.mxu0 0
  %374 = vmatpush1.bf16.msra.mxu0 0
  %375 = vmatprep.subr.bf16.mxu0 0
  %376 = vmatpush1.bf16.msra.mxu0 0
  %377 = vmatprep.subr.bf16.mxu0 0
  %378 = vmatpush1.bf16.msra.mxu0 0
  %379 = vmatprep.subr.bf16.mxu0 0
  %380 = vmatpush1.bf16.msra.mxu0 0
  %381 = vmatprep.subr.bf16.mxu0 0
  %382 = vmatpush1.bf16.msra.mxu0 0
  %383 = vmatprep.subr.bf16.mxu0 0
  %384 = vmatpush1.bf16.msra.mxu0 0
  %385 = vmatprep.mubr.bf16.mxu0 0
  %386 = vmatmul.mubr.bf16.gmra.mrb[0].mxu0 %v254
  %v387 = vpop.f32.mrb[0].mxu0
  %v388 = vadd.f32 0.0, %v387
  %v389 = vpop.f32.mrb[0].mxu0
  %v390 = vpop.f32.mrb[0].mxu0
  %v391 = vadd.f32 0.0, %v390
  %v392 = vpop.f32.mrb[0].mxu0
  %393 = vmatprep.mubr.bf16.mxu0 0
  %394 = vmatmul.mubr.bf16.gmra.mrb[0].mxu0 %v257
  %v395 = vpop.f32.mrb[0].mxu0
  %v396 = vadd.f32 0.0, %v395
  %v397 = vpop.f32.mrb[0].mxu0
  %v398 = vpop.f32.mrb[0].mxu0
  %v399 = vadd.f32 0.0, %v398
  %v400 = vpop.f32.mrb[0].mxu0
  %401 = vmatprep.mubr.bf16.mxu0 0
  %402 = vmatmul.mubr.bf16.gmra.mrb[0].mxu0 %v260
  %v403 = vpop.f32.mrb[0].mxu0
  %v404 = vadd.f32 0.0, %v403
  %v405 = vpop.f32.mrb[0].mxu0
  %v406 = vpop.f32.mrb[0].mxu0
  %v407 = vadd.f32 0.0, %v406
  %v408 = vpop.f32.mrb[0].mxu0
  %409 = vmatprep.mubr.bf16.mxu0 0
  %410 = vmatmul.mubr.bf16.gmra.mrb[0].mxu0 %v263
  %v411 = vpop.f32.mrb[0].mxu0
  %v412 = vadd.f32 0.0, %v411
  %v413 = vpop.f32.mrb[0].mxu0
  %v414 = vpop.f32.mrb[0].mxu0
  %v415 = vadd.f32 0.0, %v414
  %v416 = vpop.f32.mrb[0].mxu0
  %417 = vmatprep.mubr.bf16.mxu0 0
  %418 = vmatmul.mubr.bf16.gmra.mrb[0].mxu0 %v266
  %v419 = vpop.f32.mrb[0].mxu0
  %v420 = vadd.f32 0.0, %v419
  %v421 = vpop.f32.mrb[0].mxu0
  %v422 = vpop.f32.mrb[0].mxu0
  %v423 = vadd.f32 0.0, %v422
  %v424 = vpop.f32.mrb[0].mxu0
  %425 = vmatprep.mubr.bf16.mxu0 0
  %426 = vmatmul.mubr.bf16.gmra.mrb[0].mxu0 %v269
  %v427 = vpop.f32.mrb[0].mxu0
  %v428 = vadd.f32 0.0, %v427
  %v429 = vpop.f32.mrb[0].mxu0
  %v430 = vpop.f32.mrb[0].mxu0
  %v431 = vadd.f32 0.0, %v430
  %v432 = vpop.f32.mrb[0].mxu0
  %433 = vmatprep.mubr.bf16.mxu0 0
  %434 = vmatmul.mubr.bf16.gmra.mrb[0].mxu0 %v272
  %v435 = vpop.f32.mrb[0].mxu0
  %v436 = vadd.f32 0.0, %v435
  %v437 = vpop.f32.mrb[0].mxu0
  %v438 = vpop.f32.mrb[0].mxu0
  %v439 = vadd.f32 0.0, %v438
  %v440 = vpop.f32.mrb[0].mxu0
  %441 = vmatprep.mubr.bf16.mxu0 0
  %442 = vmatmul.mubr.bf16.gmra.mrb[0].mxu0 %v275
  %v443 = vpop.f32.mrb[0].mxu0
  %v444 = vadd.f32 0.0, %v443
  %v445 = vpop.f32.mrb[0].mxu0
  %v446 = vpop.f32.mrb[0].mxu0
  %v447 = vadd.f32 0.0, %v446
  %v448 = vpop.f32.mrb[0].mxu0
  %449 = vmatprep.mubr.bf16.mxu0 0
  %450 = vmatmul.mubr.bf16.gmra.mrb[0].mxu0 %v278
  %v451 = vpop.f32.mrb[0].mxu0
  %v452 = vadd.f32 0.0, %v451
  %v453 = vpop.f32.mrb[0].mxu0
  %v454 = vpop.f32.mrb[0].mxu0
  %v455 = vadd.f32 0.0, %v454
  %v456 = vpop.f32.mrb[0].mxu0
  %457 = vmatprep.mubr.bf16.mxu0 0
  %458 = vmatmul.mubr.bf16.gmra.mrb[0].mxu0 %v281
  %v459 = vpop.f32.mrb[0].mxu0
  %v460 = vadd.f32 0.0, %v459
  %v461 = vpop.f32.mrb[0].mxu0
  %v462 = vpop.f32.mrb[0].mxu0
  %v463 = vadd.f32 0.0, %v462
  %v464 = vpop.f32.mrb[0].mxu0
  %465 = vmatprep.mubr.bf16.mxu0 0
  %466 = vmatmul.mubr.bf16.gmra.mrb[0].mxu0 %v284
  %v467 = vpop.f32.mrb[0].mxu0
  %v468 = vadd.f32 0.0, %v467
  %v469 = vpop.f32.mrb[0].mxu0
  %v470 = vpop.f32.mrb[0].mxu0
  %v471 = vadd.f32 0.0, %v470
  %v472 = vpop.f32.mrb[0].mxu0
  %473 = vmatprep.mubr.bf16.mxu0 0
  %474 = vmatmul.mubr.bf16.gmra.mrb[0].mxu0 %v287
  %v475 = vpop.f32.mrb[0].mxu0
  %v476 = vadd.f32 0.0, %v475
  %v477 = vpop.f32.mrb[0].mxu0
  %v478 = vpop.f32.mrb[0].mxu0
  %v479 = vadd.f32 0.0, %v478
  %v480 = vpop.f32.mrb[0].mxu0
  %481 = vmatprep.mubr.bf16.mxu0 0
  %482 = vmatmul.mubr.bf16.gmra.mrb[0].mxu0 %v290
  %v483 = vpop.f32.mrb[0].mxu0
  %v484 = vadd.f32 0.0, %v483
  %v485 = vpop.f32.mrb[0].mxu0
  %v486 = vpop.f32.mrb[0].mxu0
  %v487 = vadd.f32 0.0, %v486
  %v488 = vpop.f32.mrb[0].mxu0
  %489 = vmatprep.mubr.bf16.mxu0 0
  %490 = vmatmul.mubr.bf16.gmra.mrb[0].mxu0 %v293
  %v491 = vpop.f32.mrb[0].mxu0
  %v492 = vadd.f32 0.0, %v491
  %v493 = vpop.f32.mrb[0].mxu0
  %v494 = vpop.f32.mrb[0].mxu0
  %v495 = vadd.f32 0.0, %v494
  %v496 = vpop.f32.mrb[0].mxu0
  %497 = vmatprep.mubr.bf16.mxu0 0
  %498 = vmatmul.mubr.bf16.gmra.mrb[0].mxu0 %v296
  %v499 = vpop.f32.mrb[0].mxu0
  %v500 = vadd.f32 0.0, %v499
  %v501 = vpop.f32.mrb[0].mxu0
  %v502 = vpop.f32.mrb[0].mxu0
  %v503 = vadd.f32 0.0, %v502
  %v504 = vpop.f32.mrb[0].mxu0
  %505 = vmatprep.mubr.bf16.mxu0 0
  %506 = vmatmul.mubr.bf16.gmra.mrb[0].mxu0 %v299
  %v507 = vpop.f32.mrb[0].mxu0
  %v508 = vadd.f32 0.0, %v507
  %v509 = vpop.f32.mrb[0].mxu0
  %v510 = vpop.f32.mrb[0].mxu0
  %v511 = vadd.f32 0.0, %v510
  %v512 = vpop.f32.mrb[0].mxu0
  %513 = vmatprep.mubr.bf16.mxu0 0
  %514 = vmatmul.mubr.bf16.gmra.mrb[0].mxu0 %v302
  %v515 = vpop.f32.mrb[0].mxu0
  %v516 = vadd.f32 0.0, %v515
  %v517 = vpop.f32.mrb[0].mxu0
  %v518 = vpop.f32.mrb[0].mxu0
  %v519 = vadd.f32 0.0, %v518
  %v520 = vpop.f32.mrb[0].mxu0
  %521 = vmatprep.mubr.bf16.mxu0 0
  %522 = vmatmul.mubr.bf16.gmra.mrb[0].mxu0 %v305
  %v523 = vpop.f32.mrb[0].mxu0
  %v524 = vadd.f32 0.0, %v523
  %v525 = vpop.f32.mrb[0].mxu0
  %v526 = vpop.f32.mrb[0].mxu0
  %v527 = vadd.f32 0.0, %v526
  %v528 = vpop.f32.mrb[0].mxu0
  %529 = vmatprep.mubr.bf16.mxu0 0
  %530 = vmatmul.mubr.bf16.gmra.mrb[0].mxu0 %v308
  %v531 = vpop.f32.mrb[0].mxu0
  %v532 = vadd.f32 0.0, %v531
  %v533 = vpop.f32.mrb[0].mxu0
  %v534 = vpop.f32.mrb[0].mxu0
  %v535 = vadd.f32 0.0, %v534
  %v536 = vpop.f32.mrb[0].mxu0
  %537 = vmatprep.mubr.bf16.mxu0 0
  %538 = vmatmul.mubr.bf16.gmra.mrb[0].mxu0 %v311
  %v539 = vpop.f32.mrb[0].mxu0
  %v540 = vadd.f32 0.0, %v539
  %v541 = vpop.f32.mrb[0].mxu0
  %v542 = vpop.f32.mrb[0].mxu0
  %v543 = vadd.f32 0.0, %v542
  %v544 = vpop.f32.mrb[0].mxu0
  %545 = vmatprep.mubr.bf16.mxu0 0
  %546 = vmatmul.mubr.bf16.gmra.mrb[0].mxu0 %v314
  %v547 = vpop.f32.mrb[0].mxu0
  %v548 = vadd.f32 0.0, %v547
  %v549 = vpop.f32.mrb[0].mxu0
  %v550 = vpop.f32.mrb[0].mxu0
  %v551 = vadd.f32 0.0, %v550
  %v552 = vpop.f32.mrb[0].mxu0
  %553 = vmatprep.mubr.bf16.mxu0 0
  %554 = vmatmul.mubr.bf16.gmra.mrb[0].mxu0 %v317
  %v555 = vpop.f32.mrb[0].mxu0
  %v556 = vadd.f32 0.0, %v555
  %v557 = vpop.f32.mrb[0].mxu0
  %v558 = vpop.f32.mrb[0].mxu0
  %v559 = vadd.f32 0.0, %v558
  %v560 = vpop.f32.mrb[0].mxu0
  %561 = vmatprep.mubr.bf16.mxu0 0
  %562 = vmatmul.mubr.bf16.gmra.mrb[0].mxu0 %v320
  %v563 = vpop.f32.mrb[0].mxu0
  %v564 = vadd.f32 0.0, %v563
  %v565 = vpop.f32.mrb[0].mxu0
  %v566 = vpop.f32.mrb[0].mxu0
  %v567 = vadd.f32 0.0, %v566
  %v568 = vpop.f32.mrb[0].mxu0
  %569 = vmatprep.mubr.bf16.mxu0 0
  %570 = vmatmul.mubr.bf16.gmra.mrb[0].mxu0 %v323
  %v571 = vpop.f32.mrb[0].mxu0
  %v572 = vadd.f32 0.0, %v571
  %v573 = vpop.f32.mrb[0].mxu0
  %v574 = vpop.f32.mrb[0].mxu0
  %v575 = vadd.f32 0.0, %v574
  %v576 = vpop.f32.mrb[0].mxu0
  %577 = vmatprep.mubr.bf16.mxu0 0
  %578 = vmatmul.mubr.bf16.gmra.mrb[0].mxu0 %v326
  %v579 = vpop.f32.mrb[0].mxu0
  %v580 = vadd.f32 0.0, %v579
  %v581 = vpop.f32.mrb[0].mxu0
  %v582 = vpop.f32.mrb[0].mxu0
  %v583 = vadd.f32 0.0, %v582
  %v584 = vpop.f32.mrb[0].mxu0
  %585 = vmatprep.mubr.bf16.mxu0 0
  %586 = vmatmul.mubr.bf16.gmra.mrb[0].mxu0 %v329
  %v587 = vpop.f32.mrb[0].mxu0
  %v588 = vadd.f32 0.0, %v587
  %v589 = vpop.f32.mrb[0].mxu0
  %v590 = vpop.f32.mrb[0].mxu0
  %v591 = vadd.f32 0.0, %v590
  %v592 = vpop.f32.mrb[0].mxu0
  %593 = vmatprep.mubr.bf16.mxu0 0
  %594 = vmatmul.mubr.bf16.gmra.mrb[0].mxu0 %v332
  %v595 = vpop.f32.mrb[0].mxu0
  %v596 = vadd.f32 0.0, %v595
  %v597 = vpop.f32.mrb[0].mxu0
  %v598 = vpop.f32.mrb[0].mxu0
  %v599 = vadd.f32 0.0, %v598
  %v600 = vpop.f32.mrb[0].mxu0
  %601 = vmatprep.mubr.bf16.mxu0 0
  %602 = vmatmul.mubr.bf16.gmra.mrb[0].mxu0 %v335
  %v603 = vpop.f32.mrb[0].mxu0
  %v604 = vadd.f32 0.0, %v603
  %v605 = vpop.f32.mrb[0].mxu0
  %v606 = vpop.f32.mrb[0].mxu0
  %v607 = vadd.f32 0.0, %v606
  %v608 = vpop.f32.mrb[0].mxu0
  %609 = vmatprep.mubr.bf16.mxu0 0
  %610 = vmatmul.mubr.bf16.gmra.mrb[0].mxu0 %v338
  %v611 = vpop.f32.mrb[0].mxu0
  %v612 = vadd.f32 0.0, %v611
  %v613 = vpop.f32.mrb[0].mxu0
  %v614 = vpop.f32.mrb[0].mxu0
  %v615 = vadd.f32 0.0, %v614
  %v616 = vpop.f32.mrb[0].mxu0
  %617 = vmatprep.mubr.bf16.mxu0 0
  %618 = vmatmul.mubr.bf16.gmra.mrb[0].mxu0 %v341
  %v619 = vpop.f32.mrb[0].mxu0
  %v620 = vadd.f32 0.0, %v619
  %v621 = vpop.f32.mrb[0].mxu0
  %v622 = vpop.f32.mrb[0].mxu0
  %v623 = vadd.f32 0.0, %v622
  %v624 = vpop.f32.mrb[0].mxu0
  %625 = vmatprep.mubr.bf16.mxu0 0
  %626 = vmatmul.mubr.bf16.gmra.mrb[0].mxu0 %v344
  %v627 = vpop.f32.mrb[0].mxu0
  %v628 = vadd.f32 0.0, %v627
  %v629 = vpop.f32.mrb[0].mxu0
  %v630 = vpop.f32.mrb[0].mxu0
  %v631 = vadd.f32 0.0, %v630
  %v632 = vpop.f32.mrb[0].mxu0
  %633 = vmatprep.mubr.bf16.mxu0 0
  %634 = vmatmul.mubr.bf16.gmra.mrb[0].mxu0 %v347
  %v635 = vpop.f32.mrb[0].mxu0
  %v636 = vadd.f32 0.0, %v635
  %v637 = vpop.f32.mrb[0].mxu0
  %v638 = vpop.f32.mrb[0].mxu0
  %v639 = vadd.f32 0.0, %v638
  %v640 = vpop.f32.mrb[0].mxu0
  %641 = vdwg.mxu0
  %v642 = vld [vmem:[%s2] sm:$0x1]
  %v643 = vld [vmem:[%s3] sm:$0x1]
  %vm644 = vcmask 130048
  %v645 = vsel %vm644, %v388, 0.0
  %v646 = vsel %vm644, %v391, 0.0
  %v647 = vadd.f32 %v645, %v646
  %v648 = vsel %vm644, %v396, 0.0
  %v649 = vadd.f32 %v647, %v648
  %v650 = vsel %vm644, %v399, 0.0
  %v651 = vadd.f32 %v649, %v650
  %v652 = vsel %vm644, %v404, 0.0
  %v653 = vadd.f32 %v651, %v652
  %v654 = vsel %vm644, %v407, 0.0
  %v655 = vadd.f32 %v653, %v654
  %v656 = vsel %vm644, %v412, 0.0
  %v657 = vadd.f32 %v655, %v656
  %v658 = vsel %vm644, %v415, 0.0
  %v659 = vadd.f32 %v657, %v658
  %v660 = vsel %vm644, %v420, 0.0
  %v661 = vadd.f32 %v659, %v660
  %v662 = vsel %vm644, %v423, 0.0
  %v663 = vadd.f32 %v661, %v662
  %v664 = vsel %vm644, %v428, 0.0
  %v665 = vadd.f32 %v663, %v664
  %v666 = vsel %vm644, %v431, 0.0
  %v667 = vadd.f32 %v665, %v666
  %v668 = vsel %vm644, %v436, 0.0
  %v669 = vadd.f32 %v667, %v668
  %v670 = vsel %vm644, %v439, 0.0
  %v671 = vadd.f32 %v669, %v670
  %v672 = vsel %vm644, %v444, 0.0
  %v673 = vadd.f32 %v671, %v672
  %v674 = vsel %vm644, %v447, 0.0
  %v675 = vadd.f32 %v673, %v674
  %v676 = vsel %vm644, %v452, 0.0
  %v677 = vadd.f32 %v675, %v676
  %v678 = vsel %vm644, %v455, 0.0
  %v679 = vadd.f32 %v677, %v678
  %v680 = vsel %vm644, %v460, 0.0
  %v681 = vadd.f32 %v679, %v680
  %v682 = vsel %vm644, %v463, 0.0
  %v683 = vadd.f32 %v681, %v682
  %v684 = vsel %vm644, %v468, 0.0
  %v685 = vadd.f32 %v683, %v684
  %v686 = vsel %vm644, %v471, 0.0
  %v687 = vadd.f32 %v685, %v686
  %v688 = vsel %vm644, %v476, 0.0
  %v689 = vadd.f32 %v687, %v688
  %v690 = vsel %vm644, %v479, 0.0
  %v691 = vadd.f32 %v689, %v690
  %v692 = vsel %vm644, %v484, 0.0
  %v693 = vadd.f32 %v691, %v692
  %v694 = vsel %vm644, %v487, 0.0
  %v695 = vadd.f32 %v693, %v694
  %v696 = vsel %vm644, %v492, 0.0
  %v697 = vadd.f32 %v695, %v696
  %v698 = vsel %vm644, %v495, 0.0
  %v699 = vadd.f32 %v697, %v698
  %v700 = vsel %vm644, %v500, 0.0
  %v701 = vadd.f32 %v699, %v700
  %v702 = vsel %vm644, %v503, 0.0
  %v703 = vadd.f32 %v701, %v702
  %v704 = vsel %vm644, %v508, 0.0
  %v705 = vadd.f32 %v703, %v704
  %v706 = vsel %vm644, %v511, 0.0
  %v707 = vadd.f32 %v705, %v706
  %v708 = vsel %vm644, %v516, 0.0
  %v709 = vadd.f32 %v707, %v708
  %v710 = vsel %vm644, %v519, 0.0
  %v711 = vadd.f32 %v709, %v710
  %v712 = vsel %vm644, %v524, 0.0
  %v713 = vadd.f32 %v711, %v712
  %v714 = vsel %vm644, %v527, 0.0
  %v715 = vadd.f32 %v713, %v714
  %v716 = vsel %vm644, %v532, 0.0
  %v717 = vadd.f32 %v715, %v716
  %v718 = vsel %vm644, %v535, 0.0
  %v719 = vadd.f32 %v717, %v718
  %v720 = vsel %vm644, %v540, 0.0
  %v721 = vadd.f32 %v719, %v720
  %v722 = vsel %vm644, %v543, 0.0
  %v723 = vadd.f32 %v721, %v722
  %v724 = vsel %vm644, %v548, 0.0
  %v725 = vadd.f32 %v723, %v724
  %v726 = vsel %vm644, %v551, 0.0
  %v727 = vadd.f32 %v725, %v726
  %v728 = vsel %vm644, %v556, 0.0
  %v729 = vadd.f32 %v727, %v728
  %v730 = vsel %vm644, %v559, 0.0
  %v731 = vadd.f32 %v729, %v730
  %v732 = vsel %vm644, %v564, 0.0
  %v733 = vadd.f32 %v731, %v732
  %v734 = vsel %vm644, %v567, 0.0
  %v735 = vadd.f32 %v733, %v734
  %v736 = vsel %vm644, %v572, 0.0
  %v737 = vadd.f32 %v735, %v736
  %v738 = vsel %vm644, %v575, 0.0
  %v739 = vadd.f32 %v737, %v738
  %v740 = vsel %vm644, %v580, 0.0
  %v741 = vadd.f32 %v739, %v740
  %v742 = vsel %vm644, %v583, 0.0
  %v743 = vadd.f32 %v741, %v742
  %v744 = vsel %vm644, %v588, 0.0
  %v745 = vadd.f32 %v743, %v744
  %v746 = vsel %vm644, %v591, 0.0
  %v747 = vadd.f32 %v745, %v746
  %v748 = vsel %vm644, %v596, 0.0
  %v749 = vadd.f32 %v747, %v748
  %v750 = vsel %vm644, %v599, 0.0
  %v751 = vadd.f32 %v749, %v750
  %v752 = vsel %vm644, %v604, 0.0
  %v753 = vadd.f32 %v751, %v752
  %v754 = vsel %vm644, %v607, 0.0
  %v755 = vadd.f32 %v753, %v754
  %v756 = vsel %vm644, %v612, 0.0
  %v757 = vadd.f32 %v755, %v756
  %v758 = vsel %vm644, %v615, 0.0
  %v759 = vadd.f32 %v757, %v758
  %v760 = vsel %vm644, %v620, 0.0
  %v761 = vadd.f32 %v759, %v760
  %v762 = vsel %vm644, %v623, 0.0
  %v763 = vadd.f32 %v761, %v762
  %v764 = vsel %vm644, %v628, 0.0
  %v765 = vadd.f32 %v763, %v764
  %v766 = vsel %vm644, %v631, 0.0
  %v767 = vadd.f32 %v765, %v766
  %v768 = vsel %vm644, %v636, 0.0
  %v769 = vadd.f32 %v767, %v768
  %v770 = vsel %vm644, %v639, 0.0
  %v771 = vadd.f32 %v769, %v770
  %v772 = vrot.slane %v771, 4
  %v773 = vadd.f32 %v771, %v772
  %v774 = vrot.slane %v773, 2
  %v775 = vadd.f32 %v773, %v774
  %v776 = vrot.slane %v775, 1
  %v777 = vadd.f32 %v775, %v776
  %v778 = vmul.f32 %v777, 0.001953125
  %v779 = vsub.f32 %v388, %v778
  %v780 = vsub.f32 %v391, %v778
  %v781 = vsub.f32 %v396, %v778
  %v782 = vsub.f32 %v399, %v778
  %v783 = vsub.f32 %v404, %v778
  %v784 = vsub.f32 %v407, %v778
  %v785 = vsub.f32 %v412, %v778
  %v786 = vsub.f32 %v415, %v778
  %v787 = vsub.f32 %v420, %v778
  %v788 = vsub.f32 %v423, %v778
  %v789 = vsub.f32 %v428, %v778
  %v790 = vsub.f32 %v431, %v778
  %v791 = vsub.f32 %v436, %v778
  %v792 = vsub.f32 %v439, %v778
  %v793 = vsub.f32 %v444, %v778
  %v794 = vsub.f32 %v447, %v778
  %v795 = vsub.f32 %v452, %v778
  %v796 = vsub.f32 %v455, %v778
  %v797 = vsub.f32 %v460, %v778
  %v798 = vsub.f32 %v463, %v778
  %v799 = vsub.f32 %v468, %v778
  %v800 = vsub.f32 %v471, %v778
  %v801 = vsub.f32 %v476, %v778
  %v802 = vsub.f32 %v479, %v778
  %v803 = vsub.f32 %v484, %v778
  %v804 = vsub.f32 %v487, %v778
  %v805 = vsub.f32 %v492, %v778
  %v806 = vsub.f32 %v495, %v778
  %v807 = vsub.f32 %v500, %v778
  %v808 = vsub.f32 %v503, %v778
  %v809 = vsub.f32 %v508, %v778
  %v810 = vsub.f32 %v511, %v778
  %v811 = vsub.f32 %v516, %v778
  %v812 = vsub.f32 %v519, %v778
  %v813 = vsub.f32 %v524, %v778
  %v814 = vsub.f32 %v527, %v778
  %v815 = vsub.f32 %v532, %v778
  %v816 = vsub.f32 %v535, %v778
  %v817 = vsub.f32 %v540, %v778
  %v818 = vsub.f32 %v543, %v778
  %v819 = vsub.f32 %v548, %v778
  %v820 = vsub.f32 %v551, %v778
  %v821 = vsub.f32 %v556, %v778
  %v822 = vsub.f32 %v559, %v778
  %v823 = vsub.f32 %v564, %v778
  %v824 = vsub.f32 %v567, %v778
  %v825 = vsub.f32 %v572, %v778
  %v826 = vsub.f32 %v575, %v778
  %v827 = vsub.f32 %v580, %v778
  %v828 = vsub.f32 %v583, %v778
  %v829 = vsub.f32 %v588, %v778
  %v830 = vsub.f32 %v591, %v778
  %v831 = vsub.f32 %v596, %v778
  %v832 = vsub.f32 %v599, %v778
  %v833 = vsub.f32 %v604, %v778
  %v834 = vsub.f32 %v607, %v778
  %v835 = vsub.f32 %v612, %v778
  %v836 = vsub.f32 %v615, %v778
  %v837 = vsub.f32 %v620, %v778
  %v838 = vsub.f32 %v623, %v778
  %v839 = vsub.f32 %v628, %v778
  %v840 = vsub.f32 %v631, %v778
  %v841 = vsub.f32 %v636, %v778
  %v842 = vsub.f32 %v639, %v778
  %v843 = vmul.f32 %v779, %v779
  %v844 = vmul.f32 %v780, %v780
  %v845 = vmul.f32 %v781, %v781
  %v846 = vmul.f32 %v782, %v782
  %v847 = vmul.f32 %v783, %v783
  %v848 = vmul.f32 %v784, %v784
  %v849 = vmul.f32 %v785, %v785
  %v850 = vmul.f32 %v786, %v786
  %v851 = vmul.f32 %v787, %v787
  %v852 = vmul.f32 %v788, %v788
  %v853 = vmul.f32 %v789, %v789
  %v854 = vmul.f32 %v790, %v790
  %v855 = vmul.f32 %v791, %v791
  %v856 = vmul.f32 %v792, %v792
  %v857 = vmul.f32 %v793, %v793
  %v858 = vmul.f32 %v794, %v794
  %v859 = vmul.f32 %v795, %v795
  %v860 = vmul.f32 %v796, %v796
  %v861 = vmul.f32 %v797, %v797
  %v862 = vmul.f32 %v798, %v798
  %v863 = vmul.f32 %v799, %v799
  %v864 = vmul.f32 %v800, %v800
  %v865 = vmul.f32 %v801, %v801
  %v866 = vmul.f32 %v802, %v802
  %v867 = vmul.f32 %v803, %v803
  %v868 = vmul.f32 %v804, %v804
  %v869 = vmul.f32 %v805, %v805
  %v870 = vmul.f32 %v806, %v806
  %v871 = vmul.f32 %v807, %v807
  %v872 = vmul.f32 %v808, %v808
  %v873 = vmul.f32 %v809, %v809
  %v874 = vmul.f32 %v810, %v810
  %v875 = vmul.f32 %v811, %v811
  %v876 = vmul.f32 %v812, %v812
  %v877 = vmul.f32 %v813, %v813
  %v878 = vmul.f32 %v814, %v814
  %v879 = vmul.f32 %v815, %v815
  %v880 = vmul.f32 %v816, %v816
  %v881 = vmul.f32 %v817, %v817
  %v882 = vmul.f32 %v818, %v818
  %v883 = vmul.f32 %v819, %v819
  %v884 = vmul.f32 %v820, %v820
  %v885 = vmul.f32 %v821, %v821
  %v886 = vmul.f32 %v822, %v822
  %v887 = vmul.f32 %v823, %v823
  %v888 = vmul.f32 %v824, %v824
  %v889 = vmul.f32 %v825, %v825
  %v890 = vmul.f32 %v826, %v826
  %v891 = vmul.f32 %v827, %v827
  %v892 = vmul.f32 %v828, %v828
  %v893 = vmul.f32 %v829, %v829
  %v894 = vmul.f32 %v830, %v830
  %v895 = vmul.f32 %v831, %v831
  %v896 = vmul.f32 %v832, %v832
  %v897 = vmul.f32 %v833, %v833
  %v898 = vmul.f32 %v834, %v834
  %v899 = vmul.f32 %v835, %v835
  %v900 = vmul.f32 %v836, %v836
  %v901 = vmul.f32 %v837, %v837
  %v902 = vmul.f32 %v838, %v838
  %v903 = vmul.f32 %v839, %v839
  %v904 = vmul.f32 %v840, %v840
  %v905 = vmul.f32 %v841, %v841
  %v906 = vmul.f32 %v842, %v842
  %v907 = vsel %vm644, %v843, 0.0
  %v908 = vsel %vm644, %v844, 0.0
  %v909 = vadd.f32 %v907, %v908
  %v910 = vsel %vm644, %v845, 0.0
  %v911 = vadd.f32 %v909, %v910
  %v912 = vsel %vm644, %v846, 0.0
  %v913 = vadd.f32 %v911, %v912
  %v914 = vsel %vm644, %v847, 0.0
  %v915 = vadd.f32 %v913, %v914
  %v916 = vsel %vm644, %v848, 0.0
  %v917 = vadd.f32 %v915, %v916
  %v918 = vsel %vm644, %v849, 0.0
  %v919 = vadd.f32 %v917, %v918
  %v920 = vsel %vm644, %v850, 0.0
  %v921 = vadd.f32 %v919, %v920
  %v922 = vsel %vm644, %v851, 0.0
  %v923 = vadd.f32 %v921, %v922
  %v924 = vsel %vm644, %v852, 0.0
  %v925 = vadd.f32 %v923, %v924
  %v926 = vsel %vm644, %v853, 0.0
  %v927 = vadd.f32 %v925, %v926
  %v928 = vsel %vm644, %v854, 0.0
  %v929 = vadd.f32 %v927, %v928
  %v930 = vsel %vm644, %v855, 0.0
  %v931 = vadd.f32 %v929, %v930
  %v932 = vsel %vm644, %v856, 0.0
  %v933 = vadd.f32 %v931, %v932
  %v934 = vsel %vm644, %v857, 0.0
  %v935 = vadd.f32 %v933, %v934
  %v936 = vsel %vm644, %v858, 0.0
  %v937 = vadd.f32 %v935, %v936
  %v938 = vsel %vm644, %v859, 0.0
  %v939 = vadd.f32 %v937, %v938
  %v940 = vsel %vm644, %v860, 0.0
  %v941 = vadd.f32 %v939, %v940
  %v942 = vsel %vm644, %v861, 0.0
  %v943 = vadd.f32 %v941, %v942
  %v944 = vsel %vm644, %v862, 0.0
  %v945 = vadd.f32 %v943, %v944
  %v946 = vsel %vm644, %v863, 0.0
  %v947 = vadd.f32 %v945, %v946
  %v948 = vsel %vm644, %v864, 0.0
  %v949 = vadd.f32 %v947, %v948
  %v950 = vsel %vm644, %v865, 0.0
  %v951 = vadd.f32 %v949, %v950
  %v952 = vsel %vm644, %v866, 0.0
  %v953 = vadd.f32 %v951, %v952
  %v954 = vsel %vm644, %v867, 0.0
  %v955 = vadd.f32 %v953, %v954
  %v956 = vsel %vm644, %v868, 0.0
  %v957 = vadd.f32 %v955, %v956
  %v958 = vsel %vm644, %v869, 0.0
  %v959 = vadd.f32 %v957, %v958
  %v960 = vsel %vm644, %v870, 0.0
  %v961 = vadd.f32 %v959, %v960
  %v962 = vsel %vm644, %v871, 0.0
  %v963 = vadd.f32 %v961, %v962
  %v964 = vsel %vm644, %v872, 0.0
  %v965 = vadd.f32 %v963, %v964
  %v966 = vsel %vm644, %v873, 0.0
  %v967 = vadd.f32 %v965, %v966
  %v968 = vsel %vm644, %v874, 0.0
  %v969 = vadd.f32 %v967, %v968
  %v970 = vsel %vm644, %v875, 0.0
  %v971 = vadd.f32 %v969, %v970
  %v972 = vsel %vm644, %v876, 0.0
  %v973 = vadd.f32 %v971, %v972
  %v974 = vsel %vm644, %v877, 0.0
  %v975 = vadd.f32 %v973, %v974
  %v976 = vsel %vm644, %v878, 0.0
  %v977 = vadd.f32 %v975, %v976
  %v978 = vsel %vm644, %v879, 0.0
  %v979 = vadd.f32 %v977, %v978
  %v980 = vsel %vm644, %v880, 0.0
  %v981 = vadd.f32 %v979, %v980
  %v982 = vsel %vm644, %v881, 0.0
  %v983 = vadd.f32 %v981, %v982
  %v984 = vsel %vm644, %v882, 0.0
  %v985 = vadd.f32 %v983, %v984
  %v986 = vsel %vm644, %v883, 0.0
  %v987 = vadd.f32 %v985, %v986
  %v988 = vsel %vm644, %v884, 0.0
  %v989 = vadd.f32 %v987, %v988
  %v990 = vsel %vm644, %v885, 0.0
  %v991 = vadd.f32 %v989, %v990
  %v992 = vsel %vm644, %v886, 0.0
  %v993 = vadd.f32 %v991, %v992
  %v994 = vsel %vm644, %v887, 0.0
  %v995 = vadd.f32 %v993, %v994
  %v996 = vsel %vm644, %v888, 0.0
  %v997 = vadd.f32 %v995, %v996
  %v998 = vsel %vm644, %v889, 0.0
  %v999 = vadd.f32 %v997, %v998
  %v1000 = vsel %vm644, %v890, 0.0
  %v1001 = vadd.f32 %v999, %v1000
  %v1002 = vsel %vm644, %v891, 0.0
  %v1003 = vadd.f32 %v1001, %v1002
  %v1004 = vsel %vm644, %v892, 0.0
  %v1005 = vadd.f32 %v1003, %v1004
  %v1006 = vsel %vm644, %v893, 0.0
  %v1007 = vadd.f32 %v1005, %v1006
  %v1008 = vsel %vm644, %v894, 0.0
  %v1009 = vadd.f32 %v1007, %v1008
  %v1010 = vsel %vm644, %v895, 0.0
  %v1011 = vadd.f32 %v1009, %v1010
  %v1012 = vsel %vm644, %v896, 0.0
  %v1013 = vadd.f32 %v1011, %v1012
  %v1014 = vsel %vm644, %v897, 0.0
  %v1015 = vadd.f32 %v1013, %v1014
  %v1016 = vsel %vm644, %v898, 0.0
  %v1017 = vadd.f32 %v1015, %v1016
  %v1018 = vsel %vm644, %v899, 0.0
  %v1019 = vadd.f32 %v1017, %v1018
  %v1020 = vsel %vm644, %v900, 0.0
  %v1021 = vadd.f32 %v1019, %v1020
  %v1022 = vsel %vm644, %v901, 0.0
  %v1023 = vadd.f32 %v1021, %v1022
  %v1024 = vsel %vm644, %v902, 0.0
  %v1025 = vadd.f32 %v1023, %v1024
  %v1026 = vsel %vm644, %v903, 0.0
  %v1027 = vadd.f32 %v1025, %v1026
  %v1028 = vsel %vm644, %v904, 0.0
  %v1029 = vadd.f32 %v1027, %v1028
  %v1030 = vsel %vm644, %v905, 0.0
  %v1031 = vadd.f32 %v1029, %v1030
  %v1032 = vsel %vm644, %v906, 0.0
  %v1033 = vadd.f32 %v1031, %v1032
  %v1034 = vrot.slane %v1033, 4
  %v1035 = vadd.f32 %v1033, %v1034
  %v1036 = vrot.slane %v1035, 2
  %v1037 = vadd.f32 %v1035, %v1036
  %v1038 = vrot.slane %v1037, 1
  %v1039 = vadd.f32 %v1037, %v1038
  %v1040 = vmul.f32 %v1039, 0.001953125
  %v1041 = vadd.f32 %v1040, 1e-05
  %v1042 = vrsqrt.pop %v1041
  %v1043 = vmul.f32 %v1042, %v642
  %v1044 = vlaneseq
  %v1045 = vshrl.u32 %v1044, 7
  %v1046 = vsub.s32 0, %v1045
  %v1047 = vrot.slane %v1043, %v1046
  %v1048 = vmul.f32 %v779, %v1047
  %v1049 = vmul.f32 %v780, %v1047
  %v1050 = vmul.f32 %v781, %v1047
  %v1051 = vmul.f32 %v782, %v1047
  %v1052 = vmul.f32 %v783, %v1047
  %v1053 = vmul.f32 %v784, %v1047
  %v1054 = vmul.f32 %v785, %v1047
  %v1055 = vmul.f32 %v786, %v1047
  %v1056 = vmul.f32 %v787, %v1047
  %v1057 = vmul.f32 %v788, %v1047
  %v1058 = vmul.f32 %v789, %v1047
  %v1059 = vmul.f32 %v790, %v1047
  %v1060 = vmul.f32 %v791, %v1047
  %v1061 = vmul.f32 %v792, %v1047
  %v1062 = vmul.f32 %v793, %v1047
  %v1063 = vmul.f32 %v794, %v1047
  %v1064 = vmul.f32 %v795, %v1047
  %v1065 = vmul.f32 %v796, %v1047
  %v1066 = vmul.f32 %v797, %v1047
  %v1067 = vmul.f32 %v798, %v1047
  %v1068 = vmul.f32 %v799, %v1047
  %v1069 = vmul.f32 %v800, %v1047
  %v1070 = vmul.f32 %v801, %v1047
  %v1071 = vmul.f32 %v802, %v1047
  %v1072 = vmul.f32 %v803, %v1047
  %v1073 = vmul.f32 %v804, %v1047
  %v1074 = vmul.f32 %v805, %v1047
  %v1075 = vmul.f32 %v806, %v1047
  %v1076 = vmul.f32 %v807, %v1047
  %v1077 = vmul.f32 %v808, %v1047
  %v1078 = vmul.f32 %v809, %v1047
  %v1079 = vmul.f32 %v810, %v1047
  %v1080 = vmul.f32 %v811, %v1047
  %v1081 = vmul.f32 %v812, %v1047
  %v1082 = vmul.f32 %v813, %v1047
  %v1083 = vmul.f32 %v814, %v1047
  %v1084 = vmul.f32 %v815, %v1047
  %v1085 = vmul.f32 %v816, %v1047
  %v1086 = vmul.f32 %v817, %v1047
  %v1087 = vmul.f32 %v818, %v1047
  %v1088 = vmul.f32 %v819, %v1047
  %v1089 = vmul.f32 %v820, %v1047
  %v1090 = vmul.f32 %v821, %v1047
  %v1091 = vmul.f32 %v822, %v1047
  %v1092 = vmul.f32 %v823, %v1047
  %v1093 = vmul.f32 %v824, %v1047
  %v1094 = vmul.f32 %v825, %v1047
  %v1095 = vmul.f32 %v826, %v1047
  %v1096 = vmul.f32 %v827, %v1047
  %v1097 = vmul.f32 %v828, %v1047
  %v1098 = vmul.f32 %v829, %v1047
  %v1099 = vmul.f32 %v830, %v1047
  %v1100 = vmul.f32 %v831, %v1047
  %v1101 = vmul.f32 %v832, %v1047
  %v1102 = vmul.f32 %v833, %v1047
  %v1103 = vmul.f32 %v834, %v1047
  %v1104 = vmul.f32 %v835, %v1047
  %v1105 = vmul.f32 %v836, %v1047
  %v1106 = vmul.f32 %v837, %v1047
  %v1107 = vmul.f32 %v838, %v1047
  %v1108 = vmul.f32 %v839, %v1047
  %v1109 = vmul.f32 %v840, %v1047
  %v1110 = vmul.f32 %v841, %v1047
  %v1111 = vmul.f32 %v842, %v1047
  %v1113 = vlaneseq
  %v1114 = vshrl.u32 %v1113, 7
  %v1115 = vsub.s32 0, %v1114
  %v1116 = vrot.slane %v643, %v1115
  %v1118 = vadd.f32 %v1048, %v1116
  %v1119 = vadd.f32 %v1049, %v1116
  %v1120 = vadd.f32 %v1050, %v1116
  %v1121 = vadd.f32 %v1051, %v1116
  %v1122 = vadd.f32 %v1052, %v1116
  %v1123 = vadd.f32 %v1053, %v1116
  %v1124 = vadd.f32 %v1054, %v1116
  %v1125 = vadd.f32 %v1055, %v1116
  %v1126 = vadd.f32 %v1056, %v1116
  %v1127 = vadd.f32 %v1057, %v1116
  %v1128 = vadd.f32 %v1058, %v1116
  %v1129 = vadd.f32 %v1059, %v1116
  %v1130 = vadd.f32 %v1060, %v1116
  %v1131 = vadd.f32 %v1061, %v1116
  %v1132 = vadd.f32 %v1062, %v1116
  %v1133 = vadd.f32 %v1063, %v1116
  %v1134 = vadd.f32 %v1064, %v1116
  %v1135 = vadd.f32 %v1065, %v1116
  %v1136 = vadd.f32 %v1066, %v1116
  %v1137 = vadd.f32 %v1067, %v1116
  %v1138 = vadd.f32 %v1068, %v1116
  %v1139 = vadd.f32 %v1069, %v1116
  %v1140 = vadd.f32 %v1070, %v1116
  %v1141 = vadd.f32 %v1071, %v1116
  %v1142 = vadd.f32 %v1072, %v1116
  %v1143 = vadd.f32 %v1073, %v1116
  %v1144 = vadd.f32 %v1074, %v1116
  %v1145 = vadd.f32 %v1075, %v1116
  %v1146 = vadd.f32 %v1076, %v1116
  %v1147 = vadd.f32 %v1077, %v1116
  %v1148 = vadd.f32 %v1078, %v1116
  %v1149 = vadd.f32 %v1079, %v1116
  %v1150 = vadd.f32 %v1080, %v1116
  %v1151 = vadd.f32 %v1081, %v1116
  %v1152 = vadd.f32 %v1082, %v1116
  %v1153 = vadd.f32 %v1083, %v1116
  %v1154 = vadd.f32 %v1084, %v1116
  %v1155 = vadd.f32 %v1085, %v1116
  %v1156 = vadd.f32 %v1086, %v1116
  %v1157 = vadd.f32 %v1087, %v1116
  %v1158 = vadd.f32 %v1088, %v1116
  %v1159 = vadd.f32 %v1089, %v1116
  %v1160 = vadd.f32 %v1090, %v1116
  %v1161 = vadd.f32 %v1091, %v1116
  %v1162 = vadd.f32 %v1092, %v1116
  %v1163 = vadd.f32 %v1093, %v1116
  %v1164 = vadd.f32 %v1094, %v1116
  %v1165 = vadd.f32 %v1095, %v1116
  %v1166 = vadd.f32 %v1096, %v1116
  %v1167 = vadd.f32 %v1097, %v1116
  %v1168 = vadd.f32 %v1098, %v1116
  %v1169 = vadd.f32 %v1099, %v1116
  %v1170 = vadd.f32 %v1100, %v1116
  %v1171 = vadd.f32 %v1101, %v1116
  %v1172 = vadd.f32 %v1102, %v1116
  %v1173 = vadd.f32 %v1103, %v1116
  %v1174 = vadd.f32 %v1104, %v1116
  %v1175 = vadd.f32 %v1105, %v1116
  %v1176 = vadd.f32 %v1106, %v1116
  %v1177 = vadd.f32 %v1107, %v1116
  %v1178 = vadd.f32 %v1108, %v1116
  %v1179 = vadd.f32 %v1109, %v1116
  %v1180 = vadd.f32 %v1110, %v1116
  %v1181 = vadd.f32 %v1111, %v1116
  %v1182 = vmax.f32 %v1118, 0.0
  %v1183 = vmax.f32 %v1119, 0.0
  %v1184 = vmax.f32 %v1120, 0.0
  %v1185 = vmax.f32 %v1121, 0.0
  %v1186 = vmax.f32 %v1122, 0.0
  %v1187 = vmax.f32 %v1123, 0.0
  %v1188 = vmax.f32 %v1124, 0.0
  %v1189 = vmax.f32 %v1125, 0.0
  %v1190 = vmax.f32 %v1126, 0.0
  %v1191 = vmax.f32 %v1127, 0.0
  %v1192 = vmax.f32 %v1128, 0.0
  %v1193 = vmax.f32 %v1129, 0.0
  %v1194 = vmax.f32 %v1130, 0.0
  %v1195 = vmax.f32 %v1131, 0.0
  %v1196 = vmax.f32 %v1132, 0.0
  %v1197 = vmax.f32 %v1133, 0.0
  %v1198 = vmax.f32 %v1134, 0.0
  %v1199 = vmax.f32 %v1135, 0.0
  %v1200 = vmax.f32 %v1136, 0.0
  %v1201 = vmax.f32 %v1137, 0.0
  %v1202 = vmax.f32 %v1138, 0.0
  %v1203 = vmax.f32 %v1139, 0.0
  %v1204 = vmax.f32 %v1140, 0.0
  %v1205 = vmax.f32 %v1141, 0.0
  %v1206 = vmax.f32 %v1142, 0.0
  %v1207 = vmax.f32 %v1143, 0.0
  %v1208 = vmax.f32 %v1144, 0.0
  %v1209 = vmax.f32 %v1145, 0.0
  %v1210 = vmax.f32 %v1146, 0.0
  %v1211 = vmax.f32 %v1147, 0.0
  %v1212 = vmax.f32 %v1148, 0.0
  %v1213 = vmax.f32 %v1149, 0.0
  %v1214 = vmax.f32 %v1150, 0.0
  %v1215 = vmax.f32 %v1151, 0.0
  %v1216 = vmax.f32 %v1152, 0.0
  %v1217 = vmax.f32 %v1153, 0.0
  %v1218 = vmax.f32 %v1154, 0.0
  %v1219 = vmax.f32 %v1155, 0.0
  %v1220 = vmax.f32 %v1156, 0.0
  %v1221 = vmax.f32 %v1157, 0.0
  %v1222 = vmax.f32 %v1158, 0.0
  %v1223 = vmax.f32 %v1159, 0.0
  %v1224 = vmax.f32 %v1160, 0.0
  %v1225 = vmax.f32 %v1161, 0.0
  %v1226 = vmax.f32 %v1162, 0.0
  %v1227 = vmax.f32 %v1163, 0.0
  %v1228 = vmax.f32 %v1164, 0.0
  %v1229 = vmax.f32 %v1165, 0.0
  %v1230 = vmax.f32 %v1166, 0.0
  %v1231 = vmax.f32 %v1167, 0.0
  %v1232 = vmax.f32 %v1168, 0.0
  %v1233 = vmax.f32 %v1169, 0.0
  %v1234 = vmax.f32 %v1170, 0.0
  %v1235 = vmax.f32 %v1171, 0.0
  %v1236 = vmax.f32 %v1172, 0.0
  %v1237 = vmax.f32 %v1173, 0.0
  %v1238 = vmax.f32 %v1174, 0.0
  %v1239 = vmax.f32 %v1175, 0.0
  %v1240 = vmax.f32 %v1176, 0.0
  %v1241 = vmax.f32 %v1177, 0.0
  %v1242 = vmax.f32 %v1178, 0.0
  %v1243 = vmax.f32 %v1179, 0.0
  %v1244 = vmax.f32 %v1180, 0.0
  %v1245 = vmax.f32 %v1181, 0.0
  %v1246 = vpack.c.bf16 %v1183, %v1182
  %v1247 = vpack.c.bf16 %v1185, %v1184
  %v1248 = vpack.c.bf16 %v1187, %v1186
  %v1249 = vpack.c.bf16 %v1189, %v1188
  %v1250 = vpack.c.bf16 %v1191, %v1190
  %v1251 = vpack.c.bf16 %v1193, %v1192
  %v1252 = vpack.c.bf16 %v1195, %v1194
  %v1253 = vpack.c.bf16 %v1197, %v1196
  %v1254 = vpack.c.bf16 %v1199, %v1198
  %v1255 = vpack.c.bf16 %v1201, %v1200
  %v1256 = vpack.c.bf16 %v1203, %v1202
  %v1257 = vpack.c.bf16 %v1205, %v1204
  %v1258 = vpack.c.bf16 %v1207, %v1206
  %v1259 = vpack.c.bf16 %v1209, %v1208
  %v1260 = vpack.c.bf16 %v1211, %v1210
  %v1261 = vpack.c.bf16 %v1213, %v1212
  %v1262 = vpack.c.bf16 %v1215, %v1214
  %v1263 = vpack.c.bf16 %v1217, %v1216
  %v1264 = vpack.c.bf16 %v1219, %v1218
  %v1265 = vpack.c.bf16 %v1221, %v1220
  %v1266 = vpack.c.bf16 %v1223, %v1222
  %v1267 = vpack.c.bf16 %v1225, %v1224
  %v1268 = vpack.c.bf16 %v1227, %v1226
  %v1269 = vpack.c.bf16 %v1229, %v1228
  %v1270 = vpack.c.bf16 %v1231, %v1230
  %v1271 = vpack.c.bf16 %v1233, %v1232
  %v1272 = vpack.c.bf16 %v1235, %v1234
  %v1273 = vpack.c.bf16 %v1237, %v1236
  %v1274 = vpack.c.bf16 %v1239, %v1238
  %v1275 = vpack.c.bf16 %v1241, %v1240
  %v1276 = vpack.c.bf16 %v1243, %v1242
  %v1277 = vpack.c.bf16 %v1245, %v1244
  %v1278 = vld [vmem:[%s4] sm:$0xf]
  %v1279 = vld [vmem:[%s4 + $0x4] sm:$0xf]
  %v1282 = vunpack.c.l.b16 %v1278
  %v1283 = vunpack.c.l.b16 %v1279
  %v1284 = vpack.c.b16 %v1283, %v1282
  %v1287 = vsel %vm644, %v1246, 0
  %v1290 = vsel %vm644, %v1247, 0
  %v1293 = vsel %vm644, %v1248, 0
  %v1296 = vsel %vm644, %v1249, 0
  %v1299 = vsel %vm644, %v1250, 0
  %v1302 = vsel %vm644, %v1251, 0
  %v1305 = vsel %vm644, %v1252, 0
  %v1308 = vsel %vm644, %v1253, 0
  %v1311 = vsel %vm644, %v1254, 0
  %v1314 = vsel %vm644, %v1255, 0
  %v1317 = vsel %vm644, %v1256, 0
  %v1320 = vsel %vm644, %v1257, 0
  %v1323 = vsel %vm644, %v1258, 0
  %v1326 = vsel %vm644, %v1259, 0
  %v1329 = vsel %vm644, %v1260, 0
  %v1332 = vsel %vm644, %v1261, 0
  %v1335 = vsel %vm644, %v1262, 0
  %v1338 = vsel %vm644, %v1263, 0
  %v1341 = vsel %vm644, %v1264, 0
  %v1344 = vsel %vm644, %v1265, 0
  %v1347 = vsel %vm644, %v1266, 0
  %v1350 = vsel %vm644, %v1267, 0
  %v1353 = vsel %vm644, %v1268, 0
  %v1356 = vsel %vm644, %v1269, 0
  %v1359 = vsel %vm644, %v1270, 0
  %v1362 = vsel %vm644, %v1271, 0
  %v1365 = vsel %vm644, %v1272, 0
  %v1368 = vsel %vm644, %v1273, 0
  %v1371 = vsel %vm644, %v1274, 0
  %v1374 = vsel %vm644, %v1275, 0
  %v1377 = vsel %vm644, %v1276, 0
  %v1380 = vsel %vm644, %v1277, 0
  %1382 = vmatprep.subr.bf16.mxu0 0
  %1383 = vmatpush1.bf16.msra.mxu0 %v1284
  %1384 = vmatprep.subr.bf16.mxu0 0
  %1385 = vmatpush1.bf16.msra.mxu0 0
  %1386 = vmatprep.subr.bf16.mxu0 0
  %1387 = vmatpush1.bf16.msra.mxu0 0
  %1388 = vmatprep.subr.bf16.mxu0 0
  %1389 = vmatpush1.bf16.msra.mxu0 0
  %1390 = vmatprep.subr.bf16.mxu0 0
  %1391 = vmatpush1.bf16.msra.mxu0 0
  %1392 = vmatprep.subr.bf16.mxu0 0
  %1393 = vmatpush1.bf16.msra.mxu0 0
  %1394 = vmatprep.subr.bf16.mxu0 0
  %1395 = vmatpush1.bf16.msra.mxu0 0
  %1396 = vmatprep.subr.bf16.mxu0 0
  %1397 = vmatpush1.bf16.msra.mxu0 0
  %1398 = vmatprep.subr.bf16.mxu0 0
  %1399 = vmatpush1.bf16.msra.mxu0 0
  %1400 = vmatprep.subr.bf16.mxu0 0
  %1401 = vmatpush1.bf16.msra.mxu0 0
  %1402 = vmatprep.subr.bf16.mxu0 0
  %1403 = vmatpush1.bf16.msra.mxu0 0
  %1404 = vmatprep.subr.bf16.mxu0 0
  %1405 = vmatpush1.bf16.msra.mxu0 0
  %1406 = vmatprep.subr.bf16.mxu0 0
  %1407 = vmatpush1.bf16.msra.mxu0 0
  %1408 = vmatprep.subr.bf16.mxu0 0
  %1409 = vmatpush1.bf16.msra.mxu0 0
  %1410 = vmatprep.subr.bf16.mxu0 0
  %1411 = vmatpush1.bf16.msra.mxu0 0
  %1412 = vmatprep.subr.bf16.mxu0 0
  %1413 = vmatpush1.bf16.msra.mxu0 0
  %1414 = vmatprep.mubr.bf16.mxu0 0
  %1415 = vmatmul.mubr.bf16.gmra.mrb[0].mxu0 %v1287
  %v1416 = vpop.f32.mrb[0].mxu0
  %v1417 = vadd.f32 0.0, %v1416
  %v1418 = vpop.f32.mrb[0].mxu0
  %v1419 = vpop.f32.mrb[0].mxu0
  %v1420 = vadd.f32 0.0, %v1419
  %v1421 = vpop.f32.mrb[0].mxu0
  %1422 = vmatprep.mubr.bf16.mxu0 0
  %1423 = vmatmul.mubr.bf16.gmra.mrb[0].mxu0 %v1290
  %v1424 = vpop.f32.mrb[0].mxu0
  %v1425 = vadd.f32 0.0, %v1424
  %v1426 = vpop.f32.mrb[0].mxu0
  %v1427 = vpop.f32.mrb[0].mxu0
  %v1428 = vadd.f32 0.0, %v1427
  %v1429 = vpop.f32.mrb[0].mxu0
  %1430 = vmatprep.mubr.bf16.mxu0 0
  %1431 = vmatmul.mubr.bf16.gmra.mrb[0].mxu0 %v1293
  %v1432 = vpop.f32.mrb[0].mxu0
  %v1433 = vadd.f32 0.0, %v1432
  %v1434 = vpop.f32.mrb[0].mxu0
  %v1435 = vpop.f32.mrb[0].mxu0
  %v1436 = vadd.f32 0.0, %v1435
  %v1437 = vpop.f32.mrb[0].mxu0
  %1438 = vmatprep.mubr.bf16.mxu0 0
  %1439 = vmatmul.mubr.bf16.gmra.mrb[0].mxu0 %v1296
  %v1440 = vpop.f32.mrb[0].mxu0
  %v1441 = vadd.f32 0.0, %v1440
  %v1442 = vpop.f32.mrb[0].mxu0
  %v1443 = vpop.f32.mrb[0].mxu0
  %v1444 = vadd.f32 0.0, %v1443
  %v1445 = vpop.f32.mrb[0].mxu0
  %1446 = vmatprep.mubr.bf16.mxu0 0
  %1447 = vmatmul.mubr.bf16.gmra.mrb[0].mxu0 %v1299
  %v1448 = vpop.f32.mrb[0].mxu0
  %v1449 = vadd.f32 0.0, %v1448
  %v1450 = vpop.f32.mrb[0].mxu0
  %v1451 = vpop.f32.mrb[0].mxu0
  %v1452 = vadd.f32 0.0, %v1451
  %v1453 = vpop.f32.mrb[0].mxu0
  %1454 = vmatprep.mubr.bf16.mxu0 0
  %1455 = vmatmul.mubr.bf16.gmra.mrb[0].mxu0 %v1302
  %v1456 = vpop.f32.mrb[0].mxu0
  %v1457 = vadd.f32 0.0, %v1456
  %v1458 = vpop.f32.mrb[0].mxu0
  %v1459 = vpop.f32.mrb[0].mxu0
  %v1460 = vadd.f32 0.0, %v1459
  %v1461 = vpop.f32.mrb[0].mxu0
  %1462 = vmatprep.mubr.bf16.mxu0 0
  %1463 = vmatmul.mubr.bf16.gmra.mrb[0].mxu0 %v1305
  %v1464 = vpop.f32.mrb[0].mxu0
  %v1465 = vadd.f32 0.0, %v1464
  %v1466 = vpop.f32.mrb[0].mxu0
  %v1467 = vpop.f32.mrb[0].mxu0
  %v1468 = vadd.f32 0.0, %v1467
  %v1469 = vpop.f32.mrb[0].mxu0
  %1470 = vmatprep.mubr.bf16.mxu0 0
  %1471 = vmatmul.mubr.bf16.gmra.mrb[0].mxu0 %v1308
  %v1472 = vpop.f32.mrb[0].mxu0
  %v1473 = vadd.f32 0.0, %v1472
  %v1474 = vpop.f32.mrb[0].mxu0
  %v1475 = vpop.f32.mrb[0].mxu0
  %v1476 = vadd.f32 0.0, %v1475
  %v1477 = vpop.f32.mrb[0].mxu0
  %1478 = vmatprep.mubr.bf16.mxu0 0
  %1479 = vmatmul.mubr.bf16.gmra.mrb[0].mxu0 %v1311
  %v1480 = vpop.f32.mrb[0].mxu0
  %v1481 = vadd.f32 0.0, %v1480
  %v1482 = vpop.f32.mrb[0].mxu0
  %v1483 = vpop.f32.mrb[0].mxu0
  %v1484 = vadd.f32 0.0, %v1483
  %v1485 = vpop.f32.mrb[0].mxu0
  %1486 = vmatprep.mubr.bf16.mxu0 0
  %1487 = vmatmul.mubr.bf16.gmra.mrb[0].mxu0 %v1314
  %v1488 = vpop.f32.mrb[0].mxu0
  %v1489 = vadd.f32 0.0, %v1488
  %v1490 = vpop.f32.mrb[0].mxu0
  %v1491 = vpop.f32.mrb[0].mxu0
  %v1492 = vadd.f32 0.0, %v1491
  %v1493 = vpop.f32.mrb[0].mxu0
  %1494 = vmatprep.mubr.bf16.mxu0 0
  %1495 = vmatmul.mubr.bf16.gmra.mrb[0].mxu0 %v1317
  %v1496 = vpop.f32.mrb[0].mxu0
  %v1497 = vadd.f32 0.0, %v1496
  %v1498 = vpop.f32.mrb[0].mxu0
  %v1499 = vpop.f32.mrb[0].mxu0
  %v1500 = vadd.f32 0.0, %v1499
  %v1501 = vpop.f32.mrb[0].mxu0
  %1502 = vmatprep.mubr.bf16.mxu0 0
  %1503 = vmatmul.mubr.bf16.gmra.mrb[0].mxu0 %v1320
  %v1504 = vpop.f32.mrb[0].mxu0
  %v1505 = vadd.f32 0.0, %v1504
  %v1506 = vpop.f32.mrb[0].mxu0
  %v1507 = vpop.f32.mrb[0].mxu0
  %v1508 = vadd.f32 0.0, %v1507
  %v1509 = vpop.f32.mrb[0].mxu0
  %1510 = vmatprep.mubr.bf16.mxu0 0
  %1511 = vmatmul.mubr.bf16.gmra.mrb[0].mxu0 %v1323
  %v1512 = vpop.f32.mrb[0].mxu0
  %v1513 = vadd.f32 0.0, %v1512
  %v1514 = vpop.f32.mrb[0].mxu0
  %v1515 = vpop.f32.mrb[0].mxu0
  %v1516 = vadd.f32 0.0, %v1515
  %v1517 = vpop.f32.mrb[0].mxu0
  %1518 = vmatprep.mubr.bf16.mxu0 0
  %1519 = vmatmul.mubr.bf16.gmra.mrb[0].mxu0 %v1326
  %v1520 = vpop.f32.mrb[0].mxu0
  %v1521 = vadd.f32 0.0, %v1520
  %v1522 = vpop.f32.mrb[0].mxu0
  %v1523 = vpop.f32.mrb[0].mxu0
  %v1524 = vadd.f32 0.0, %v1523
  %v1525 = vpop.f32.mrb[0].mxu0
  %1526 = vmatprep.mubr.bf16.mxu0 0
  %1527 = vmatmul.mubr.bf16.gmra.mrb[0].mxu0 %v1329
  %v1528 = vpop.f32.mrb[0].mxu0
  %v1529 = vadd.f32 0.0, %v1528
  %v1530 = vpop.f32.mrb[0].mxu0
  %v1531 = vpop.f32.mrb[0].mxu0
  %v1532 = vadd.f32 0.0, %v1531
  %v1533 = vpop.f32.mrb[0].mxu0
  %1534 = vmatprep.mubr.bf16.mxu0 0
  %1535 = vmatmul.mubr.bf16.gmra.mrb[0].mxu0 %v1332
  %v1536 = vpop.f32.mrb[0].mxu0
  %v1537 = vadd.f32 0.0, %v1536
  %v1538 = vpop.f32.mrb[0].mxu0
  %v1539 = vpop.f32.mrb[0].mxu0
  %v1540 = vadd.f32 0.0, %v1539
  %v1541 = vpop.f32.mrb[0].mxu0
  %1542 = vmatprep.mubr.bf16.mxu0 0
  %1543 = vmatmul.mubr.bf16.gmra.mrb[0].mxu0 %v1335
  %v1544 = vpop.f32.mrb[0].mxu0
  %v1545 = vadd.f32 0.0, %v1544
  %v1546 = vpop.f32.mrb[0].mxu0
  %v1547 = vpop.f32.mrb[0].mxu0
  %v1548 = vadd.f32 0.0, %v1547
  %v1549 = vpop.f32.mrb[0].mxu0
  %1550 = vmatprep.mubr.bf16.mxu0 0
  %1551 = vmatmul.mubr.bf16.gmra.mrb[0].mxu0 %v1338
  %v1552 = vpop.f32.mrb[0].mxu0
  %v1553 = vadd.f32 0.0, %v1552
  %v1554 = vpop.f32.mrb[0].mxu0
  %v1555 = vpop.f32.mrb[0].mxu0
  %v1556 = vadd.f32 0.0, %v1555
  %v1557 = vpop.f32.mrb[0].mxu0
  %1558 = vmatprep.mubr.bf16.mxu0 0
  %1559 = vmatmul.mubr.bf16.gmra.mrb[0].mxu0 %v1341
  %v1560 = vpop.f32.mrb[0].mxu0
  %v1561 = vadd.f32 0.0, %v1560
  %v1562 = vpop.f32.mrb[0].mxu0
  %v1563 = vpop.f32.mrb[0].mxu0
  %v1564 = vadd.f32 0.0, %v1563
  %v1565 = vpop.f32.mrb[0].mxu0
  %1566 = vmatprep.mubr.bf16.mxu0 0
  %1567 = vmatmul.mubr.bf16.gmra.mrb[0].mxu0 %v1344
  %v1568 = vpop.f32.mrb[0].mxu0
  %v1569 = vadd.f32 0.0, %v1568
  %v1570 = vpop.f32.mrb[0].mxu0
  %v1571 = vpop.f32.mrb[0].mxu0
  %v1572 = vadd.f32 0.0, %v1571
  %v1573 = vpop.f32.mrb[0].mxu0
  %1574 = vmatprep.mubr.bf16.mxu0 0
  %1575 = vmatmul.mubr.bf16.gmra.mrb[0].mxu0 %v1347
  %v1576 = vpop.f32.mrb[0].mxu0
  %v1577 = vadd.f32 0.0, %v1576
  %v1578 = vpop.f32.mrb[0].mxu0
  %v1579 = vpop.f32.mrb[0].mxu0
  %v1580 = vadd.f32 0.0, %v1579
  %v1581 = vpop.f32.mrb[0].mxu0
  %1582 = vmatprep.mubr.bf16.mxu0 0
  %1583 = vmatmul.mubr.bf16.gmra.mrb[0].mxu0 %v1350
  %v1584 = vpop.f32.mrb[0].mxu0
  %v1585 = vadd.f32 0.0, %v1584
  %v1586 = vpop.f32.mrb[0].mxu0
  %v1587 = vpop.f32.mrb[0].mxu0
  %v1588 = vadd.f32 0.0, %v1587
  %v1589 = vpop.f32.mrb[0].mxu0
  %1590 = vmatprep.mubr.bf16.mxu0 0
  %1591 = vmatmul.mubr.bf16.gmra.mrb[0].mxu0 %v1353
  %v1592 = vpop.f32.mrb[0].mxu0
  %v1593 = vadd.f32 0.0, %v1592
  %v1594 = vpop.f32.mrb[0].mxu0
  %v1595 = vpop.f32.mrb[0].mxu0
  %v1596 = vadd.f32 0.0, %v1595
  %v1597 = vpop.f32.mrb[0].mxu0
  %1598 = vmatprep.mubr.bf16.mxu0 0
  %1599 = vmatmul.mubr.bf16.gmra.mrb[0].mxu0 %v1356
  %v1600 = vpop.f32.mrb[0].mxu0
  %v1601 = vadd.f32 0.0, %v1600
  %v1602 = vpop.f32.mrb[0].mxu0
  %v1603 = vpop.f32.mrb[0].mxu0
  %v1604 = vadd.f32 0.0, %v1603
  %v1605 = vpop.f32.mrb[0].mxu0
  %1606 = vmatprep.mubr.bf16.mxu0 0
  %1607 = vmatmul.mubr.bf16.gmra.mrb[0].mxu0 %v1359
  %v1608 = vpop.f32.mrb[0].mxu0
  %v1609 = vadd.f32 0.0, %v1608
  %v1610 = vpop.f32.mrb[0].mxu0
  %v1611 = vpop.f32.mrb[0].mxu0
  %v1612 = vadd.f32 0.0, %v1611
  %v1613 = vpop.f32.mrb[0].mxu0
  %1614 = vmatprep.mubr.bf16.mxu0 0
  %1615 = vmatmul.mubr.bf16.gmra.mrb[0].mxu0 %v1362
  %v1616 = vpop.f32.mrb[0].mxu0
  %v1617 = vadd.f32 0.0, %v1616
  %v1618 = vpop.f32.mrb[0].mxu0
  %v1619 = vpop.f32.mrb[0].mxu0
  %v1620 = vadd.f32 0.0, %v1619
  %v1621 = vpop.f32.mrb[0].mxu0
  %1622 = vmatprep.mubr.bf16.mxu0 0
  %1623 = vmatmul.mubr.bf16.gmra.mrb[0].mxu0 %v1365
  %v1624 = vpop.f32.mrb[0].mxu0
  %v1625 = vadd.f32 0.0, %v1624
  %v1626 = vpop.f32.mrb[0].mxu0
  %v1627 = vpop.f32.mrb[0].mxu0
  %v1628 = vadd.f32 0.0, %v1627
  %v1629 = vpop.f32.mrb[0].mxu0
  %1630 = vmatprep.mubr.bf16.mxu0 0
  %1631 = vmatmul.mubr.bf16.gmra.mrb[0].mxu0 %v1368
  %v1632 = vpop.f32.mrb[0].mxu0
  %v1633 = vadd.f32 0.0, %v1632
  %v1634 = vpop.f32.mrb[0].mxu0
  %v1635 = vpop.f32.mrb[0].mxu0
  %v1636 = vadd.f32 0.0, %v1635
  %v1637 = vpop.f32.mrb[0].mxu0
  %1638 = vmatprep.mubr.bf16.mxu0 0
  %1639 = vmatmul.mubr.bf16.gmra.mrb[0].mxu0 %v1371
  %v1640 = vpop.f32.mrb[0].mxu0
  %v1641 = vadd.f32 0.0, %v1640
  %v1642 = vpop.f32.mrb[0].mxu0
  %v1643 = vpop.f32.mrb[0].mxu0
  %v1644 = vadd.f32 0.0, %v1643
  %v1645 = vpop.f32.mrb[0].mxu0
  %1646 = vmatprep.mubr.bf16.mxu0 0
  %1647 = vmatmul.mubr.bf16.gmra.mrb[0].mxu0 %v1374
  %v1648 = vpop.f32.mrb[0].mxu0
  %v1649 = vadd.f32 0.0, %v1648
  %v1650 = vpop.f32.mrb[0].mxu0
  %v1651 = vpop.f32.mrb[0].mxu0
  %v1652 = vadd.f32 0.0, %v1651
  %v1653 = vpop.f32.mrb[0].mxu0
  %1654 = vmatprep.mubr.bf16.mxu0 0
  %1655 = vmatmul.mubr.bf16.gmra.mrb[0].mxu0 %v1377
  %v1656 = vpop.f32.mrb[0].mxu0
  %v1657 = vadd.f32 0.0, %v1656
  %v1658 = vpop.f32.mrb[0].mxu0
  %v1659 = vpop.f32.mrb[0].mxu0
  %v1660 = vadd.f32 0.0, %v1659
  %v1661 = vpop.f32.mrb[0].mxu0
  %1662 = vmatprep.mubr.bf16.mxu0 0
  %1663 = vmatmul.mubr.bf16.gmra.mrb[0].mxu0 %v1380
  %v1664 = vpop.f32.mrb[0].mxu0
  %v1665 = vadd.f32 0.0, %v1664
  %v1666 = vpop.f32.mrb[0].mxu0
  %v1667 = vpop.f32.mrb[0].mxu0
  %v1668 = vadd.f32 0.0, %v1667
  %v1669 = vpop.f32.mrb[0].mxu0
  %1670 = vdwg.mxu0
  %v1671 = vld [vmem:[%s5] sm:$0x1]
  %v1672 = vld [vmem:[%s6] sm:$0x1]
  %vm1673 = vcmask 261120
  %v1674 = vsel %vm1673, %v1417, 0.0
  %v1675 = vsel %vm1673, %v1420, 0.0
  %v1676 = vadd.f32 %v1674, %v1675
  %v1677 = vsel %vm1673, %v1425, 0.0
  %v1678 = vadd.f32 %v1676, %v1677
  %v1679 = vsel %vm1673, %v1428, 0.0
  %v1680 = vadd.f32 %v1678, %v1679
  %v1681 = vsel %vm1673, %v1433, 0.0
  %v1682 = vadd.f32 %v1680, %v1681
  %v1683 = vsel %vm1673, %v1436, 0.0
  %v1684 = vadd.f32 %v1682, %v1683
  %v1685 = vsel %vm1673, %v1441, 0.0
  %v1686 = vadd.f32 %v1684, %v1685
  %v1687 = vsel %vm1673, %v1444, 0.0
  %v1688 = vadd.f32 %v1686, %v1687
  %v1689 = vsel %vm1673, %v1449, 0.0
  %v1690 = vadd.f32 %v1688, %v1689
  %v1691 = vsel %vm1673, %v1452, 0.0
  %v1692 = vadd.f32 %v1690, %v1691
  %v1693 = vsel %vm1673, %v1457, 0.0
  %v1694 = vadd.f32 %v1692, %v1693
  %v1695 = vsel %vm1673, %v1460, 0.0
  %v1696 = vadd.f32 %v1694, %v1695
  %v1697 = vsel %vm1673, %v1465, 0.0
  %v1698 = vadd.f32 %v1696, %v1697
  %v1699 = vsel %vm1673, %v1468, 0.0
  %v1700 = vadd.f32 %v1698, %v1699
  %v1701 = vsel %vm1673, %v1473, 0.0
  %v1702 = vadd.f32 %v1700, %v1701
  %v1703 = vsel %vm1673, %v1476, 0.0
  %v1704 = vadd.f32 %v1702, %v1703
  %v1705 = vsel %vm1673, %v1481, 0.0
  %v1706 = vadd.f32 %v1704, %v1705
  %v1707 = vsel %vm1673, %v1484, 0.0
  %v1708 = vadd.f32 %v1706, %v1707
  %v1709 = vsel %vm1673, %v1489, 0.0
  %v1710 = vadd.f32 %v1708, %v1709
  %v1711 = vsel %vm1673, %v1492, 0.0
  %v1712 = vadd.f32 %v1710, %v1711
  %v1713 = vsel %vm1673, %v1497, 0.0
  %v1714 = vadd.f32 %v1712, %v1713
  %v1715 = vsel %vm1673, %v1500, 0.0
  %v1716 = vadd.f32 %v1714, %v1715
  %v1717 = vsel %vm1673, %v1505, 0.0
  %v1718 = vadd.f32 %v1716, %v1717
  %v1719 = vsel %vm1673, %v1508, 0.0
  %v1720 = vadd.f32 %v1718, %v1719
  %v1721 = vsel %vm1673, %v1513, 0.0
  %v1722 = vadd.f32 %v1720, %v1721
  %v1723 = vsel %vm1673, %v1516, 0.0
  %v1724 = vadd.f32 %v1722, %v1723
  %v1725 = vsel %vm1673, %v1521, 0.0
  %v1726 = vadd.f32 %v1724, %v1725
  %v1727 = vsel %vm1673, %v1524, 0.0
  %v1728 = vadd.f32 %v1726, %v1727
  %v1729 = vsel %vm1673, %v1529, 0.0
  %v1730 = vadd.f32 %v1728, %v1729
  %v1731 = vsel %vm1673, %v1532, 0.0
  %v1732 = vadd.f32 %v1730, %v1731
  %v1733 = vsel %vm1673, %v1537, 0.0
  %v1734 = vadd.f32 %v1732, %v1733
  %v1735 = vsel %vm1673, %v1540, 0.0
  %v1736 = vadd.f32 %v1734, %v1735
  %v1737 = vsel %vm1673, %v1545, 0.0
  %v1738 = vadd.f32 %v1736, %v1737
  %v1739 = vsel %vm1673, %v1548, 0.0
  %v1740 = vadd.f32 %v1738, %v1739
  %v1741 = vsel %vm1673, %v1553, 0.0
  %v1742 = vadd.f32 %v1740, %v1741
  %v1743 = vsel %vm1673, %v1556, 0.0
  %v1744 = vadd.f32 %v1742, %v1743
  %v1745 = vsel %vm1673, %v1561, 0.0
  %v1746 = vadd.f32 %v1744, %v1745
  %v1747 = vsel %vm1673, %v1564, 0.0
  %v1748 = vadd.f32 %v1746, %v1747
  %v1749 = vsel %vm1673, %v1569, 0.0
  %v1750 = vadd.f32 %v1748, %v1749
  %v1751 = vsel %vm1673, %v1572, 0.0
  %v1752 = vadd.f32 %v1750, %v1751
  %v1753 = vsel %vm1673, %v1577, 0.0
  %v1754 = vadd.f32 %v1752, %v1753
  %v1755 = vsel %vm1673, %v1580, 0.0
  %v1756 = vadd.f32 %v1754, %v1755
  %v1757 = vsel %vm1673, %v1585, 0.0
  %v1758 = vadd.f32 %v1756, %v1757
  %v1759 = vsel %vm1673, %v1588, 0.0
  %v1760 = vadd.f32 %v1758, %v1759
  %v1761 = vsel %vm1673, %v1593, 0.0
  %v1762 = vadd.f32 %v1760, %v1761
  %v1763 = vsel %vm1673, %v1596, 0.0
  %v1764 = vadd.f32 %v1762, %v1763
  %v1765 = vsel %vm1673, %v1601, 0.0
  %v1766 = vadd.f32 %v1764, %v1765
  %v1767 = vsel %vm1673, %v1604, 0.0
  %v1768 = vadd.f32 %v1766, %v1767
  %v1769 = vsel %vm1673, %v1609, 0.0
  %v1770 = vadd.f32 %v1768, %v1769
  %v1771 = vsel %vm1673, %v1612, 0.0
  %v1772 = vadd.f32 %v1770, %v1771
  %v1773 = vsel %vm1673, %v1617, 0.0
  %v1774 = vadd.f32 %v1772, %v1773
  %v1775 = vsel %vm1673, %v1620, 0.0
  %v1776 = vadd.f32 %v1774, %v1775
  %v1777 = vsel %vm1673, %v1625, 0.0
  %v1778 = vadd.f32 %v1776, %v1777
  %v1779 = vsel %vm1673, %v1628, 0.0
  %v1780 = vadd.f32 %v1778, %v1779
  %v1781 = vsel %vm1673, %v1633, 0.0
  %v1782 = vadd.f32 %v1780, %v1781
  %v1783 = vsel %vm1673, %v1636, 0.0
  %v1784 = vadd.f32 %v1782, %v1783
  %v1785 = vsel %vm1673, %v1641, 0.0
  %v1786 = vadd.f32 %v1784, %v1785
  %v1787 = vsel %vm1673, %v1644, 0.0
  %v1788 = vadd.f32 %v1786, %v1787
  %v1789 = vsel %vm1673, %v1649, 0.0
  %v1790 = vadd.f32 %v1788, %v1789
  %v1791 = vsel %vm1673, %v1652, 0.0
  %v1792 = vadd.f32 %v1790, %v1791
  %v1793 = vsel %vm1673, %v1657, 0.0
  %v1794 = vadd.f32 %v1792, %v1793
  %v1795 = vsel %vm1673, %v1660, 0.0
  %v1796 = vadd.f32 %v1794, %v1795
  %v1797 = vsel %vm1673, %v1665, 0.0
  %v1798 = vadd.f32 %v1796, %v1797
  %v1799 = vsel %vm1673, %v1668, 0.0
  %v1800 = vadd.f32 %v1798, %v1799
  %v1801 = vrot.slane %v1800, 4
  %v1802 = vadd.f32 %v1800, %v1801
  %v1803 = vrot.slane %v1802, 2
  %v1804 = vadd.f32 %v1802, %v1803
  %v1805 = vrot.slane %v1804, 1
  %v1806 = vadd.f32 %v1804, %v1805
  %v1807 = vmul.f32 %v1806, 0.001953125
  %v1808 = vsub.f32 %v1417, %v1807
  %v1809 = vsub.f32 %v1420, %v1807
  %v1810 = vsub.f32 %v1425, %v1807
  %v1811 = vsub.f32 %v1428, %v1807
  %v1812 = vsub.f32 %v1433, %v1807
  %v1813 = vsub.f32 %v1436, %v1807
  %v1814 = vsub.f32 %v1441, %v1807
  %v1815 = vsub.f32 %v1444, %v1807
  %v1816 = vsub.f32 %v1449, %v1807
  %v1817 = vsub.f32 %v1452, %v1807
  %v1818 = vsub.f32 %v1457, %v1807
  %v1819 = vsub.f32 %v1460, %v1807
  %v1820 = vsub.f32 %v1465, %v1807
  %v1821 = vsub.f32 %v1468, %v1807
  %v1822 = vsub.f32 %v1473, %v1807
  %v1823 = vsub.f32 %v1476, %v1807
  %v1824 = vsub.f32 %v1481, %v1807
  %v1825 = vsub.f32 %v1484, %v1807
  %v1826 = vsub.f32 %v1489, %v1807
  %v1827 = vsub.f32 %v1492, %v1807
  %v1828 = vsub.f32 %v1497, %v1807
  %v1829 = vsub.f32 %v1500, %v1807
  %v1830 = vsub.f32 %v1505, %v1807
  %v1831 = vsub.f32 %v1508, %v1807
  %v1832 = vsub.f32 %v1513, %v1807
  %v1833 = vsub.f32 %v1516, %v1807
  %v1834 = vsub.f32 %v1521, %v1807
  %v1835 = vsub.f32 %v1524, %v1807
  %v1836 = vsub.f32 %v1529, %v1807
  %v1837 = vsub.f32 %v1532, %v1807
  %v1838 = vsub.f32 %v1537, %v1807
  %v1839 = vsub.f32 %v1540, %v1807
  %v1840 = vsub.f32 %v1545, %v1807
  %v1841 = vsub.f32 %v1548, %v1807
  %v1842 = vsub.f32 %v1553, %v1807
  %v1843 = vsub.f32 %v1556, %v1807
  %v1844 = vsub.f32 %v1561, %v1807
  %v1845 = vsub.f32 %v1564, %v1807
  %v1846 = vsub.f32 %v1569, %v1807
  %v1847 = vsub.f32 %v1572, %v1807
  %v1848 = vsub.f32 %v1577, %v1807
  %v1849 = vsub.f32 %v1580, %v1807
  %v1850 = vsub.f32 %v1585, %v1807
  %v1851 = vsub.f32 %v1588, %v1807
  %v1852 = vsub.f32 %v1593, %v1807
  %v1853 = vsub.f32 %v1596, %v1807
  %v1854 = vsub.f32 %v1601, %v1807
  %v1855 = vsub.f32 %v1604, %v1807
  %v1856 = vsub.f32 %v1609, %v1807
  %v1857 = vsub.f32 %v1612, %v1807
  %v1858 = vsub.f32 %v1617, %v1807
  %v1859 = vsub.f32 %v1620, %v1807
  %v1860 = vsub.f32 %v1625, %v1807
  %v1861 = vsub.f32 %v1628, %v1807
  %v1862 = vsub.f32 %v1633, %v1807
  %v1863 = vsub.f32 %v1636, %v1807
  %v1864 = vsub.f32 %v1641, %v1807
  %v1865 = vsub.f32 %v1644, %v1807
  %v1866 = vsub.f32 %v1649, %v1807
  %v1867 = vsub.f32 %v1652, %v1807
  %v1868 = vsub.f32 %v1657, %v1807
  %v1869 = vsub.f32 %v1660, %v1807
  %v1870 = vsub.f32 %v1665, %v1807
  %v1871 = vsub.f32 %v1668, %v1807
  %v1872 = vmul.f32 %v1808, %v1808
  %v1873 = vmul.f32 %v1809, %v1809
  %v1874 = vmul.f32 %v1810, %v1810
  %v1875 = vmul.f32 %v1811, %v1811
  %v1876 = vmul.f32 %v1812, %v1812
  %v1877 = vmul.f32 %v1813, %v1813
  %v1878 = vmul.f32 %v1814, %v1814
  %v1879 = vmul.f32 %v1815, %v1815
  %v1880 = vmul.f32 %v1816, %v1816
  %v1881 = vmul.f32 %v1817, %v1817
  %v1882 = vmul.f32 %v1818, %v1818
  %v1883 = vmul.f32 %v1819, %v1819
  %v1884 = vmul.f32 %v1820, %v1820
  %v1885 = vmul.f32 %v1821, %v1821
  %v1886 = vmul.f32 %v1822, %v1822
  %v1887 = vmul.f32 %v1823, %v1823
  %v1888 = vmul.f32 %v1824, %v1824
  %v1889 = vmul.f32 %v1825, %v1825
  %v1890 = vmul.f32 %v1826, %v1826
  %v1891 = vmul.f32 %v1827, %v1827
  %v1892 = vmul.f32 %v1828, %v1828
  %v1893 = vmul.f32 %v1829, %v1829
  %v1894 = vmul.f32 %v1830, %v1830
  %v1895 = vmul.f32 %v1831, %v1831
  %v1896 = vmul.f32 %v1832, %v1832
  %v1897 = vmul.f32 %v1833, %v1833
  %v1898 = vmul.f32 %v1834, %v1834
  %v1899 = vmul.f32 %v1835, %v1835
  %v1900 = vmul.f32 %v1836, %v1836
  %v1901 = vmul.f32 %v1837, %v1837
  %v1902 = vmul.f32 %v1838, %v1838
  %v1903 = vmul.f32 %v1839, %v1839
  %v1904 = vmul.f32 %v1840, %v1840
  %v1905 = vmul.f32 %v1841, %v1841
  %v1906 = vmul.f32 %v1842, %v1842
  %v1907 = vmul.f32 %v1843, %v1843
  %v1908 = vmul.f32 %v1844, %v1844
  %v1909 = vmul.f32 %v1845, %v1845
  %v1910 = vmul.f32 %v1846, %v1846
  %v1911 = vmul.f32 %v1847, %v1847
  %v1912 = vmul.f32 %v1848, %v1848
  %v1913 = vmul.f32 %v1849, %v1849
  %v1914 = vmul.f32 %v1850, %v1850
  %v1915 = vmul.f32 %v1851, %v1851
  %v1916 = vmul.f32 %v1852, %v1852
  %v1917 = vmul.f32 %v1853, %v1853
  %v1918 = vmul.f32 %v1854, %v1854
  %v1919 = vmul.f32 %v1855, %v1855
  %v1920 = vmul.f32 %v1856, %v1856
  %v1921 = vmul.f32 %v1857, %v1857
  %v1922 = vmul.f32 %v1858, %v1858
  %v1923 = vmul.f32 %v1859, %v1859
  %v1924 = vmul.f32 %v1860, %v1860
  %v1925 = vmul.f32 %v1861, %v1861
  %v1926 = vmul.f32 %v1862, %v1862
  %v1927 = vmul.f32 %v1863, %v1863
  %v1928 = vmul.f32 %v1864, %v1864
  %v1929 = vmul.f32 %v1865, %v1865
  %v1930 = vmul.f32 %v1866, %v1866
  %v1931 = vmul.f32 %v1867, %v1867
  %v1932 = vmul.f32 %v1868, %v1868
  %v1933 = vmul.f32 %v1869, %v1869
  %v1934 = vmul.f32 %v1870, %v1870
  %v1935 = vmul.f32 %v1871, %v1871
  %v1936 = vsel %vm1673, %v1872, 0.0
  %v1937 = vsel %vm1673, %v1873, 0.0
  %v1938 = vadd.f32 %v1936, %v1937
  %v1939 = vsel %vm1673, %v1874, 0.0
  %v1940 = vadd.f32 %v1938, %v1939
  %v1941 = vsel %vm1673, %v1875, 0.0
  %v1942 = vadd.f32 %v1940, %v1941
  %v1943 = vsel %vm1673, %v1876, 0.0
  %v1944 = vadd.f32 %v1942, %v1943
  %v1945 = vsel %vm1673, %v1877, 0.0
  %v1946 = vadd.f32 %v1944, %v1945
  %v1947 = vsel %vm1673, %v1878, 0.0
  %v1948 = vadd.f32 %v1946, %v1947
  %v1949 = vsel %vm1673, %v1879, 0.0
  %v1950 = vadd.f32 %v1948, %v1949
  %v1951 = vsel %vm1673, %v1880, 0.0
  %v1952 = vadd.f32 %v1950, %v1951
  %v1953 = vsel %vm1673, %v1881, 0.0
  %v1954 = vadd.f32 %v1952, %v1953
  %v1955 = vsel %vm1673, %v1882, 0.0
  %v1956 = vadd.f32 %v1954, %v1955
  %v1957 = vsel %vm1673, %v1883, 0.0
  %v1958 = vadd.f32 %v1956, %v1957
  %v1959 = vsel %vm1673, %v1884, 0.0
  %v1960 = vadd.f32 %v1958, %v1959
  %v1961 = vsel %vm1673, %v1885, 0.0
  %v1962 = vadd.f32 %v1960, %v1961
  %v1963 = vsel %vm1673, %v1886, 0.0
  %v1964 = vadd.f32 %v1962, %v1963
  %v1965 = vsel %vm1673, %v1887, 0.0
  %v1966 = vadd.f32 %v1964, %v1965
  %v1967 = vsel %vm1673, %v1888, 0.0
  %v1968 = vadd.f32 %v1966, %v1967
  %v1969 = vsel %vm1673, %v1889, 0.0
  %v1970 = vadd.f32 %v1968, %v1969
  %v1971 = vsel %vm1673, %v1890, 0.0
  %v1972 = vadd.f32 %v1970, %v1971
  %v1973 = vsel %vm1673, %v1891, 0.0
  %v1974 = vadd.f32 %v1972, %v1973
  %v1975 = vsel %vm1673, %v1892, 0.0
  %v1976 = vadd.f32 %v1974, %v1975
  %v1977 = vsel %vm1673, %v1893, 0.0
  %v1978 = vadd.f32 %v1976, %v1977
  %v1979 = vsel %vm1673, %v1894, 0.0
  %v1980 = vadd.f32 %v1978, %v1979
  %v1981 = vsel %vm1673, %v1895, 0.0
  %v1982 = vadd.f32 %v1980, %v1981
  %v1983 = vsel %vm1673, %v1896, 0.0
  %v1984 = vadd.f32 %v1982, %v1983
  %v1985 = vsel %vm1673, %v1897, 0.0
  %v1986 = vadd.f32 %v1984, %v1985
  %v1987 = vsel %vm1673, %v1898, 0.0
  %v1988 = vadd.f32 %v1986, %v1987
  %v1989 = vsel %vm1673, %v1899, 0.0
  %v1990 = vadd.f32 %v1988, %v1989
  %v1991 = vsel %vm1673, %v1900, 0.0
  %v1992 = vadd.f32 %v1990, %v1991
  %v1993 = vsel %vm1673, %v1901, 0.0
  %v1994 = vadd.f32 %v1992, %v1993
  %v1995 = vsel %vm1673, %v1902, 0.0
  %v1996 = vadd.f32 %v1994, %v1995
  %v1997 = vsel %vm1673, %v1903, 0.0
  %v1998 = vadd.f32 %v1996, %v1997
  %v1999 = vsel %vm1673, %v1904, 0.0
  %v2000 = vadd.f32 %v1998, %v1999
  %v2001 = vsel %vm1673, %v1905, 0.0
  %v2002 = vadd.f32 %v2000, %v2001
  %v2003 = vsel %vm1673, %v1906, 0.0
  %v2004 = vadd.f32 %v2002, %v2003
  %v2005 = vsel %vm1673, %v1907, 0.0
  %v2006 = vadd.f32 %v2004, %v2005
  %v2007 = vsel %vm1673, %v1908, 0.0
  %v2008 = vadd.f32 %v2006, %v2007
  %v2009 = vsel %vm1673, %v1909, 0.0
  %v2010 = vadd.f32 %v2008, %v2009
  %v2011 = vsel %vm1673, %v1910, 0.0
  %v2012 = vadd.f32 %v2010, %v2011
  %v2013 = vsel %vm1673, %v1911, 0.0
  %v2014 = vadd.f32 %v2012, %v2013
  %v2015 = vsel %vm1673, %v1912, 0.0
  %v2016 = vadd.f32 %v2014, %v2015
  %v2017 = vsel %vm1673, %v1913, 0.0
  %v2018 = vadd.f32 %v2016, %v2017
  %v2019 = vsel %vm1673, %v1914, 0.0
  %v2020 = vadd.f32 %v2018, %v2019
  %v2021 = vsel %vm1673, %v1915, 0.0
  %v2022 = vadd.f32 %v2020, %v2021
  %v2023 = vsel %vm1673, %v1916, 0.0
  %v2024 = vadd.f32 %v2022, %v2023
  %v2025 = vsel %vm1673, %v1917, 0.0
  %v2026 = vadd.f32 %v2024, %v2025
  %v2027 = vsel %vm1673, %v1918, 0.0
  %v2028 = vadd.f32 %v2026, %v2027
  %v2029 = vsel %vm1673, %v1919, 0.0
  %v2030 = vadd.f32 %v2028, %v2029
  %v2031 = vsel %vm1673, %v1920, 0.0
  %v2032 = vadd.f32 %v2030, %v2031
  %v2033 = vsel %vm1673, %v1921, 0.0
  %v2034 = vadd.f32 %v2032, %v2033
  %v2035 = vsel %vm1673, %v1922, 0.0
  %v2036 = vadd.f32 %v2034, %v2035
  %v2037 = vsel %vm1673, %v1923, 0.0
  %v2038 = vadd.f32 %v2036, %v2037
  %v2039 = vsel %vm1673, %v1924, 0.0
  %v2040 = vadd.f32 %v2038, %v2039
  %v2041 = vsel %vm1673, %v1925, 0.0
  %v2042 = vadd.f32 %v2040, %v2041
  %v2043 = vsel %vm1673, %v1926, 0.0
  %v2044 = vadd.f32 %v2042, %v2043
  %v2045 = vsel %vm1673, %v1927, 0.0
  %v2046 = vadd.f32 %v2044, %v2045
  %v2047 = vsel %vm1673, %v1928, 0.0
  %v2048 = vadd.f32 %v2046, %v2047
  %v2049 = vsel %vm1673, %v1929, 0.0
  %v2050 = vadd.f32 %v2048, %v2049
  %v2051 = vsel %vm1673, %v1930, 0.0
  %v2052 = vadd.f32 %v2050, %v2051
  %v2053 = vsel %vm1673, %v1931, 0.0
  %v2054 = vadd.f32 %v2052, %v2053
  %v2055 = vsel %vm1673, %v1932, 0.0
  %v2056 = vadd.f32 %v2054, %v2055
  %v2057 = vsel %vm1673, %v1933, 0.0
  %v2058 = vadd.f32 %v2056, %v2057
  %v2059 = vsel %vm1673, %v1934, 0.0
  %v2060 = vadd.f32 %v2058, %v2059
  %v2061 = vsel %vm1673, %v1935, 0.0
  %v2062 = vadd.f32 %v2060, %v2061
  %v2063 = vrot.slane %v2062, 4
  %v2064 = vadd.f32 %v2062, %v2063
  %v2065 = vrot.slane %v2064, 2
  %v2066 = vadd.f32 %v2064, %v2065
  %v2067 = vrot.slane %v2066, 1
  %v2068 = vadd.f32 %v2066, %v2067
  %v2069 = vmul.f32 %v2068, 0.001953125
  %v2070 = vadd.f32 %v2069, 1e-05
  %v2071 = vrsqrt.pop %v2070
  %v2072 = vmul.f32 %v2071, %v1671
  %v2073 = vlaneseq
  %v2074 = vshrl.u32 %v2073, 7
  %v2075 = vsub.s32 0, %v2074
  %v2076 = vrot.slane %v2072, %v2075
  %v2077 = vmul.f32 %v1808, %v2076
  %v2078 = vmul.f32 %v1809, %v2076
  %v2079 = vmul.f32 %v1810, %v2076
  %v2080 = vmul.f32 %v1811, %v2076
  %v2081 = vmul.f32 %v1812, %v2076
  %v2082 = vmul.f32 %v1813, %v2076
  %v2083 = vmul.f32 %v1814, %v2076
  %v2084 = vmul.f32 %v1815, %v2076
  %v2085 = vmul.f32 %v1816, %v2076
  %v2086 = vmul.f32 %v1817, %v2076
  %v2087 = vmul.f32 %v1818, %v2076
  %v2088 = vmul.f32 %v1819, %v2076
  %v2089 = vmul.f32 %v1820, %v2076
  %v2090 = vmul.f32 %v1821, %v2076
  %v2091 = vmul.f32 %v1822, %v2076
  %v2092 = vmul.f32 %v1823, %v2076
  %v2093 = vmul.f32 %v1824, %v2076
  %v2094 = vmul.f32 %v1825, %v2076
  %v2095 = vmul.f32 %v1826, %v2076
  %v2096 = vmul.f32 %v1827, %v2076
  %v2097 = vmul.f32 %v1828, %v2076
  %v2098 = vmul.f32 %v1829, %v2076
  %v2099 = vmul.f32 %v1830, %v2076
  %v2100 = vmul.f32 %v1831, %v2076
  %v2101 = vmul.f32 %v1832, %v2076
  %v2102 = vmul.f32 %v1833, %v2076
  %v2103 = vmul.f32 %v1834, %v2076
  %v2104 = vmul.f32 %v1835, %v2076
  %v2105 = vmul.f32 %v1836, %v2076
  %v2106 = vmul.f32 %v1837, %v2076
  %v2107 = vmul.f32 %v1838, %v2076
  %v2108 = vmul.f32 %v1839, %v2076
  %v2109 = vmul.f32 %v1840, %v2076
  %v2110 = vmul.f32 %v1841, %v2076
  %v2111 = vmul.f32 %v1842, %v2076
  %v2112 = vmul.f32 %v1843, %v2076
  %v2113 = vmul.f32 %v1844, %v2076
  %v2114 = vmul.f32 %v1845, %v2076
  %v2115 = vmul.f32 %v1846, %v2076
  %v2116 = vmul.f32 %v1847, %v2076
  %v2117 = vmul.f32 %v1848, %v2076
  %v2118 = vmul.f32 %v1849, %v2076
  %v2119 = vmul.f32 %v1850, %v2076
  %v2120 = vmul.f32 %v1851, %v2076
  %v2121 = vmul.f32 %v1852, %v2076
  %v2122 = vmul.f32 %v1853, %v2076
  %v2123 = vmul.f32 %v1854, %v2076
  %v2124 = vmul.f32 %v1855, %v2076
  %v2125 = vmul.f32 %v1856, %v2076
  %v2126 = vmul.f32 %v1857, %v2076
  %v2127 = vmul.f32 %v1858, %v2076
  %v2128 = vmul.f32 %v1859, %v2076
  %v2129 = vmul.f32 %v1860, %v2076
  %v2130 = vmul.f32 %v1861, %v2076
  %v2131 = vmul.f32 %v1862, %v2076
  %v2132 = vmul.f32 %v1863, %v2076
  %v2133 = vmul.f32 %v1864, %v2076
  %v2134 = vmul.f32 %v1865, %v2076
  %v2135 = vmul.f32 %v1866, %v2076
  %v2136 = vmul.f32 %v1867, %v2076
  %v2137 = vmul.f32 %v1868, %v2076
  %v2138 = vmul.f32 %v1869, %v2076
  %v2139 = vmul.f32 %v1870, %v2076
  %v2140 = vmul.f32 %v1871, %v2076
  %v2142 = vlaneseq
  %v2143 = vshrl.u32 %v2142, 7
  %v2144 = vsub.s32 0, %v2143
  %v2145 = vrot.slane %v1672, %v2144
  %v2147 = vadd.f32 %v2077, %v2145
  %v2148 = vadd.f32 %v2078, %v2145
  %v2149 = vadd.f32 %v2079, %v2145
  %v2150 = vadd.f32 %v2080, %v2145
  %v2151 = vadd.f32 %v2081, %v2145
  %v2152 = vadd.f32 %v2082, %v2145
  %v2153 = vadd.f32 %v2083, %v2145
  %v2154 = vadd.f32 %v2084, %v2145
  %v2155 = vadd.f32 %v2085, %v2145
  %v2156 = vadd.f32 %v2086, %v2145
  %v2157 = vadd.f32 %v2087, %v2145
  %v2158 = vadd.f32 %v2088, %v2145
  %v2159 = vadd.f32 %v2089, %v2145
  %v2160 = vadd.f32 %v2090, %v2145
  %v2161 = vadd.f32 %v2091, %v2145
  %v2162 = vadd.f32 %v2092, %v2145
  %v2163 = vadd.f32 %v2093, %v2145
  %v2164 = vadd.f32 %v2094, %v2145
  %v2165 = vadd.f32 %v2095, %v2145
  %v2166 = vadd.f32 %v2096, %v2145
  %v2167 = vadd.f32 %v2097, %v2145
  %v2168 = vadd.f32 %v2098, %v2145
  %v2169 = vadd.f32 %v2099, %v2145
  %v2170 = vadd.f32 %v2100, %v2145
  %v2171 = vadd.f32 %v2101, %v2145
  %v2172 = vadd.f32 %v2102, %v2145
  %v2173 = vadd.f32 %v2103, %v2145
  %v2174 = vadd.f32 %v2104, %v2145
  %v2175 = vadd.f32 %v2105, %v2145
  %v2176 = vadd.f32 %v2106, %v2145
  %v2177 = vadd.f32 %v2107, %v2145
  %v2178 = vadd.f32 %v2108, %v2145
  %v2179 = vadd.f32 %v2109, %v2145
  %v2180 = vadd.f32 %v2110, %v2145
  %v2181 = vadd.f32 %v2111, %v2145
  %v2182 = vadd.f32 %v2112, %v2145
  %v2183 = vadd.f32 %v2113, %v2145
  %v2184 = vadd.f32 %v2114, %v2145
  %v2185 = vadd.f32 %v2115, %v2145
  %v2186 = vadd.f32 %v2116, %v2145
  %v2187 = vadd.f32 %v2117, %v2145
  %v2188 = vadd.f32 %v2118, %v2145
  %v2189 = vadd.f32 %v2119, %v2145
  %v2190 = vadd.f32 %v2120, %v2145
  %v2191 = vadd.f32 %v2121, %v2145
  %v2192 = vadd.f32 %v2122, %v2145
  %v2193 = vadd.f32 %v2123, %v2145
  %v2194 = vadd.f32 %v2124, %v2145
  %v2195 = vadd.f32 %v2125, %v2145
  %v2196 = vadd.f32 %v2126, %v2145
  %v2197 = vadd.f32 %v2127, %v2145
  %v2198 = vadd.f32 %v2128, %v2145
  %v2199 = vadd.f32 %v2129, %v2145
  %v2200 = vadd.f32 %v2130, %v2145
  %v2201 = vadd.f32 %v2131, %v2145
  %v2202 = vadd.f32 %v2132, %v2145
  %v2203 = vadd.f32 %v2133, %v2145
  %v2204 = vadd.f32 %v2134, %v2145
  %v2205 = vadd.f32 %v2135, %v2145
  %v2206 = vadd.f32 %v2136, %v2145
  %v2207 = vadd.f32 %v2137, %v2145
  %v2208 = vadd.f32 %v2138, %v2145
  %v2209 = vadd.f32 %v2139, %v2145
  %v2210 = vadd.f32 %v2140, %v2145
  %v2211 = vmax.f32 %v2147, 0.0
  %v2212 = vmax.f32 %v2148, 0.0
  %v2213 = vmax.f32 %v2149, 0.0
  %v2214 = vmax.f32 %v2150, 0.0
  %v2215 = vmax.f32 %v2151, 0.0
  %v2216 = vmax.f32 %v2152, 0.0
  %v2217 = vmax.f32 %v2153, 0.0
  %v2218 = vmax.f32 %v2154, 0.0
  %v2219 = vmax.f32 %v2155, 0.0
  %v2220 = vmax.f32 %v2156, 0.0
  %v2221 = vmax.f32 %v2157, 0.0
  %v2222 = vmax.f32 %v2158, 0.0
  %v2223 = vmax.f32 %v2159, 0.0
  %v2224 = vmax.f32 %v2160, 0.0
  %v2225 = vmax.f32 %v2161, 0.0
  %v2226 = vmax.f32 %v2162, 0.0
  %v2227 = vmax.f32 %v2163, 0.0
  %v2228 = vmax.f32 %v2164, 0.0
  %v2229 = vmax.f32 %v2165, 0.0
  %v2230 = vmax.f32 %v2166, 0.0
  %v2231 = vmax.f32 %v2167, 0.0
  %v2232 = vmax.f32 %v2168, 0.0
  %v2233 = vmax.f32 %v2169, 0.0
  %v2234 = vmax.f32 %v2170, 0.0
  %v2235 = vmax.f32 %v2171, 0.0
  %v2236 = vmax.f32 %v2172, 0.0
  %v2237 = vmax.f32 %v2173, 0.0
  %v2238 = vmax.f32 %v2174, 0.0
  %v2239 = vmax.f32 %v2175, 0.0
  %v2240 = vmax.f32 %v2176, 0.0
  %v2241 = vmax.f32 %v2177, 0.0
  %v2242 = vmax.f32 %v2178, 0.0
  %v2243 = vmax.f32 %v2179, 0.0
  %v2244 = vmax.f32 %v2180, 0.0
  %v2245 = vmax.f32 %v2181, 0.0
  %v2246 = vmax.f32 %v2182, 0.0
  %v2247 = vmax.f32 %v2183, 0.0
  %v2248 = vmax.f32 %v2184, 0.0
  %v2249 = vmax.f32 %v2185, 0.0
  %v2250 = vmax.f32 %v2186, 0.0
  %v2251 = vmax.f32 %v2187, 0.0
  %v2252 = vmax.f32 %v2188, 0.0
  %v2253 = vmax.f32 %v2189, 0.0
  %v2254 = vmax.f32 %v2190, 0.0
  %v2255 = vmax.f32 %v2191, 0.0
  %v2256 = vmax.f32 %v2192, 0.0
  %v2257 = vmax.f32 %v2193, 0.0
  %v2258 = vmax.f32 %v2194, 0.0
  %v2259 = vmax.f32 %v2195, 0.0
  %v2260 = vmax.f32 %v2196, 0.0
  %v2261 = vmax.f32 %v2197, 0.0
  %v2262 = vmax.f32 %v2198, 0.0
  %v2263 = vmax.f32 %v2199, 0.0
  %v2264 = vmax.f32 %v2200, 0.0
  %v2265 = vmax.f32 %v2201, 0.0
  %v2266 = vmax.f32 %v2202, 0.0
  %v2267 = vmax.f32 %v2203, 0.0
  %v2268 = vmax.f32 %v2204, 0.0
  %v2269 = vmax.f32 %v2205, 0.0
  %v2270 = vmax.f32 %v2206, 0.0
  %v2271 = vmax.f32 %v2207, 0.0
  %v2272 = vmax.f32 %v2208, 0.0
  %v2273 = vmax.f32 %v2209, 0.0
  %v2274 = vmax.f32 %v2210, 0.0
  %v2275 = vpack.c.bf16 %v2212, %v2211
  %v2276 = vpack.c.bf16 %v2214, %v2213
  %v2277 = vpack.c.bf16 %v2216, %v2215
  %v2278 = vpack.c.bf16 %v2218, %v2217
  %v2279 = vpack.c.bf16 %v2220, %v2219
  %v2280 = vpack.c.bf16 %v2222, %v2221
  %v2281 = vpack.c.bf16 %v2224, %v2223
  %v2282 = vpack.c.bf16 %v2226, %v2225
  %v2283 = vpack.c.bf16 %v2228, %v2227
  %v2284 = vpack.c.bf16 %v2230, %v2229
  %v2285 = vpack.c.bf16 %v2232, %v2231
  %v2286 = vpack.c.bf16 %v2234, %v2233
  %v2287 = vpack.c.bf16 %v2236, %v2235
  %v2288 = vpack.c.bf16 %v2238, %v2237
  %v2289 = vpack.c.bf16 %v2240, %v2239
  %v2290 = vpack.c.bf16 %v2242, %v2241
  %v2291 = vpack.c.bf16 %v2244, %v2243
  %v2292 = vpack.c.bf16 %v2246, %v2245
  %v2293 = vpack.c.bf16 %v2248, %v2247
  %v2294 = vpack.c.bf16 %v2250, %v2249
  %v2295 = vpack.c.bf16 %v2252, %v2251
  %v2296 = vpack.c.bf16 %v2254, %v2253
  %v2297 = vpack.c.bf16 %v2256, %v2255
  %v2298 = vpack.c.bf16 %v2258, %v2257
  %v2299 = vpack.c.bf16 %v2260, %v2259
  %v2300 = vpack.c.bf16 %v2262, %v2261
  %v2301 = vpack.c.bf16 %v2264, %v2263
  %v2302 = vpack.c.bf16 %v2266, %v2265
  %v2303 = vpack.c.bf16 %v2268, %v2267
  %v2304 = vpack.c.bf16 %v2270, %v2269
  %v2305 = vpack.c.bf16 %v2272, %v2271
  %v2306 = vpack.c.bf16 %v2274, %v2273
  %v2339 = vunpack.c.l.b16 %v2275
  %v2340 = vunpack.c.h.b16 %v2275
  %v2341 = vunpack.c.l.b16 %v2276
  %v2342 = vunpack.c.h.b16 %v2276
  %v2343 = vunpack.c.l.b16 %v2277
  %v2344 = vunpack.c.h.b16 %v2277
  %v2345 = vunpack.c.l.b16 %v2278
  %v2346 = vunpack.c.h.b16 %v2278
  %v2347 = vunpack.c.l.b16 %v2279
  %v2348 = vunpack.c.h.b16 %v2279
  %v2349 = vunpack.c.l.b16 %v2280
  %v2350 = vunpack.c.h.b16 %v2280
  %v2351 = vunpack.c.l.b16 %v2281
  %v2352 = vunpack.c.h.b16 %v2281
  %v2353 = vunpack.c.l.b16 %v2282
  %v2354 = vunpack.c.h.b16 %v2282
  %v2355 = vunpack.c.l.b16 %v2283
  %v2356 = vunpack.c.h.b16 %v2283
  %v2357 = vunpack.c.l.b16 %v2284
  %v2358 = vunpack.c.h.b16 %v2284
  %v2359 = vunpack.c.l.b16 %v2285
  %v2360 = vunpack.c.h.b16 %v2285
  %v2361 = vunpack.c.l.b16 %v2286
  %v2362 = vunpack.c.h.b16 %v2286
  %v2363 = vunpack.c.l.b16 %v2287
  %v2364 = vunpack.c.h.b16 %v2287
  %v2365 = vunpack.c.l.b16 %v2288
  %v2366 = vunpack.c.h.b16 %v2288
  %v2367 = vunpack.c.l.b16 %v2289
  %v2368 = vunpack.c.h.b16 %v2289
  %v2369 = vunpack.c.l.b16 %v2290
  %v2370 = vunpack.c.h.b16 %v2290
  %v2371 = vunpack.c.l.b16 %v2291
  %v2372 = vunpack.c.h.b16 %v2291
  %v2373 = vunpack.c.l.b16 %v2292
  %v2374 = vunpack.c.h.b16 %v2292
  %v2375 = vunpack.c.l.b16 %v2293
  %v2376 = vunpack.c.h.b16 %v2293
  %v2377 = vunpack.c.l.b16 %v2294
  %v2378 = vunpack.c.h.b16 %v2294
  %v2379 = vunpack.c.l.b16 %v2295
  %v2380 = vunpack.c.h.b16 %v2295
  %v2381 = vunpack.c.l.b16 %v2296
  %v2382 = vunpack.c.h.b16 %v2296
  %v2383 = vunpack.c.l.b16 %v2297
  %v2384 = vunpack.c.h.b16 %v2297
  %v2385 = vunpack.c.l.b16 %v2298
  %v2386 = vunpack.c.h.b16 %v2298
  %v2387 = vunpack.c.l.b16 %v2299
  %v2388 = vunpack.c.h.b16 %v2299
  %v2389 = vunpack.c.l.b16 %v2300
  %v2390 = vunpack.c.h.b16 %v2300
  %v2391 = vunpack.c.l.b16 %v2301
  %v2392 = vunpack.c.h.b16 %v2301
  %v2393 = vunpack.c.l.b16 %v2302
  %v2394 = vunpack.c.h.b16 %v2302
  %v2395 = vunpack.c.l.b16 %v2303
  %v2396 = vunpack.c.h.b16 %v2303
  %v2397 = vunpack.c.l.b16 %v2304
  %v2398 = vunpack.c.h.b16 %v2304
  %v2399 = vunpack.c.l.b16 %v2305
  %v2400 = vunpack.c.h.b16 %v2305
  %v2401 = vunpack.c.l.b16 %v2306
  %v2402 = vunpack.c.h.b16 %v2306
  %v2403 = vpack.c.b16 %v2339, %v2339
  %v2404 = vpack.c.b16 %v2340, %v2340
  %v2405 = vpack.c.b16 %v2341, %v2341
  %v2406 = vpack.c.b16 %v2342, %v2342
  %v2407 = vpack.c.b16 %v2343, %v2343
  %v2408 = vpack.c.b16 %v2344, %v2344
  %v2409 = vpack.c.b16 %v2345, %v2345
  %v2410 = vpack.c.b16 %v2346, %v2346
  %v2411 = vpack.c.b16 %v2347, %v2347
  %v2412 = vpack.c.b16 %v2348, %v2348
  %v2413 = vpack.c.b16 %v2349, %v2349
  %v2414 = vpack.c.b16 %v2350, %v2350
  %v2415 = vpack.c.b16 %v2351, %v2351
  %v2416 = vpack.c.b16 %v2352, %v2352
  %v2417 = vpack.c.b16 %v2353, %v2353
  %v2418 = vpack.c.b16 %v2354, %v2354
  %v2419 = vpack.c.b16 %v2355, %v2355
  %v2420 = vpack.c.b16 %v2356, %v2356
  %v2421 = vpack.c.b16 %v2357, %v2357
  %v2422 = vpack.c.b16 %v2358, %v2358
  %v2423 = vpack.c.b16 %v2359, %v2359
  %v2424 = vpack.c.b16 %v2360, %v2360
  %v2425 = vpack.c.b16 %v2361, %v2361
  %v2426 = vpack.c.b16 %v2362, %v2362
  %v2427 = vpack.c.b16 %v2363, %v2363
  %v2428 = vpack.c.b16 %v2364, %v2364
  %v2429 = vpack.c.b16 %v2365, %v2365
  %v2430 = vpack.c.b16 %v2366, %v2366
  %v2431 = vpack.c.b16 %v2367, %v2367
  %v2432 = vpack.c.b16 %v2368, %v2368
  %v2433 = vpack.c.b16 %v2369, %v2369
  %v2434 = vpack.c.b16 %v2370, %v2370
  %v2435 = vpack.c.b16 %v2371, %v2371
  %v2436 = vpack.c.b16 %v2372, %v2372
  %v2437 = vpack.c.b16 %v2373, %v2373
  %v2438 = vpack.c.b16 %v2374, %v2374
  %v2439 = vpack.c.b16 %v2375, %v2375
  %v2440 = vpack.c.b16 %v2376, %v2376
  %v2441 = vpack.c.b16 %v2377, %v2377
  %v2442 = vpack.c.b16 %v2378, %v2378
  %v2443 = vpack.c.b16 %v2379, %v2379
  %v2444 = vpack.c.b16 %v2380, %v2380
  %v2445 = vpack.c.b16 %v2381, %v2381
  %v2446 = vpack.c.b16 %v2382, %v2382
  %v2447 = vpack.c.b16 %v2383, %v2383
  %v2448 = vpack.c.b16 %v2384, %v2384
  %v2449 = vpack.c.b16 %v2385, %v2385
  %v2450 = vpack.c.b16 %v2386, %v2386
  %v2451 = vpack.c.b16 %v2387, %v2387
  %v2452 = vpack.c.b16 %v2388, %v2388
  %v2453 = vpack.c.b16 %v2389, %v2389
  %v2454 = vpack.c.b16 %v2390, %v2390
  %v2455 = vpack.c.b16 %v2391, %v2391
  %v2456 = vpack.c.b16 %v2392, %v2392
  %v2457 = vpack.c.b16 %v2393, %v2393
  %v2458 = vpack.c.b16 %v2394, %v2394
  %v2459 = vpack.c.b16 %v2395, %v2395
  %v2460 = vpack.c.b16 %v2396, %v2396
  %v2461 = vpack.c.b16 %v2397, %v2397
  %v2462 = vpack.c.b16 %v2398, %v2398
  %v2463 = vpack.c.b16 %v2399, %v2399
  %v2464 = vpack.c.b16 %v2400, %v2400
  %v2465 = vpack.c.b16 %v2401, %v2401
  %v2466 = vpack.c.b16 %v2402, %v2402
  %vm2531 = vcmask 257024
  %2532 = vst.msk [vmem:[%s7] sm:$0xf] %vm2531, %v2403
  %2533 = vst.msk [vmem:[%s7 + $0x4] sm:$0xf] %vm2531, %v2404
  %2534 = vst.msk [vmem:[%s7 + $0x8] sm:$0xf] %vm2531, %v2405
  %2535 = vst.msk [vmem:[%s7 + $0xc] sm:$0xf] %vm2531, %v2406
  %2536 = vst.msk [vmem:[%s7 + $0x10] sm:$0xf] %vm2531, %v2407
  %2537 = vst.msk [vmem:[%s7 + $0x14] sm:$0xf] %vm2531, %v2408
  %2538 = vst.msk [vmem:[%s7 + $0x18] sm:$0xf] %vm2531, %v2409
  %2539 = vst.msk [vmem:[%s7 + $0x1c] sm:$0xf] %vm2531, %v2410
  %2540 = vst.msk [vmem:[%s7 + $0x20] sm:$0xf] %vm2531, %v2411
  %2541 = vst.msk [vmem:[%s7 + $0x24] sm:$0xf] %vm2531, %v2412
  %2542 = vst.msk [vmem:[%s7 + $0x28] sm:$0xf] %vm2531, %v2413
  %2543 = vst.msk [vmem:[%s7 + $0x2c] sm:$0xf] %vm2531, %v2414
  %2544 = vst.msk [vmem:[%s7 + $0x30] sm:$0xf] %vm2531, %v2415
  %2545 = vst.msk [vmem:[%s7 + $0x34] sm:$0xf] %vm2531, %v2416
  %2546 = vst.msk [vmem:[%s7 + $0x38] sm:$0xf] %vm2531, %v2417
  %2547 = vst.msk [vmem:[%s7 + $0x3c] sm:$0xf] %vm2531, %v2418
  %2548 = vst.msk [vmem:[%s7 + $0x40] sm:$0xf] %vm2531, %v2419
  %2549 = vst.msk [vmem:[%s7 + $0x44] sm:$0xf] %vm2531, %v2420
  %2550 = vst.msk [vmem:[%s7 + $0x48] sm:$0xf] %vm2531, %v2421
  %2551 = vst.msk [vmem:[%s7 + $0x4c] sm:$0xf] %vm2531, %v2422
  %2552 = vst.msk [vmem:[%s7 + $0x50] sm:$0xf] %vm2531, %v2423
  %2553 = vst.msk [vmem:[%s7 + $0x54] sm:$0xf] %vm2531, %v2424
  %2554 = vst.msk [vmem:[%s7 + $0x58] sm:$0xf] %vm2531, %v2425
  %2555 = vst.msk [vmem:[%s7 + $0x5c] sm:$0xf] %vm2531, %v2426
  %2556 = vst.msk [vmem:[%s7 + $0x60] sm:$0xf] %vm2531, %v2427
  %2557 = vst.msk [vmem:[%s7 + $0x64] sm:$0xf] %vm2531, %v2428
  %2558 = vst.msk [vmem:[%s7 + $0x68] sm:$0xf] %vm2531, %v2429
  %2559 = vst.msk [vmem:[%s7 + $0x6c] sm:$0xf] %vm2531, %v2430
  %2560 = vst.msk [vmem:[%s7 + $0x70] sm:$0xf] %vm2531, %v2431
  %2561 = vst.msk [vmem:[%s7 + $0x74] sm:$0xf] %vm2531, %v2432
  %2562 = vst.msk [vmem:[%s7 + $0x78] sm:$0xf] %vm2531, %v2433
  %2563 = vst.msk [vmem:[%s7 + $0x7c] sm:$0xf] %vm2531, %v2434
  %2564 = vst.msk [vmem:[%s7 + $0x80] sm:$0xf] %vm2531, %v2435
  %2565 = vst.msk [vmem:[%s7 + $0x84] sm:$0xf] %vm2531, %v2436
  %2566 = vst.msk [vmem:[%s7 + $0x88] sm:$0xf] %vm2531, %v2437
  %2567 = vst.msk [vmem:[%s7 + $0x8c] sm:$0xf] %vm2531, %v2438
  %2568 = vst.msk [vmem:[%s7 + $0x90] sm:$0xf] %vm2531, %v2439
  %2569 = vst.msk [vmem:[%s7 + $0x94] sm:$0xf] %vm2531, %v2440
  %2570 = vst.msk [vmem:[%s7 + $0x98] sm:$0xf] %vm2531, %v2441
  %2571 = vst.msk [vmem:[%s7 + $0x9c] sm:$0xf] %vm2531, %v2442
  %2572 = vst.msk [vmem:[%s7 + $0xa0] sm:$0xf] %vm2531, %v2443
  %2573 = vst.msk [vmem:[%s7 + $0xa4] sm:$0xf] %vm2531, %v2444
  %2574 = vst.msk [vmem:[%s7 + $0xa8] sm:$0xf] %vm2531, %v2445
  %2575 = vst.msk [vmem:[%s7 + $0xac] sm:$0xf] %vm2531, %v2446
  %2576 = vst.msk [vmem:[%s7 + $0xb0] sm:$0xf] %vm2531, %v2447
  %2577 = vst.msk [vmem:[%s7 + $0xb4] sm:$0xf] %vm2531, %v2448
  %2578 = vst.msk [vmem:[%s7 + $0xb8] sm:$0xf] %vm2531, %v2449
  %2579 = vst.msk [vmem:[%s7 + $0xbc] sm:$0xf] %vm2531, %v2450
  %2580 = vst.msk [vmem:[%s7 + $0xc0] sm:$0xf] %vm2531, %v2451
  %2581 = vst.msk [vmem:[%s7 + $0xc4] sm:$0xf] %vm2531, %v2452
  %2582 = vst.msk [vmem:[%s7 + $0xc8] sm:$0xf] %vm2531, %v2453
  %2583 = vst.msk [vmem:[%s7 + $0xcc] sm:$0xf] %vm2531, %v2454
  %2584 = vst.msk [vmem:[%s7 + $0xd0] sm:$0xf] %vm2531, %v2455
  %2585 = vst.msk [vmem:[%s7 + $0xd4] sm:$0xf] %vm2531, %v2456
  %2586 = vst.msk [vmem:[%s7 + $0xd8] sm:$0xf] %vm2531, %v2457
  %2587 = vst.msk [vmem:[%s7 + $0xdc] sm:$0xf] %vm2531, %v2458
  %2588 = vst.msk [vmem:[%s7 + $0xe0] sm:$0xf] %vm2531, %v2459
  %2589 = vst.msk [vmem:[%s7 + $0xe4] sm:$0xf] %vm2531, %v2460
  %2590 = vst.msk [vmem:[%s7 + $0xe8] sm:$0xf] %vm2531, %v2461
  %2591 = vst.msk [vmem:[%s7 + $0xec] sm:$0xf] %vm2531, %v2462
  %2592 = vst.msk [vmem:[%s7 + $0xf0] sm:$0xf] %vm2531, %v2463
  %2593 = vst.msk [vmem:[%s7 + $0xf4] sm:$0xf] %vm2531, %v2464
  %2594 = vst.msk [vmem:[%s7 + $0xf8] sm:$0xf] %vm2531, %v2465
  %2595 = vst.msk [vmem:[%s7 + $0xfc] sm:$0xf] %vm2531, %v2466
  // Predicated region
  $region30: #{cnn_forward.12} parent=0 // pred_check
    _
  $region31: #{cnn_forward.12} parent=0 // pred_check_branch
    %2597 = sbr.rel (0) target = $region33
  $region32: #{cnn_forward.12} parent=0 // pred_region
    _
  $region33: #{cnn_forward.12} parent=0 // pred_fallthru
    _
  // Predicated region
  $region34: #{cnn_forward.12} parent=0 // pred_check
    _
  $region35: #{cnn_forward.12} parent=0 // pred_check_branch
    %2599 = sbr.rel (0) target = $region37
  $region36: #{cnn_forward.12} parent=0 // pred_region
    _
  $region37: #{cnn_forward.12} parent=0 // pred_fallthru
    _

</llo_original>
